<compile_context>
chip_gen: v5e
topology: v5e:2x2
jax: 0.10.0
libtpu: 0.0.40
codegen_flags: <defaults>
</compile_context>

<pallas_src>
import functools

import jax
import jax.numpy as jnp
from jax.experimental import pallas as pl
from jax.experimental.pallas import tpu as pltpu


# ------------------------------------------------------------------ kernel

def _emotion_rnn_kernel(x_ref, w1_ref, b1_ref, u1_ref, w2_ref, u2_ref,
                        b2_ref, wl_ref, bl_ref, o_ref, *, T, B, H, O):
    """Whole forward pass in one invocation.

    x_ref  : (T*B, F)   time-major sequence, flattened over (t, b); B is the
                        sublane-padded batch (multiple of 8)
    w1_ref : (F, 4H)    layer-1 input weights, gates packed [i|f|o|c~]
    b1_ref : (1, 4H)    layer-1 combined bias (bias_W + bias_U)
    u1_ref : (H, 4H)    layer-1 recurrent weights
    w2_ref : (H, 4H)    layer-2 input weights (act on h1)
    u2_ref : (H, 4H)    layer-2 recurrent weights
    b2_ref : (1, 4H)    layer-2 combined bias
    wl_ref : (T, H, O)  head weights, time-major (matches torch.cat order)
    bl_ref : (1, O)     head bias
    o_ref  : (B, O)     softmax output
    """
    H3, H4 = 3 * H, 4 * H

    # ---- hoisted layer-1 input projection: one matmul for all T steps ----
    xg = (jnp.dot(x_ref[...], w1_ref[...], preferred_element_type=jnp.float32)
          + b1_ref[...])                                     # (T*B, 4H)

    u1 = u1_ref[...]                                         # (H, 4H)
    w2 = w2_ref[...]                                         # (H, 4H)
    u2 = u2_ref[...]                                         # (H, 4H)
    b2 = jnp.broadcast_to(b2_ref[...], (B, H4))              # hoisted broadcast

    # Per-lane pre-scale so ONE whole-vreg tanh covers all four gates:
    #   sigmoid(x) = 0.5*(tanh(0.5*x) + 1)  on the i|f|o lane blocks,
    #   tanh(x)                             on the c~ block.
    lane = jax.lax.broadcasted_iota(jnp.int32, (B, H4), 1)
    gate_scale = jnp.where(lane < H3, jnp.float32(0.5), jnp.float32(1.0))

    def cell(g, c):
        t = jnp.tanh(g * gate_scale)                         # 1st EUP push/cell
        s = 0.5 * (t + 1.0)                                  # i|f|o in one VPU op
        i = s[:, 0 * H:1 * H]
        f = s[:, 1 * H:2 * H]
        o = s[:, 2 * H:3 * H]
        cb = t[:, 3 * H:4 * H]
        c_new = f * c + i * cb
        return o * jnp.tanh(c_new), c_new                    # 2nd EUP push/cell

    zeros_h = jnp.zeros((B, H), jnp.float32)
    zeros_g = jnp.zeros((B, H4), jnp.float32)
    h1, c1, h2, c2 = zeros_h, zeros_h, zeros_h, zeros_h
    rec1 = zeros_g            # h1(t-1) @ U1   (h1(-1) == 0)
    rec2 = zeros_g            # h2(t-1) @ U2   (h2(-1) == 0)
    logits = jnp.broadcast_to(bl_ref[...], (B, O))           # head bias folded in

    # ---- statically-unrolled, layer-skewed recurrence (T is trace-time) ----
    for t in range(T):
        g1 = xg[t * B:(t + 1) * B, :] + rec1                 # aligned (8,128) slice
        h1, c1 = cell(g1, c1)
        rec1 = jnp.dot(h1, u1, preferred_element_type=jnp.float32)   # for step t+1
        g2 = jnp.dot(h1, w2, preferred_element_type=jnp.float32) + rec2 + b2
        h2, c2 = cell(g2, c2)
        rec2 = jnp.dot(h2, u2, preferred_element_type=jnp.float32)   # for step t+1
        # head accumulated in-loop: the tiny (B,H)@(H,O) MACs hide in the
        # recurrence's slack; no slab stores, no exposed tail matmul.
        logits = logits + jnp.dot(h2, wl_ref[t],
                                  preferred_element_type=jnp.float32)

    # ---- softmax epilogue -------------------------------------------------
    m = jnp.max(logits, axis=-1, keepdims=True)
    p = jnp.exp(logits - m)
    o_ref[...] = p * pl.reciprocal(jnp.sum(p, axis=-1, keepdims=True))


# ------------------------------------------------------------------ wrapper

def emotion_rnn_forward(x_flat, w1, b1, u1, w2, u2, b2, wl3, bl, *, T, B, H):
    O = wl3.shape[-1]
    kernel = functools.partial(_emotion_rnn_kernel, T=T, B=B, H=H, O=O)
    vmem = lambda: pl.BlockSpec(memory_space=pltpu.MemorySpace.VMEM)
    return pl.pallas_call(
        kernel,
        out_shape=jax.ShapeDtypeStruct((B, O), jnp.float32),
        # no grid: total footprint (~1 MB) sits in VMEM for one invocation;
        # every operand is DMA'd exactly once and never double-buffered.
        in_specs=[vmem() for _ in range(9)],
        out_specs=vmem(),
    )(x_flat, w1, b1, u1, w2, u2, b2, wl3, bl)


class EmotionRnnPallas:
    """Mirrors EmotionRnn.forward.  Gate weights of each LSTMCell are packed
    as (in, 4H) = [Wi|Wf|Wo|Wc] (x @ W layout); the two per-gate biases
    (Linear W* and U*) are summed into one (1, 4H) bias, mathematically
    identical to PyTorch's Wi(x) + Ui(h).  The head weight is additionally
    kept reshaped as (T, H, O) so the kernel can accumulate the linear head
    step-by-step inside the recurrence."""

    def __init__(self, in_features, hide_features, out_features, seq_len, key):
        F, H, O, T = in_features, hide_features, out_features, seq_len
        ks = jax.random.split(key, 7)

        def init(k, shape, fan_in):
            return (jax.random.uniform(k, shape, jnp.float32, -1.0, 1.0)
                    / jnp.sqrt(jnp.float32(fan_in)))

        self.F, self.H, self.O, self.T = F, H, O, T
        self.w1 = init(ks[0], (F, 4 * H), F)
        self.u1 = init(ks[1], (H, 4 * H), H)
        self.b1 = init(ks[2], (1, 4 * H), H)      # (bias_W + bias_U) combined
        self.w2 = init(ks[3], (H, 4 * H), H)
        self.u2 = init(ks[4], (H, 4 * H), H)
        self.b2 = init(ks[5], (1, 4 * H), H)
        kl1, kl2 = jax.random.split(ks[6])
        self.wl = init(kl1, (H * T, O), H * T)    # nn.Linear(hide*50, out)
        self.bl = init(kl2, (1, O), H * T)
        # time-major head weight for in-loop accumulation:
        # wl3[t, j, o] == wl[t*H + j, o]  (matches torch.cat(..., dim=1) order)
        self.wl3 = self.wl.reshape(T, H, O)

    def __call__(self, seq):
        # seq: (B, 1, T, F) as in the PyTorch forward (squeeze(1), chunk over time)
        seq = jnp.squeeze(seq, axis=1)                          # (B, T, F)
        B, T, F = seq.shape
        # pad batch to a full 8-sublane tile: aligned per-step loads, and the
        # hardware runs on full (8,128) vregs anyway (same latency as B=2).
        B_pad = max(8, ((B + 7) // 8) * 8)
        if B_pad != B:
            seq = jnp.pad(seq, ((0, B_pad - B), (0, 0), (0, 0)))
        x_flat = jnp.transpose(seq, (1, 0, 2)).reshape(T * B_pad, F)  # time-major
        out = emotion_rnn_forward(x_flat, self.w1, self.b1, self.u1,
                                  self.w2, self.u2, self.b2,
                                  self.wl3, self.bl,
                                  T=T, B=B_pad, H=self.H)       # (B_pad, O)
        return out[:B]                                          # (B, O) softmaxed


# ------------------------------------------------------------------ reference

def reference_forward(seq, m: EmotionRnnPallas):
    seq = jnp.squeeze(seq, axis=1)
    B, T, F = seq.shape
    H = m.H

    def cell(x, h, c, w, u, b):
        g = x @ w + h @ u + b
        i = jax.nn.sigmoid(g[:, :H])
        f = jax.nn.sigmoid(g[:, H:2 * H])
        o = jax.nn.sigmoid(g[:, 2 * H:3 * H])
        cb = jnp.tanh(g[:, 3 * H:])
        c = f * c + i * cb
        return o * jnp.tanh(c), c

    h1 = c1 = h2 = c2 = jnp.zeros((B, H), jnp.float32)
    outs = []
    for t in range(T):
        x = seq[:, t, :]
        h1, c1 = cell(x, h1, c1, m.w1, m.u1, m.b1)
        h2, c2 = cell(h1, h2, c2, m.w2, m.u2, m.b2)
        outs.append(h2)
    out = jnp.concatenate(outs, axis=1)           # (B, T*H) == torch.cat(dim=1)
    logits = out @ m.wl + m.bl
    return jax.nn.softmax(logits, axis=1)


# ------------------------------------------------------------------ main

if __name__ == "__main__":
    B, F, H, O, T = 2, 8, 32, 2, 50   # T=50 is implied by nn.Linear(hide*50, out)

    key = jax.random.PRNGKey(0)
    k_param, k_data = jax.random.split(key)
    model = EmotionRnnPallas(in_features=F, hide_features=H,
                             out_features=O, seq_len=T, key=k_param)

    seq = jax.random.normal(k_data, (B, 1, T, F), jnp.float32)

    out = jax.block_until_ready(model(seq))
    ref = jax.block_until_ready(reference_forward(seq, model))

    assert out.shape == (B, O)
    assert jnp.allclose(out, ref, rtol=1e-4, atol=1e-4), (out, ref)
    assert jnp.allclose(jnp.sum(out, axis=1), 1.0, atol=1e-5)

    print("KERNEL_OK")
</pallas_src>

<mosaic_0001>
module attributes {stable_mosaic.version = 11 : i64} {
  func.func @_emotion_rnn_kernel(%arg0: memref<400x8xf32, #tpu.memory_space<vmem>>, %arg1: memref<8x128xf32, #tpu.memory_space<vmem>>, %arg2: memref<1x128xf32, #tpu.memory_space<vmem>>, %arg3: memref<32x128xf32, #tpu.memory_space<vmem>>, %arg4: memref<32x128xf32, #tpu.memory_space<vmem>>, %arg5: memref<32x128xf32, #tpu.memory_space<vmem>>, %arg6: memref<1x128xf32, #tpu.memory_space<vmem>>, %arg7: memref<50x32x2xf32, #tpu.memory_space<vmem>>, %arg8: memref<1x2xf32, #tpu.memory_space<vmem>>, %arg9: memref<8x2xf32, #tpu.memory_space<vmem>>) attributes {dimension_semantics = [], scalar_prefetch = 0 : i64, scratch_operands = 0 : i64, tpu.core_type = #tpu.core_type<tc>} {
    %c0 = arith.constant 0 : index
    %c0_0 = arith.constant 0 : index
    %0 = vector.load %arg0[%c0, %c0_0] : memref<400x8xf32, #tpu.memory_space<vmem>>, vector<400x8xf32>
    %c0_1 = arith.constant 0 : index
    %c0_2 = arith.constant 0 : index
    %1 = vector.load %arg1[%c0_1, %c0_2] : memref<8x128xf32, #tpu.memory_space<vmem>>, vector<8x128xf32>
    %cst = arith.constant dense<0.000000e+00> : vector<400x128xf32>
    %2 = tpu.matmul %0, %1, %cst {dimension_numbers = #tpu.dot_dimension_numbers<[1], [0], [0], [1], [0, 0, 1, 1], [], []>} : vector<400x8xf32>, vector<8x128xf32>, vector<400x128xf32> -> vector<400x128xf32>
    %c0_3 = arith.constant 0 : index
    %c0_4 = arith.constant 0 : index
    %3 = vector.load %arg2[%c0_3, %c0_4] : memref<1x128xf32, #tpu.memory_space<vmem>>, vector<1x128xf32>
    %4 = vector.broadcast %3 : vector<1x128xf32> to vector<400x128xf32>
    %5 = arith.addf %2, %4 : vector<400x128xf32>
    %c0_5 = arith.constant 0 : index
    %c0_6 = arith.constant 0 : index
    %6 = vector.load %arg3[%c0_5, %c0_6] : memref<32x128xf32, #tpu.memory_space<vmem>>, vector<32x128xf32>
    %c0_7 = arith.constant 0 : index
    %c0_8 = arith.constant 0 : index
    %7 = vector.load %arg4[%c0_7, %c0_8] : memref<32x128xf32, #tpu.memory_space<vmem>>, vector<32x128xf32>
    %c0_9 = arith.constant 0 : index
    %c0_10 = arith.constant 0 : index
    %8 = vector.load %arg5[%c0_9, %c0_10] : memref<32x128xf32, #tpu.memory_space<vmem>>, vector<32x128xf32>
    %c0_11 = arith.constant 0 : index
    %c0_12 = arith.constant 0 : index
    %9 = vector.load %arg6[%c0_11, %c0_12] : memref<1x128xf32, #tpu.memory_space<vmem>>, vector<1x128xf32>
    %10 = vector.shape_cast %9 : vector<1x128xf32> to vector<1x128xf32>
    %11 = vector.broadcast %10 : vector<1x128xf32> to vector<8x128xf32>
    %12 = tpu.iota {dimensions = array<i32: 1>} : vector<8x128xi32>
    %c96_i32 = arith.constant 96 : i32
    %13 = vector.broadcast %c96_i32 : i32 to vector<8x128xi32>
    %14 = arith.cmpi slt, %12, %13 : vector<8x128xi32>
    %cst_13 = arith.constant 5.000000e-01 : f32
    %cst_14 = arith.constant 1.000000e+00 : f32
    %15 = vector.broadcast %cst_13 : f32 to vector<8x128xf32>
    %16 = vector.broadcast %cst_14 : f32 to vector<8x128xf32>
    %17 = arith.select %14, %15, %16 : vector<8x128xi1>, vector<8x128xf32>
    %cst_15 = arith.constant 0.000000e+00 : f32
    %18 = vector.broadcast %cst_15 : f32 to vector<8x32xf32>
    %cst_16 = arith.constant 0.000000e+00 : f32
    %19 = vector.broadcast %cst_16 : f32 to vector<8x128xf32>
    %c0_17 = arith.constant 0 : index
    %c0_18 = arith.constant 0 : index
    %20 = vector.load %arg8[%c0_17, %c0_18] : memref<1x2xf32, #tpu.memory_space<vmem>>, vector<1x2xf32>
    %21 = vector.shape_cast %20 : vector<1x2xf32> to vector<1x2xf32>
    %22 = vector.broadcast %21 : vector<1x2xf32> to vector<8x2xf32>
    %23 = vector.extract_strided_slice %5 {offsets = [0, 0], sizes = [8, 128], strides = [1, 1]} : vector<400x128xf32> to vector<8x128xf32>
    %24 = arith.addf %23, %19 : vector<8x128xf32>
    %25 = arith.mulf %24, %17 : vector<8x128xf32>
    %26 = math.tanh %25 : vector<8x128xf32>
    %cst_19 = arith.constant 1.000000e+00 : f32
    %27 = vector.broadcast %cst_19 : f32 to vector<8x128xf32>
    %28 = arith.addf %26, %27 : vector<8x128xf32>
    %cst_20 = arith.constant 5.000000e-01 : f32
    %29 = vector.broadcast %cst_20 : f32 to vector<8x128xf32>
    %30 = arith.mulf %29, %28 : vector<8x128xf32>
    %31 = vector.extract_strided_slice %30 {offsets = [0, 0], sizes = [8, 32], strides = [1, 1]} : vector<8x128xf32> to vector<8x32xf32>
    %32 = vector.extract_strided_slice %30 {offsets = [0, 32], sizes = [8, 32], strides = [1, 1]} : vector<8x128xf32> to vector<8x32xf32>
    %33 = vector.extract_strided_slice %30 {offsets = [0, 64], sizes = [8, 32], strides = [1, 1]} : vector<8x128xf32> to vector<8x32xf32>
    %34 = vector.extract_strided_slice %26 {offsets = [0, 96], sizes = [8, 32], strides = [1, 1]} : vector<8x128xf32> to vector<8x32xf32>
    %35 = arith.mulf %32, %18 : vector<8x32xf32>
    %36 = arith.mulf %31, %34 : vector<8x32xf32>
    %37 = arith.addf %35, %36 : vector<8x32xf32>
    %38 = math.tanh %37 : vector<8x32xf32>
    %39 = arith.mulf %33, %38 : vector<8x32xf32>
    %cst_21 = arith.constant dense<0.000000e+00> : vector<8x128xf32>
    %40 = tpu.matmul %39, %6, %cst_21 {dimension_numbers = #tpu.dot_dimension_numbers<[1], [0], [0], [1], [0, 0, 1, 1], [], []>} : vector<8x32xf32>, vector<32x128xf32>, vector<8x128xf32> -> vector<8x128xf32>
    %cst_22 = arith.constant dense<0.000000e+00> : vector<8x128xf32>
    %41 = tpu.matmul %39, %7, %cst_22 {dimension_numbers = #tpu.dot_dimension_numbers<[1], [0], [0], [1], [0, 0, 1, 1], [], []>} : vector<8x32xf32>, vector<32x128xf32>, vector<8x128xf32> -> vector<8x128xf32>
    %42 = arith.addf %41, %19 : vector<8x128xf32>
    %43 = arith.addf %42, %11 : vector<8x128xf32>
    %44 = arith.mulf %43, %17 : vector<8x128xf32>
    %45 = math.tanh %44 : vector<8x128xf32>
    %cst_23 = arith.constant 1.000000e+00 : f32
    %46 = vector.broadcast %cst_23 : f32 to vector<8x128xf32>
    %47 = arith.addf %45, %46 : vector<8x128xf32>
    %cst_24 = arith.constant 5.000000e-01 : f32
    %48 = vector.broadcast %cst_24 : f32 to vector<8x128xf32>
    %49 = arith.mulf %48, %47 : vector<8x128xf32>
    %50 = vector.extract_strided_slice %49 {offsets = [0, 0], sizes = [8, 32], strides = [1, 1]} : vector<8x128xf32> to vector<8x32xf32>
    %51 = vector.extract_strided_slice %49 {offsets = [0, 32], sizes = [8, 32], strides = [1, 1]} : vector<8x128xf32> to vector<8x32xf32>
    %52 = vector.extract_strided_slice %49 {offsets = [0, 64], sizes = [8, 32], strides = [1, 1]} : vector<8x128xf32> to vector<8x32xf32>
    %53 = vector.extract_strided_slice %45 {offsets = [0, 96], sizes = [8, 32], strides = [1, 1]} : vector<8x128xf32> to vector<8x32xf32>
    %54 = arith.mulf %51, %18 : vector<8x32xf32>
    %55 = arith.mulf %50, %53 : vector<8x32xf32>
    %56 = arith.addf %54, %55 : vector<8x32xf32>
    %57 = math.tanh %56 : vector<8x32xf32>
    %58 = arith.mulf %52, %57 : vector<8x32xf32>
    %cst_25 = arith.constant dense<0.000000e+00> : vector<8x128xf32>
    %59 = tpu.matmul %58, %8, %cst_25 {dimension_numbers = #tpu.dot_dimension_numbers<[1], [0], [0], [1], [0, 0, 1, 1], [], []>} : vector<8x32xf32>, vector<32x128xf32>, vector<8x128xf32> -> vector<8x128xf32>
    %c0_26 = arith.constant 0 : index
    %c0_27 = arith.constant 0 : index
    %c0_28 = arith.constant 0 : index
    %60 = vector.load %arg7[%c0_26, %c0_27, %c0_28] : memref<50x32x2xf32, #tpu.memory_space<vmem>>, vector<1x32x2xf32>
    %61 = vector.shape_cast %60 : vector<1x32x2xf32> to vector<32x2xf32>
    %cst_29 = arith.constant dense<0.000000e+00> : vector<8x2xf32>
    %62 = tpu.matmul %58, %61, %cst_29 {dimension_numbers = #tpu.dot_dimension_numbers<[1], [0], [0], [1], [0, 0, 1, 1], [], []>} : vector<8x32xf32>, vector<32x2xf32>, vector<8x2xf32> -> vector<8x2xf32>
    %63 = arith.addf %22, %62 : vector<8x2xf32>
    %64 = vector.extract_strided_slice %5 {offsets = [8, 0], sizes = [8, 128], strides = [1, 1]} : vector<400x128xf32> to vector<8x128xf32>
    %65 = arith.addf %64, %40 : vector<8x128xf32>
    %66 = arith.mulf %65, %17 : vector<8x128xf32>
    %67 = math.tanh %66 : vector<8x128xf32>
    %cst_30 = arith.constant 1.000000e+00 : f32
    %68 = vector.broadcast %cst_30 : f32 to vector<8x128xf32>
    %69 = arith.addf %67, %68 : vector<8x128xf32>
    %cst_31 = arith.constant 5.000000e-01 : f32
    %70 = vector.broadcast %cst_31 : f32 to vector<8x128xf32>
    %71 = arith.mulf %70, %69 : vector<8x128xf32>
    %72 = vector.extract_strided_slice %71 {offsets = [0, 0], sizes = [8, 32], strides = [1, 1]} : vector<8x128xf32> to vector<8x32xf32>
    %73 = vector.extract_strided_slice %71 {offsets = [0, 32], sizes = [8, 32], strides = [1, 1]} : vector<8x128xf32> to vector<8x32xf32>
    %74 = vector.extract_strided_slice %71 {offsets = [0, 64], sizes = [8, 32], strides = [1, 1]} : vector<8x128xf32> to vector<8x32xf32>
    %75 = vector.extract_strided_slice %67 {offsets = [0, 96], sizes = [8, 32], strides = [1, 1]} : vector<8x128xf32> to vector<8x32xf32>
    %76 = arith.mulf %73, %37 : vector<8x32xf32>
    %77 = arith.mulf %72, %75 : vector<8x32xf32>
    %78 = arith.addf %76, %77 : vector<8x32xf32>
    %79 = math.tanh %78 : vector<8x32xf32>
    %80 = arith.mulf %74, %79 : vector<8x32xf32>
    %cst_32 = arith.constant dense<0.000000e+00> : vector<8x128xf32>
    %81 = tpu.matmul %80, %6, %cst_32 {dimension_numbers = #tpu.dot_dimension_numbers<[1], [0], [0], [1], [0, 0, 1, 1], [], []>} : vector<8x32xf32>, vector<32x128xf32>, vector<8x128xf32> -> vector<8x128xf32>
    %cst_33 = arith.constant dense<0.000000e+00> : vector<8x128xf32>
    %82 = tpu.matmul %80, %7, %cst_33 {dimension_numbers = #tpu.dot_dimension_numbers<[1], [0], [0], [1], [0, 0, 1, 1], [], []>} : vector<8x32xf32>, vector<32x128xf32>, vector<8x128xf32> -> vector<8x128xf32>
    %83 = arith.addf %82, %59 : vector<8x128xf32>
    %84 = arith.addf %83, %11 : vector<8x128xf32>
    %85 = arith.mulf %84, %17 : vector<8x128xf32>
    %86 = math.tanh %85 : vector<8x128xf32>
    %cst_34 = arith.constant 1.000000e+00 : f32
    %87 = vector.broadcast %cst_34 : f32 to vector<8x128xf32>
    %88 = arith.addf %86, %87 : vector<8x128xf32>
    %cst_35 = arith.constant 5.000000e-01 : f32
    %89 = vector.broadcast %cst_35 : f32 to vector<8x128xf32>
    %90 = arith.mulf %89, %88 : vector<8x128xf32>
    %91 = vector.extract_strided_slice %90 {offsets = [0, 0], sizes = [8, 32], strides = [1, 1]} : vector<8x128xf32> to vector<8x32xf32>
    %92 = vector.extract_strided_slice %90 {offsets = [0, 32], sizes = [8, 32], strides = [1, 1]} : vector<8x128xf32> to vector<8x32xf32>
    %93 = vector.extract_strided_slice %90 {offsets = [0, 64], sizes = [8, 32], strides = [1, 1]} : vector<8x128xf32> to vector<8x32xf32>
    %94 = vector.extract_strided_slice %86 {offsets = [0, 96], sizes = [8, 32], strides = [1, 1]} : vector<8x128xf32> to vector<8x32xf32>
    %95 = arith.mulf %92, %56 : vector<8x32xf32>
    %96 = arith.mulf %91, %94 : vector<8x32xf32>
    %97 = arith.addf %95, %96 : vector<8x32xf32>
    %98 = math.tanh %97 : vector<8x32xf32>
    %99 = arith.mulf %93, %98 : vector<8x32xf32>
    %cst_36 = arith.constant dense<0.000000e+00> : vector<8x128xf32>
    %100 = tpu.matmul %99, %8, %cst_36 {dimension_numbers = #tpu.dot_dimension_numbers<[1], [0], [0], [1], [0, 0, 1, 1], [], []>} : vector<8x32xf32>, vector<32x128xf32>, vector<8x128xf32> -> vector<8x128xf32>
    %c1 = arith.constant 1 : index
    %c0_37 = arith.constant 0 : index
    %c0_38 = arith.constant 0 : index
    %101 = vector.load %arg7[%c1, %c0_37, %c0_38] : memref<50x32x2xf32, #tpu.memory_space<vmem>>, vector<1x32x2xf32>
    %102 = vector.shape_cast %101 : vector<1x32x2xf32> to vector<32x2xf32>
    %cst_39 = arith.constant dense<0.000000e+00> : vector<8x2xf32>
    %103 = tpu.matmul %99, %102, %cst_39 {dimension_numbers = #tpu.dot_dimension_numbers<[1], [0], [0], [1], [0, 0, 1, 1], [], []>} : vector<8x32xf32>, vector<32x2xf32>, vector<8x2xf32> -> vector<8x2xf32>
    %104 = arith.addf %63, %103 : vector<8x2xf32>
    %105 = vector.extract_strided_slice %5 {offsets = [16, 0], sizes = [8, 128], strides = [1, 1]} : vector<400x128xf32> to vector<8x128xf32>
    %106 = arith.addf %105, %81 : vector<8x128xf32>
    %107 = arith.mulf %106, %17 : vector<8x128xf32>
    %108 = math.tanh %107 : vector<8x128xf32>
    %cst_40 = arith.constant 1.000000e+00 : f32
    %109 = vector.broadcast %cst_40 : f32 to vector<8x128xf32>
    %110 = arith.addf %108, %109 : vector<8x128xf32>
    %cst_41 = arith.constant 5.000000e-01 : f32
    %111 = vector.broadcast %cst_41 : f32 to vector<8x128xf32>
    %112 = arith.mulf %111, %110 : vector<8x128xf32>
    %113 = vector.extract_strided_slice %112 {offsets = [0, 0], sizes = [8, 32], strides = [1, 1]} : vector<8x128xf32> to vector<8x32xf32>
    %114 = vector.extract_strided_slice %112 {offsets = [0, 32], sizes = [8, 32], strides = [1, 1]} : vector<8x128xf32> to vector<8x32xf32>
    %115 = vector.extract_strided_slice %112 {offsets = [0, 64], sizes = [8, 32], strides = [1, 1]} : vector<8x128xf32> to vector<8x32xf32>
    %116 = vector.extract_strided_slice %108 {offsets = [0, 96], sizes = [8, 32], strides = [1, 1]} : vector<8x128xf32> to vector<8x32xf32>
    %117 = arith.mulf %114, %78 : vector<8x32xf32>
    %118 = arith.mulf %113, %116 : vector<8x32xf32>
    %119 = arith.addf %117, %118 : vector<8x32xf32>
    %120 = math.tanh %119 : vector<8x32xf32>
    %121 = arith.mulf %115, %120 : vector<8x32xf32>
    %cst_42 = arith.constant dense<0.000000e+00> : vector<8x128xf32>
    %122 = tpu.matmul %121, %6, %cst_42 {dimension_numbers = #tpu.dot_dimension_numbers<[1], [0], [0], [1], [0, 0, 1, 1], [], []>} : vector<8x32xf32>, vector<32x128xf32>, vector<8x128xf32> -> vector<8x128xf32>
    %cst_43 = arith.constant dense<0.000000e+00> : vector<8x128xf32>
    %123 = tpu.matmul %121, %7, %cst_43 {dimension_numbers = #tpu.dot_dimension_numbers<[1], [0], [0], [1], [0, 0, 1, 1], [], []>} : vector<8x32xf32>, vector<32x128xf32>, vector<8x128xf32> -> vector<8x128xf32>
    %124 = arith.addf %123, %100 : vector<8x128xf32>
    %125 = arith.addf %124, %11 : vector<8x128xf32>
    %126 = arith.mulf %125, %17 : vector<8x128xf32>
    %127 = math.tanh %126 : vector<8x128xf32>
    %cst_44 = arith.constant 1.000000e+00 : f32
    %128 = vector.broadcast %cst_44 : f32 to vector<8x128xf32>
    %129 = arith.addf %127, %128 : vector<8x128xf32>
    %cst_45 = arith.constant 5.000000e-01 : f32
    %130 = vector.broadcast %cst_45 : f32 to vector<8x128xf32>
    %131 = arith.mulf %130, %129 : vector<8x128xf32>
    %132 = vector.extract_strided_slice %131 {offsets = [0, 0], sizes = [8, 32], strides = [1, 1]} : vector<8x128xf32> to vector<8x32xf32>
    %133 = vector.extract_strided_slice %131 {offsets = [0, 32], sizes = [8, 32], strides = [1, 1]} : vector<8x128xf32> to vector<8x32xf32>
    %134 = vector.extract_strided_slice %131 {offsets = [0, 64], sizes = [8, 32], strides = [1, 1]} : vector<8x128xf32> to vector<8x32xf32>
    %135 = vector.extract_strided_slice %127 {offsets = [0, 96], sizes = [8, 32], strides = [1, 1]} : vector<8x128xf32> to vector<8x32xf32>
    %136 = arith.mulf %133, %97 : vector<8x32xf32>
    %137 = arith.mulf %132, %135 : vector<8x32xf32>
    %138 = arith.addf %136, %137 : vector<8x32xf32>
    %139 = math.tanh %138 : vector<8x32xf32>
    %140 = arith.mulf %134, %139 : vector<8x32xf32>
    %cst_46 = arith.constant dense<0.000000e+00> : vector<8x128xf32>
    %141 = tpu.matmul %140, %8, %cst_46 {dimension_numbers = #tpu.dot_dimension_numbers<[1], [0], [0], [1], [0, 0, 1, 1], [], []>} : vector<8x32xf32>, vector<32x128xf32>, vector<8x128xf32> -> vector<8x128xf32>
    %c2 = arith.constant 2 : index
    %c0_47 = arith.constant 0 : index
    %c0_48 = arith.constant 0 : index
    %142 = vector.load %arg7[%c2, %c0_47, %c0_48] : memref<50x32x2xf32, #tpu.memory_space<vmem>>, vector<1x32x2xf32>
    %143 = vector.shape_cast %142 : vector<1x32x2xf32> to vector<32x2xf32>
    %cst_49 = arith.constant dense<0.000000e+00> : vector<8x2xf32>
    %144 = tpu.matmul %140, %143, %cst_49 {dimension_numbers = #tpu.dot_dimension_numbers<[1], [0], [0], [1], [0, 0, 1, 1], [], []>} : vector<8x32xf32>, vector<32x2xf32>, vector<8x2xf32> -> vector<8x2xf32>
    %145 = arith.addf %104, %144 : vector<8x2xf32>
    %146 = vector.extract_strided_slice %5 {offsets = [24, 0], sizes = [8, 128], strides = [1, 1]} : vector<400x128xf32> to vector<8x128xf32>
    %147 = arith.addf %146, %122 : vector<8x128xf32>
    %148 = arith.mulf %147, %17 : vector<8x128xf32>
    %149 = math.tanh %148 : vector<8x128xf32>
    %cst_50 = arith.constant 1.000000e+00 : f32
    %150 = vector.broadcast %cst_50 : f32 to vector<8x128xf32>
    %151 = arith.addf %149, %150 : vector<8x128xf32>
    %cst_51 = arith.constant 5.000000e-01 : f32
    %152 = vector.broadcast %cst_51 : f32 to vector<8x128xf32>
    %153 = arith.mulf %152, %151 : vector<8x128xf32>
    %154 = vector.extract_strided_slice %153 {offsets = [0, 0], sizes = [8, 32], strides = [1, 1]} : vector<8x128xf32> to vector<8x32xf32>
    %155 = vector.extract_strided_slice %153 {offsets = [0, 32], sizes = [8, 32], strides = [1, 1]} : vector<8x128xf32> to vector<8x32xf32>
    %156 = vector.extract_strided_slice %153 {offsets = [0, 64], sizes = [8, 32], strides = [1, 1]} : vector<8x128xf32> to vector<8x32xf32>
    %157 = vector.extract_strided_slice %149 {offsets = [0, 96], sizes = [8, 32], strides = [1, 1]} : vector<8x128xf32> to vector<8x32xf32>
    %158 = arith.mulf %155, %119 : vector<8x32xf32>
    %159 = arith.mulf %154, %157 : vector<8x32xf32>
    %160 = arith.addf %158, %159 : vector<8x32xf32>
    %161 = math.tanh %160 : vector<8x32xf32>
    %162 = arith.mulf %156, %161 : vector<8x32xf32>
    %cst_52 = arith.constant dense<0.000000e+00> : vector<8x128xf32>
    %163 = tpu.matmul %162, %6, %cst_52 {dimension_numbers = #tpu.dot_dimension_numbers<[1], [0], [0], [1], [0, 0, 1, 1], [], []>} : vector<8x32xf32>, vector<32x128xf32>, vector<8x128xf32> -> vector<8x128xf32>
    %cst_53 = arith.constant dense<0.000000e+00> : vector<8x128xf32>
    %164 = tpu.matmul %162, %7, %cst_53 {dimension_numbers = #tpu.dot_dimension_numbers<[1], [0], [0], [1], [0, 0, 1, 1], [], []>} : vector<8x32xf32>, vector<32x128xf32>, vector<8x128xf32> -> vector<8x128xf32>
    %165 = arith.addf %164, %141 : vector<8x128xf32>
    %166 = arith.addf %165, %11 : vector<8x128xf32>
    %167 = arith.mulf %166, %17 : vector<8x128xf32>
    %168 = math.tanh %167 : vector<8x128xf32>
    %cst_54 = arith.constant 1.000000e+00 : f32
    %169 = vector.broadcast %cst_54 : f32 to vector<8x128xf32>
    %170 = arith.addf %168, %169 : vector<8x128xf32>
    %cst_55 = arith.constant 5.000000e-01 : f32
    %171 = vector.broadcast %cst_55 : f32 to vector<8x128xf32>
    %172 = arith.mulf %171, %170 : vector<8x128xf32>
    %173 = vector.extract_strided_slice %172 {offsets = [0, 0], sizes = [8, 32], strides = [1, 1]} : vector<8x128xf32> to vector<8x32xf32>
    %174 = vector.extract_strided_slice %172 {offsets = [0, 32], sizes = [8, 32], strides = [1, 1]} : vector<8x128xf32> to vector<8x32xf32>
    %175 = vector.extract_strided_slice %172 {offsets = [0, 64], sizes = [8, 32], strides = [1, 1]} : vector<8x128xf32> to vector<8x32xf32>
    %176 = vector.extract_strided_slice %168 {offsets = [0, 96], sizes = [8, 32], strides = [1, 1]} : vector<8x128xf32> to vector<8x32xf32>
    %177 = arith.mulf %174, %138 : vector<8x32xf32>
    %178 = arith.mulf %173, %176 : vector<8x32xf32>
    %179 = arith.addf %177, %178 : vector<8x32xf32>
    %180 = math.tanh %179 : vector<8x32xf32>
    %181 = arith.mulf %175, %180 : vector<8x32xf32>
    %cst_56 = arith.constant dense<0.000000e+00> : vector<8x128xf32>
    %182 = tpu.matmul %181, %8, %cst_56 {dimension_numbers = #tpu.dot_dimension_numbers<[1], [0], [0], [1], [0, 0, 1, 1], [], []>} : vector<8x32xf32>, vector<32x128xf32>, vector<8x128xf32> -> vector<8x128xf32>
    %c3 = arith.constant 3 : index
    %c0_57 = arith.constant 0 : index
    %c0_58 = arith.constant 0 : index
    %183 = vector.load %arg7[%c3, %c0_57, %c0_58] : memref<50x32x2xf32, #tpu.memory_space<vmem>>, vector<1x32x2xf32>
    %184 = vector.shape_cast %183 : vector<1x32x2xf32> to vector<32x2xf32>
    %cst_59 = arith.constant dense<0.000000e+00> : vector<8x2xf32>
    %185 = tpu.matmul %181, %184, %cst_59 {dimension_numbers = #tpu.dot_dimension_numbers<[1], [0], [0], [1], [0, 0, 1, 1], [], []>} : vector<8x32xf32>, vector<32x2xf32>, vector<8x2xf32> -> vector<8x2xf32>
    %186 = arith.addf %145, %185 : vector<8x2xf32>
    %187 = vector.extract_strided_slice %5 {offsets = [32, 0], sizes = [8, 128], strides = [1, 1]} : vector<400x128xf32> to vector<8x128xf32>
    %188 = arith.addf %187, %163 : vector<8x128xf32>
    %189 = arith.mulf %188, %17 : vector<8x128xf32>
    %190 = math.tanh %189 : vector<8x128xf32>
    %cst_60 = arith.constant 1.000000e+00 : f32
    %191 = vector.broadcast %cst_60 : f32 to vector<8x128xf32>
    %192 = arith.addf %190, %191 : vector<8x128xf32>
    %cst_61 = arith.constant 5.000000e-01 : f32
    %193 = vector.broadcast %cst_61 : f32 to vector<8x128xf32>
    %194 = arith.mulf %193, %192 : vector<8x128xf32>
    %195 = vector.extract_strided_slice %194 {offsets = [0, 0], sizes = [8, 32], strides = [1, 1]} : vector<8x128xf32> to vector<8x32xf32>
    %196 = vector.extract_strided_slice %194 {offsets = [0, 32], sizes = [8, 32], strides = [1, 1]} : vector<8x128xf32> to vector<8x32xf32>
    %197 = vector.extract_strided_slice %194 {offsets = [0, 64], sizes = [8, 32], strides = [1, 1]} : vector<8x128xf32> to vector<8x32xf32>
    %198 = vector.extract_strided_slice %190 {offsets = [0, 96], sizes = [8, 32], strides = [1, 1]} : vector<8x128xf32> to vector<8x32xf32>
    %199 = arith.mulf %196, %160 : vector<8x32xf32>
    %200 = arith.mulf %195, %198 : vector<8x32xf32>
    %201 = arith.addf %199, %200 : vector<8x32xf32>
    %202 = math.tanh %201 : vector<8x32xf32>
    %203 = arith.mulf %197, %202 : vector<8x32xf32>
    %cst_62 = arith.constant dense<0.000000e+00> : vector<8x128xf32>
    %204 = tpu.matmul %203, %6, %cst_62 {dimension_numbers = #tpu.dot_dimension_numbers<[1], [0], [0], [1], [0, 0, 1, 1], [], []>} : vector<8x32xf32>, vector<32x128xf32>, vector<8x128xf32> -> vector<8x128xf32>
    %cst_63 = arith.constant dense<0.000000e+00> : vector<8x128xf32>
    %205 = tpu.matmul %203, %7, %cst_63 {dimension_numbers = #tpu.dot_dimension_numbers<[1], [0], [0], [1], [0, 0, 1, 1], [], []>} : vector<8x32xf32>, vector<32x128xf32>, vector<8x128xf32> -> vector<8x128xf32>
    %206 = arith.addf %205, %182 : vector<8x128xf32>
    %207 = arith.addf %206, %11 : vector<8x128xf32>
    %208 = arith.mulf %207, %17 : vector<8x128xf32>
    %209 = math.tanh %208 : vector<8x128xf32>
    %cst_64 = arith.constant 1.000000e+00 : f32
    %210 = vector.broadcast %cst_64 : f32 to vector<8x128xf32>
    %211 = arith.addf %209, %210 : vector<8x128xf32>
    %cst_65 = arith.constant 5.000000e-01 : f32
    %212 = vector.broadcast %cst_65 : f32 to vector<8x128xf32>
    %213 = arith.mulf %212, %211 : vector<8x128xf32>
    %214 = vector.extract_strided_slice %213 {offsets = [0, 0], sizes = [8, 32], strides = [1, 1]} : vector<8x128xf32> to vector<8x32xf32>
    %215 = vector.extract_strided_slice %213 {offsets = [0, 32], sizes = [8, 32], strides = [1, 1]} : vector<8x128xf32> to vector<8x32xf32>
    %216 = vector.extract_strided_slice %213 {offsets = [0, 64], sizes = [8, 32], strides = [1, 1]} : vector<8x128xf32> to vector<8x32xf32>
    %217 = vector.extract_strided_slice %209 {offsets = [0, 96], sizes = [8, 32], strides = [1, 1]} : vector<8x128xf32> to vector<8x32xf32>
    %218 = arith.mulf %215, %179 : vector<8x32xf32>
    %219 = arith.mulf %214, %217 : vector<8x32xf32>
    %220 = arith.addf %218, %219 : vector<8x32xf32>
    %221 = math.tanh %220 : vector<8x32xf32>
    %222 = arith.mulf %216, %221 : vector<8x32xf32>
    %cst_66 = arith.constant dense<0.000000e+00> : vector<8x128xf32>
    %223 = tpu.matmul %222, %8, %cst_66 {dimension_numbers = #tpu.dot_dimension_numbers<[1], [0], [0], [1], [0, 0, 1, 1], [], []>} : vector<8x32xf32>, vector<32x128xf32>, vector<8x128xf32> -> vector<8x128xf32>
    %c4 = arith.constant 4 : index
    %c0_67 = arith.constant 0 : index
    %c0_68 = arith.constant 0 : index
    %224 = vector.load %arg7[%c4, %c0_67, %c0_68] : memref<50x32x2xf32, #tpu.memory_space<vmem>>, vector<1x32x2xf32>
    %225 = vector.shape_cast %224 : vector<1x32x2xf32> to vector<32x2xf32>
    %cst_69 = arith.constant dense<0.000000e+00> : vector<8x2xf32>
    %226 = tpu.matmul %222, %225, %cst_69 {dimension_numbers = #tpu.dot_dimension_numbers<[1], [0], [0], [1], [0, 0, 1, 1], [], []>} : vector<8x32xf32>, vector<32x2xf32>, vector<8x2xf32> -> vector<8x2xf32>
    %227 = arith.addf %186, %226 : vector<8x2xf32>
    %228 = vector.extract_strided_slice %5 {offsets = [40, 0], sizes = [8, 128], strides = [1, 1]} : vector<400x128xf32> to vector<8x128xf32>
    %229 = arith.addf %228, %204 : vector<8x128xf32>
    %230 = arith.mulf %229, %17 : vector<8x128xf32>
    %231 = math.tanh %230 : vector<8x128xf32>
    %cst_70 = arith.constant 1.000000e+00 : f32
    %232 = vector.broadcast %cst_70 : f32 to vector<8x128xf32>
    %233 = arith.addf %231, %232 : vector<8x128xf32>
    %cst_71 = arith.constant 5.000000e-01 : f32
    %234 = vector.broadcast %cst_71 : f32 to vector<8x128xf32>
    %235 = arith.mulf %234, %233 : vector<8x128xf32>
    %236 = vector.extract_strided_slice %235 {offsets = [0, 0], sizes = [8, 32], strides = [1, 1]} : vector<8x128xf32> to vector<8x32xf32>
    %237 = vector.extract_strided_slice %235 {offsets = [0, 32], sizes = [8, 32], strides = [1, 1]} : vector<8x128xf32> to vector<8x32xf32>
    %238 = vector.extract_strided_slice %235 {offsets = [0, 64], sizes = [8, 32], strides = [1, 1]} : vector<8x128xf32> to vector<8x32xf32>
    %239 = vector.extract_strided_slice %231 {offsets = [0, 96], sizes = [8, 32], strides = [1, 1]} : vector<8x128xf32> to vector<8x32xf32>
    %240 = arith.mulf %237, %201 : vector<8x32xf32>
    %241 = arith.mulf %236, %239 : vector<8x32xf32>
    %242 = arith.addf %240, %241 : vector<8x32xf32>
    %243 = math.tanh %242 : vector<8x32xf32>
    %244 = arith.mulf %238, %243 : vector<8x32xf32>
    %cst_72 = arith.constant dense<0.000000e+00> : vector<8x128xf32>
    %245 = tpu.matmul %244, %6, %cst_72 {dimension_numbers = #tpu.dot_dimension_numbers<[1], [0], [0], [1], [0, 0, 1, 1], [], []>} : vector<8x32xf32>, vector<32x128xf32>, vector<8x128xf32> -> vector<8x128xf32>
    %cst_73 = arith.constant dense<0.000000e+00> : vector<8x128xf32>
    %246 = tpu.matmul %244, %7, %cst_73 {dimension_numbers = #tpu.dot_dimension_numbers<[1], [0], [0], [1], [0, 0, 1, 1], [], []>} : vector<8x32xf32>, vector<32x128xf32>, vector<8x128xf32> -> vector<8x128xf32>
    %247 = arith.addf %246, %223 : vector<8x128xf32>
    %248 = arith.addf %247, %11 : vector<8x128xf32>
    %249 = arith.mulf %248, %17 : vector<8x128xf32>
    %250 = math.tanh %249 : vector<8x128xf32>
    %cst_74 = arith.constant 1.000000e+00 : f32
    %251 = vector.broadcast %cst_74 : f32 to vector<8x128xf32>
    %252 = arith.addf %250, %251 : vector<8x128xf32>
    %cst_75 = arith.constant 5.000000e-01 : f32
    %253 = vector.broadcast %cst_75 : f32 to vector<8x128xf32>
    %254 = arith.mulf %253, %252 : vector<8x128xf32>
    %255 = vector.extract_strided_slice %254 {offsets = [0, 0], sizes = [8, 32], strides = [1, 1]} : vector<8x128xf32> to vector<8x32xf32>
    %256 = vector.extract_strided_slice %254 {offsets = [0, 32], sizes = [8, 32], strides = [1, 1]} : vector<8x128xf32> to vector<8x32xf32>
    %257 = vector.extract_strided_slice %254 {offsets = [0, 64], sizes = [8, 32], strides = [1, 1]} : vector<8x128xf32> to vector<8x32xf32>
    %258 = vector.extract_strided_slice %250 {offsets = [0, 96], sizes = [8, 32], strides = [1, 1]} : vector<8x128xf32> to vector<8x32xf32>
    %259 = arith.mulf %256, %220 : vector<8x32xf32>
    %260 = arith.mulf %255, %258 : vector<8x32xf32>
    %261 = arith.addf %259, %260 : vector<8x32xf32>
    %262 = math.tanh %261 : vector<8x32xf32>
    %263 = arith.mulf %257, %262 : vector<8x32xf32>
    %cst_76 = arith.constant dense<0.000000e+00> : vector<8x128xf32>
    %264 = tpu.matmul %263, %8, %cst_76 {dimension_numbers = #tpu.dot_dimension_numbers<[1], [0], [0], [1], [0, 0, 1, 1], [], []>} : vector<8x32xf32>, vector<32x128xf32>, vector<8x128xf32> -> vector<8x128xf32>
    %c5 = arith.constant 5 : index
    %c0_77 = arith.constant 0 : index
    %c0_78 = arith.constant 0 : index
    %265 = vector.load %arg7[%c5, %c0_77, %c0_78] : memref<50x32x2xf32, #tpu.memory_space<vmem>>, vector<1x32x2xf32>
    %266 = vector.shape_cast %265 : vector<1x32x2xf32> to vector<32x2xf32>
    %cst_79 = arith.constant dense<0.000000e+00> : vector<8x2xf32>
    %267 = tpu.matmul %263, %266, %cst_79 {dimension_numbers = #tpu.dot_dimension_numbers<[1], [0], [0], [1], [0, 0, 1, 1], [], []>} : vector<8x32xf32>, vector<32x2xf32>, vector<8x2xf32> -> vector<8x2xf32>
    %268 = arith.addf %227, %267 : vector<8x2xf32>
    %269 = vector.extract_strided_slice %5 {offsets = [48, 0], sizes = [8, 128], strides = [1, 1]} : vector<400x128xf32> to vector<8x128xf32>
    %270 = arith.addf %269, %245 : vector<8x128xf32>
    %271 = arith.mulf %270, %17 : vector<8x128xf32>
    %272 = math.tanh %271 : vector<8x128xf32>
    %cst_80 = arith.constant 1.000000e+00 : f32
    %273 = vector.broadcast %cst_80 : f32 to vector<8x128xf32>
    %274 = arith.addf %272, %273 : vector<8x128xf32>
    %cst_81 = arith.constant 5.000000e-01 : f32
    %275 = vector.broadcast %cst_81 : f32 to vector<8x128xf32>
    %276 = arith.mulf %275, %274 : vector<8x128xf32>
    %277 = vector.extract_strided_slice %276 {offsets = [0, 0], sizes = [8, 32], strides = [1, 1]} : vector<8x128xf32> to vector<8x32xf32>
    %278 = vector.extract_strided_slice %276 {offsets = [0, 32], sizes = [8, 32], strides = [1, 1]} : vector<8x128xf32> to vector<8x32xf32>
    %279 = vector.extract_strided_slice %276 {offsets = [0, 64], sizes = [8, 32], strides = [1, 1]} : vector<8x128xf32> to vector<8x32xf32>
    %280 = vector.extract_strided_slice %272 {offsets = [0, 96], sizes = [8, 32], strides = [1, 1]} : vector<8x128xf32> to vector<8x32xf32>
    %281 = arith.mulf %278, %242 : vector<8x32xf32>
    %282 = arith.mulf %277, %280 : vector<8x32xf32>
    %283 = arith.addf %281, %282 : vector<8x32xf32>
    %284 = math.tanh %283 : vector<8x32xf32>
    %285 = arith.mulf %279, %284 : vector<8x32xf32>
    %cst_82 = arith.constant dense<0.000000e+00> : vector<8x128xf32>
    %286 = tpu.matmul %285, %6, %cst_82 {dimension_numbers = #tpu.dot_dimension_numbers<[1], [0], [0], [1], [0, 0, 1, 1], [], []>} : vector<8x32xf32>, vector<32x128xf32>, vector<8x128xf32> -> vector<8x128xf32>
    %cst_83 = arith.constant dense<0.000000e+00> : vector<8x128xf32>
    %287 = tpu.matmul %285, %7, %cst_83 {dimension_numbers = #tpu.dot_dimension_numbers<[1], [0], [0], [1], [0, 0, 1, 1], [], []>} : vector<8x32xf32>, vector<32x128xf32>, vector<8x128xf32> -> vector<8x128xf32>
    %288 = arith.addf %287, %264 : vector<8x128xf32>
    %289 = arith.addf %288, %11 : vector<8x128xf32>
    %290 = arith.mulf %289, %17 : vector<8x128xf32>
    %291 = math.tanh %290 : vector<8x128xf32>
    %cst_84 = arith.constant 1.000000e+00 : f32
    %292 = vector.broadcast %cst_84 : f32 to vector<8x128xf32>
    %293 = arith.addf %291, %292 : vector<8x128xf32>
    %cst_85 = arith.constant 5.000000e-01 : f32
    %294 = vector.broadcast %cst_85 : f32 to vector<8x128xf32>
    %295 = arith.mulf %294, %293 : vector<8x128xf32>
    %296 = vector.extract_strided_slice %295 {offsets = [0, 0], sizes = [8, 32], strides = [1, 1]} : vector<8x128xf32> to vector<8x32xf32>
    %297 = vector.extract_strided_slice %295 {offsets = [0, 32], sizes = [8, 32], strides = [1, 1]} : vector<8x128xf32> to vector<8x32xf32>
    %298 = vector.extract_strided_slice %295 {offsets = [0, 64], sizes = [8, 32], strides = [1, 1]} : vector<8x128xf32> to vector<8x32xf32>
    %299 = vector.extract_strided_slice %291 {offsets = [0, 96], sizes = [8, 32], strides = [1, 1]} : vector<8x128xf32> to vector<8x32xf32>
    %300 = arith.mulf %297, %261 : vector<8x32xf32>
    %301 = arith.mulf %296, %299 : vector<8x32xf32>
    %302 = arith.addf %300, %301 : vector<8x32xf32>
    %303 = math.tanh %302 : vector<8x32xf32>
    %304 = arith.mulf %298, %303 : vector<8x32xf32>
    %cst_86 = arith.constant dense<0.000000e+00> : vector<8x128xf32>
    %305 = tpu.matmul %304, %8, %cst_86 {dimension_numbers = #tpu.dot_dimension_numbers<[1], [0], [0], [1], [0, 0, 1, 1], [], []>} : vector<8x32xf32>, vector<32x128xf32>, vector<8x128xf32> -> vector<8x128xf32>
    %c6 = arith.constant 6 : index
    %c0_87 = arith.constant 0 : index
    %c0_88 = arith.constant 0 : index
    %306 = vector.load %arg7[%c6, %c0_87, %c0_88] : memref<50x32x2xf32, #tpu.memory_space<vmem>>, vector<1x32x2xf32>
    %307 = vector.shape_cast %306 : vector<1x32x2xf32> to vector<32x2xf32>
    %cst_89 = arith.constant dense<0.000000e+00> : vector<8x2xf32>
    %308 = tpu.matmul %304, %307, %cst_89 {dimension_numbers = #tpu.dot_dimension_numbers<[1], [0], [0], [1], [0, 0, 1, 1], [], []>} : vector<8x32xf32>, vector<32x2xf32>, vector<8x2xf32> -> vector<8x2xf32>
    %309 = arith.addf %268, %308 : vector<8x2xf32>
    %310 = vector.extract_strided_slice %5 {offsets = [56, 0], sizes = [8, 128], strides = [1, 1]} : vector<400x128xf32> to vector<8x128xf32>
    %311 = arith.addf %310, %286 : vector<8x128xf32>
    %312 = arith.mulf %311, %17 : vector<8x128xf32>
    %313 = math.tanh %312 : vector<8x128xf32>
    %cst_90 = arith.constant 1.000000e+00 : f32
    %314 = vector.broadcast %cst_90 : f32 to vector<8x128xf32>
    %315 = arith.addf %313, %314 : vector<8x128xf32>
    %cst_91 = arith.constant 5.000000e-01 : f32
    %316 = vector.broadcast %cst_91 : f32 to vector<8x128xf32>
    %317 = arith.mulf %316, %315 : vector<8x128xf32>
    %318 = vector.extract_strided_slice %317 {offsets = [0, 0], sizes = [8, 32], strides = [1, 1]} : vector<8x128xf32> to vector<8x32xf32>
    %319 = vector.extract_strided_slice %317 {offsets = [0, 32], sizes = [8, 32], strides = [1, 1]} : vector<8x128xf32> to vector<8x32xf32>
    %320 = vector.extract_strided_slice %317 {offsets = [0, 64], sizes = [8, 32], strides = [1, 1]} : vector<8x128xf32> to vector<8x32xf32>
    %321 = vector.extract_strided_slice %313 {offsets = [0, 96], sizes = [8, 32], strides = [1, 1]} : vector<8x128xf32> to vector<8x32xf32>
    %322 = arith.mulf %319, %283 : vector<8x32xf32>
    %323 = arith.mulf %318, %321 : vector<8x32xf32>
    %324 = arith.addf %322, %323 : vector<8x32xf32>
    %325 = math.tanh %324 : vector<8x32xf32>
    %326 = arith.mulf %320, %325 : vector<8x32xf32>
    %cst_92 = arith.constant dense<0.000000e+00> : vector<8x128xf32>
    %327 = tpu.matmul %326, %6, %cst_92 {dimension_numbers = #tpu.dot_dimension_numbers<[1], [0], [0], [1], [0, 0, 1, 1], [], []>} : vector<8x32xf32>, vector<32x128xf32>, vector<8x128xf32> -> vector<8x128xf32>
    %cst_93 = arith.constant dense<0.000000e+00> : vector<8x128xf32>
    %328 = tpu.matmul %326, %7, %cst_93 {dimension_numbers = #tpu.dot_dimension_numbers<[1], [0], [0], [1], [0, 0, 1, 1], [], []>} : vector<8x32xf32>, vector<32x128xf32>, vector<8x128xf32> -> vector<8x128xf32>
    %329 = arith.addf %328, %305 : vector<8x128xf32>
    %330 = arith.addf %329, %11 : vector<8x128xf32>
    %331 = arith.mulf %330, %17 : vector<8x128xf32>
    %332 = math.tanh %331 : vector<8x128xf32>
    %cst_94 = arith.constant 1.000000e+00 : f32
    %333 = vector.broadcast %cst_94 : f32 to vector<8x128xf32>
    %334 = arith.addf %332, %333 : vector<8x128xf32>
    %cst_95 = arith.constant 5.000000e-01 : f32
    %335 = vector.broadcast %cst_95 : f32 to vector<8x128xf32>
    %336 = arith.mulf %335, %334 : vector<8x128xf32>
    %337 = vector.extract_strided_slice %336 {offsets = [0, 0], sizes = [8, 32], strides = [1, 1]} : vector<8x128xf32> to vector<8x32xf32>
    %338 = vector.extract_strided_slice %336 {offsets = [0, 32], sizes = [8, 32], strides = [1, 1]} : vector<8x128xf32> to vector<8x32xf32>
    %339 = vector.extract_strided_slice %336 {offsets = [0, 64], sizes = [8, 32], strides = [1, 1]} : vector<8x128xf32> to vector<8x32xf32>
    %340 = vector.extract_strided_slice %332 {offsets = [0, 96], sizes = [8, 32], strides = [1, 1]} : vector<8x128xf32> to vector<8x32xf32>
    %341 = arith.mulf %338, %302 : vector<8x32xf32>
    %342 = arith.mulf %337, %340 : vector<8x32xf32>
    %343 = arith.addf %341, %342 : vector<8x32xf32>
    %344 = math.tanh %343 : vector<8x32xf32>
    %345 = arith.mulf %339, %344 : vector<8x32xf32>
    %cst_96 = arith.constant dense<0.000000e+00> : vector<8x128xf32>
    %346 = tpu.matmul %345, %8, %cst_96 {dimension_numbers = #tpu.dot_dimension_numbers<[1], [0], [0], [1], [0, 0, 1, 1], [], []>} : vector<8x32xf32>, vector<32x128xf32>, vector<8x128xf32> -> vector<8x128xf32>
    %c7 = arith.constant 7 : index
    %c0_97 = arith.constant 0 : index
    %c0_98 = arith.constant 0 : index
    %347 = vector.load %arg7[%c7, %c0_97, %c0_98] : memref<50x32x2xf32, #tpu.memory_space<vmem>>, vector<1x32x2xf32>
    %348 = vector.shape_cast %347 : vector<1x32x2xf32> to vector<32x2xf32>
    %cst_99 = arith.constant dense<0.000000e+00> : vector<8x2xf32>
    %349 = tpu.matmul %345, %348, %cst_99 {dimension_numbers = #tpu.dot_dimension_numbers<[1], [0], [0], [1], [0, 0, 1, 1], [], []>} : vector<8x32xf32>, vector<32x2xf32>, vector<8x2xf32> -> vector<8x2xf32>
    %350 = arith.addf %309, %349 : vector<8x2xf32>
    %351 = vector.extract_strided_slice %5 {offsets = [64, 0], sizes = [8, 128], strides = [1, 1]} : vector<400x128xf32> to vector<8x128xf32>
    %352 = arith.addf %351, %327 : vector<8x128xf32>
    %353 = arith.mulf %352, %17 : vector<8x128xf32>
    %354 = math.tanh %353 : vector<8x128xf32>
    %cst_100 = arith.constant 1.000000e+00 : f32
    %355 = vector.broadcast %cst_100 : f32 to vector<8x128xf32>
    %356 = arith.addf %354, %355 : vector<8x128xf32>
    %cst_101 = arith.constant 5.000000e-01 : f32
    %357 = vector.broadcast %cst_101 : f32 to vector<8x128xf32>
    %358 = arith.mulf %357, %356 : vector<8x128xf32>
    %359 = vector.extract_strided_slice %358 {offsets = [0, 0], sizes = [8, 32], strides = [1, 1]} : vector<8x128xf32> to vector<8x32xf32>
    %360 = vector.extract_strided_slice %358 {offsets = [0, 32], sizes = [8, 32], strides = [1, 1]} : vector<8x128xf32> to vector<8x32xf32>
    %361 = vector.extract_strided_slice %358 {offsets = [0, 64], sizes = [8, 32], strides = [1, 1]} : vector<8x128xf32> to vector<8x32xf32>
    %362 = vector.extract_strided_slice %354 {offsets = [0, 96], sizes = [8, 32], strides = [1, 1]} : vector<8x128xf32> to vector<8x32xf32>
    %363 = arith.mulf %360, %324 : vector<8x32xf32>
    %364 = arith.mulf %359, %362 : vector<8x32xf32>
    %365 = arith.addf %363, %364 : vector<8x32xf32>
    %366 = math.tanh %365 : vector<8x32xf32>
    %367 = arith.mulf %361, %366 : vector<8x32xf32>
    %cst_102 = arith.constant dense<0.000000e+00> : vector<8x128xf32>
    %368 = tpu.matmul %367, %6, %cst_102 {dimension_numbers = #tpu.dot_dimension_numbers<[1], [0], [0], [1], [0, 0, 1, 1], [], []>} : vector<8x32xf32>, vector<32x128xf32>, vector<8x128xf32> -> vector<8x128xf32>
    %cst_103 = arith.constant dense<0.000000e+00> : vector<8x128xf32>
    %369 = tpu.matmul %367, %7, %cst_103 {dimension_numbers = #tpu.dot_dimension_numbers<[1], [0], [0], [1], [0, 0, 1, 1], [], []>} : vector<8x32xf32>, vector<32x128xf32>, vector<8x128xf32> -> vector<8x128xf32>
    %370 = arith.addf %369, %346 : vector<8x128xf32>
    %371 = arith.addf %370, %11 : vector<8x128xf32>
    %372 = arith.mulf %371, %17 : vector<8x128xf32>
    %373 = math.tanh %372 : vector<8x128xf32>
    %cst_104 = arith.constant 1.000000e+00 : f32
    %374 = vector.broadcast %cst_104 : f32 to vector<8x128xf32>
    %375 = arith.addf %373, %374 : vector<8x128xf32>
    %cst_105 = arith.constant 5.000000e-01 : f32
    %376 = vector.broadcast %cst_105 : f32 to vector<8x128xf32>
    %377 = arith.mulf %376, %375 : vector<8x128xf32>
    %378 = vector.extract_strided_slice %377 {offsets = [0, 0], sizes = [8, 32], strides = [1, 1]} : vector<8x128xf32> to vector<8x32xf32>
    %379 = vector.extract_strided_slice %377 {offsets = [0, 32], sizes = [8, 32], strides = [1, 1]} : vector<8x128xf32> to vector<8x32xf32>
    %380 = vector.extract_strided_slice %377 {offsets = [0, 64], sizes = [8, 32], strides = [1, 1]} : vector<8x128xf32> to vector<8x32xf32>
    %381 = vector.extract_strided_slice %373 {offsets = [0, 96], sizes = [8, 32], strides = [1, 1]} : vector<8x128xf32> to vector<8x32xf32>
    %382 = arith.mulf %379, %343 : vector<8x32xf32>
    %383 = arith.mulf %378, %381 : vector<8x32xf32>
    %384 = arith.addf %382, %383 : vector<8x32xf32>
    %385 = math.tanh %384 : vector<8x32xf32>
    %386 = arith.mulf %380, %385 : vector<8x32xf32>
    %cst_106 = arith.constant dense<0.000000e+00> : vector<8x128xf32>
    %387 = tpu.matmul %386, %8, %cst_106 {dimension_numbers = #tpu.dot_dimension_numbers<[1], [0], [0], [1], [0, 0, 1, 1], [], []>} : vector<8x32xf32>, vector<32x128xf32>, vector<8x128xf32> -> vector<8x128xf32>
    %c8 = arith.constant 8 : index
    %c0_107 = arith.constant 0 : index
    %c0_108 = arith.constant 0 : index
    %388 = vector.load %arg7[%c8, %c0_107, %c0_108] : memref<50x32x2xf32, #tpu.memory_space<vmem>>, vector<1x32x2xf32>
    %389 = vector.shape_cast %388 : vector<1x32x2xf32> to vector<32x2xf32>
    %cst_109 = arith.constant dense<0.000000e+00> : vector<8x2xf32>
    %390 = tpu.matmul %386, %389, %cst_109 {dimension_numbers = #tpu.dot_dimension_numbers<[1], [0], [0], [1], [0, 0, 1, 1], [], []>} : vector<8x32xf32>, vector<32x2xf32>, vector<8x2xf32> -> vector<8x2xf32>
    %391 = arith.addf %350, %390 : vector<8x2xf32>
    %392 = vector.extract_strided_slice %5 {offsets = [72, 0], sizes = [8, 128], strides = [1, 1]} : vector<400x128xf32> to vector<8x128xf32>
    %393 = arith.addf %392, %368 : vector<8x128xf32>
    %394 = arith.mulf %393, %17 : vector<8x128xf32>
    %395 = math.tanh %394 : vector<8x128xf32>
    %cst_110 = arith.constant 1.000000e+00 : f32
    %396 = vector.broadcast %cst_110 : f32 to vector<8x128xf32>
    %397 = arith.addf %395, %396 : vector<8x128xf32>
    %cst_111 = arith.constant 5.000000e-01 : f32
    %398 = vector.broadcast %cst_111 : f32 to vector<8x128xf32>
    %399 = arith.mulf %398, %397 : vector<8x128xf32>
    %400 = vector.extract_strided_slice %399 {offsets = [0, 0], sizes = [8, 32], strides = [1, 1]} : vector<8x128xf32> to vector<8x32xf32>
    %401 = vector.extract_strided_slice %399 {offsets = [0, 32], sizes = [8, 32], strides = [1, 1]} : vector<8x128xf32> to vector<8x32xf32>
    %402 = vector.extract_strided_slice %399 {offsets = [0, 64], sizes = [8, 32], strides = [1, 1]} : vector<8x128xf32> to vector<8x32xf32>
    %403 = vector.extract_strided_slice %395 {offsets = [0, 96], sizes = [8, 32], strides = [1, 1]} : vector<8x128xf32> to vector<8x32xf32>
    %404 = arith.mulf %401, %365 : vector<8x32xf32>
    %405 = arith.mulf %400, %403 : vector<8x32xf32>
    %406 = arith.addf %404, %405 : vector<8x32xf32>
    %407 = math.tanh %406 : vector<8x32xf32>
    %408 = arith.mulf %402, %407 : vector<8x32xf32>
    %cst_112 = arith.constant dense<0.000000e+00> : vector<8x128xf32>
    %409 = tpu.matmul %408, %6, %cst_112 {dimension_numbers = #tpu.dot_dimension_numbers<[1], [0], [0], [1], [0, 0, 1, 1], [], []>} : vector<8x32xf32>, vector<32x128xf32>, vector<8x128xf32> -> vector<8x128xf32>
    %cst_113 = arith.constant dense<0.000000e+00> : vector<8x128xf32>
    %410 = tpu.matmul %408, %7, %cst_113 {dimension_numbers = #tpu.dot_dimension_numbers<[1], [0], [0], [1], [0, 0, 1, 1], [], []>} : vector<8x32xf32>, vector<32x128xf32>, vector<8x128xf32> -> vector<8x128xf32>
    %411 = arith.addf %410, %387 : vector<8x128xf32>
    %412 = arith.addf %411, %11 : vector<8x128xf32>
    %413 = arith.mulf %412, %17 : vector<8x128xf32>
    %414 = math.tanh %413 : vector<8x128xf32>
    %cst_114 = arith.constant 1.000000e+00 : f32
    %415 = vector.broadcast %cst_114 : f32 to vector<8x128xf32>
    %416 = arith.addf %414, %415 : vector<8x128xf32>
    %cst_115 = arith.constant 5.000000e-01 : f32
    %417 = vector.broadcast %cst_115 : f32 to vector<8x128xf32>
    %418 = arith.mulf %417, %416 : vector<8x128xf32>
    %419 = vector.extract_strided_slice %418 {offsets = [0, 0], sizes = [8, 32], strides = [1, 1]} : vector<8x128xf32> to vector<8x32xf32>
    %420 = vector.extract_strided_slice %418 {offsets = [0, 32], sizes = [8, 32], strides = [1, 1]} : vector<8x128xf32> to vector<8x32xf32>
    %421 = vector.extract_strided_slice %418 {offsets = [0, 64], sizes = [8, 32], strides = [1, 1]} : vector<8x128xf32> to vector<8x32xf32>
    %422 = vector.extract_strided_slice %414 {offsets = [0, 96], sizes = [8, 32], strides = [1, 1]} : vector<8x128xf32> to vector<8x32xf32>
    %423 = arith.mulf %420, %384 : vector<8x32xf32>
    %424 = arith.mulf %419, %422 : vector<8x32xf32>
    %425 = arith.addf %423, %424 : vector<8x32xf32>
    %426 = math.tanh %425 : vector<8x32xf32>
    %427 = arith.mulf %421, %426 : vector<8x32xf32>
    %cst_116 = arith.constant dense<0.000000e+00> : vector<8x128xf32>
    %428 = tpu.matmul %427, %8, %cst_116 {dimension_numbers = #tpu.dot_dimension_numbers<[1], [0], [0], [1], [0, 0, 1, 1], [], []>} : vector<8x32xf32>, vector<32x128xf32>, vector<8x128xf32> -> vector<8x128xf32>
    %c9 = arith.constant 9 : index
    %c0_117 = arith.constant 0 : index
    %c0_118 = arith.constant 0 : index
    %429 = vector.load %arg7[%c9, %c0_117, %c0_118] : memref<50x32x2xf32, #tpu.memory_space<vmem>>, vector<1x32x2xf32>
    %430 = vector.shape_cast %429 : vector<1x32x2xf32> to vector<32x2xf32>
    %cst_119 = arith.constant dense<0.000000e+00> : vector<8x2xf32>
    %431 = tpu.matmul %427, %430, %cst_119 {dimension_numbers = #tpu.dot_dimension_numbers<[1], [0], [0], [1], [0, 0, 1, 1], [], []>} : vector<8x32xf32>, vector<32x2xf32>, vector<8x2xf32> -> vector<8x2xf32>
    %432 = arith.addf %391, %431 : vector<8x2xf32>
    %433 = vector.extract_strided_slice %5 {offsets = [80, 0], sizes = [8, 128], strides = [1, 1]} : vector<400x128xf32> to vector<8x128xf32>
    %434 = arith.addf %433, %409 : vector<8x128xf32>
    %435 = arith.mulf %434, %17 : vector<8x128xf32>
    %436 = math.tanh %435 : vector<8x128xf32>
    %cst_120 = arith.constant 1.000000e+00 : f32
    %437 = vector.broadcast %cst_120 : f32 to vector<8x128xf32>
    %438 = arith.addf %436, %437 : vector<8x128xf32>
    %cst_121 = arith.constant 5.000000e-01 : f32
    %439 = vector.broadcast %cst_121 : f32 to vector<8x128xf32>
    %440 = arith.mulf %439, %438 : vector<8x128xf32>
    %441 = vector.extract_strided_slice %440 {offsets = [0, 0], sizes = [8, 32], strides = [1, 1]} : vector<8x128xf32> to vector<8x32xf32>
    %442 = vector.extract_strided_slice %440 {offsets = [0, 32], sizes = [8, 32], strides = [1, 1]} : vector<8x128xf32> to vector<8x32xf32>
    %443 = vector.extract_strided_slice %440 {offsets = [0, 64], sizes = [8, 32], strides = [1, 1]} : vector<8x128xf32> to vector<8x32xf32>
    %444 = vector.extract_strided_slice %436 {offsets = [0, 96], sizes = [8, 32], strides = [1, 1]} : vector<8x128xf32> to vector<8x32xf32>
    %445 = arith.mulf %442, %406 : vector<8x32xf32>
    %446 = arith.mulf %441, %444 : vector<8x32xf32>
    %447 = arith.addf %445, %446 : vector<8x32xf32>
    %448 = math.tanh %447 : vector<8x32xf32>
    %449 = arith.mulf %443, %448 : vector<8x32xf32>
    %cst_122 = arith.constant dense<0.000000e+00> : vector<8x128xf32>
    %450 = tpu.matmul %449, %6, %cst_122 {dimension_numbers = #tpu.dot_dimension_numbers<[1], [0], [0], [1], [0, 0, 1, 1], [], []>} : vector<8x32xf32>, vector<32x128xf32>, vector<8x128xf32> -> vector<8x128xf32>
    %cst_123 = arith.constant dense<0.000000e+00> : vector<8x128xf32>
    %451 = tpu.matmul %449, %7, %cst_123 {dimension_numbers = #tpu.dot_dimension_numbers<[1], [0], [0], [1], [0, 0, 1, 1], [], []>} : vector<8x32xf32>, vector<32x128xf32>, vector<8x128xf32> -> vector<8x128xf32>
    %452 = arith.addf %451, %428 : vector<8x128xf32>
    %453 = arith.addf %452, %11 : vector<8x128xf32>
    %454 = arith.mulf %453, %17 : vector<8x128xf32>
    %455 = math.tanh %454 : vector<8x128xf32>
    %cst_124 = arith.constant 1.000000e+00 : f32
    %456 = vector.broadcast %cst_124 : f32 to vector<8x128xf32>
    %457 = arith.addf %455, %456 : vector<8x128xf32>
    %cst_125 = arith.constant 5.000000e-01 : f32
    %458 = vector.broadcast %cst_125 : f32 to vector<8x128xf32>
    %459 = arith.mulf %458, %457 : vector<8x128xf32>
    %460 = vector.extract_strided_slice %459 {offsets = [0, 0], sizes = [8, 32], strides = [1, 1]} : vector<8x128xf32> to vector<8x32xf32>
    %461 = vector.extract_strided_slice %459 {offsets = [0, 32], sizes = [8, 32], strides = [1, 1]} : vector<8x128xf32> to vector<8x32xf32>
    %462 = vector.extract_strided_slice %459 {offsets = [0, 64], sizes = [8, 32], strides = [1, 1]} : vector<8x128xf32> to vector<8x32xf32>
    %463 = vector.extract_strided_slice %455 {offsets = [0, 96], sizes = [8, 32], strides = [1, 1]} : vector<8x128xf32> to vector<8x32xf32>
    %464 = arith.mulf %461, %425 : vector<8x32xf32>
    %465 = arith.mulf %460, %463 : vector<8x32xf32>
    %466 = arith.addf %464, %465 : vector<8x32xf32>
    %467 = math.tanh %466 : vector<8x32xf32>
    %468 = arith.mulf %462, %467 : vector<8x32xf32>
    %cst_126 = arith.constant dense<0.000000e+00> : vector<8x128xf32>
    %469 = tpu.matmul %468, %8, %cst_126 {dimension_numbers = #tpu.dot_dimension_numbers<[1], [0], [0], [1], [0, 0, 1, 1], [], []>} : vector<8x32xf32>, vector<32x128xf32>, vector<8x128xf32> -> vector<8x128xf32>
    %c10 = arith.constant 10 : index
    %c0_127 = arith.constant 0 : index
    %c0_128 = arith.constant 0 : index
    %470 = vector.load %arg7[%c10, %c0_127, %c0_128] : memref<50x32x2xf32, #tpu.memory_space<vmem>>, vector<1x32x2xf32>
    %471 = vector.shape_cast %470 : vector<1x32x2xf32> to vector<32x2xf32>
    %cst_129 = arith.constant dense<0.000000e+00> : vector<8x2xf32>
    %472 = tpu.matmul %468, %471, %cst_129 {dimension_numbers = #tpu.dot_dimension_numbers<[1], [0], [0], [1], [0, 0, 1, 1], [], []>} : vector<8x32xf32>, vector<32x2xf32>, vector<8x2xf32> -> vector<8x2xf32>
    %473 = arith.addf %432, %472 : vector<8x2xf32>
    %474 = vector.extract_strided_slice %5 {offsets = [88, 0], sizes = [8, 128], strides = [1, 1]} : vector<400x128xf32> to vector<8x128xf32>
    %475 = arith.addf %474, %450 : vector<8x128xf32>
    %476 = arith.mulf %475, %17 : vector<8x128xf32>
    %477 = math.tanh %476 : vector<8x128xf32>
    %cst_130 = arith.constant 1.000000e+00 : f32
    %478 = vector.broadcast %cst_130 : f32 to vector<8x128xf32>
    %479 = arith.addf %477, %478 : vector<8x128xf32>
    %cst_131 = arith.constant 5.000000e-01 : f32
    %480 = vector.broadcast %cst_131 : f32 to vector<8x128xf32>
    %481 = arith.mulf %480, %479 : vector<8x128xf32>
    %482 = vector.extract_strided_slice %481 {offsets = [0, 0], sizes = [8, 32], strides = [1, 1]} : vector<8x128xf32> to vector<8x32xf32>
    %483 = vector.extract_strided_slice %481 {offsets = [0, 32], sizes = [8, 32], strides = [1, 1]} : vector<8x128xf32> to vector<8x32xf32>
    %484 = vector.extract_strided_slice %481 {offsets = [0, 64], sizes = [8, 32], strides = [1, 1]} : vector<8x128xf32> to vector<8x32xf32>
    %485 = vector.extract_strided_slice %477 {offsets = [0, 96], sizes = [8, 32], strides = [1, 1]} : vector<8x128xf32> to vector<8x32xf32>
    %486 = arith.mulf %483, %447 : vector<8x32xf32>
    %487 = arith.mulf %482, %485 : vector<8x32xf32>
    %488 = arith.addf %486, %487 : vector<8x32xf32>
    %489 = math.tanh %488 : vector<8x32xf32>
    %490 = arith.mulf %484, %489 : vector<8x32xf32>
    %cst_132 = arith.constant dense<0.000000e+00> : vector<8x128xf32>
    %491 = tpu.matmul %490, %6, %cst_132 {dimension_numbers = #tpu.dot_dimension_numbers<[1], [0], [0], [1], [0, 0, 1, 1], [], []>} : vector<8x32xf32>, vector<32x128xf32>, vector<8x128xf32> -> vector<8x128xf32>
    %cst_133 = arith.constant dense<0.000000e+00> : vector<8x128xf32>
    %492 = tpu.matmul %490, %7, %cst_133 {dimension_numbers = #tpu.dot_dimension_numbers<[1], [0], [0], [1], [0, 0, 1, 1], [], []>} : vector<8x32xf32>, vector<32x128xf32>, vector<8x128xf32> -> vector<8x128xf32>
    %493 = arith.addf %492, %469 : vector<8x128xf32>
    %494 = arith.addf %493, %11 : vector<8x128xf32>
    %495 = arith.mulf %494, %17 : vector<8x128xf32>
    %496 = math.tanh %495 : vector<8x128xf32>
    %cst_134 = arith.constant 1.000000e+00 : f32
    %497 = vector.broadcast %cst_134 : f32 to vector<8x128xf32>
    %498 = arith.addf %496, %497 : vector<8x128xf32>
    %cst_135 = arith.constant 5.000000e-01 : f32
    %499 = vector.broadcast %cst_135 : f32 to vector<8x128xf32>
    %500 = arith.mulf %499, %498 : vector<8x128xf32>
    %501 = vector.extract_strided_slice %500 {offsets = [0, 0], sizes = [8, 32], strides = [1, 1]} : vector<8x128xf32> to vector<8x32xf32>
    %502 = vector.extract_strided_slice %500 {offsets = [0, 32], sizes = [8, 32], strides = [1, 1]} : vector<8x128xf32> to vector<8x32xf32>
    %503 = vector.extract_strided_slice %500 {offsets = [0, 64], sizes = [8, 32], strides = [1, 1]} : vector<8x128xf32> to vector<8x32xf32>
    %504 = vector.extract_strided_slice %496 {offsets = [0, 96], sizes = [8, 32], strides = [1, 1]} : vector<8x128xf32> to vector<8x32xf32>
    %505 = arith.mulf %502, %466 : vector<8x32xf32>
    %506 = arith.mulf %501, %504 : vector<8x32xf32>
    %507 = arith.addf %505, %506 : vector<8x32xf32>
    %508 = math.tanh %507 : vector<8x32xf32>
    %509 = arith.mulf %503, %508 : vector<8x32xf32>
    %cst_136 = arith.constant dense<0.000000e+00> : vector<8x128xf32>
    %510 = tpu.matmul %509, %8, %cst_136 {dimension_numbers = #tpu.dot_dimension_numbers<[1], [0], [0], [1], [0, 0, 1, 1], [], []>} : vector<8x32xf32>, vector<32x128xf32>, vector<8x128xf32> -> vector<8x128xf32>
    %c11 = arith.constant 11 : index
    %c0_137 = arith.constant 0 : index
    %c0_138 = arith.constant 0 : index
    %511 = vector.load %arg7[%c11, %c0_137, %c0_138] : memref<50x32x2xf32, #tpu.memory_space<vmem>>, vector<1x32x2xf32>
    %512 = vector.shape_cast %511 : vector<1x32x2xf32> to vector<32x2xf32>
    %cst_139 = arith.constant dense<0.000000e+00> : vector<8x2xf32>
    %513 = tpu.matmul %509, %512, %cst_139 {dimension_numbers = #tpu.dot_dimension_numbers<[1], [0], [0], [1], [0, 0, 1, 1], [], []>} : vector<8x32xf32>, vector<32x2xf32>, vector<8x2xf32> -> vector<8x2xf32>
    %514 = arith.addf %473, %513 : vector<8x2xf32>
    %515 = vector.extract_strided_slice %5 {offsets = [96, 0], sizes = [8, 128], strides = [1, 1]} : vector<400x128xf32> to vector<8x128xf32>
    %516 = arith.addf %515, %491 : vector<8x128xf32>
    %517 = arith.mulf %516, %17 : vector<8x128xf32>
    %518 = math.tanh %517 : vector<8x128xf32>
    %cst_140 = arith.constant 1.000000e+00 : f32
    %519 = vector.broadcast %cst_140 : f32 to vector<8x128xf32>
    %520 = arith.addf %518, %519 : vector<8x128xf32>
    %cst_141 = arith.constant 5.000000e-01 : f32
    %521 = vector.broadcast %cst_141 : f32 to vector<8x128xf32>
    %522 = arith.mulf %521, %520 : vector<8x128xf32>
    %523 = vector.extract_strided_slice %522 {offsets = [0, 0], sizes = [8, 32], strides = [1, 1]} : vector<8x128xf32> to vector<8x32xf32>
    %524 = vector.extract_strided_slice %522 {offsets = [0, 32], sizes = [8, 32], strides = [1, 1]} : vector<8x128xf32> to vector<8x32xf32>
    %525 = vector.extract_strided_slice %522 {offsets = [0, 64], sizes = [8, 32], strides = [1, 1]} : vector<8x128xf32> to vector<8x32xf32>
    %526 = vector.extract_strided_slice %518 {offsets = [0, 96], sizes = [8, 32], strides = [1, 1]} : vector<8x128xf32> to vector<8x32xf32>
    %527 = arith.mulf %524, %488 : vector<8x32xf32>
    %528 = arith.mulf %523, %526 : vector<8x32xf32>
    %529 = arith.addf %527, %528 : vector<8x32xf32>
    %530 = math.tanh %529 : vector<8x32xf32>
    %531 = arith.mulf %525, %530 : vector<8x32xf32>
    %cst_142 = arith.constant dense<0.000000e+00> : vector<8x128xf32>
    %532 = tpu.matmul %531, %6, %cst_142 {dimension_numbers = #tpu.dot_dimension_numbers<[1], [0], [0], [1], [0, 0, 1, 1], [], []>} : vector<8x32xf32>, vector<32x128xf32>, vector<8x128xf32> -> vector<8x128xf32>
    %cst_143 = arith.constant dense<0.000000e+00> : vector<8x128xf32>
    %533 = tpu.matmul %531, %7, %cst_143 {dimension_numbers = #tpu.dot_dimension_numbers<[1], [0], [0], [1], [0, 0, 1, 1], [], []>} : vector<8x32xf32>, vector<32x128xf32>, vector<8x128xf32> -> vector<8x128xf32>
    %534 = arith.addf %533, %510 : vector<8x128xf32>
    %535 = arith.addf %534, %11 : vector<8x128xf32>
    %536 = arith.mulf %535, %17 : vector<8x128xf32>
    %537 = math.tanh %536 : vector<8x128xf32>
    %cst_144 = arith.constant 1.000000e+00 : f32
    %538 = vector.broadcast %cst_144 : f32 to vector<8x128xf32>
    %539 = arith.addf %537, %538 : vector<8x128xf32>
    %cst_145 = arith.constant 5.000000e-01 : f32
    %540 = vector.broadcast %cst_145 : f32 to vector<8x128xf32>
    %541 = arith.mulf %540, %539 : vector<8x128xf32>
    %542 = vector.extract_strided_slice %541 {offsets = [0, 0], sizes = [8, 32], strides = [1, 1]} : vector<8x128xf32> to vector<8x32xf32>
    %543 = vector.extract_strided_slice %541 {offsets = [0, 32], sizes = [8, 32], strides = [1, 1]} : vector<8x128xf32> to vector<8x32xf32>
    %544 = vector.extract_strided_slice %541 {offsets = [0, 64], sizes = [8, 32], strides = [1, 1]} : vector<8x128xf32> to vector<8x32xf32>
    %545 = vector.extract_strided_slice %537 {offsets = [0, 96], sizes = [8, 32], strides = [1, 1]} : vector<8x128xf32> to vector<8x32xf32>
    %546 = arith.mulf %543, %507 : vector<8x32xf32>
    %547 = arith.mulf %542, %545 : vector<8x32xf32>
    %548 = arith.addf %546, %547 : vector<8x32xf32>
    %549 = math.tanh %548 : vector<8x32xf32>
    %550 = arith.mulf %544, %549 : vector<8x32xf32>
    %cst_146 = arith.constant dense<0.000000e+00> : vector<8x128xf32>
    %551 = tpu.matmul %550, %8, %cst_146 {dimension_numbers = #tpu.dot_dimension_numbers<[1], [0], [0], [1], [0, 0, 1, 1], [], []>} : vector<8x32xf32>, vector<32x128xf32>, vector<8x128xf32> -> vector<8x128xf32>
    %c12 = arith.constant 12 : index
    %c0_147 = arith.constant 0 : index
    %c0_148 = arith.constant 0 : index
    %552 = vector.load %arg7[%c12, %c0_147, %c0_148] : memref<50x32x2xf32, #tpu.memory_space<vmem>>, vector<1x32x2xf32>
    %553 = vector.shape_cast %552 : vector<1x32x2xf32> to vector<32x2xf32>
    %cst_149 = arith.constant dense<0.000000e+00> : vector<8x2xf32>
    %554 = tpu.matmul %550, %553, %cst_149 {dimension_numbers = #tpu.dot_dimension_numbers<[1], [0], [0], [1], [0, 0, 1, 1], [], []>} : vector<8x32xf32>, vector<32x2xf32>, vector<8x2xf32> -> vector<8x2xf32>
    %555 = arith.addf %514, %554 : vector<8x2xf32>
    %556 = vector.extract_strided_slice %5 {offsets = [104, 0], sizes = [8, 128], strides = [1, 1]} : vector<400x128xf32> to vector<8x128xf32>
    %557 = arith.addf %556, %532 : vector<8x128xf32>
    %558 = arith.mulf %557, %17 : vector<8x128xf32>
    %559 = math.tanh %558 : vector<8x128xf32>
    %cst_150 = arith.constant 1.000000e+00 : f32
    %560 = vector.broadcast %cst_150 : f32 to vector<8x128xf32>
    %561 = arith.addf %559, %560 : vector<8x128xf32>
    %cst_151 = arith.constant 5.000000e-01 : f32
    %562 = vector.broadcast %cst_151 : f32 to vector<8x128xf32>
    %563 = arith.mulf %562, %561 : vector<8x128xf32>
    %564 = vector.extract_strided_slice %563 {offsets = [0, 0], sizes = [8, 32], strides = [1, 1]} : vector<8x128xf32> to vector<8x32xf32>
    %565 = vector.extract_strided_slice %563 {offsets = [0, 32], sizes = [8, 32], strides = [1, 1]} : vector<8x128xf32> to vector<8x32xf32>
    %566 = vector.extract_strided_slice %563 {offsets = [0, 64], sizes = [8, 32], strides = [1, 1]} : vector<8x128xf32> to vector<8x32xf32>
    %567 = vector.extract_strided_slice %559 {offsets = [0, 96], sizes = [8, 32], strides = [1, 1]} : vector<8x128xf32> to vector<8x32xf32>
    %568 = arith.mulf %565, %529 : vector<8x32xf32>
    %569 = arith.mulf %564, %567 : vector<8x32xf32>
    %570 = arith.addf %568, %569 : vector<8x32xf32>
    %571 = math.tanh %570 : vector<8x32xf32>
    %572 = arith.mulf %566, %571 : vector<8x32xf32>
    %cst_152 = arith.constant dense<0.000000e+00> : vector<8x128xf32>
    %573 = tpu.matmul %572, %6, %cst_152 {dimension_numbers = #tpu.dot_dimension_numbers<[1], [0], [0], [1], [0, 0, 1, 1], [], []>} : vector<8x32xf32>, vector<32x128xf32>, vector<8x128xf32> -> vector<8x128xf32>
    %cst_153 = arith.constant dense<0.000000e+00> : vector<8x128xf32>
    %574 = tpu.matmul %572, %7, %cst_153 {dimension_numbers = #tpu.dot_dimension_numbers<[1], [0], [0], [1], [0, 0, 1, 1], [], []>} : vector<8x32xf32>, vector<32x128xf32>, vector<8x128xf32> -> vector<8x128xf32>
    %575 = arith.addf %574, %551 : vector<8x128xf32>
    %576 = arith.addf %575, %11 : vector<8x128xf32>
    %577 = arith.mulf %576, %17 : vector<8x128xf32>
    %578 = math.tanh %577 : vector<8x128xf32>
    %cst_154 = arith.constant 1.000000e+00 : f32
    %579 = vector.broadcast %cst_154 : f32 to vector<8x128xf32>
    %580 = arith.addf %578, %579 : vector<8x128xf32>
    %cst_155 = arith.constant 5.000000e-01 : f32
    %581 = vector.broadcast %cst_155 : f32 to vector<8x128xf32>
    %582 = arith.mulf %581, %580 : vector<8x128xf32>
    %583 = vector.extract_strided_slice %582 {offsets = [0, 0], sizes = [8, 32], strides = [1, 1]} : vector<8x128xf32> to vector<8x32xf32>
    %584 = vector.extract_strided_slice %582 {offsets = [0, 32], sizes = [8, 32], strides = [1, 1]} : vector<8x128xf32> to vector<8x32xf32>
    %585 = vector.extract_strided_slice %582 {offsets = [0, 64], sizes = [8, 32], strides = [1, 1]} : vector<8x128xf32> to vector<8x32xf32>
    %586 = vector.extract_strided_slice %578 {offsets = [0, 96], sizes = [8, 32], strides = [1, 1]} : vector<8x128xf32> to vector<8x32xf32>
    %587 = arith.mulf %584, %548 : vector<8x32xf32>
    %588 = arith.mulf %583, %586 : vector<8x32xf32>
    %589 = arith.addf %587, %588 : vector<8x32xf32>
    %590 = math.tanh %589 : vector<8x32xf32>
    %591 = arith.mulf %585, %590 : vector<8x32xf32>
    %cst_156 = arith.constant dense<0.000000e+00> : vector<8x128xf32>
    %592 = tpu.matmul %591, %8, %cst_156 {dimension_numbers = #tpu.dot_dimension_numbers<[1], [0], [0], [1], [0, 0, 1, 1], [], []>} : vector<8x32xf32>, vector<32x128xf32>, vector<8x128xf32> -> vector<8x128xf32>
    %c13 = arith.constant 13 : index
    %c0_157 = arith.constant 0 : index
    %c0_158 = arith.constant 0 : index
    %593 = vector.load %arg7[%c13, %c0_157, %c0_158] : memref<50x32x2xf32, #tpu.memory_space<vmem>>, vector<1x32x2xf32>
    %594 = vector.shape_cast %593 : vector<1x32x2xf32> to vector<32x2xf32>
    %cst_159 = arith.constant dense<0.000000e+00> : vector<8x2xf32>
    %595 = tpu.matmul %591, %594, %cst_159 {dimension_numbers = #tpu.dot_dimension_numbers<[1], [0], [0], [1], [0, 0, 1, 1], [], []>} : vector<8x32xf32>, vector<32x2xf32>, vector<8x2xf32> -> vector<8x2xf32>
    %596 = arith.addf %555, %595 : vector<8x2xf32>
    %597 = vector.extract_strided_slice %5 {offsets = [112, 0], sizes = [8, 128], strides = [1, 1]} : vector<400x128xf32> to vector<8x128xf32>
    %598 = arith.addf %597, %573 : vector<8x128xf32>
    %599 = arith.mulf %598, %17 : vector<8x128xf32>
    %600 = math.tanh %599 : vector<8x128xf32>
    %cst_160 = arith.constant 1.000000e+00 : f32
    %601 = vector.broadcast %cst_160 : f32 to vector<8x128xf32>
    %602 = arith.addf %600, %601 : vector<8x128xf32>
    %cst_161 = arith.constant 5.000000e-01 : f32
    %603 = vector.broadcast %cst_161 : f32 to vector<8x128xf32>
    %604 = arith.mulf %603, %602 : vector<8x128xf32>
    %605 = vector.extract_strided_slice %604 {offsets = [0, 0], sizes = [8, 32], strides = [1, 1]} : vector<8x128xf32> to vector<8x32xf32>
    %606 = vector.extract_strided_slice %604 {offsets = [0, 32], sizes = [8, 32], strides = [1, 1]} : vector<8x128xf32> to vector<8x32xf32>
    %607 = vector.extract_strided_slice %604 {offsets = [0, 64], sizes = [8, 32], strides = [1, 1]} : vector<8x128xf32> to vector<8x32xf32>
    %608 = vector.extract_strided_slice %600 {offsets = [0, 96], sizes = [8, 32], strides = [1, 1]} : vector<8x128xf32> to vector<8x32xf32>
    %609 = arith.mulf %606, %570 : vector<8x32xf32>
    %610 = arith.mulf %605, %608 : vector<8x32xf32>
    %611 = arith.addf %609, %610 : vector<8x32xf32>
    %612 = math.tanh %611 : vector<8x32xf32>
    %613 = arith.mulf %607, %612 : vector<8x32xf32>
    %cst_162 = arith.constant dense<0.000000e+00> : vector<8x128xf32>
    %614 = tpu.matmul %613, %6, %cst_162 {dimension_numbers = #tpu.dot_dimension_numbers<[1], [0], [0], [1], [0, 0, 1, 1], [], []>} : vector<8x32xf32>, vector<32x128xf32>, vector<8x128xf32> -> vector<8x128xf32>
    %cst_163 = arith.constant dense<0.000000e+00> : vector<8x128xf32>
    %615 = tpu.matmul %613, %7, %cst_163 {dimension_numbers = #tpu.dot_dimension_numbers<[1], [0], [0], [1], [0, 0, 1, 1], [], []>} : vector<8x32xf32>, vector<32x128xf32>, vector<8x128xf32> -> vector<8x128xf32>
    %616 = arith.addf %615, %592 : vector<8x128xf32>
    %617 = arith.addf %616, %11 : vector<8x128xf32>
    %618 = arith.mulf %617, %17 : vector<8x128xf32>
    %619 = math.tanh %618 : vector<8x128xf32>
    %cst_164 = arith.constant 1.000000e+00 : f32
    %620 = vector.broadcast %cst_164 : f32 to vector<8x128xf32>
    %621 = arith.addf %619, %620 : vector<8x128xf32>
    %cst_165 = arith.constant 5.000000e-01 : f32
    %622 = vector.broadcast %cst_165 : f32 to vector<8x128xf32>
    %623 = arith.mulf %622, %621 : vector<8x128xf32>
    %624 = vector.extract_strided_slice %623 {offsets = [0, 0], sizes = [8, 32], strides = [1, 1]} : vector<8x128xf32> to vector<8x32xf32>
    %625 = vector.extract_strided_slice %623 {offsets = [0, 32], sizes = [8, 32], strides = [1, 1]} : vector<8x128xf32> to vector<8x32xf32>
    %626 = vector.extract_strided_slice %623 {offsets = [0, 64], sizes = [8, 32], strides = [1, 1]} : vector<8x128xf32> to vector<8x32xf32>
    %627 = vector.extract_strided_slice %619 {offsets = [0, 96], sizes = [8, 32], strides = [1, 1]} : vector<8x128xf32> to vector<8x32xf32>
    %628 = arith.mulf %625, %589 : vector<8x32xf32>
    %629 = arith.mulf %624, %627 : vector<8x32xf32>
    %630 = arith.addf %628, %629 : vector<8x32xf32>
    %631 = math.tanh %630 : vector<8x32xf32>
    %632 = arith.mulf %626, %631 : vector<8x32xf32>
    %cst_166 = arith.constant dense<0.000000e+00> : vector<8x128xf32>
    %633 = tpu.matmul %632, %8, %cst_166 {dimension_numbers = #tpu.dot_dimension_numbers<[1], [0], [0], [1], [0, 0, 1, 1], [], []>} : vector<8x32xf32>, vector<32x128xf32>, vector<8x128xf32> -> vector<8x128xf32>
    %c14 = arith.constant 14 : index
    %c0_167 = arith.constant 0 : index
    %c0_168 = arith.constant 0 : index
    %634 = vector.load %arg7[%c14, %c0_167, %c0_168] : memref<50x32x2xf32, #tpu.memory_space<vmem>>, vector<1x32x2xf32>
    %635 = vector.shape_cast %634 : vector<1x32x2xf32> to vector<32x2xf32>
    %cst_169 = arith.constant dense<0.000000e+00> : vector<8x2xf32>
    %636 = tpu.matmul %632, %635, %cst_169 {dimension_numbers = #tpu.dot_dimension_numbers<[1], [0], [0], [1], [0, 0, 1, 1], [], []>} : vector<8x32xf32>, vector<32x2xf32>, vector<8x2xf32> -> vector<8x2xf32>
    %637 = arith.addf %596, %636 : vector<8x2xf32>
    %638 = vector.extract_strided_slice %5 {offsets = [120, 0], sizes = [8, 128], strides = [1, 1]} : vector<400x128xf32> to vector<8x128xf32>
    %639 = arith.addf %638, %614 : vector<8x128xf32>
    %640 = arith.mulf %639, %17 : vector<8x128xf32>
    %641 = math.tanh %640 : vector<8x128xf32>
    %cst_170 = arith.constant 1.000000e+00 : f32
    %642 = vector.broadcast %cst_170 : f32 to vector<8x128xf32>
    %643 = arith.addf %641, %642 : vector<8x128xf32>
    %cst_171 = arith.constant 5.000000e-01 : f32
    %644 = vector.broadcast %cst_171 : f32 to vector<8x128xf32>
    %645 = arith.mulf %644, %643 : vector<8x128xf32>
    %646 = vector.extract_strided_slice %645 {offsets = [0, 0], sizes = [8, 32], strides = [1, 1]} : vector<8x128xf32> to vector<8x32xf32>
    %647 = vector.extract_strided_slice %645 {offsets = [0, 32], sizes = [8, 32], strides = [1, 1]} : vector<8x128xf32> to vector<8x32xf32>
    %648 = vector.extract_strided_slice %645 {offsets = [0, 64], sizes = [8, 32], strides = [1, 1]} : vector<8x128xf32> to vector<8x32xf32>
    %649 = vector.extract_strided_slice %641 {offsets = [0, 96], sizes = [8, 32], strides = [1, 1]} : vector<8x128xf32> to vector<8x32xf32>
    %650 = arith.mulf %647, %611 : vector<8x32xf32>
    %651 = arith.mulf %646, %649 : vector<8x32xf32>
    %652 = arith.addf %650, %651 : vector<8x32xf32>
    %653 = math.tanh %652 : vector<8x32xf32>
    %654 = arith.mulf %648, %653 : vector<8x32xf32>
    %cst_172 = arith.constant dense<0.000000e+00> : vector<8x128xf32>
    %655 = tpu.matmul %654, %6, %cst_172 {dimension_numbers = #tpu.dot_dimension_numbers<[1], [0], [0], [1], [0, 0, 1, 1], [], []>} : vector<8x32xf32>, vector<32x128xf32>, vector<8x128xf32> -> vector<8x128xf32>
    %cst_173 = arith.constant dense<0.000000e+00> : vector<8x128xf32>
    %656 = tpu.matmul %654, %7, %cst_173 {dimension_numbers = #tpu.dot_dimension_numbers<[1], [0], [0], [1], [0, 0, 1, 1], [], []>} : vector<8x32xf32>, vector<32x128xf32>, vector<8x128xf32> -> vector<8x128xf32>
    %657 = arith.addf %656, %633 : vector<8x128xf32>
    %658 = arith.addf %657, %11 : vector<8x128xf32>
    %659 = arith.mulf %658, %17 : vector<8x128xf32>
    %660 = math.tanh %659 : vector<8x128xf32>
    %cst_174 = arith.constant 1.000000e+00 : f32
    %661 = vector.broadcast %cst_174 : f32 to vector<8x128xf32>
    %662 = arith.addf %660, %661 : vector<8x128xf32>
    %cst_175 = arith.constant 5.000000e-01 : f32
    %663 = vector.broadcast %cst_175 : f32 to vector<8x128xf32>
    %664 = arith.mulf %663, %662 : vector<8x128xf32>
    %665 = vector.extract_strided_slice %664 {offsets = [0, 0], sizes = [8, 32], strides = [1, 1]} : vector<8x128xf32> to vector<8x32xf32>
    %666 = vector.extract_strided_slice %664 {offsets = [0, 32], sizes = [8, 32], strides = [1, 1]} : vector<8x128xf32> to vector<8x32xf32>
    %667 = vector.extract_strided_slice %664 {offsets = [0, 64], sizes = [8, 32], strides = [1, 1]} : vector<8x128xf32> to vector<8x32xf32>
    %668 = vector.extract_strided_slice %660 {offsets = [0, 96], sizes = [8, 32], strides = [1, 1]} : vector<8x128xf32> to vector<8x32xf32>
    %669 = arith.mulf %666, %630 : vector<8x32xf32>
    %670 = arith.mulf %665, %668 : vector<8x32xf32>
    %671 = arith.addf %669, %670 : vector<8x32xf32>
    %672 = math.tanh %671 : vector<8x32xf32>
    %673 = arith.mulf %667, %672 : vector<8x32xf32>
    %cst_176 = arith.constant dense<0.000000e+00> : vector<8x128xf32>
    %674 = tpu.matmul %673, %8, %cst_176 {dimension_numbers = #tpu.dot_dimension_numbers<[1], [0], [0], [1], [0, 0, 1, 1], [], []>} : vector<8x32xf32>, vector<32x128xf32>, vector<8x128xf32> -> vector<8x128xf32>
    %c15 = arith.constant 15 : index
    %c0_177 = arith.constant 0 : index
    %c0_178 = arith.constant 0 : index
    %675 = vector.load %arg7[%c15, %c0_177, %c0_178] : memref<50x32x2xf32, #tpu.memory_space<vmem>>, vector<1x32x2xf32>
    %676 = vector.shape_cast %675 : vector<1x32x2xf32> to vector<32x2xf32>
    %cst_179 = arith.constant dense<0.000000e+00> : vector<8x2xf32>
    %677 = tpu.matmul %673, %676, %cst_179 {dimension_numbers = #tpu.dot_dimension_numbers<[1], [0], [0], [1], [0, 0, 1, 1], [], []>} : vector<8x32xf32>, vector<32x2xf32>, vector<8x2xf32> -> vector<8x2xf32>
    %678 = arith.addf %637, %677 : vector<8x2xf32>
    %679 = vector.extract_strided_slice %5 {offsets = [128, 0], sizes = [8, 128], strides = [1, 1]} : vector<400x128xf32> to vector<8x128xf32>
    %680 = arith.addf %679, %655 : vector<8x128xf32>
    %681 = arith.mulf %680, %17 : vector<8x128xf32>
    %682 = math.tanh %681 : vector<8x128xf32>
    %cst_180 = arith.constant 1.000000e+00 : f32
    %683 = vector.broadcast %cst_180 : f32 to vector<8x128xf32>
    %684 = arith.addf %682, %683 : vector<8x128xf32>
    %cst_181 = arith.constant 5.000000e-01 : f32
    %685 = vector.broadcast %cst_181 : f32 to vector<8x128xf32>
    %686 = arith.mulf %685, %684 : vector<8x128xf32>
    %687 = vector.extract_strided_slice %686 {offsets = [0, 0], sizes = [8, 32], strides = [1, 1]} : vector<8x128xf32> to vector<8x32xf32>
    %688 = vector.extract_strided_slice %686 {offsets = [0, 32], sizes = [8, 32], strides = [1, 1]} : vector<8x128xf32> to vector<8x32xf32>
    %689 = vector.extract_strided_slice %686 {offsets = [0, 64], sizes = [8, 32], strides = [1, 1]} : vector<8x128xf32> to vector<8x32xf32>
    %690 = vector.extract_strided_slice %682 {offsets = [0, 96], sizes = [8, 32], strides = [1, 1]} : vector<8x128xf32> to vector<8x32xf32>
    %691 = arith.mulf %688, %652 : vector<8x32xf32>
    %692 = arith.mulf %687, %690 : vector<8x32xf32>
    %693 = arith.addf %691, %692 : vector<8x32xf32>
    %694 = math.tanh %693 : vector<8x32xf32>
    %695 = arith.mulf %689, %694 : vector<8x32xf32>
    %cst_182 = arith.constant dense<0.000000e+00> : vector<8x128xf32>
    %696 = tpu.matmul %695, %6, %cst_182 {dimension_numbers = #tpu.dot_dimension_numbers<[1], [0], [0], [1], [0, 0, 1, 1], [], []>} : vector<8x32xf32>, vector<32x128xf32>, vector<8x128xf32> -> vector<8x128xf32>
    %cst_183 = arith.constant dense<0.000000e+00> : vector<8x128xf32>
    %697 = tpu.matmul %695, %7, %cst_183 {dimension_numbers = #tpu.dot_dimension_numbers<[1], [0], [0], [1], [0, 0, 1, 1], [], []>} : vector<8x32xf32>, vector<32x128xf32>, vector<8x128xf32> -> vector<8x128xf32>
    %698 = arith.addf %697, %674 : vector<8x128xf32>
    %699 = arith.addf %698, %11 : vector<8x128xf32>
    %700 = arith.mulf %699, %17 : vector<8x128xf32>
    %701 = math.tanh %700 : vector<8x128xf32>
    %cst_184 = arith.constant 1.000000e+00 : f32
    %702 = vector.broadcast %cst_184 : f32 to vector<8x128xf32>
    %703 = arith.addf %701, %702 : vector<8x128xf32>
    %cst_185 = arith.constant 5.000000e-01 : f32
    %704 = vector.broadcast %cst_185 : f32 to vector<8x128xf32>
    %705 = arith.mulf %704, %703 : vector<8x128xf32>
    %706 = vector.extract_strided_slice %705 {offsets = [0, 0], sizes = [8, 32], strides = [1, 1]} : vector<8x128xf32> to vector<8x32xf32>
    %707 = vector.extract_strided_slice %705 {offsets = [0, 32], sizes = [8, 32], strides = [1, 1]} : vector<8x128xf32> to vector<8x32xf32>
    %708 = vector.extract_strided_slice %705 {offsets = [0, 64], sizes = [8, 32], strides = [1, 1]} : vector<8x128xf32> to vector<8x32xf32>
    %709 = vector.extract_strided_slice %701 {offsets = [0, 96], sizes = [8, 32], strides = [1, 1]} : vector<8x128xf32> to vector<8x32xf32>
    %710 = arith.mulf %707, %671 : vector<8x32xf32>
    %711 = arith.mulf %706, %709 : vector<8x32xf32>
    %712 = arith.addf %710, %711 : vector<8x32xf32>
    %713 = math.tanh %712 : vector<8x32xf32>
    %714 = arith.mulf %708, %713 : vector<8x32xf32>
    %cst_186 = arith.constant dense<0.000000e+00> : vector<8x128xf32>
    %715 = tpu.matmul %714, %8, %cst_186 {dimension_numbers = #tpu.dot_dimension_numbers<[1], [0], [0], [1], [0, 0, 1, 1], [], []>} : vector<8x32xf32>, vector<32x128xf32>, vector<8x128xf32> -> vector<8x128xf32>
    %c16 = arith.constant 16 : index
    %c0_187 = arith.constant 0 : index
    %c0_188 = arith.constant 0 : index
    %716 = vector.load %arg7[%c16, %c0_187, %c0_188] : memref<50x32x2xf32, #tpu.memory_space<vmem>>, vector<1x32x2xf32>
    %717 = vector.shape_cast %716 : vector<1x32x2xf32> to vector<32x2xf32>
    %cst_189 = arith.constant dense<0.000000e+00> : vector<8x2xf32>
    %718 = tpu.matmul %714, %717, %cst_189 {dimension_numbers = #tpu.dot_dimension_numbers<[1], [0], [0], [1], [0, 0, 1, 1], [], []>} : vector<8x32xf32>, vector<32x2xf32>, vector<8x2xf32> -> vector<8x2xf32>
    %719 = arith.addf %678, %718 : vector<8x2xf32>
    %720 = vector.extract_strided_slice %5 {offsets = [136, 0], sizes = [8, 128], strides = [1, 1]} : vector<400x128xf32> to vector<8x128xf32>
    %721 = arith.addf %720, %696 : vector<8x128xf32>
    %722 = arith.mulf %721, %17 : vector<8x128xf32>
    %723 = math.tanh %722 : vector<8x128xf32>
    %cst_190 = arith.constant 1.000000e+00 : f32
    %724 = vector.broadcast %cst_190 : f32 to vector<8x128xf32>
    %725 = arith.addf %723, %724 : vector<8x128xf32>
    %cst_191 = arith.constant 5.000000e-01 : f32
    %726 = vector.broadcast %cst_191 : f32 to vector<8x128xf32>
    %727 = arith.mulf %726, %725 : vector<8x128xf32>
    %728 = vector.extract_strided_slice %727 {offsets = [0, 0], sizes = [8, 32], strides = [1, 1]} : vector<8x128xf32> to vector<8x32xf32>
    %729 = vector.extract_strided_slice %727 {offsets = [0, 32], sizes = [8, 32], strides = [1, 1]} : vector<8x128xf32> to vector<8x32xf32>
    %730 = vector.extract_strided_slice %727 {offsets = [0, 64], sizes = [8, 32], strides = [1, 1]} : vector<8x128xf32> to vector<8x32xf32>
    %731 = vector.extract_strided_slice %723 {offsets = [0, 96], sizes = [8, 32], strides = [1, 1]} : vector<8x128xf32> to vector<8x32xf32>
    %732 = arith.mulf %729, %693 : vector<8x32xf32>
    %733 = arith.mulf %728, %731 : vector<8x32xf32>
    %734 = arith.addf %732, %733 : vector<8x32xf32>
    %735 = math.tanh %734 : vector<8x32xf32>
    %736 = arith.mulf %730, %735 : vector<8x32xf32>
    %cst_192 = arith.constant dense<0.000000e+00> : vector<8x128xf32>
    %737 = tpu.matmul %736, %6, %cst_192 {dimension_numbers = #tpu.dot_dimension_numbers<[1], [0], [0], [1], [0, 0, 1, 1], [], []>} : vector<8x32xf32>, vector<32x128xf32>, vector<8x128xf32> -> vector<8x128xf32>
    %cst_193 = arith.constant dense<0.000000e+00> : vector<8x128xf32>
    %738 = tpu.matmul %736, %7, %cst_193 {dimension_numbers = #tpu.dot_dimension_numbers<[1], [0], [0], [1], [0, 0, 1, 1], [], []>} : vector<8x32xf32>, vector<32x128xf32>, vector<8x128xf32> -> vector<8x128xf32>
    %739 = arith.addf %738, %715 : vector<8x128xf32>
    %740 = arith.addf %739, %11 : vector<8x128xf32>
    %741 = arith.mulf %740, %17 : vector<8x128xf32>
    %742 = math.tanh %741 : vector<8x128xf32>
    %cst_194 = arith.constant 1.000000e+00 : f32
    %743 = vector.broadcast %cst_194 : f32 to vector<8x128xf32>
    %744 = arith.addf %742, %743 : vector<8x128xf32>
    %cst_195 = arith.constant 5.000000e-01 : f32
    %745 = vector.broadcast %cst_195 : f32 to vector<8x128xf32>
    %746 = arith.mulf %745, %744 : vector<8x128xf32>
    %747 = vector.extract_strided_slice %746 {offsets = [0, 0], sizes = [8, 32], strides = [1, 1]} : vector<8x128xf32> to vector<8x32xf32>
    %748 = vector.extract_strided_slice %746 {offsets = [0, 32], sizes = [8, 32], strides = [1, 1]} : vector<8x128xf32> to vector<8x32xf32>
    %749 = vector.extract_strided_slice %746 {offsets = [0, 64], sizes = [8, 32], strides = [1, 1]} : vector<8x128xf32> to vector<8x32xf32>
    %750 = vector.extract_strided_slice %742 {offsets = [0, 96], sizes = [8, 32], strides = [1, 1]} : vector<8x128xf32> to vector<8x32xf32>
    %751 = arith.mulf %748, %712 : vector<8x32xf32>
    %752 = arith.mulf %747, %750 : vector<8x32xf32>
    %753 = arith.addf %751, %752 : vector<8x32xf32>
    %754 = math.tanh %753 : vector<8x32xf32>
    %755 = arith.mulf %749, %754 : vector<8x32xf32>
    %cst_196 = arith.constant dense<0.000000e+00> : vector<8x128xf32>
    %756 = tpu.matmul %755, %8, %cst_196 {dimension_numbers = #tpu.dot_dimension_numbers<[1], [0], [0], [1], [0, 0, 1, 1], [], []>} : vector<8x32xf32>, vector<32x128xf32>, vector<8x128xf32> -> vector<8x128xf32>
    %c17 = arith.constant 17 : index
    %c0_197 = arith.constant 0 : index
    %c0_198 = arith.constant 0 : index
    %757 = vector.load %arg7[%c17, %c0_197, %c0_198] : memref<50x32x2xf32, #tpu.memory_space<vmem>>, vector<1x32x2xf32>
    %758 = vector.shape_cast %757 : vector<1x32x2xf32> to vector<32x2xf32>
    %cst_199 = arith.constant dense<0.000000e+00> : vector<8x2xf32>
    %759 = tpu.matmul %755, %758, %cst_199 {dimension_numbers = #tpu.dot_dimension_numbers<[1], [0], [0], [1], [0, 0, 1, 1], [], []>} : vector<8x32xf32>, vector<32x2xf32>, vector<8x2xf32> -> vector<8x2xf32>
    %760 = arith.addf %719, %759 : vector<8x2xf32>
    %761 = vector.extract_strided_slice %5 {offsets = [144, 0], sizes = [8, 128], strides = [1, 1]} : vector<400x128xf32> to vector<8x128xf32>
    %762 = arith.addf %761, %737 : vector<8x128xf32>
    %763 = arith.mulf %762, %17 : vector<8x128xf32>
    %764 = math.tanh %763 : vector<8x128xf32>
    %cst_200 = arith.constant 1.000000e+00 : f32
    %765 = vector.broadcast %cst_200 : f32 to vector<8x128xf32>
    %766 = arith.addf %764, %765 : vector<8x128xf32>
    %cst_201 = arith.constant 5.000000e-01 : f32
    %767 = vector.broadcast %cst_201 : f32 to vector<8x128xf32>
    %768 = arith.mulf %767, %766 : vector<8x128xf32>
    %769 = vector.extract_strided_slice %768 {offsets = [0, 0], sizes = [8, 32], strides = [1, 1]} : vector<8x128xf32> to vector<8x32xf32>
    %770 = vector.extract_strided_slice %768 {offsets = [0, 32], sizes = [8, 32], strides = [1, 1]} : vector<8x128xf32> to vector<8x32xf32>
    %771 = vector.extract_strided_slice %768 {offsets = [0, 64], sizes = [8, 32], strides = [1, 1]} : vector<8x128xf32> to vector<8x32xf32>
    %772 = vector.extract_strided_slice %764 {offsets = [0, 96], sizes = [8, 32], strides = [1, 1]} : vector<8x128xf32> to vector<8x32xf32>
    %773 = arith.mulf %770, %734 : vector<8x32xf32>
    %774 = arith.mulf %769, %772 : vector<8x32xf32>
    %775 = arith.addf %773, %774 : vector<8x32xf32>
    %776 = math.tanh %775 : vector<8x32xf32>
    %777 = arith.mulf %771, %776 : vector<8x32xf32>
    %cst_202 = arith.constant dense<0.000000e+00> : vector<8x128xf32>
    %778 = tpu.matmul %777, %6, %cst_202 {dimension_numbers = #tpu.dot_dimension_numbers<[1], [0], [0], [1], [0, 0, 1, 1], [], []>} : vector<8x32xf32>, vector<32x128xf32>, vector<8x128xf32> -> vector<8x128xf32>
    %cst_203 = arith.constant dense<0.000000e+00> : vector<8x128xf32>
    %779 = tpu.matmul %777, %7, %cst_203 {dimension_numbers = #tpu.dot_dimension_numbers<[1], [0], [0], [1], [0, 0, 1, 1], [], []>} : vector<8x32xf32>, vector<32x128xf32>, vector<8x128xf32> -> vector<8x128xf32>
    %780 = arith.addf %779, %756 : vector<8x128xf32>
    %781 = arith.addf %780, %11 : vector<8x128xf32>
    %782 = arith.mulf %781, %17 : vector<8x128xf32>
    %783 = math.tanh %782 : vector<8x128xf32>
    %cst_204 = arith.constant 1.000000e+00 : f32
    %784 = vector.broadcast %cst_204 : f32 to vector<8x128xf32>
    %785 = arith.addf %783, %784 : vector<8x128xf32>
    %cst_205 = arith.constant 5.000000e-01 : f32
    %786 = vector.broadcast %cst_205 : f32 to vector<8x128xf32>
    %787 = arith.mulf %786, %785 : vector<8x128xf32>
    %788 = vector.extract_strided_slice %787 {offsets = [0, 0], sizes = [8, 32], strides = [1, 1]} : vector<8x128xf32> to vector<8x32xf32>
    %789 = vector.extract_strided_slice %787 {offsets = [0, 32], sizes = [8, 32], strides = [1, 1]} : vector<8x128xf32> to vector<8x32xf32>
    %790 = vector.extract_strided_slice %787 {offsets = [0, 64], sizes = [8, 32], strides = [1, 1]} : vector<8x128xf32> to vector<8x32xf32>
    %791 = vector.extract_strided_slice %783 {offsets = [0, 96], sizes = [8, 32], strides = [1, 1]} : vector<8x128xf32> to vector<8x32xf32>
    %792 = arith.mulf %789, %753 : vector<8x32xf32>
    %793 = arith.mulf %788, %791 : vector<8x32xf32>
    %794 = arith.addf %792, %793 : vector<8x32xf32>
    %795 = math.tanh %794 : vector<8x32xf32>
    %796 = arith.mulf %790, %795 : vector<8x32xf32>
    %cst_206 = arith.constant dense<0.000000e+00> : vector<8x128xf32>
    %797 = tpu.matmul %796, %8, %cst_206 {dimension_numbers = #tpu.dot_dimension_numbers<[1], [0], [0], [1], [0, 0, 1, 1], [], []>} : vector<8x32xf32>, vector<32x128xf32>, vector<8x128xf32> -> vector<8x128xf32>
    %c18 = arith.constant 18 : index
    %c0_207 = arith.constant 0 : index
    %c0_208 = arith.constant 0 : index
    %798 = vector.load %arg7[%c18, %c0_207, %c0_208] : memref<50x32x2xf32, #tpu.memory_space<vmem>>, vector<1x32x2xf32>
    %799 = vector.shape_cast %798 : vector<1x32x2xf32> to vector<32x2xf32>
    %cst_209 = arith.constant dense<0.000000e+00> : vector<8x2xf32>
    %800 = tpu.matmul %796, %799, %cst_209 {dimension_numbers = #tpu.dot_dimension_numbers<[1], [0], [0], [1], [0, 0, 1, 1], [], []>} : vector<8x32xf32>, vector<32x2xf32>, vector<8x2xf32> -> vector<8x2xf32>
    %801 = arith.addf %760, %800 : vector<8x2xf32>
    %802 = vector.extract_strided_slice %5 {offsets = [152, 0], sizes = [8, 128], strides = [1, 1]} : vector<400x128xf32> to vector<8x128xf32>
    %803 = arith.addf %802, %778 : vector<8x128xf32>
    %804 = arith.mulf %803, %17 : vector<8x128xf32>
    %805 = math.tanh %804 : vector<8x128xf32>
    %cst_210 = arith.constant 1.000000e+00 : f32
    %806 = vector.broadcast %cst_210 : f32 to vector<8x128xf32>
    %807 = arith.addf %805, %806 : vector<8x128xf32>
    %cst_211 = arith.constant 5.000000e-01 : f32
    %808 = vector.broadcast %cst_211 : f32 to vector<8x128xf32>
    %809 = arith.mulf %808, %807 : vector<8x128xf32>
    %810 = vector.extract_strided_slice %809 {offsets = [0, 0], sizes = [8, 32], strides = [1, 1]} : vector<8x128xf32> to vector<8x32xf32>
    %811 = vector.extract_strided_slice %809 {offsets = [0, 32], sizes = [8, 32], strides = [1, 1]} : vector<8x128xf32> to vector<8x32xf32>
    %812 = vector.extract_strided_slice %809 {offsets = [0, 64], sizes = [8, 32], strides = [1, 1]} : vector<8x128xf32> to vector<8x32xf32>
    %813 = vector.extract_strided_slice %805 {offsets = [0, 96], sizes = [8, 32], strides = [1, 1]} : vector<8x128xf32> to vector<8x32xf32>
    %814 = arith.mulf %811, %775 : vector<8x32xf32>
    %815 = arith.mulf %810, %813 : vector<8x32xf32>
    %816 = arith.addf %814, %815 : vector<8x32xf32>
    %817 = math.tanh %816 : vector<8x32xf32>
    %818 = arith.mulf %812, %817 : vector<8x32xf32>
    %cst_212 = arith.constant dense<0.000000e+00> : vector<8x128xf32>
    %819 = tpu.matmul %818, %6, %cst_212 {dimension_numbers = #tpu.dot_dimension_numbers<[1], [0], [0], [1], [0, 0, 1, 1], [], []>} : vector<8x32xf32>, vector<32x128xf32>, vector<8x128xf32> -> vector<8x128xf32>
    %cst_213 = arith.constant dense<0.000000e+00> : vector<8x128xf32>
    %820 = tpu.matmul %818, %7, %cst_213 {dimension_numbers = #tpu.dot_dimension_numbers<[1], [0], [0], [1], [0, 0, 1, 1], [], []>} : vector<8x32xf32>, vector<32x128xf32>, vector<8x128xf32> -> vector<8x128xf32>
    %821 = arith.addf %820, %797 : vector<8x128xf32>
    %822 = arith.addf %821, %11 : vector<8x128xf32>
    %823 = arith.mulf %822, %17 : vector<8x128xf32>
    %824 = math.tanh %823 : vector<8x128xf32>
    %cst_214 = arith.constant 1.000000e+00 : f32
    %825 = vector.broadcast %cst_214 : f32 to vector<8x128xf32>
    %826 = arith.addf %824, %825 : vector<8x128xf32>
    %cst_215 = arith.constant 5.000000e-01 : f32
    %827 = vector.broadcast %cst_215 : f32 to vector<8x128xf32>
    %828 = arith.mulf %827, %826 : vector<8x128xf32>
    %829 = vector.extract_strided_slice %828 {offsets = [0, 0], sizes = [8, 32], strides = [1, 1]} : vector<8x128xf32> to vector<8x32xf32>
    %830 = vector.extract_strided_slice %828 {offsets = [0, 32], sizes = [8, 32], strides = [1, 1]} : vector<8x128xf32> to vector<8x32xf32>
    %831 = vector.extract_strided_slice %828 {offsets = [0, 64], sizes = [8, 32], strides = [1, 1]} : vector<8x128xf32> to vector<8x32xf32>
    %832 = vector.extract_strided_slice %824 {offsets = [0, 96], sizes = [8, 32], strides = [1, 1]} : vector<8x128xf32> to vector<8x32xf32>
    %833 = arith.mulf %830, %794 : vector<8x32xf32>
    %834 = arith.mulf %829, %832 : vector<8x32xf32>
    %835 = arith.addf %833, %834 : vector<8x32xf32>
    %836 = math.tanh %835 : vector<8x32xf32>
    %837 = arith.mulf %831, %836 : vector<8x32xf32>
    %cst_216 = arith.constant dense<0.000000e+00> : vector<8x128xf32>
    %838 = tpu.matmul %837, %8, %cst_216 {dimension_numbers = #tpu.dot_dimension_numbers<[1], [0], [0], [1], [0, 0, 1, 1], [], []>} : vector<8x32xf32>, vector<32x128xf32>, vector<8x128xf32> -> vector<8x128xf32>
    %c19 = arith.constant 19 : index
    %c0_217 = arith.constant 0 : index
    %c0_218 = arith.constant 0 : index
    %839 = vector.load %arg7[%c19, %c0_217, %c0_218] : memref<50x32x2xf32, #tpu.memory_space<vmem>>, vector<1x32x2xf32>
    %840 = vector.shape_cast %839 : vector<1x32x2xf32> to vector<32x2xf32>
    %cst_219 = arith.constant dense<0.000000e+00> : vector<8x2xf32>
    %841 = tpu.matmul %837, %840, %cst_219 {dimension_numbers = #tpu.dot_dimension_numbers<[1], [0], [0], [1], [0, 0, 1, 1], [], []>} : vector<8x32xf32>, vector<32x2xf32>, vector<8x2xf32> -> vector<8x2xf32>
    %842 = arith.addf %801, %841 : vector<8x2xf32>
    %843 = vector.extract_strided_slice %5 {offsets = [160, 0], sizes = [8, 128], strides = [1, 1]} : vector<400x128xf32> to vector<8x128xf32>
    %844 = arith.addf %843, %819 : vector<8x128xf32>
    %845 = arith.mulf %844, %17 : vector<8x128xf32>
    %846 = math.tanh %845 : vector<8x128xf32>
    %cst_220 = arith.constant 1.000000e+00 : f32
    %847 = vector.broadcast %cst_220 : f32 to vector<8x128xf32>
    %848 = arith.addf %846, %847 : vector<8x128xf32>
    %cst_221 = arith.constant 5.000000e-01 : f32
    %849 = vector.broadcast %cst_221 : f32 to vector<8x128xf32>
    %850 = arith.mulf %849, %848 : vector<8x128xf32>
    %851 = vector.extract_strided_slice %850 {offsets = [0, 0], sizes = [8, 32], strides = [1, 1]} : vector<8x128xf32> to vector<8x32xf32>
    %852 = vector.extract_strided_slice %850 {offsets = [0, 32], sizes = [8, 32], strides = [1, 1]} : vector<8x128xf32> to vector<8x32xf32>
    %853 = vector.extract_strided_slice %850 {offsets = [0, 64], sizes = [8, 32], strides = [1, 1]} : vector<8x128xf32> to vector<8x32xf32>
    %854 = vector.extract_strided_slice %846 {offsets = [0, 96], sizes = [8, 32], strides = [1, 1]} : vector<8x128xf32> to vector<8x32xf32>
    %855 = arith.mulf %852, %816 : vector<8x32xf32>
    %856 = arith.mulf %851, %854 : vector<8x32xf32>
    %857 = arith.addf %855, %856 : vector<8x32xf32>
    %858 = math.tanh %857 : vector<8x32xf32>
    %859 = arith.mulf %853, %858 : vector<8x32xf32>
    %cst_222 = arith.constant dense<0.000000e+00> : vector<8x128xf32>
    %860 = tpu.matmul %859, %6, %cst_222 {dimension_numbers = #tpu.dot_dimension_numbers<[1], [0], [0], [1], [0, 0, 1, 1], [], []>} : vector<8x32xf32>, vector<32x128xf32>, vector<8x128xf32> -> vector<8x128xf32>
    %cst_223 = arith.constant dense<0.000000e+00> : vector<8x128xf32>
    %861 = tpu.matmul %859, %7, %cst_223 {dimension_numbers = #tpu.dot_dimension_numbers<[1], [0], [0], [1], [0, 0, 1, 1], [], []>} : vector<8x32xf32>, vector<32x128xf32>, vector<8x128xf32> -> vector<8x128xf32>
    %862 = arith.addf %861, %838 : vector<8x128xf32>
    %863 = arith.addf %862, %11 : vector<8x128xf32>
    %864 = arith.mulf %863, %17 : vector<8x128xf32>
    %865 = math.tanh %864 : vector<8x128xf32>
    %cst_224 = arith.constant 1.000000e+00 : f32
    %866 = vector.broadcast %cst_224 : f32 to vector<8x128xf32>
    %867 = arith.addf %865, %866 : vector<8x128xf32>
    %cst_225 = arith.constant 5.000000e-01 : f32
    %868 = vector.broadcast %cst_225 : f32 to vector<8x128xf32>
    %869 = arith.mulf %868, %867 : vector<8x128xf32>
    %870 = vector.extract_strided_slice %869 {offsets = [0, 0], sizes = [8, 32], strides = [1, 1]} : vector<8x128xf32> to vector<8x32xf32>
    %871 = vector.extract_strided_slice %869 {offsets = [0, 32], sizes = [8, 32], strides = [1, 1]} : vector<8x128xf32> to vector<8x32xf32>
    %872 = vector.extract_strided_slice %869 {offsets = [0, 64], sizes = [8, 32], strides = [1, 1]} : vector<8x128xf32> to vector<8x32xf32>
    %873 = vector.extract_strided_slice %865 {offsets = [0, 96], sizes = [8, 32], strides = [1, 1]} : vector<8x128xf32> to vector<8x32xf32>
    %874 = arith.mulf %871, %835 : vector<8x32xf32>
    %875 = arith.mulf %870, %873 : vector<8x32xf32>
    %876 = arith.addf %874, %875 : vector<8x32xf32>
    %877 = math.tanh %876 : vector<8x32xf32>
    %878 = arith.mulf %872, %877 : vector<8x32xf32>
    %cst_226 = arith.constant dense<0.000000e+00> : vector<8x128xf32>
    %879 = tpu.matmul %878, %8, %cst_226 {dimension_numbers = #tpu.dot_dimension_numbers<[1], [0], [0], [1], [0, 0, 1, 1], [], []>} : vector<8x32xf32>, vector<32x128xf32>, vector<8x128xf32> -> vector<8x128xf32>
    %c20 = arith.constant 20 : index
    %c0_227 = arith.constant 0 : index
    %c0_228 = arith.constant 0 : index
    %880 = vector.load %arg7[%c20, %c0_227, %c0_228] : memref<50x32x2xf32, #tpu.memory_space<vmem>>, vector<1x32x2xf32>
    %881 = vector.shape_cast %880 : vector<1x32x2xf32> to vector<32x2xf32>
    %cst_229 = arith.constant dense<0.000000e+00> : vector<8x2xf32>
    %882 = tpu.matmul %878, %881, %cst_229 {dimension_numbers = #tpu.dot_dimension_numbers<[1], [0], [0], [1], [0, 0, 1, 1], [], []>} : vector<8x32xf32>, vector<32x2xf32>, vector<8x2xf32> -> vector<8x2xf32>
    %883 = arith.addf %842, %882 : vector<8x2xf32>
    %884 = vector.extract_strided_slice %5 {offsets = [168, 0], sizes = [8, 128], strides = [1, 1]} : vector<400x128xf32> to vector<8x128xf32>
    %885 = arith.addf %884, %860 : vector<8x128xf32>
    %886 = arith.mulf %885, %17 : vector<8x128xf32>
    %887 = math.tanh %886 : vector<8x128xf32>
    %cst_230 = arith.constant 1.000000e+00 : f32
    %888 = vector.broadcast %cst_230 : f32 to vector<8x128xf32>
    %889 = arith.addf %887, %888 : vector<8x128xf32>
    %cst_231 = arith.constant 5.000000e-01 : f32
    %890 = vector.broadcast %cst_231 : f32 to vector<8x128xf32>
    %891 = arith.mulf %890, %889 : vector<8x128xf32>
    %892 = vector.extract_strided_slice %891 {offsets = [0, 0], sizes = [8, 32], strides = [1, 1]} : vector<8x128xf32> to vector<8x32xf32>
    %893 = vector.extract_strided_slice %891 {offsets = [0, 32], sizes = [8, 32], strides = [1, 1]} : vector<8x128xf32> to vector<8x32xf32>
    %894 = vector.extract_strided_slice %891 {offsets = [0, 64], sizes = [8, 32], strides = [1, 1]} : vector<8x128xf32> to vector<8x32xf32>
    %895 = vector.extract_strided_slice %887 {offsets = [0, 96], sizes = [8, 32], strides = [1, 1]} : vector<8x128xf32> to vector<8x32xf32>
    %896 = arith.mulf %893, %857 : vector<8x32xf32>
    %897 = arith.mulf %892, %895 : vector<8x32xf32>
    %898 = arith.addf %896, %897 : vector<8x32xf32>
    %899 = math.tanh %898 : vector<8x32xf32>
    %900 = arith.mulf %894, %899 : vector<8x32xf32>
    %cst_232 = arith.constant dense<0.000000e+00> : vector<8x128xf32>
    %901 = tpu.matmul %900, %6, %cst_232 {dimension_numbers = #tpu.dot_dimension_numbers<[1], [0], [0], [1], [0, 0, 1, 1], [], []>} : vector<8x32xf32>, vector<32x128xf32>, vector<8x128xf32> -> vector<8x128xf32>
    %cst_233 = arith.constant dense<0.000000e+00> : vector<8x128xf32>
    %902 = tpu.matmul %900, %7, %cst_233 {dimension_numbers = #tpu.dot_dimension_numbers<[1], [0], [0], [1], [0, 0, 1, 1], [], []>} : vector<8x32xf32>, vector<32x128xf32>, vector<8x128xf32> -> vector<8x128xf32>
    %903 = arith.addf %902, %879 : vector<8x128xf32>
    %904 = arith.addf %903, %11 : vector<8x128xf32>
    %905 = arith.mulf %904, %17 : vector<8x128xf32>
    %906 = math.tanh %905 : vector<8x128xf32>
    %cst_234 = arith.constant 1.000000e+00 : f32
    %907 = vector.broadcast %cst_234 : f32 to vector<8x128xf32>
    %908 = arith.addf %906, %907 : vector<8x128xf32>
    %cst_235 = arith.constant 5.000000e-01 : f32
    %909 = vector.broadcast %cst_235 : f32 to vector<8x128xf32>
    %910 = arith.mulf %909, %908 : vector<8x128xf32>
    %911 = vector.extract_strided_slice %910 {offsets = [0, 0], sizes = [8, 32], strides = [1, 1]} : vector<8x128xf32> to vector<8x32xf32>
    %912 = vector.extract_strided_slice %910 {offsets = [0, 32], sizes = [8, 32], strides = [1, 1]} : vector<8x128xf32> to vector<8x32xf32>
    %913 = vector.extract_strided_slice %910 {offsets = [0, 64], sizes = [8, 32], strides = [1, 1]} : vector<8x128xf32> to vector<8x32xf32>
    %914 = vector.extract_strided_slice %906 {offsets = [0, 96], sizes = [8, 32], strides = [1, 1]} : vector<8x128xf32> to vector<8x32xf32>
    %915 = arith.mulf %912, %876 : vector<8x32xf32>
    %916 = arith.mulf %911, %914 : vector<8x32xf32>
    %917 = arith.addf %915, %916 : vector<8x32xf32>
    %918 = math.tanh %917 : vector<8x32xf32>
    %919 = arith.mulf %913, %918 : vector<8x32xf32>
    %cst_236 = arith.constant dense<0.000000e+00> : vector<8x128xf32>
    %920 = tpu.matmul %919, %8, %cst_236 {dimension_numbers = #tpu.dot_dimension_numbers<[1], [0], [0], [1], [0, 0, 1, 1], [], []>} : vector<8x32xf32>, vector<32x128xf32>, vector<8x128xf32> -> vector<8x128xf32>
    %c21 = arith.constant 21 : index
    %c0_237 = arith.constant 0 : index
    %c0_238 = arith.constant 0 : index
    %921 = vector.load %arg7[%c21, %c0_237, %c0_238] : memref<50x32x2xf32, #tpu.memory_space<vmem>>, vector<1x32x2xf32>
    %922 = vector.shape_cast %921 : vector<1x32x2xf32> to vector<32x2xf32>
    %cst_239 = arith.constant dense<0.000000e+00> : vector<8x2xf32>
    %923 = tpu.matmul %919, %922, %cst_239 {dimension_numbers = #tpu.dot_dimension_numbers<[1], [0], [0], [1], [0, 0, 1, 1], [], []>} : vector<8x32xf32>, vector<32x2xf32>, vector<8x2xf32> -> vector<8x2xf32>
    %924 = arith.addf %883, %923 : vector<8x2xf32>
    %925 = vector.extract_strided_slice %5 {offsets = [176, 0], sizes = [8, 128], strides = [1, 1]} : vector<400x128xf32> to vector<8x128xf32>
    %926 = arith.addf %925, %901 : vector<8x128xf32>
    %927 = arith.mulf %926, %17 : vector<8x128xf32>
    %928 = math.tanh %927 : vector<8x128xf32>
    %cst_240 = arith.constant 1.000000e+00 : f32
    %929 = vector.broadcast %cst_240 : f32 to vector<8x128xf32>
    %930 = arith.addf %928, %929 : vector<8x128xf32>
    %cst_241 = arith.constant 5.000000e-01 : f32
    %931 = vector.broadcast %cst_241 : f32 to vector<8x128xf32>
    %932 = arith.mulf %931, %930 : vector<8x128xf32>
    %933 = vector.extract_strided_slice %932 {offsets = [0, 0], sizes = [8, 32], strides = [1, 1]} : vector<8x128xf32> to vector<8x32xf32>
    %934 = vector.extract_strided_slice %932 {offsets = [0, 32], sizes = [8, 32], strides = [1, 1]} : vector<8x128xf32> to vector<8x32xf32>
    %935 = vector.extract_strided_slice %932 {offsets = [0, 64], sizes = [8, 32], strides = [1, 1]} : vector<8x128xf32> to vector<8x32xf32>
    %936 = vector.extract_strided_slice %928 {offsets = [0, 96], sizes = [8, 32], strides = [1, 1]} : vector<8x128xf32> to vector<8x32xf32>
    %937 = arith.mulf %934, %898 : vector<8x32xf32>
    %938 = arith.mulf %933, %936 : vector<8x32xf32>
    %939 = arith.addf %937, %938 : vector<8x32xf32>
    %940 = math.tanh %939 : vector<8x32xf32>
    %941 = arith.mulf %935, %940 : vector<8x32xf32>
    %cst_242 = arith.constant dense<0.000000e+00> : vector<8x128xf32>
    %942 = tpu.matmul %941, %6, %cst_242 {dimension_numbers = #tpu.dot_dimension_numbers<[1], [0], [0], [1], [0, 0, 1, 1], [], []>} : vector<8x32xf32>, vector<32x128xf32>, vector<8x128xf32> -> vector<8x128xf32>
    %cst_243 = arith.constant dense<0.000000e+00> : vector<8x128xf32>
    %943 = tpu.matmul %941, %7, %cst_243 {dimension_numbers = #tpu.dot_dimension_numbers<[1], [0], [0], [1], [0, 0, 1, 1], [], []>} : vector<8x32xf32>, vector<32x128xf32>, vector<8x128xf32> -> vector<8x128xf32>
    %944 = arith.addf %943, %920 : vector<8x128xf32>
    %945 = arith.addf %944, %11 : vector<8x128xf32>
    %946 = arith.mulf %945, %17 : vector<8x128xf32>
    %947 = math.tanh %946 : vector<8x128xf32>
    %cst_244 = arith.constant 1.000000e+00 : f32
    %948 = vector.broadcast %cst_244 : f32 to vector<8x128xf32>
    %949 = arith.addf %947, %948 : vector<8x128xf32>
    %cst_245 = arith.constant 5.000000e-01 : f32
    %950 = vector.broadcast %cst_245 : f32 to vector<8x128xf32>
    %951 = arith.mulf %950, %949 : vector<8x128xf32>
    %952 = vector.extract_strided_slice %951 {offsets = [0, 0], sizes = [8, 32], strides = [1, 1]} : vector<8x128xf32> to vector<8x32xf32>
    %953 = vector.extract_strided_slice %951 {offsets = [0, 32], sizes = [8, 32], strides = [1, 1]} : vector<8x128xf32> to vector<8x32xf32>
    %954 = vector.extract_strided_slice %951 {offsets = [0, 64], sizes = [8, 32], strides = [1, 1]} : vector<8x128xf32> to vector<8x32xf32>
    %955 = vector.extract_strided_slice %947 {offsets = [0, 96], sizes = [8, 32], strides = [1, 1]} : vector<8x128xf32> to vector<8x32xf32>
    %956 = arith.mulf %953, %917 : vector<8x32xf32>
    %957 = arith.mulf %952, %955 : vector<8x32xf32>
    %958 = arith.addf %956, %957 : vector<8x32xf32>
    %959 = math.tanh %958 : vector<8x32xf32>
    %960 = arith.mulf %954, %959 : vector<8x32xf32>
    %cst_246 = arith.constant dense<0.000000e+00> : vector<8x128xf32>
    %961 = tpu.matmul %960, %8, %cst_246 {dimension_numbers = #tpu.dot_dimension_numbers<[1], [0], [0], [1], [0, 0, 1, 1], [], []>} : vector<8x32xf32>, vector<32x128xf32>, vector<8x128xf32> -> vector<8x128xf32>
    %c22 = arith.constant 22 : index
    %c0_247 = arith.constant 0 : index
    %c0_248 = arith.constant 0 : index
    %962 = vector.load %arg7[%c22, %c0_247, %c0_248] : memref<50x32x2xf32, #tpu.memory_space<vmem>>, vector<1x32x2xf32>
    %963 = vector.shape_cast %962 : vector<1x32x2xf32> to vector<32x2xf32>
    %cst_249 = arith.constant dense<0.000000e+00> : vector<8x2xf32>
    %964 = tpu.matmul %960, %963, %cst_249 {dimension_numbers = #tpu.dot_dimension_numbers<[1], [0], [0], [1], [0, 0, 1, 1], [], []>} : vector<8x32xf32>, vector<32x2xf32>, vector<8x2xf32> -> vector<8x2xf32>
    %965 = arith.addf %924, %964 : vector<8x2xf32>
    %966 = vector.extract_strided_slice %5 {offsets = [184, 0], sizes = [8, 128], strides = [1, 1]} : vector<400x128xf32> to vector<8x128xf32>
    %967 = arith.addf %966, %942 : vector<8x128xf32>
    %968 = arith.mulf %967, %17 : vector<8x128xf32>
    %969 = math.tanh %968 : vector<8x128xf32>
    %cst_250 = arith.constant 1.000000e+00 : f32
    %970 = vector.broadcast %cst_250 : f32 to vector<8x128xf32>
    %971 = arith.addf %969, %970 : vector<8x128xf32>
    %cst_251 = arith.constant 5.000000e-01 : f32
    %972 = vector.broadcast %cst_251 : f32 to vector<8x128xf32>
    %973 = arith.mulf %972, %971 : vector<8x128xf32>
    %974 = vector.extract_strided_slice %973 {offsets = [0, 0], sizes = [8, 32], strides = [1, 1]} : vector<8x128xf32> to vector<8x32xf32>
    %975 = vector.extract_strided_slice %973 {offsets = [0, 32], sizes = [8, 32], strides = [1, 1]} : vector<8x128xf32> to vector<8x32xf32>
    %976 = vector.extract_strided_slice %973 {offsets = [0, 64], sizes = [8, 32], strides = [1, 1]} : vector<8x128xf32> to vector<8x32xf32>
    %977 = vector.extract_strided_slice %969 {offsets = [0, 96], sizes = [8, 32], strides = [1, 1]} : vector<8x128xf32> to vector<8x32xf32>
    %978 = arith.mulf %975, %939 : vector<8x32xf32>
    %979 = arith.mulf %974, %977 : vector<8x32xf32>
    %980 = arith.addf %978, %979 : vector<8x32xf32>
    %981 = math.tanh %980 : vector<8x32xf32>
    %982 = arith.mulf %976, %981 : vector<8x32xf32>
    %cst_252 = arith.constant dense<0.000000e+00> : vector<8x128xf32>
    %983 = tpu.matmul %982, %6, %cst_252 {dimension_numbers = #tpu.dot_dimension_numbers<[1], [0], [0], [1], [0, 0, 1, 1], [], []>} : vector<8x32xf32>, vector<32x128xf32>, vector<8x128xf32> -> vector<8x128xf32>
    %cst_253 = arith.constant dense<0.000000e+00> : vector<8x128xf32>
    %984 = tpu.matmul %982, %7, %cst_253 {dimension_numbers = #tpu.dot_dimension_numbers<[1], [0], [0], [1], [0, 0, 1, 1], [], []>} : vector<8x32xf32>, vector<32x128xf32>, vector<8x128xf32> -> vector<8x128xf32>
    %985 = arith.addf %984, %961 : vector<8x128xf32>
    %986 = arith.addf %985, %11 : vector<8x128xf32>
    %987 = arith.mulf %986, %17 : vector<8x128xf32>
    %988 = math.tanh %987 : vector<8x128xf32>
    %cst_254 = arith.constant 1.000000e+00 : f32
    %989 = vector.broadcast %cst_254 : f32 to vector<8x128xf32>
    %990 = arith.addf %988, %989 : vector<8x128xf32>
    %cst_255 = arith.constant 5.000000e-01 : f32
    %991 = vector.broadcast %cst_255 : f32 to vector<8x128xf32>
    %992 = arith.mulf %991, %990 : vector<8x128xf32>
    %993 = vector.extract_strided_slice %992 {offsets = [0, 0], sizes = [8, 32], strides = [1, 1]} : vector<8x128xf32> to vector<8x32xf32>
    %994 = vector.extract_strided_slice %992 {offsets = [0, 32], sizes = [8, 32], strides = [1, 1]} : vector<8x128xf32> to vector<8x32xf32>
    %995 = vector.extract_strided_slice %992 {offsets = [0, 64], sizes = [8, 32], strides = [1, 1]} : vector<8x128xf32> to vector<8x32xf32>
    %996 = vector.extract_strided_slice %988 {offsets = [0, 96], sizes = [8, 32], strides = [1, 1]} : vector<8x128xf32> to vector<8x32xf32>
    %997 = arith.mulf %994, %958 : vector<8x32xf32>
    %998 = arith.mulf %993, %996 : vector<8x32xf32>
    %999 = arith.addf %997, %998 : vector<8x32xf32>
    %1000 = math.tanh %999 : vector<8x32xf32>
    %1001 = arith.mulf %995, %1000 : vector<8x32xf32>
    %cst_256 = arith.constant dense<0.000000e+00> : vector<8x128xf32>
    %1002 = tpu.matmul %1001, %8, %cst_256 {dimension_numbers = #tpu.dot_dimension_numbers<[1], [0], [0], [1], [0, 0, 1, 1], [], []>} : vector<8x32xf32>, vector<32x128xf32>, vector<8x128xf32> -> vector<8x128xf32>
    %c23 = arith.constant 23 : index
    %c0_257 = arith.constant 0 : index
    %c0_258 = arith.constant 0 : index
    %1003 = vector.load %arg7[%c23, %c0_257, %c0_258] : memref<50x32x2xf32, #tpu.memory_space<vmem>>, vector<1x32x2xf32>
    %1004 = vector.shape_cast %1003 : vector<1x32x2xf32> to vector<32x2xf32>
    %cst_259 = arith.constant dense<0.000000e+00> : vector<8x2xf32>
    %1005 = tpu.matmul %1001, %1004, %cst_259 {dimension_numbers = #tpu.dot_dimension_numbers<[1], [0], [0], [1], [0, 0, 1, 1], [], []>} : vector<8x32xf32>, vector<32x2xf32>, vector<8x2xf32> -> vector<8x2xf32>
    %1006 = arith.addf %965, %1005 : vector<8x2xf32>
    %1007 = vector.extract_strided_slice %5 {offsets = [192, 0], sizes = [8, 128], strides = [1, 1]} : vector<400x128xf32> to vector<8x128xf32>
    %1008 = arith.addf %1007, %983 : vector<8x128xf32>
    %1009 = arith.mulf %1008, %17 : vector<8x128xf32>
    %1010 = math.tanh %1009 : vector<8x128xf32>
    %cst_260 = arith.constant 1.000000e+00 : f32
    %1011 = vector.broadcast %cst_260 : f32 to vector<8x128xf32>
    %1012 = arith.addf %1010, %1011 : vector<8x128xf32>
    %cst_261 = arith.constant 5.000000e-01 : f32
    %1013 = vector.broadcast %cst_261 : f32 to vector<8x128xf32>
    %1014 = arith.mulf %1013, %1012 : vector<8x128xf32>
    %1015 = vector.extract_strided_slice %1014 {offsets = [0, 0], sizes = [8, 32], strides = [1, 1]} : vector<8x128xf32> to vector<8x32xf32>
    %1016 = vector.extract_strided_slice %1014 {offsets = [0, 32], sizes = [8, 32], strides = [1, 1]} : vector<8x128xf32> to vector<8x32xf32>
    %1017 = vector.extract_strided_slice %1014 {offsets = [0, 64], sizes = [8, 32], strides = [1, 1]} : vector<8x128xf32> to vector<8x32xf32>
    %1018 = vector.extract_strided_slice %1010 {offsets = [0, 96], sizes = [8, 32], strides = [1, 1]} : vector<8x128xf32> to vector<8x32xf32>
    %1019 = arith.mulf %1016, %980 : vector<8x32xf32>
    %1020 = arith.mulf %1015, %1018 : vector<8x32xf32>
    %1021 = arith.addf %1019, %1020 : vector<8x32xf32>
    %1022 = math.tanh %1021 : vector<8x32xf32>
    %1023 = arith.mulf %1017, %1022 : vector<8x32xf32>
    %cst_262 = arith.constant dense<0.000000e+00> : vector<8x128xf32>
    %1024 = tpu.matmul %1023, %6, %cst_262 {dimension_numbers = #tpu.dot_dimension_numbers<[1], [0], [0], [1], [0, 0, 1, 1], [], []>} : vector<8x32xf32>, vector<32x128xf32>, vector<8x128xf32> -> vector<8x128xf32>
    %cst_263 = arith.constant dense<0.000000e+00> : vector<8x128xf32>
    %1025 = tpu.matmul %1023, %7, %cst_263 {dimension_numbers = #tpu.dot_dimension_numbers<[1], [0], [0], [1], [0, 0, 1, 1], [], []>} : vector<8x32xf32>, vector<32x128xf32>, vector<8x128xf32> -> vector<8x128xf32>
    %1026 = arith.addf %1025, %1002 : vector<8x128xf32>
    %1027 = arith.addf %1026, %11 : vector<8x128xf32>
    %1028 = arith.mulf %1027, %17 : vector<8x128xf32>
    %1029 = math.tanh %1028 : vector<8x128xf32>
    %cst_264 = arith.constant 1.000000e+00 : f32
    %1030 = vector.broadcast %cst_264 : f32 to vector<8x128xf32>
    %1031 = arith.addf %1029, %1030 : vector<8x128xf32>
    %cst_265 = arith.constant 5.000000e-01 : f32
    %1032 = vector.broadcast %cst_265 : f32 to vector<8x128xf32>
    %1033 = arith.mulf %1032, %1031 : vector<8x128xf32>
    %1034 = vector.extract_strided_slice %1033 {offsets = [0, 0], sizes = [8, 32], strides = [1, 1]} : vector<8x128xf32> to vector<8x32xf32>
    %1035 = vector.extract_strided_slice %1033 {offsets = [0, 32], sizes = [8, 32], strides = [1, 1]} : vector<8x128xf32> to vector<8x32xf32>
    %1036 = vector.extract_strided_slice %1033 {offsets = [0, 64], sizes = [8, 32], strides = [1, 1]} : vector<8x128xf32> to vector<8x32xf32>
    %1037 = vector.extract_strided_slice %1029 {offsets = [0, 96], sizes = [8, 32], strides = [1, 1]} : vector<8x128xf32> to vector<8x32xf32>
    %1038 = arith.mulf %1035, %999 : vector<8x32xf32>
    %1039 = arith.mulf %1034, %1037 : vector<8x32xf32>
    %1040 = arith.addf %1038, %1039 : vector<8x32xf32>
    %1041 = math.tanh %1040 : vector<8x32xf32>
    %1042 = arith.mulf %1036, %1041 : vector<8x32xf32>
    %cst_266 = arith.constant dense<0.000000e+00> : vector<8x128xf32>
    %1043 = tpu.matmul %1042, %8, %cst_266 {dimension_numbers = #tpu.dot_dimension_numbers<[1], [0], [0], [1], [0, 0, 1, 1], [], []>} : vector<8x32xf32>, vector<32x128xf32>, vector<8x128xf32> -> vector<8x128xf32>
    %c24 = arith.constant 24 : index
    %c0_267 = arith.constant 0 : index
    %c0_268 = arith.constant 0 : index
    %1044 = vector.load %arg7[%c24, %c0_267, %c0_268] : memref<50x32x2xf32, #tpu.memory_space<vmem>>, vector<1x32x2xf32>
    %1045 = vector.shape_cast %1044 : vector<1x32x2xf32> to vector<32x2xf32>
    %cst_269 = arith.constant dense<0.000000e+00> : vector<8x2xf32>
    %1046 = tpu.matmul %1042, %1045, %cst_269 {dimension_numbers = #tpu.dot_dimension_numbers<[1], [0], [0], [1], [0, 0, 1, 1], [], []>} : vector<8x32xf32>, vector<32x2xf32>, vector<8x2xf32> -> vector<8x2xf32>
    %1047 = arith.addf %1006, %1046 : vector<8x2xf32>
    %1048 = vector.extract_strided_slice %5 {offsets = [200, 0], sizes = [8, 128], strides = [1, 1]} : vector<400x128xf32> to vector<8x128xf32>
    %1049 = arith.addf %1048, %1024 : vector<8x128xf32>
    %1050 = arith.mulf %1049, %17 : vector<8x128xf32>
    %1051 = math.tanh %1050 : vector<8x128xf32>
    %cst_270 = arith.constant 1.000000e+00 : f32
    %1052 = vector.broadcast %cst_270 : f32 to vector<8x128xf32>
    %1053 = arith.addf %1051, %1052 : vector<8x128xf32>
    %cst_271 = arith.constant 5.000000e-01 : f32
    %1054 = vector.broadcast %cst_271 : f32 to vector<8x128xf32>
    %1055 = arith.mulf %1054, %1053 : vector<8x128xf32>
    %1056 = vector.extract_strided_slice %1055 {offsets = [0, 0], sizes = [8, 32], strides = [1, 1]} : vector<8x128xf32> to vector<8x32xf32>
    %1057 = vector.extract_strided_slice %1055 {offsets = [0, 32], sizes = [8, 32], strides = [1, 1]} : vector<8x128xf32> to vector<8x32xf32>
    %1058 = vector.extract_strided_slice %1055 {offsets = [0, 64], sizes = [8, 32], strides = [1, 1]} : vector<8x128xf32> to vector<8x32xf32>
    %1059 = vector.extract_strided_slice %1051 {offsets = [0, 96], sizes = [8, 32], strides = [1, 1]} : vector<8x128xf32> to vector<8x32xf32>
    %1060 = arith.mulf %1057, %1021 : vector<8x32xf32>
    %1061 = arith.mulf %1056, %1059 : vector<8x32xf32>
    %1062 = arith.addf %1060, %1061 : vector<8x32xf32>
    %1063 = math.tanh %1062 : vector<8x32xf32>
    %1064 = arith.mulf %1058, %1063 : vector<8x32xf32>
    %cst_272 = arith.constant dense<0.000000e+00> : vector<8x128xf32>
    %1065 = tpu.matmul %1064, %6, %cst_272 {dimension_numbers = #tpu.dot_dimension_numbers<[1], [0], [0], [1], [0, 0, 1, 1], [], []>} : vector<8x32xf32>, vector<32x128xf32>, vector<8x128xf32> -> vector<8x128xf32>
    %cst_273 = arith.constant dense<0.000000e+00> : vector<8x128xf32>
    %1066 = tpu.matmul %1064, %7, %cst_273 {dimension_numbers = #tpu.dot_dimension_numbers<[1], [0], [0], [1], [0, 0, 1, 1], [], []>} : vector<8x32xf32>, vector<32x128xf32>, vector<8x128xf32> -> vector<8x128xf32>
    %1067 = arith.addf %1066, %1043 : vector<8x128xf32>
    %1068 = arith.addf %1067, %11 : vector<8x128xf32>
    %1069 = arith.mulf %1068, %17 : vector<8x128xf32>
    %1070 = math.tanh %1069 : vector<8x128xf32>
    %cst_274 = arith.constant 1.000000e+00 : f32
    %1071 = vector.broadcast %cst_274 : f32 to vector<8x128xf32>
    %1072 = arith.addf %1070, %1071 : vector<8x128xf32>
    %cst_275 = arith.constant 5.000000e-01 : f32
    %1073 = vector.broadcast %cst_275 : f32 to vector<8x128xf32>
    %1074 = arith.mulf %1073, %1072 : vector<8x128xf32>
    %1075 = vector.extract_strided_slice %1074 {offsets = [0, 0], sizes = [8, 32], strides = [1, 1]} : vector<8x128xf32> to vector<8x32xf32>
    %1076 = vector.extract_strided_slice %1074 {offsets = [0, 32], sizes = [8, 32], strides = [1, 1]} : vector<8x128xf32> to vector<8x32xf32>
    %1077 = vector.extract_strided_slice %1074 {offsets = [0, 64], sizes = [8, 32], strides = [1, 1]} : vector<8x128xf32> to vector<8x32xf32>
    %1078 = vector.extract_strided_slice %1070 {offsets = [0, 96], sizes = [8, 32], strides = [1, 1]} : vector<8x128xf32> to vector<8x32xf32>
    %1079 = arith.mulf %1076, %1040 : vector<8x32xf32>
    %1080 = arith.mulf %1075, %1078 : vector<8x32xf32>
    %1081 = arith.addf %1079, %1080 : vector<8x32xf32>
    %1082 = math.tanh %1081 : vector<8x32xf32>
    %1083 = arith.mulf %1077, %1082 : vector<8x32xf32>
    %cst_276 = arith.constant dense<0.000000e+00> : vector<8x128xf32>
    %1084 = tpu.matmul %1083, %8, %cst_276 {dimension_numbers = #tpu.dot_dimension_numbers<[1], [0], [0], [1], [0, 0, 1, 1], [], []>} : vector<8x32xf32>, vector<32x128xf32>, vector<8x128xf32> -> vector<8x128xf32>
    %c25 = arith.constant 25 : index
    %c0_277 = arith.constant 0 : index
    %c0_278 = arith.constant 0 : index
    %1085 = vector.load %arg7[%c25, %c0_277, %c0_278] : memref<50x32x2xf32, #tpu.memory_space<vmem>>, vector<1x32x2xf32>
    %1086 = vector.shape_cast %1085 : vector<1x32x2xf32> to vector<32x2xf32>
    %cst_279 = arith.constant dense<0.000000e+00> : vector<8x2xf32>
    %1087 = tpu.matmul %1083, %1086, %cst_279 {dimension_numbers = #tpu.dot_dimension_numbers<[1], [0], [0], [1], [0, 0, 1, 1], [], []>} : vector<8x32xf32>, vector<32x2xf32>, vector<8x2xf32> -> vector<8x2xf32>
    %1088 = arith.addf %1047, %1087 : vector<8x2xf32>
    %1089 = vector.extract_strided_slice %5 {offsets = [208, 0], sizes = [8, 128], strides = [1, 1]} : vector<400x128xf32> to vector<8x128xf32>
    %1090 = arith.addf %1089, %1065 : vector<8x128xf32>
    %1091 = arith.mulf %1090, %17 : vector<8x128xf32>
    %1092 = math.tanh %1091 : vector<8x128xf32>
    %cst_280 = arith.constant 1.000000e+00 : f32
    %1093 = vector.broadcast %cst_280 : f32 to vector<8x128xf32>
    %1094 = arith.addf %1092, %1093 : vector<8x128xf32>
    %cst_281 = arith.constant 5.000000e-01 : f32
    %1095 = vector.broadcast %cst_281 : f32 to vector<8x128xf32>
    %1096 = arith.mulf %1095, %1094 : vector<8x128xf32>
    %1097 = vector.extract_strided_slice %1096 {offsets = [0, 0], sizes = [8, 32], strides = [1, 1]} : vector<8x128xf32> to vector<8x32xf32>
    %1098 = vector.extract_strided_slice %1096 {offsets = [0, 32], sizes = [8, 32], strides = [1, 1]} : vector<8x128xf32> to vector<8x32xf32>
    %1099 = vector.extract_strided_slice %1096 {offsets = [0, 64], sizes = [8, 32], strides = [1, 1]} : vector<8x128xf32> to vector<8x32xf32>
    %1100 = vector.extract_strided_slice %1092 {offsets = [0, 96], sizes = [8, 32], strides = [1, 1]} : vector<8x128xf32> to vector<8x32xf32>
    %1101 = arith.mulf %1098, %1062 : vector<8x32xf32>
    %1102 = arith.mulf %1097, %1100 : vector<8x32xf32>
    %1103 = arith.addf %1101, %1102 : vector<8x32xf32>
    %1104 = math.tanh %1103 : vector<8x32xf32>
    %1105 = arith.mulf %1099, %1104 : vector<8x32xf32>
    %cst_282 = arith.constant dense<0.000000e+00> : vector<8x128xf32>
    %1106 = tpu.matmul %1105, %6, %cst_282 {dimension_numbers = #tpu.dot_dimension_numbers<[1], [0], [0], [1], [0, 0, 1, 1], [], []>} : vector<8x32xf32>, vector<32x128xf32>, vector<8x128xf32> -> vector<8x128xf32>
    %cst_283 = arith.constant dense<0.000000e+00> : vector<8x128xf32>
    %1107 = tpu.matmul %1105, %7, %cst_283 {dimension_numbers = #tpu.dot_dimension_numbers<[1], [0], [0], [1], [0, 0, 1, 1], [], []>} : vector<8x32xf32>, vector<32x128xf32>, vector<8x128xf32> -> vector<8x128xf32>
    %1108 = arith.addf %1107, %1084 : vector<8x128xf32>
    %1109 = arith.addf %1108, %11 : vector<8x128xf32>
    %1110 = arith.mulf %1109, %17 : vector<8x128xf32>
    %1111 = math.tanh %1110 : vector<8x128xf32>
    %cst_284 = arith.constant 1.000000e+00 : f32
    %1112 = vector.broadcast %cst_284 : f32 to vector<8x128xf32>
    %1113 = arith.addf %1111, %1112 : vector<8x128xf32>
    %cst_285 = arith.constant 5.000000e-01 : f32
    %1114 = vector.broadcast %cst_285 : f32 to vector<8x128xf32>
    %1115 = arith.mulf %1114, %1113 : vector<8x128xf32>
    %1116 = vector.extract_strided_slice %1115 {offsets = [0, 0], sizes = [8, 32], strides = [1, 1]} : vector<8x128xf32> to vector<8x32xf32>
    %1117 = vector.extract_strided_slice %1115 {offsets = [0, 32], sizes = [8, 32], strides = [1, 1]} : vector<8x128xf32> to vector<8x32xf32>
    %1118 = vector.extract_strided_slice %1115 {offsets = [0, 64], sizes = [8, 32], strides = [1, 1]} : vector<8x128xf32> to vector<8x32xf32>
    %1119 = vector.extract_strided_slice %1111 {offsets = [0, 96], sizes = [8, 32], strides = [1, 1]} : vector<8x128xf32> to vector<8x32xf32>
    %1120 = arith.mulf %1117, %1081 : vector<8x32xf32>
    %1121 = arith.mulf %1116, %1119 : vector<8x32xf32>
    %1122 = arith.addf %1120, %1121 : vector<8x32xf32>
    %1123 = math.tanh %1122 : vector<8x32xf32>
    %1124 = arith.mulf %1118, %1123 : vector<8x32xf32>
    %cst_286 = arith.constant dense<0.000000e+00> : vector<8x128xf32>
    %1125 = tpu.matmul %1124, %8, %cst_286 {dimension_numbers = #tpu.dot_dimension_numbers<[1], [0], [0], [1], [0, 0, 1, 1], [], []>} : vector<8x32xf32>, vector<32x128xf32>, vector<8x128xf32> -> vector<8x128xf32>
    %c26 = arith.constant 26 : index
    %c0_287 = arith.constant 0 : index
    %c0_288 = arith.constant 0 : index
    %1126 = vector.load %arg7[%c26, %c0_287, %c0_288] : memref<50x32x2xf32, #tpu.memory_space<vmem>>, vector<1x32x2xf32>
    %1127 = vector.shape_cast %1126 : vector<1x32x2xf32> to vector<32x2xf32>
    %cst_289 = arith.constant dense<0.000000e+00> : vector<8x2xf32>
    %1128 = tpu.matmul %1124, %1127, %cst_289 {dimension_numbers = #tpu.dot_dimension_numbers<[1], [0], [0], [1], [0, 0, 1, 1], [], []>} : vector<8x32xf32>, vector<32x2xf32>, vector<8x2xf32> -> vector<8x2xf32>
    %1129 = arith.addf %1088, %1128 : vector<8x2xf32>
    %1130 = vector.extract_strided_slice %5 {offsets = [216, 0], sizes = [8, 128], strides = [1, 1]} : vector<400x128xf32> to vector<8x128xf32>
    %1131 = arith.addf %1130, %1106 : vector<8x128xf32>
    %1132 = arith.mulf %1131, %17 : vector<8x128xf32>
    %1133 = math.tanh %1132 : vector<8x128xf32>
    %cst_290 = arith.constant 1.000000e+00 : f32
    %1134 = vector.broadcast %cst_290 : f32 to vector<8x128xf32>
    %1135 = arith.addf %1133, %1134 : vector<8x128xf32>
    %cst_291 = arith.constant 5.000000e-01 : f32
    %1136 = vector.broadcast %cst_291 : f32 to vector<8x128xf32>
    %1137 = arith.mulf %1136, %1135 : vector<8x128xf32>
    %1138 = vector.extract_strided_slice %1137 {offsets = [0, 0], sizes = [8, 32], strides = [1, 1]} : vector<8x128xf32> to vector<8x32xf32>
    %1139 = vector.extract_strided_slice %1137 {offsets = [0, 32], sizes = [8, 32], strides = [1, 1]} : vector<8x128xf32> to vector<8x32xf32>
    %1140 = vector.extract_strided_slice %1137 {offsets = [0, 64], sizes = [8, 32], strides = [1, 1]} : vector<8x128xf32> to vector<8x32xf32>
    %1141 = vector.extract_strided_slice %1133 {offsets = [0, 96], sizes = [8, 32], strides = [1, 1]} : vector<8x128xf32> to vector<8x32xf32>
    %1142 = arith.mulf %1139, %1103 : vector<8x32xf32>
    %1143 = arith.mulf %1138, %1141 : vector<8x32xf32>
    %1144 = arith.addf %1142, %1143 : vector<8x32xf32>
    %1145 = math.tanh %1144 : vector<8x32xf32>
    %1146 = arith.mulf %1140, %1145 : vector<8x32xf32>
    %cst_292 = arith.constant dense<0.000000e+00> : vector<8x128xf32>
    %1147 = tpu.matmul %1146, %6, %cst_292 {dimension_numbers = #tpu.dot_dimension_numbers<[1], [0], [0], [1], [0, 0, 1, 1], [], []>} : vector<8x32xf32>, vector<32x128xf32>, vector<8x128xf32> -> vector<8x128xf32>
    %cst_293 = arith.constant dense<0.000000e+00> : vector<8x128xf32>
    %1148 = tpu.matmul %1146, %7, %cst_293 {dimension_numbers = #tpu.dot_dimension_numbers<[1], [0], [0], [1], [0, 0, 1, 1], [], []>} : vector<8x32xf32>, vector<32x128xf32>, vector<8x128xf32> -> vector<8x128xf32>
    %1149 = arith.addf %1148, %1125 : vector<8x128xf32>
    %1150 = arith.addf %1149, %11 : vector<8x128xf32>
    %1151 = arith.mulf %1150, %17 : vector<8x128xf32>
    %1152 = math.tanh %1151 : vector<8x128xf32>
    %cst_294 = arith.constant 1.000000e+00 : f32
    %1153 = vector.broadcast %cst_294 : f32 to vector<8x128xf32>
    %1154 = arith.addf %1152, %1153 : vector<8x128xf32>
    %cst_295 = arith.constant 5.000000e-01 : f32
    %1155 = vector.broadcast %cst_295 : f32 to vector<8x128xf32>
    %1156 = arith.mulf %1155, %1154 : vector<8x128xf32>
    %1157 = vector.extract_strided_slice %1156 {offsets = [0, 0], sizes = [8, 32], strides = [1, 1]} : vector<8x128xf32> to vector<8x32xf32>
    %1158 = vector.extract_strided_slice %1156 {offsets = [0, 32], sizes = [8, 32], strides = [1, 1]} : vector<8x128xf32> to vector<8x32xf32>
    %1159 = vector.extract_strided_slice %1156 {offsets = [0, 64], sizes = [8, 32], strides = [1, 1]} : vector<8x128xf32> to vector<8x32xf32>
    %1160 = vector.extract_strided_slice %1152 {offsets = [0, 96], sizes = [8, 32], strides = [1, 1]} : vector<8x128xf32> to vector<8x32xf32>
    %1161 = arith.mulf %1158, %1122 : vector<8x32xf32>
    %1162 = arith.mulf %1157, %1160 : vector<8x32xf32>
    %1163 = arith.addf %1161, %1162 : vector<8x32xf32>
    %1164 = math.tanh %1163 : vector<8x32xf32>
    %1165 = arith.mulf %1159, %1164 : vector<8x32xf32>
    %cst_296 = arith.constant dense<0.000000e+00> : vector<8x128xf32>
    %1166 = tpu.matmul %1165, %8, %cst_296 {dimension_numbers = #tpu.dot_dimension_numbers<[1], [0], [0], [1], [0, 0, 1, 1], [], []>} : vector<8x32xf32>, vector<32x128xf32>, vector<8x128xf32> -> vector<8x128xf32>
    %c27 = arith.constant 27 : index
    %c0_297 = arith.constant 0 : index
    %c0_298 = arith.constant 0 : index
    %1167 = vector.load %arg7[%c27, %c0_297, %c0_298] : memref<50x32x2xf32, #tpu.memory_space<vmem>>, vector<1x32x2xf32>
    %1168 = vector.shape_cast %1167 : vector<1x32x2xf32> to vector<32x2xf32>
    %cst_299 = arith.constant dense<0.000000e+00> : vector<8x2xf32>
    %1169 = tpu.matmul %1165, %1168, %cst_299 {dimension_numbers = #tpu.dot_dimension_numbers<[1], [0], [0], [1], [0, 0, 1, 1], [], []>} : vector<8x32xf32>, vector<32x2xf32>, vector<8x2xf32> -> vector<8x2xf32>
    %1170 = arith.addf %1129, %1169 : vector<8x2xf32>
    %1171 = vector.extract_strided_slice %5 {offsets = [224, 0], sizes = [8, 128], strides = [1, 1]} : vector<400x128xf32> to vector<8x128xf32>
    %1172 = arith.addf %1171, %1147 : vector<8x128xf32>
    %1173 = arith.mulf %1172, %17 : vector<8x128xf32>
    %1174 = math.tanh %1173 : vector<8x128xf32>
    %cst_300 = arith.constant 1.000000e+00 : f32
    %1175 = vector.broadcast %cst_300 : f32 to vector<8x128xf32>
    %1176 = arith.addf %1174, %1175 : vector<8x128xf32>
    %cst_301 = arith.constant 5.000000e-01 : f32
    %1177 = vector.broadcast %cst_301 : f32 to vector<8x128xf32>
    %1178 = arith.mulf %1177, %1176 : vector<8x128xf32>
    %1179 = vector.extract_strided_slice %1178 {offsets = [0, 0], sizes = [8, 32], strides = [1, 1]} : vector<8x128xf32> to vector<8x32xf32>
    %1180 = vector.extract_strided_slice %1178 {offsets = [0, 32], sizes = [8, 32], strides = [1, 1]} : vector<8x128xf32> to vector<8x32xf32>
    %1181 = vector.extract_strided_slice %1178 {offsets = [0, 64], sizes = [8, 32], strides = [1, 1]} : vector<8x128xf32> to vector<8x32xf32>
    %1182 = vector.extract_strided_slice %1174 {offsets = [0, 96], sizes = [8, 32], strides = [1, 1]} : vector<8x128xf32> to vector<8x32xf32>
    %1183 = arith.mulf %1180, %1144 : vector<8x32xf32>
    %1184 = arith.mulf %1179, %1182 : vector<8x32xf32>
    %1185 = arith.addf %1183, %1184 : vector<8x32xf32>
    %1186 = math.tanh %1185 : vector<8x32xf32>
    %1187 = arith.mulf %1181, %1186 : vector<8x32xf32>
    %cst_302 = arith.constant dense<0.000000e+00> : vector<8x128xf32>
    %1188 = tpu.matmul %1187, %6, %cst_302 {dimension_numbers = #tpu.dot_dimension_numbers<[1], [0], [0], [1], [0, 0, 1, 1], [], []>} : vector<8x32xf32>, vector<32x128xf32>, vector<8x128xf32> -> vector<8x128xf32>
    %cst_303 = arith.constant dense<0.000000e+00> : vector<8x128xf32>
    %1189 = tpu.matmul %1187, %7, %cst_303 {dimension_numbers = #tpu.dot_dimension_numbers<[1], [0], [0], [1], [0, 0, 1, 1], [], []>} : vector<8x32xf32>, vector<32x128xf32>, vector<8x128xf32> -> vector<8x128xf32>
    %1190 = arith.addf %1189, %1166 : vector<8x128xf32>
    %1191 = arith.addf %1190, %11 : vector<8x128xf32>
    %1192 = arith.mulf %1191, %17 : vector<8x128xf32>
    %1193 = math.tanh %1192 : vector<8x128xf32>
    %cst_304 = arith.constant 1.000000e+00 : f32
    %1194 = vector.broadcast %cst_304 : f32 to vector<8x128xf32>
    %1195 = arith.addf %1193, %1194 : vector<8x128xf32>
    %cst_305 = arith.constant 5.000000e-01 : f32
    %1196 = vector.broadcast %cst_305 : f32 to vector<8x128xf32>
    %1197 = arith.mulf %1196, %1195 : vector<8x128xf32>
    %1198 = vector.extract_strided_slice %1197 {offsets = [0, 0], sizes = [8, 32], strides = [1, 1]} : vector<8x128xf32> to vector<8x32xf32>
    %1199 = vector.extract_strided_slice %1197 {offsets = [0, 32], sizes = [8, 32], strides = [1, 1]} : vector<8x128xf32> to vector<8x32xf32>
    %1200 = vector.extract_strided_slice %1197 {offsets = [0, 64], sizes = [8, 32], strides = [1, 1]} : vector<8x128xf32> to vector<8x32xf32>
    %1201 = vector.extract_strided_slice %1193 {offsets = [0, 96], sizes = [8, 32], strides = [1, 1]} : vector<8x128xf32> to vector<8x32xf32>
    %1202 = arith.mulf %1199, %1163 : vector<8x32xf32>
    %1203 = arith.mulf %1198, %1201 : vector<8x32xf32>
    %1204 = arith.addf %1202, %1203 : vector<8x32xf32>
    %1205 = math.tanh %1204 : vector<8x32xf32>
    %1206 = arith.mulf %1200, %1205 : vector<8x32xf32>
    %cst_306 = arith.constant dense<0.000000e+00> : vector<8x128xf32>
    %1207 = tpu.matmul %1206, %8, %cst_306 {dimension_numbers = #tpu.dot_dimension_numbers<[1], [0], [0], [1], [0, 0, 1, 1], [], []>} : vector<8x32xf32>, vector<32x128xf32>, vector<8x128xf32> -> vector<8x128xf32>
    %c28 = arith.constant 28 : index
    %c0_307 = arith.constant 0 : index
    %c0_308 = arith.constant 0 : index
    %1208 = vector.load %arg7[%c28, %c0_307, %c0_308] : memref<50x32x2xf32, #tpu.memory_space<vmem>>, vector<1x32x2xf32>
    %1209 = vector.shape_cast %1208 : vector<1x32x2xf32> to vector<32x2xf32>
    %cst_309 = arith.constant dense<0.000000e+00> : vector<8x2xf32>
    %1210 = tpu.matmul %1206, %1209, %cst_309 {dimension_numbers = #tpu.dot_dimension_numbers<[1], [0], [0], [1], [0, 0, 1, 1], [], []>} : vector<8x32xf32>, vector<32x2xf32>, vector<8x2xf32> -> vector<8x2xf32>
    %1211 = arith.addf %1170, %1210 : vector<8x2xf32>
    %1212 = vector.extract_strided_slice %5 {offsets = [232, 0], sizes = [8, 128], strides = [1, 1]} : vector<400x128xf32> to vector<8x128xf32>
    %1213 = arith.addf %1212, %1188 : vector<8x128xf32>
    %1214 = arith.mulf %1213, %17 : vector<8x128xf32>
    %1215 = math.tanh %1214 : vector<8x128xf32>
    %cst_310 = arith.constant 1.000000e+00 : f32
    %1216 = vector.broadcast %cst_310 : f32 to vector<8x128xf32>
    %1217 = arith.addf %1215, %1216 : vector<8x128xf32>
    %cst_311 = arith.constant 5.000000e-01 : f32
    %1218 = vector.broadcast %cst_311 : f32 to vector<8x128xf32>
    %1219 = arith.mulf %1218, %1217 : vector<8x128xf32>
    %1220 = vector.extract_strided_slice %1219 {offsets = [0, 0], sizes = [8, 32], strides = [1, 1]} : vector<8x128xf32> to vector<8x32xf32>
    %1221 = vector.extract_strided_slice %1219 {offsets = [0, 32], sizes = [8, 32], strides = [1, 1]} : vector<8x128xf32> to vector<8x32xf32>
    %1222 = vector.extract_strided_slice %1219 {offsets = [0, 64], sizes = [8, 32], strides = [1, 1]} : vector<8x128xf32> to vector<8x32xf32>
    %1223 = vector.extract_strided_slice %1215 {offsets = [0, 96], sizes = [8, 32], strides = [1, 1]} : vector<8x128xf32> to vector<8x32xf32>
    %1224 = arith.mulf %1221, %1185 : vector<8x32xf32>
    %1225 = arith.mulf %1220, %1223 : vector<8x32xf32>
    %1226 = arith.addf %1224, %1225 : vector<8x32xf32>
    %1227 = math.tanh %1226 : vector<8x32xf32>
    %1228 = arith.mulf %1222, %1227 : vector<8x32xf32>
    %cst_312 = arith.constant dense<0.000000e+00> : vector<8x128xf32>
    %1229 = tpu.matmul %1228, %6, %cst_312 {dimension_numbers = #tpu.dot_dimension_numbers<[1], [0], [0], [1], [0, 0, 1, 1], [], []>} : vector<8x32xf32>, vector<32x128xf32>, vector<8x128xf32> -> vector<8x128xf32>
    %cst_313 = arith.constant dense<0.000000e+00> : vector<8x128xf32>
    %1230 = tpu.matmul %1228, %7, %cst_313 {dimension_numbers = #tpu.dot_dimension_numbers<[1], [0], [0], [1], [0, 0, 1, 1], [], []>} : vector<8x32xf32>, vector<32x128xf32>, vector<8x128xf32> -> vector<8x128xf32>
    %1231 = arith.addf %1230, %1207 : vector<8x128xf32>
    %1232 = arith.addf %1231, %11 : vector<8x128xf32>
    %1233 = arith.mulf %1232, %17 : vector<8x128xf32>
    %1234 = math.tanh %1233 : vector<8x128xf32>
    %cst_314 = arith.constant 1.000000e+00 : f32
    %1235 = vector.broadcast %cst_314 : f32 to vector<8x128xf32>
    %1236 = arith.addf %1234, %1235 : vector<8x128xf32>
    %cst_315 = arith.constant 5.000000e-01 : f32
    %1237 = vector.broadcast %cst_315 : f32 to vector<8x128xf32>
    %1238 = arith.mulf %1237, %1236 : vector<8x128xf32>
    %1239 = vector.extract_strided_slice %1238 {offsets = [0, 0], sizes = [8, 32], strides = [1, 1]} : vector<8x128xf32> to vector<8x32xf32>
    %1240 = vector.extract_strided_slice %1238 {offsets = [0, 32], sizes = [8, 32], strides = [1, 1]} : vector<8x128xf32> to vector<8x32xf32>
    %1241 = vector.extract_strided_slice %1238 {offsets = [0, 64], sizes = [8, 32], strides = [1, 1]} : vector<8x128xf32> to vector<8x32xf32>
    %1242 = vector.extract_strided_slice %1234 {offsets = [0, 96], sizes = [8, 32], strides = [1, 1]} : vector<8x128xf32> to vector<8x32xf32>
    %1243 = arith.mulf %1240, %1204 : vector<8x32xf32>
    %1244 = arith.mulf %1239, %1242 : vector<8x32xf32>
    %1245 = arith.addf %1243, %1244 : vector<8x32xf32>
    %1246 = math.tanh %1245 : vector<8x32xf32>
    %1247 = arith.mulf %1241, %1246 : vector<8x32xf32>
    %cst_316 = arith.constant dense<0.000000e+00> : vector<8x128xf32>
    %1248 = tpu.matmul %1247, %8, %cst_316 {dimension_numbers = #tpu.dot_dimension_numbers<[1], [0], [0], [1], [0, 0, 1, 1], [], []>} : vector<8x32xf32>, vector<32x128xf32>, vector<8x128xf32> -> vector<8x128xf32>
    %c29 = arith.constant 29 : index
    %c0_317 = arith.constant 0 : index
    %c0_318 = arith.constant 0 : index
    %1249 = vector.load %arg7[%c29, %c0_317, %c0_318] : memref<50x32x2xf32, #tpu.memory_space<vmem>>, vector<1x32x2xf32>
    %1250 = vector.shape_cast %1249 : vector<1x32x2xf32> to vector<32x2xf32>
    %cst_319 = arith.constant dense<0.000000e+00> : vector<8x2xf32>
    %1251 = tpu.matmul %1247, %1250, %cst_319 {dimension_numbers = #tpu.dot_dimension_numbers<[1], [0], [0], [1], [0, 0, 1, 1], [], []>} : vector<8x32xf32>, vector<32x2xf32>, vector<8x2xf32> -> vector<8x2xf32>
    %1252 = arith.addf %1211, %1251 : vector<8x2xf32>
    %1253 = vector.extract_strided_slice %5 {offsets = [240, 0], sizes = [8, 128], strides = [1, 1]} : vector<400x128xf32> to vector<8x128xf32>
    %1254 = arith.addf %1253, %1229 : vector<8x128xf32>
    %1255 = arith.mulf %1254, %17 : vector<8x128xf32>
    %1256 = math.tanh %1255 : vector<8x128xf32>
    %cst_320 = arith.constant 1.000000e+00 : f32
    %1257 = vector.broadcast %cst_320 : f32 to vector<8x128xf32>
    %1258 = arith.addf %1256, %1257 : vector<8x128xf32>
    %cst_321 = arith.constant 5.000000e-01 : f32
    %1259 = vector.broadcast %cst_321 : f32 to vector<8x128xf32>
    %1260 = arith.mulf %1259, %1258 : vector<8x128xf32>
    %1261 = vector.extract_strided_slice %1260 {offsets = [0, 0], sizes = [8, 32], strides = [1, 1]} : vector<8x128xf32> to vector<8x32xf32>
    %1262 = vector.extract_strided_slice %1260 {offsets = [0, 32], sizes = [8, 32], strides = [1, 1]} : vector<8x128xf32> to vector<8x32xf32>
    %1263 = vector.extract_strided_slice %1260 {offsets = [0, 64], sizes = [8, 32], strides = [1, 1]} : vector<8x128xf32> to vector<8x32xf32>
    %1264 = vector.extract_strided_slice %1256 {offsets = [0, 96], sizes = [8, 32], strides = [1, 1]} : vector<8x128xf32> to vector<8x32xf32>
    %1265 = arith.mulf %1262, %1226 : vector<8x32xf32>
    %1266 = arith.mulf %1261, %1264 : vector<8x32xf32>
    %1267 = arith.addf %1265, %1266 : vector<8x32xf32>
    %1268 = math.tanh %1267 : vector<8x32xf32>
    %1269 = arith.mulf %1263, %1268 : vector<8x32xf32>
    %cst_322 = arith.constant dense<0.000000e+00> : vector<8x128xf32>
    %1270 = tpu.matmul %1269, %6, %cst_322 {dimension_numbers = #tpu.dot_dimension_numbers<[1], [0], [0], [1], [0, 0, 1, 1], [], []>} : vector<8x32xf32>, vector<32x128xf32>, vector<8x128xf32> -> vector<8x128xf32>
    %cst_323 = arith.constant dense<0.000000e+00> : vector<8x128xf32>
    %1271 = tpu.matmul %1269, %7, %cst_323 {dimension_numbers = #tpu.dot_dimension_numbers<[1], [0], [0], [1], [0, 0, 1, 1], [], []>} : vector<8x32xf32>, vector<32x128xf32>, vector<8x128xf32> -> vector<8x128xf32>
    %1272 = arith.addf %1271, %1248 : vector<8x128xf32>
    %1273 = arith.addf %1272, %11 : vector<8x128xf32>
    %1274 = arith.mulf %1273, %17 : vector<8x128xf32>
    %1275 = math.tanh %1274 : vector<8x128xf32>
    %cst_324 = arith.constant 1.000000e+00 : f32
    %1276 = vector.broadcast %cst_324 : f32 to vector<8x128xf32>
    %1277 = arith.addf %1275, %1276 : vector<8x128xf32>
    %cst_325 = arith.constant 5.000000e-01 : f32
    %1278 = vector.broadcast %cst_325 : f32 to vector<8x128xf32>
    %1279 = arith.mulf %1278, %1277 : vector<8x128xf32>
    %1280 = vector.extract_strided_slice %1279 {offsets = [0, 0], sizes = [8, 32], strides = [1, 1]} : vector<8x128xf32> to vector<8x32xf32>
    %1281 = vector.extract_strided_slice %1279 {offsets = [0, 32], sizes = [8, 32], strides = [1, 1]} : vector<8x128xf32> to vector<8x32xf32>
    %1282 = vector.extract_strided_slice %1279 {offsets = [0, 64], sizes = [8, 32], strides = [1, 1]} : vector<8x128xf32> to vector<8x32xf32>
    %1283 = vector.extract_strided_slice %1275 {offsets = [0, 96], sizes = [8, 32], strides = [1, 1]} : vector<8x128xf32> to vector<8x32xf32>
    %1284 = arith.mulf %1281, %1245 : vector<8x32xf32>
    %1285 = arith.mulf %1280, %1283 : vector<8x32xf32>
    %1286 = arith.addf %1284, %1285 : vector<8x32xf32>
    %1287 = math.tanh %1286 : vector<8x32xf32>
    %1288 = arith.mulf %1282, %1287 : vector<8x32xf32>
    %cst_326 = arith.constant dense<0.000000e+00> : vector<8x128xf32>
    %1289 = tpu.matmul %1288, %8, %cst_326 {dimension_numbers = #tpu.dot_dimension_numbers<[1], [0], [0], [1], [0, 0, 1, 1], [], []>} : vector<8x32xf32>, vector<32x128xf32>, vector<8x128xf32> -> vector<8x128xf32>
    %c30 = arith.constant 30 : index
    %c0_327 = arith.constant 0 : index
    %c0_328 = arith.constant 0 : index
    %1290 = vector.load %arg7[%c30, %c0_327, %c0_328] : memref<50x32x2xf32, #tpu.memory_space<vmem>>, vector<1x32x2xf32>
    %1291 = vector.shape_cast %1290 : vector<1x32x2xf32> to vector<32x2xf32>
    %cst_329 = arith.constant dense<0.000000e+00> : vector<8x2xf32>
    %1292 = tpu.matmul %1288, %1291, %cst_329 {dimension_numbers = #tpu.dot_dimension_numbers<[1], [0], [0], [1], [0, 0, 1, 1], [], []>} : vector<8x32xf32>, vector<32x2xf32>, vector<8x2xf32> -> vector<8x2xf32>
    %1293 = arith.addf %1252, %1292 : vector<8x2xf32>
    %1294 = vector.extract_strided_slice %5 {offsets = [248, 0], sizes = [8, 128], strides = [1, 1]} : vector<400x128xf32> to vector<8x128xf32>
    %1295 = arith.addf %1294, %1270 : vector<8x128xf32>
    %1296 = arith.mulf %1295, %17 : vector<8x128xf32>
    %1297 = math.tanh %1296 : vector<8x128xf32>
    %cst_330 = arith.constant 1.000000e+00 : f32
    %1298 = vector.broadcast %cst_330 : f32 to vector<8x128xf32>
    %1299 = arith.addf %1297, %1298 : vector<8x128xf32>
    %cst_331 = arith.constant 5.000000e-01 : f32
    %1300 = vector.broadcast %cst_331 : f32 to vector<8x128xf32>
    %1301 = arith.mulf %1300, %1299 : vector<8x128xf32>
    %1302 = vector.extract_strided_slice %1301 {offsets = [0, 0], sizes = [8, 32], strides = [1, 1]} : vector<8x128xf32> to vector<8x32xf32>
    %1303 = vector.extract_strided_slice %1301 {offsets = [0, 32], sizes = [8, 32], strides = [1, 1]} : vector<8x128xf32> to vector<8x32xf32>
    %1304 = vector.extract_strided_slice %1301 {offsets = [0, 64], sizes = [8, 32], strides = [1, 1]} : vector<8x128xf32> to vector<8x32xf32>
    %1305 = vector.extract_strided_slice %1297 {offsets = [0, 96], sizes = [8, 32], strides = [1, 1]} : vector<8x128xf32> to vector<8x32xf32>
    %1306 = arith.mulf %1303, %1267 : vector<8x32xf32>
    %1307 = arith.mulf %1302, %1305 : vector<8x32xf32>
    %1308 = arith.addf %1306, %1307 : vector<8x32xf32>
    %1309 = math.tanh %1308 : vector<8x32xf32>
    %1310 = arith.mulf %1304, %1309 : vector<8x32xf32>
    %cst_332 = arith.constant dense<0.000000e+00> : vector<8x128xf32>
    %1311 = tpu.matmul %1310, %6, %cst_332 {dimension_numbers = #tpu.dot_dimension_numbers<[1], [0], [0], [1], [0, 0, 1, 1], [], []>} : vector<8x32xf32>, vector<32x128xf32>, vector<8x128xf32> -> vector<8x128xf32>
    %cst_333 = arith.constant dense<0.000000e+00> : vector<8x128xf32>
    %1312 = tpu.matmul %1310, %7, %cst_333 {dimension_numbers = #tpu.dot_dimension_numbers<[1], [0], [0], [1], [0, 0, 1, 1], [], []>} : vector<8x32xf32>, vector<32x128xf32>, vector<8x128xf32> -> vector<8x128xf32>
    %1313 = arith.addf %1312, %1289 : vector<8x128xf32>
    %1314 = arith.addf %1313, %11 : vector<8x128xf32>
    %1315 = arith.mulf %1314, %17 : vector<8x128xf32>
    %1316 = math.tanh %1315 : vector<8x128xf32>
    %cst_334 = arith.constant 1.000000e+00 : f32
    %1317 = vector.broadcast %cst_334 : f32 to vector<8x128xf32>
    %1318 = arith.addf %1316, %1317 : vector<8x128xf32>
    %cst_335 = arith.constant 5.000000e-01 : f32
    %1319 = vector.broadcast %cst_335 : f32 to vector<8x128xf32>
    %1320 = arith.mulf %1319, %1318 : vector<8x128xf32>
    %1321 = vector.extract_strided_slice %1320 {offsets = [0, 0], sizes = [8, 32], strides = [1, 1]} : vector<8x128xf32> to vector<8x32xf32>
    %1322 = vector.extract_strided_slice %1320 {offsets = [0, 32], sizes = [8, 32], strides = [1, 1]} : vector<8x128xf32> to vector<8x32xf32>
    %1323 = vector.extract_strided_slice %1320 {offsets = [0, 64], sizes = [8, 32], strides = [1, 1]} : vector<8x128xf32> to vector<8x32xf32>
    %1324 = vector.extract_strided_slice %1316 {offsets = [0, 96], sizes = [8, 32], strides = [1, 1]} : vector<8x128xf32> to vector<8x32xf32>
    %1325 = arith.mulf %1322, %1286 : vector<8x32xf32>
    %1326 = arith.mulf %1321, %1324 : vector<8x32xf32>
    %1327 = arith.addf %1325, %1326 : vector<8x32xf32>
    %1328 = math.tanh %1327 : vector<8x32xf32>
    %1329 = arith.mulf %1323, %1328 : vector<8x32xf32>
    %cst_336 = arith.constant dense<0.000000e+00> : vector<8x128xf32>
    %1330 = tpu.matmul %1329, %8, %cst_336 {dimension_numbers = #tpu.dot_dimension_numbers<[1], [0], [0], [1], [0, 0, 1, 1], [], []>} : vector<8x32xf32>, vector<32x128xf32>, vector<8x128xf32> -> vector<8x128xf32>
    %c31 = arith.constant 31 : index
    %c0_337 = arith.constant 0 : index
    %c0_338 = arith.constant 0 : index
    %1331 = vector.load %arg7[%c31, %c0_337, %c0_338] : memref<50x32x2xf32, #tpu.memory_space<vmem>>, vector<1x32x2xf32>
    %1332 = vector.shape_cast %1331 : vector<1x32x2xf32> to vector<32x2xf32>
    %cst_339 = arith.constant dense<0.000000e+00> : vector<8x2xf32>
    %1333 = tpu.matmul %1329, %1332, %cst_339 {dimension_numbers = #tpu.dot_dimension_numbers<[1], [0], [0], [1], [0, 0, 1, 1], [], []>} : vector<8x32xf32>, vector<32x2xf32>, vector<8x2xf32> -> vector<8x2xf32>
    %1334 = arith.addf %1293, %1333 : vector<8x2xf32>
    %1335 = vector.extract_strided_slice %5 {offsets = [256, 0], sizes = [8, 128], strides = [1, 1]} : vector<400x128xf32> to vector<8x128xf32>
    %1336 = arith.addf %1335, %1311 : vector<8x128xf32>
    %1337 = arith.mulf %1336, %17 : vector<8x128xf32>
    %1338 = math.tanh %1337 : vector<8x128xf32>
    %cst_340 = arith.constant 1.000000e+00 : f32
    %1339 = vector.broadcast %cst_340 : f32 to vector<8x128xf32>
    %1340 = arith.addf %1338, %1339 : vector<8x128xf32>
    %cst_341 = arith.constant 5.000000e-01 : f32
    %1341 = vector.broadcast %cst_341 : f32 to vector<8x128xf32>
    %1342 = arith.mulf %1341, %1340 : vector<8x128xf32>
    %1343 = vector.extract_strided_slice %1342 {offsets = [0, 0], sizes = [8, 32], strides = [1, 1]} : vector<8x128xf32> to vector<8x32xf32>
    %1344 = vector.extract_strided_slice %1342 {offsets = [0, 32], sizes = [8, 32], strides = [1, 1]} : vector<8x128xf32> to vector<8x32xf32>
    %1345 = vector.extract_strided_slice %1342 {offsets = [0, 64], sizes = [8, 32], strides = [1, 1]} : vector<8x128xf32> to vector<8x32xf32>
    %1346 = vector.extract_strided_slice %1338 {offsets = [0, 96], sizes = [8, 32], strides = [1, 1]} : vector<8x128xf32> to vector<8x32xf32>
    %1347 = arith.mulf %1344, %1308 : vector<8x32xf32>
    %1348 = arith.mulf %1343, %1346 : vector<8x32xf32>
    %1349 = arith.addf %1347, %1348 : vector<8x32xf32>
    %1350 = math.tanh %1349 : vector<8x32xf32>
    %1351 = arith.mulf %1345, %1350 : vector<8x32xf32>
    %cst_342 = arith.constant dense<0.000000e+00> : vector<8x128xf32>
    %1352 = tpu.matmul %1351, %6, %cst_342 {dimension_numbers = #tpu.dot_dimension_numbers<[1], [0], [0], [1], [0, 0, 1, 1], [], []>} : vector<8x32xf32>, vector<32x128xf32>, vector<8x128xf32> -> vector<8x128xf32>
    %cst_343 = arith.constant dense<0.000000e+00> : vector<8x128xf32>
    %1353 = tpu.matmul %1351, %7, %cst_343 {dimension_numbers = #tpu.dot_dimension_numbers<[1], [0], [0], [1], [0, 0, 1, 1], [], []>} : vector<8x32xf32>, vector<32x128xf32>, vector<8x128xf32> -> vector<8x128xf32>
    %1354 = arith.addf %1353, %1330 : vector<8x128xf32>
    %1355 = arith.addf %1354, %11 : vector<8x128xf32>
    %1356 = arith.mulf %1355, %17 : vector<8x128xf32>
    %1357 = math.tanh %1356 : vector<8x128xf32>
    %cst_344 = arith.constant 1.000000e+00 : f32
    %1358 = vector.broadcast %cst_344 : f32 to vector<8x128xf32>
    %1359 = arith.addf %1357, %1358 : vector<8x128xf32>
    %cst_345 = arith.constant 5.000000e-01 : f32
    %1360 = vector.broadcast %cst_345 : f32 to vector<8x128xf32>
    %1361 = arith.mulf %1360, %1359 : vector<8x128xf32>
    %1362 = vector.extract_strided_slice %1361 {offsets = [0, 0], sizes = [8, 32], strides = [1, 1]} : vector<8x128xf32> to vector<8x32xf32>
    %1363 = vector.extract_strided_slice %1361 {offsets = [0, 32], sizes = [8, 32], strides = [1, 1]} : vector<8x128xf32> to vector<8x32xf32>
    %1364 = vector.extract_strided_slice %1361 {offsets = [0, 64], sizes = [8, 32], strides = [1, 1]} : vector<8x128xf32> to vector<8x32xf32>
    %1365 = vector.extract_strided_slice %1357 {offsets = [0, 96], sizes = [8, 32], strides = [1, 1]} : vector<8x128xf32> to vector<8x32xf32>
    %1366 = arith.mulf %1363, %1327 : vector<8x32xf32>
    %1367 = arith.mulf %1362, %1365 : vector<8x32xf32>
    %1368 = arith.addf %1366, %1367 : vector<8x32xf32>
    %1369 = math.tanh %1368 : vector<8x32xf32>
    %1370 = arith.mulf %1364, %1369 : vector<8x32xf32>
    %cst_346 = arith.constant dense<0.000000e+00> : vector<8x128xf32>
    %1371 = tpu.matmul %1370, %8, %cst_346 {dimension_numbers = #tpu.dot_dimension_numbers<[1], [0], [0], [1], [0, 0, 1, 1], [], []>} : vector<8x32xf32>, vector<32x128xf32>, vector<8x128xf32> -> vector<8x128xf32>
    %c32 = arith.constant 32 : index
    %c0_347 = arith.constant 0 : index
    %c0_348 = arith.constant 0 : index
    %1372 = vector.load %arg7[%c32, %c0_347, %c0_348] : memref<50x32x2xf32, #tpu.memory_space<vmem>>, vector<1x32x2xf32>
    %1373 = vector.shape_cast %1372 : vector<1x32x2xf32> to vector<32x2xf32>
    %cst_349 = arith.constant dense<0.000000e+00> : vector<8x2xf32>
    %1374 = tpu.matmul %1370, %1373, %cst_349 {dimension_numbers = #tpu.dot_dimension_numbers<[1], [0], [0], [1], [0, 0, 1, 1], [], []>} : vector<8x32xf32>, vector<32x2xf32>, vector<8x2xf32> -> vector<8x2xf32>
    %1375 = arith.addf %1334, %1374 : vector<8x2xf32>
    %1376 = vector.extract_strided_slice %5 {offsets = [264, 0], sizes = [8, 128], strides = [1, 1]} : vector<400x128xf32> to vector<8x128xf32>
    %1377 = arith.addf %1376, %1352 : vector<8x128xf32>
    %1378 = arith.mulf %1377, %17 : vector<8x128xf32>
    %1379 = math.tanh %1378 : vector<8x128xf32>
    %cst_350 = arith.constant 1.000000e+00 : f32
    %1380 = vector.broadcast %cst_350 : f32 to vector<8x128xf32>
    %1381 = arith.addf %1379, %1380 : vector<8x128xf32>
    %cst_351 = arith.constant 5.000000e-01 : f32
    %1382 = vector.broadcast %cst_351 : f32 to vector<8x128xf32>
    %1383 = arith.mulf %1382, %1381 : vector<8x128xf32>
    %1384 = vector.extract_strided_slice %1383 {offsets = [0, 0], sizes = [8, 32], strides = [1, 1]} : vector<8x128xf32> to vector<8x32xf32>
    %1385 = vector.extract_strided_slice %1383 {offsets = [0, 32], sizes = [8, 32], strides = [1, 1]} : vector<8x128xf32> to vector<8x32xf32>
    %1386 = vector.extract_strided_slice %1383 {offsets = [0, 64], sizes = [8, 32], strides = [1, 1]} : vector<8x128xf32> to vector<8x32xf32>
    %1387 = vector.extract_strided_slice %1379 {offsets = [0, 96], sizes = [8, 32], strides = [1, 1]} : vector<8x128xf32> to vector<8x32xf32>
    %1388 = arith.mulf %1385, %1349 : vector<8x32xf32>
    %1389 = arith.mulf %1384, %1387 : vector<8x32xf32>
    %1390 = arith.addf %1388, %1389 : vector<8x32xf32>
    %1391 = math.tanh %1390 : vector<8x32xf32>
    %1392 = arith.mulf %1386, %1391 : vector<8x32xf32>
    %cst_352 = arith.constant dense<0.000000e+00> : vector<8x128xf32>
    %1393 = tpu.matmul %1392, %6, %cst_352 {dimension_numbers = #tpu.dot_dimension_numbers<[1], [0], [0], [1], [0, 0, 1, 1], [], []>} : vector<8x32xf32>, vector<32x128xf32>, vector<8x128xf32> -> vector<8x128xf32>
    %cst_353 = arith.constant dense<0.000000e+00> : vector<8x128xf32>
    %1394 = tpu.matmul %1392, %7, %cst_353 {dimension_numbers = #tpu.dot_dimension_numbers<[1], [0], [0], [1], [0, 0, 1, 1], [], []>} : vector<8x32xf32>, vector<32x128xf32>, vector<8x128xf32> -> vector<8x128xf32>
    %1395 = arith.addf %1394, %1371 : vector<8x128xf32>
    %1396 = arith.addf %1395, %11 : vector<8x128xf32>
    %1397 = arith.mulf %1396, %17 : vector<8x128xf32>
    %1398 = math.tanh %1397 : vector<8x128xf32>
    %cst_354 = arith.constant 1.000000e+00 : f32
    %1399 = vector.broadcast %cst_354 : f32 to vector<8x128xf32>
    %1400 = arith.addf %1398, %1399 : vector<8x128xf32>
    %cst_355 = arith.constant 5.000000e-01 : f32
    %1401 = vector.broadcast %cst_355 : f32 to vector<8x128xf32>
    %1402 = arith.mulf %1401, %1400 : vector<8x128xf32>
    %1403 = vector.extract_strided_slice %1402 {offsets = [0, 0], sizes = [8, 32], strides = [1, 1]} : vector<8x128xf32> to vector<8x32xf32>
    %1404 = vector.extract_strided_slice %1402 {offsets = [0, 32], sizes = [8, 32], strides = [1, 1]} : vector<8x128xf32> to vector<8x32xf32>
    %1405 = vector.extract_strided_slice %1402 {offsets = [0, 64], sizes = [8, 32], strides = [1, 1]} : vector<8x128xf32> to vector<8x32xf32>
    %1406 = vector.extract_strided_slice %1398 {offsets = [0, 96], sizes = [8, 32], strides = [1, 1]} : vector<8x128xf32> to vector<8x32xf32>
    %1407 = arith.mulf %1404, %1368 : vector<8x32xf32>
    %1408 = arith.mulf %1403, %1406 : vector<8x32xf32>
    %1409 = arith.addf %1407, %1408 : vector<8x32xf32>
    %1410 = math.tanh %1409 : vector<8x32xf32>
    %1411 = arith.mulf %1405, %1410 : vector<8x32xf32>
    %cst_356 = arith.constant dense<0.000000e+00> : vector<8x128xf32>
    %1412 = tpu.matmul %1411, %8, %cst_356 {dimension_numbers = #tpu.dot_dimension_numbers<[1], [0], [0], [1], [0, 0, 1, 1], [], []>} : vector<8x32xf32>, vector<32x128xf32>, vector<8x128xf32> -> vector<8x128xf32>
    %c33 = arith.constant 33 : index
    %c0_357 = arith.constant 0 : index
    %c0_358 = arith.constant 0 : index
    %1413 = vector.load %arg7[%c33, %c0_357, %c0_358] : memref<50x32x2xf32, #tpu.memory_space<vmem>>, vector<1x32x2xf32>
    %1414 = vector.shape_cast %1413 : vector<1x32x2xf32> to vector<32x2xf32>
    %cst_359 = arith.constant dense<0.000000e+00> : vector<8x2xf32>
    %1415 = tpu.matmul %1411, %1414, %cst_359 {dimension_numbers = #tpu.dot_dimension_numbers<[1], [0], [0], [1], [0, 0, 1, 1], [], []>} : vector<8x32xf32>, vector<32x2xf32>, vector<8x2xf32> -> vector<8x2xf32>
    %1416 = arith.addf %1375, %1415 : vector<8x2xf32>
    %1417 = vector.extract_strided_slice %5 {offsets = [272, 0], sizes = [8, 128], strides = [1, 1]} : vector<400x128xf32> to vector<8x128xf32>
    %1418 = arith.addf %1417, %1393 : vector<8x128xf32>
    %1419 = arith.mulf %1418, %17 : vector<8x128xf32>
    %1420 = math.tanh %1419 : vector<8x128xf32>
    %cst_360 = arith.constant 1.000000e+00 : f32
    %1421 = vector.broadcast %cst_360 : f32 to vector<8x128xf32>
    %1422 = arith.addf %1420, %1421 : vector<8x128xf32>
    %cst_361 = arith.constant 5.000000e-01 : f32
    %1423 = vector.broadcast %cst_361 : f32 to vector<8x128xf32>
    %1424 = arith.mulf %1423, %1422 : vector<8x128xf32>
    %1425 = vector.extract_strided_slice %1424 {offsets = [0, 0], sizes = [8, 32], strides = [1, 1]} : vector<8x128xf32> to vector<8x32xf32>
    %1426 = vector.extract_strided_slice %1424 {offsets = [0, 32], sizes = [8, 32], strides = [1, 1]} : vector<8x128xf32> to vector<8x32xf32>
    %1427 = vector.extract_strided_slice %1424 {offsets = [0, 64], sizes = [8, 32], strides = [1, 1]} : vector<8x128xf32> to vector<8x32xf32>
    %1428 = vector.extract_strided_slice %1420 {offsets = [0, 96], sizes = [8, 32], strides = [1, 1]} : vector<8x128xf32> to vector<8x32xf32>
    %1429 = arith.mulf %1426, %1390 : vector<8x32xf32>
    %1430 = arith.mulf %1425, %1428 : vector<8x32xf32>
    %1431 = arith.addf %1429, %1430 : vector<8x32xf32>
    %1432 = math.tanh %1431 : vector<8x32xf32>
    %1433 = arith.mulf %1427, %1432 : vector<8x32xf32>
    %cst_362 = arith.constant dense<0.000000e+00> : vector<8x128xf32>
    %1434 = tpu.matmul %1433, %6, %cst_362 {dimension_numbers = #tpu.dot_dimension_numbers<[1], [0], [0], [1], [0, 0, 1, 1], [], []>} : vector<8x32xf32>, vector<32x128xf32>, vector<8x128xf32> -> vector<8x128xf32>
    %cst_363 = arith.constant dense<0.000000e+00> : vector<8x128xf32>
    %1435 = tpu.matmul %1433, %7, %cst_363 {dimension_numbers = #tpu.dot_dimension_numbers<[1], [0], [0], [1], [0, 0, 1, 1], [], []>} : vector<8x32xf32>, vector<32x128xf32>, vector<8x128xf32> -> vector<8x128xf32>
    %1436 = arith.addf %1435, %1412 : vector<8x128xf32>
    %1437 = arith.addf %1436, %11 : vector<8x128xf32>
    %1438 = arith.mulf %1437, %17 : vector<8x128xf32>
    %1439 = math.tanh %1438 : vector<8x128xf32>
    %cst_364 = arith.constant 1.000000e+00 : f32
    %1440 = vector.broadcast %cst_364 : f32 to vector<8x128xf32>
    %1441 = arith.addf %1439, %1440 : vector<8x128xf32>
    %cst_365 = arith.constant 5.000000e-01 : f32
    %1442 = vector.broadcast %cst_365 : f32 to vector<8x128xf32>
    %1443 = arith.mulf %1442, %1441 : vector<8x128xf32>
    %1444 = vector.extract_strided_slice %1443 {offsets = [0, 0], sizes = [8, 32], strides = [1, 1]} : vector<8x128xf32> to vector<8x32xf32>
    %1445 = vector.extract_strided_slice %1443 {offsets = [0, 32], sizes = [8, 32], strides = [1, 1]} : vector<8x128xf32> to vector<8x32xf32>
    %1446 = vector.extract_strided_slice %1443 {offsets = [0, 64], sizes = [8, 32], strides = [1, 1]} : vector<8x128xf32> to vector<8x32xf32>
    %1447 = vector.extract_strided_slice %1439 {offsets = [0, 96], sizes = [8, 32], strides = [1, 1]} : vector<8x128xf32> to vector<8x32xf32>
    %1448 = arith.mulf %1445, %1409 : vector<8x32xf32>
    %1449 = arith.mulf %1444, %1447 : vector<8x32xf32>
    %1450 = arith.addf %1448, %1449 : vector<8x32xf32>
    %1451 = math.tanh %1450 : vector<8x32xf32>
    %1452 = arith.mulf %1446, %1451 : vector<8x32xf32>
    %cst_366 = arith.constant dense<0.000000e+00> : vector<8x128xf32>
    %1453 = tpu.matmul %1452, %8, %cst_366 {dimension_numbers = #tpu.dot_dimension_numbers<[1], [0], [0], [1], [0, 0, 1, 1], [], []>} : vector<8x32xf32>, vector<32x128xf32>, vector<8x128xf32> -> vector<8x128xf32>
    %c34 = arith.constant 34 : index
    %c0_367 = arith.constant 0 : index
    %c0_368 = arith.constant 0 : index
    %1454 = vector.load %arg7[%c34, %c0_367, %c0_368] : memref<50x32x2xf32, #tpu.memory_space<vmem>>, vector<1x32x2xf32>
    %1455 = vector.shape_cast %1454 : vector<1x32x2xf32> to vector<32x2xf32>
    %cst_369 = arith.constant dense<0.000000e+00> : vector<8x2xf32>
    %1456 = tpu.matmul %1452, %1455, %cst_369 {dimension_numbers = #tpu.dot_dimension_numbers<[1], [0], [0], [1], [0, 0, 1, 1], [], []>} : vector<8x32xf32>, vector<32x2xf32>, vector<8x2xf32> -> vector<8x2xf32>
    %1457 = arith.addf %1416, %1456 : vector<8x2xf32>
    %1458 = vector.extract_strided_slice %5 {offsets = [280, 0], sizes = [8, 128], strides = [1, 1]} : vector<400x128xf32> to vector<8x128xf32>
    %1459 = arith.addf %1458, %1434 : vector<8x128xf32>
    %1460 = arith.mulf %1459, %17 : vector<8x128xf32>
    %1461 = math.tanh %1460 : vector<8x128xf32>
    %cst_370 = arith.constant 1.000000e+00 : f32
    %1462 = vector.broadcast %cst_370 : f32 to vector<8x128xf32>
    %1463 = arith.addf %1461, %1462 : vector<8x128xf32>
    %cst_371 = arith.constant 5.000000e-01 : f32
    %1464 = vector.broadcast %cst_371 : f32 to vector<8x128xf32>
    %1465 = arith.mulf %1464, %1463 : vector<8x128xf32>
    %1466 = vector.extract_strided_slice %1465 {offsets = [0, 0], sizes = [8, 32], strides = [1, 1]} : vector<8x128xf32> to vector<8x32xf32>
    %1467 = vector.extract_strided_slice %1465 {offsets = [0, 32], sizes = [8, 32], strides = [1, 1]} : vector<8x128xf32> to vector<8x32xf32>
    %1468 = vector.extract_strided_slice %1465 {offsets = [0, 64], sizes = [8, 32], strides = [1, 1]} : vector<8x128xf32> to vector<8x32xf32>
    %1469 = vector.extract_strided_slice %1461 {offsets = [0, 96], sizes = [8, 32], strides = [1, 1]} : vector<8x128xf32> to vector<8x32xf32>
    %1470 = arith.mulf %1467, %1431 : vector<8x32xf32>
    %1471 = arith.mulf %1466, %1469 : vector<8x32xf32>
    %1472 = arith.addf %1470, %1471 : vector<8x32xf32>
    %1473 = math.tanh %1472 : vector<8x32xf32>
    %1474 = arith.mulf %1468, %1473 : vector<8x32xf32>
    %cst_372 = arith.constant dense<0.000000e+00> : vector<8x128xf32>
    %1475 = tpu.matmul %1474, %6, %cst_372 {dimension_numbers = #tpu.dot_dimension_numbers<[1], [0], [0], [1], [0, 0, 1, 1], [], []>} : vector<8x32xf32>, vector<32x128xf32>, vector<8x128xf32> -> vector<8x128xf32>
    %cst_373 = arith.constant dense<0.000000e+00> : vector<8x128xf32>
    %1476 = tpu.matmul %1474, %7, %cst_373 {dimension_numbers = #tpu.dot_dimension_numbers<[1], [0], [0], [1], [0, 0, 1, 1], [], []>} : vector<8x32xf32>, vector<32x128xf32>, vector<8x128xf32> -> vector<8x128xf32>
    %1477 = arith.addf %1476, %1453 : vector<8x128xf32>
    %1478 = arith.addf %1477, %11 : vector<8x128xf32>
    %1479 = arith.mulf %1478, %17 : vector<8x128xf32>
    %1480 = math.tanh %1479 : vector<8x128xf32>
    %cst_374 = arith.constant 1.000000e+00 : f32
    %1481 = vector.broadcast %cst_374 : f32 to vector<8x128xf32>
    %1482 = arith.addf %1480, %1481 : vector<8x128xf32>
    %cst_375 = arith.constant 5.000000e-01 : f32
    %1483 = vector.broadcast %cst_375 : f32 to vector<8x128xf32>
    %1484 = arith.mulf %1483, %1482 : vector<8x128xf32>
    %1485 = vector.extract_strided_slice %1484 {offsets = [0, 0], sizes = [8, 32], strides = [1, 1]} : vector<8x128xf32> to vector<8x32xf32>
    %1486 = vector.extract_strided_slice %1484 {offsets = [0, 32], sizes = [8, 32], strides = [1, 1]} : vector<8x128xf32> to vector<8x32xf32>
    %1487 = vector.extract_strided_slice %1484 {offsets = [0, 64], sizes = [8, 32], strides = [1, 1]} : vector<8x128xf32> to vector<8x32xf32>
    %1488 = vector.extract_strided_slice %1480 {offsets = [0, 96], sizes = [8, 32], strides = [1, 1]} : vector<8x128xf32> to vector<8x32xf32>
    %1489 = arith.mulf %1486, %1450 : vector<8x32xf32>
    %1490 = arith.mulf %1485, %1488 : vector<8x32xf32>
    %1491 = arith.addf %1489, %1490 : vector<8x32xf32>
    %1492 = math.tanh %1491 : vector<8x32xf32>
    %1493 = arith.mulf %1487, %1492 : vector<8x32xf32>
    %cst_376 = arith.constant dense<0.000000e+00> : vector<8x128xf32>
    %1494 = tpu.matmul %1493, %8, %cst_376 {dimension_numbers = #tpu.dot_dimension_numbers<[1], [0], [0], [1], [0, 0, 1, 1], [], []>} : vector<8x32xf32>, vector<32x128xf32>, vector<8x128xf32> -> vector<8x128xf32>
    %c35 = arith.constant 35 : index
    %c0_377 = arith.constant 0 : index
    %c0_378 = arith.constant 0 : index
    %1495 = vector.load %arg7[%c35, %c0_377, %c0_378] : memref<50x32x2xf32, #tpu.memory_space<vmem>>, vector<1x32x2xf32>
    %1496 = vector.shape_cast %1495 : vector<1x32x2xf32> to vector<32x2xf32>
    %cst_379 = arith.constant dense<0.000000e+00> : vector<8x2xf32>
    %1497 = tpu.matmul %1493, %1496, %cst_379 {dimension_numbers = #tpu.dot_dimension_numbers<[1], [0], [0], [1], [0, 0, 1, 1], [], []>} : vector<8x32xf32>, vector<32x2xf32>, vector<8x2xf32> -> vector<8x2xf32>
    %1498 = arith.addf %1457, %1497 : vector<8x2xf32>
    %1499 = vector.extract_strided_slice %5 {offsets = [288, 0], sizes = [8, 128], strides = [1, 1]} : vector<400x128xf32> to vector<8x128xf32>
    %1500 = arith.addf %1499, %1475 : vector<8x128xf32>
    %1501 = arith.mulf %1500, %17 : vector<8x128xf32>
    %1502 = math.tanh %1501 : vector<8x128xf32>
    %cst_380 = arith.constant 1.000000e+00 : f32
    %1503 = vector.broadcast %cst_380 : f32 to vector<8x128xf32>
    %1504 = arith.addf %1502, %1503 : vector<8x128xf32>
    %cst_381 = arith.constant 5.000000e-01 : f32
    %1505 = vector.broadcast %cst_381 : f32 to vector<8x128xf32>
    %1506 = arith.mulf %1505, %1504 : vector<8x128xf32>
    %1507 = vector.extract_strided_slice %1506 {offsets = [0, 0], sizes = [8, 32], strides = [1, 1]} : vector<8x128xf32> to vector<8x32xf32>
    %1508 = vector.extract_strided_slice %1506 {offsets = [0, 32], sizes = [8, 32], strides = [1, 1]} : vector<8x128xf32> to vector<8x32xf32>
    %1509 = vector.extract_strided_slice %1506 {offsets = [0, 64], sizes = [8, 32], strides = [1, 1]} : vector<8x128xf32> to vector<8x32xf32>
    %1510 = vector.extract_strided_slice %1502 {offsets = [0, 96], sizes = [8, 32], strides = [1, 1]} : vector<8x128xf32> to vector<8x32xf32>
    %1511 = arith.mulf %1508, %1472 : vector<8x32xf32>
    %1512 = arith.mulf %1507, %1510 : vector<8x32xf32>
    %1513 = arith.addf %1511, %1512 : vector<8x32xf32>
    %1514 = math.tanh %1513 : vector<8x32xf32>
    %1515 = arith.mulf %1509, %1514 : vector<8x32xf32>
    %cst_382 = arith.constant dense<0.000000e+00> : vector<8x128xf32>
    %1516 = tpu.matmul %1515, %6, %cst_382 {dimension_numbers = #tpu.dot_dimension_numbers<[1], [0], [0], [1], [0, 0, 1, 1], [], []>} : vector<8x32xf32>, vector<32x128xf32>, vector<8x128xf32> -> vector<8x128xf32>
    %cst_383 = arith.constant dense<0.000000e+00> : vector<8x128xf32>
    %1517 = tpu.matmul %1515, %7, %cst_383 {dimension_numbers = #tpu.dot_dimension_numbers<[1], [0], [0], [1], [0, 0, 1, 1], [], []>} : vector<8x32xf32>, vector<32x128xf32>, vector<8x128xf32> -> vector<8x128xf32>
    %1518 = arith.addf %1517, %1494 : vector<8x128xf32>
    %1519 = arith.addf %1518, %11 : vector<8x128xf32>
    %1520 = arith.mulf %1519, %17 : vector<8x128xf32>
    %1521 = math.tanh %1520 : vector<8x128xf32>
    %cst_384 = arith.constant 1.000000e+00 : f32
    %1522 = vector.broadcast %cst_384 : f32 to vector<8x128xf32>
    %1523 = arith.addf %1521, %1522 : vector<8x128xf32>
    %cst_385 = arith.constant 5.000000e-01 : f32
    %1524 = vector.broadcast %cst_385 : f32 to vector<8x128xf32>
    %1525 = arith.mulf %1524, %1523 : vector<8x128xf32>
    %1526 = vector.extract_strided_slice %1525 {offsets = [0, 0], sizes = [8, 32], strides = [1, 1]} : vector<8x128xf32> to vector<8x32xf32>
    %1527 = vector.extract_strided_slice %1525 {offsets = [0, 32], sizes = [8, 32], strides = [1, 1]} : vector<8x128xf32> to vector<8x32xf32>
    %1528 = vector.extract_strided_slice %1525 {offsets = [0, 64], sizes = [8, 32], strides = [1, 1]} : vector<8x128xf32> to vector<8x32xf32>
    %1529 = vector.extract_strided_slice %1521 {offsets = [0, 96], sizes = [8, 32], strides = [1, 1]} : vector<8x128xf32> to vector<8x32xf32>
    %1530 = arith.mulf %1527, %1491 : vector<8x32xf32>
    %1531 = arith.mulf %1526, %1529 : vector<8x32xf32>
    %1532 = arith.addf %1530, %1531 : vector<8x32xf32>
    %1533 = math.tanh %1532 : vector<8x32xf32>
    %1534 = arith.mulf %1528, %1533 : vector<8x32xf32>
    %cst_386 = arith.constant dense<0.000000e+00> : vector<8x128xf32>
    %1535 = tpu.matmul %1534, %8, %cst_386 {dimension_numbers = #tpu.dot_dimension_numbers<[1], [0], [0], [1], [0, 0, 1, 1], [], []>} : vector<8x32xf32>, vector<32x128xf32>, vector<8x128xf32> -> vector<8x128xf32>
    %c36 = arith.constant 36 : index
    %c0_387 = arith.constant 0 : index
    %c0_388 = arith.constant 0 : index
    %1536 = vector.load %arg7[%c36, %c0_387, %c0_388] : memref<50x32x2xf32, #tpu.memory_space<vmem>>, vector<1x32x2xf32>
    %1537 = vector.shape_cast %1536 : vector<1x32x2xf32> to vector<32x2xf32>
    %cst_389 = arith.constant dense<0.000000e+00> : vector<8x2xf32>
    %1538 = tpu.matmul %1534, %1537, %cst_389 {dimension_numbers = #tpu.dot_dimension_numbers<[1], [0], [0], [1], [0, 0, 1, 1], [], []>} : vector<8x32xf32>, vector<32x2xf32>, vector<8x2xf32> -> vector<8x2xf32>
    %1539 = arith.addf %1498, %1538 : vector<8x2xf32>
    %1540 = vector.extract_strided_slice %5 {offsets = [296, 0], sizes = [8, 128], strides = [1, 1]} : vector<400x128xf32> to vector<8x128xf32>
    %1541 = arith.addf %1540, %1516 : vector<8x128xf32>
    %1542 = arith.mulf %1541, %17 : vector<8x128xf32>
    %1543 = math.tanh %1542 : vector<8x128xf32>
    %cst_390 = arith.constant 1.000000e+00 : f32
    %1544 = vector.broadcast %cst_390 : f32 to vector<8x128xf32>
    %1545 = arith.addf %1543, %1544 : vector<8x128xf32>
    %cst_391 = arith.constant 5.000000e-01 : f32
    %1546 = vector.broadcast %cst_391 : f32 to vector<8x128xf32>
    %1547 = arith.mulf %1546, %1545 : vector<8x128xf32>
    %1548 = vector.extract_strided_slice %1547 {offsets = [0, 0], sizes = [8, 32], strides = [1, 1]} : vector<8x128xf32> to vector<8x32xf32>
    %1549 = vector.extract_strided_slice %1547 {offsets = [0, 32], sizes = [8, 32], strides = [1, 1]} : vector<8x128xf32> to vector<8x32xf32>
    %1550 = vector.extract_strided_slice %1547 {offsets = [0, 64], sizes = [8, 32], strides = [1, 1]} : vector<8x128xf32> to vector<8x32xf32>
    %1551 = vector.extract_strided_slice %1543 {offsets = [0, 96], sizes = [8, 32], strides = [1, 1]} : vector<8x128xf32> to vector<8x32xf32>
    %1552 = arith.mulf %1549, %1513 : vector<8x32xf32>
    %1553 = arith.mulf %1548, %1551 : vector<8x32xf32>
    %1554 = arith.addf %1552, %1553 : vector<8x32xf32>
    %1555 = math.tanh %1554 : vector<8x32xf32>
    %1556 = arith.mulf %1550, %1555 : vector<8x32xf32>
    %cst_392 = arith.constant dense<0.000000e+00> : vector<8x128xf32>
    %1557 = tpu.matmul %1556, %6, %cst_392 {dimension_numbers = #tpu.dot_dimension_numbers<[1], [0], [0], [1], [0, 0, 1, 1], [], []>} : vector<8x32xf32>, vector<32x128xf32>, vector<8x128xf32> -> vector<8x128xf32>
    %cst_393 = arith.constant dense<0.000000e+00> : vector<8x128xf32>
    %1558 = tpu.matmul %1556, %7, %cst_393 {dimension_numbers = #tpu.dot_dimension_numbers<[1], [0], [0], [1], [0, 0, 1, 1], [], []>} : vector<8x32xf32>, vector<32x128xf32>, vector<8x128xf32> -> vector<8x128xf32>
    %1559 = arith.addf %1558, %1535 : vector<8x128xf32>
    %1560 = arith.addf %1559, %11 : vector<8x128xf32>
    %1561 = arith.mulf %1560, %17 : vector<8x128xf32>
    %1562 = math.tanh %1561 : vector<8x128xf32>
    %cst_394 = arith.constant 1.000000e+00 : f32
    %1563 = vector.broadcast %cst_394 : f32 to vector<8x128xf32>
    %1564 = arith.addf %1562, %1563 : vector<8x128xf32>
    %cst_395 = arith.constant 5.000000e-01 : f32
    %1565 = vector.broadcast %cst_395 : f32 to vector<8x128xf32>
    %1566 = arith.mulf %1565, %1564 : vector<8x128xf32>
    %1567 = vector.extract_strided_slice %1566 {offsets = [0, 0], sizes = [8, 32], strides = [1, 1]} : vector<8x128xf32> to vector<8x32xf32>
    %1568 = vector.extract_strided_slice %1566 {offsets = [0, 32], sizes = [8, 32], strides = [1, 1]} : vector<8x128xf32> to vector<8x32xf32>
    %1569 = vector.extract_strided_slice %1566 {offsets = [0, 64], sizes = [8, 32], strides = [1, 1]} : vector<8x128xf32> to vector<8x32xf32>
    %1570 = vector.extract_strided_slice %1562 {offsets = [0, 96], sizes = [8, 32], strides = [1, 1]} : vector<8x128xf32> to vector<8x32xf32>
    %1571 = arith.mulf %1568, %1532 : vector<8x32xf32>
    %1572 = arith.mulf %1567, %1570 : vector<8x32xf32>
    %1573 = arith.addf %1571, %1572 : vector<8x32xf32>
    %1574 = math.tanh %1573 : vector<8x32xf32>
    %1575 = arith.mulf %1569, %1574 : vector<8x32xf32>
    %cst_396 = arith.constant dense<0.000000e+00> : vector<8x128xf32>
    %1576 = tpu.matmul %1575, %8, %cst_396 {dimension_numbers = #tpu.dot_dimension_numbers<[1], [0], [0], [1], [0, 0, 1, 1], [], []>} : vector<8x32xf32>, vector<32x128xf32>, vector<8x128xf32> -> vector<8x128xf32>
    %c37 = arith.constant 37 : index
    %c0_397 = arith.constant 0 : index
    %c0_398 = arith.constant 0 : index
    %1577 = vector.load %arg7[%c37, %c0_397, %c0_398] : memref<50x32x2xf32, #tpu.memory_space<vmem>>, vector<1x32x2xf32>
    %1578 = vector.shape_cast %1577 : vector<1x32x2xf32> to vector<32x2xf32>
    %cst_399 = arith.constant dense<0.000000e+00> : vector<8x2xf32>
    %1579 = tpu.matmul %1575, %1578, %cst_399 {dimension_numbers = #tpu.dot_dimension_numbers<[1], [0], [0], [1], [0, 0, 1, 1], [], []>} : vector<8x32xf32>, vector<32x2xf32>, vector<8x2xf32> -> vector<8x2xf32>
    %1580 = arith.addf %1539, %1579 : vector<8x2xf32>
    %1581 = vector.extract_strided_slice %5 {offsets = [304, 0], sizes = [8, 128], strides = [1, 1]} : vector<400x128xf32> to vector<8x128xf32>
    %1582 = arith.addf %1581, %1557 : vector<8x128xf32>
    %1583 = arith.mulf %1582, %17 : vector<8x128xf32>
    %1584 = math.tanh %1583 : vector<8x128xf32>
    %cst_400 = arith.constant 1.000000e+00 : f32
    %1585 = vector.broadcast %cst_400 : f32 to vector<8x128xf32>
    %1586 = arith.addf %1584, %1585 : vector<8x128xf32>
    %cst_401 = arith.constant 5.000000e-01 : f32
    %1587 = vector.broadcast %cst_401 : f32 to vector<8x128xf32>
    %1588 = arith.mulf %1587, %1586 : vector<8x128xf32>
    %1589 = vector.extract_strided_slice %1588 {offsets = [0, 0], sizes = [8, 32], strides = [1, 1]} : vector<8x128xf32> to vector<8x32xf32>
    %1590 = vector.extract_strided_slice %1588 {offsets = [0, 32], sizes = [8, 32], strides = [1, 1]} : vector<8x128xf32> to vector<8x32xf32>
    %1591 = vector.extract_strided_slice %1588 {offsets = [0, 64], sizes = [8, 32], strides = [1, 1]} : vector<8x128xf32> to vector<8x32xf32>
    %1592 = vector.extract_strided_slice %1584 {offsets = [0, 96], sizes = [8, 32], strides = [1, 1]} : vector<8x128xf32> to vector<8x32xf32>
    %1593 = arith.mulf %1590, %1554 : vector<8x32xf32>
    %1594 = arith.mulf %1589, %1592 : vector<8x32xf32>
    %1595 = arith.addf %1593, %1594 : vector<8x32xf32>
    %1596 = math.tanh %1595 : vector<8x32xf32>
    %1597 = arith.mulf %1591, %1596 : vector<8x32xf32>
    %cst_402 = arith.constant dense<0.000000e+00> : vector<8x128xf32>
    %1598 = tpu.matmul %1597, %6, %cst_402 {dimension_numbers = #tpu.dot_dimension_numbers<[1], [0], [0], [1], [0, 0, 1, 1], [], []>} : vector<8x32xf32>, vector<32x128xf32>, vector<8x128xf32> -> vector<8x128xf32>
    %cst_403 = arith.constant dense<0.000000e+00> : vector<8x128xf32>
    %1599 = tpu.matmul %1597, %7, %cst_403 {dimension_numbers = #tpu.dot_dimension_numbers<[1], [0], [0], [1], [0, 0, 1, 1], [], []>} : vector<8x32xf32>, vector<32x128xf32>, vector<8x128xf32> -> vector<8x128xf32>
    %1600 = arith.addf %1599, %1576 : vector<8x128xf32>
    %1601 = arith.addf %1600, %11 : vector<8x128xf32>
    %1602 = arith.mulf %1601, %17 : vector<8x128xf32>
    %1603 = math.tanh %1602 : vector<8x128xf32>
    %cst_404 = arith.constant 1.000000e+00 : f32
    %1604 = vector.broadcast %cst_404 : f32 to vector<8x128xf32>
    %1605 = arith.addf %1603, %1604 : vector<8x128xf32>
    %cst_405 = arith.constant 5.000000e-01 : f32
    %1606 = vector.broadcast %cst_405 : f32 to vector<8x128xf32>
    %1607 = arith.mulf %1606, %1605 : vector<8x128xf32>
    %1608 = vector.extract_strided_slice %1607 {offsets = [0, 0], sizes = [8, 32], strides = [1, 1]} : vector<8x128xf32> to vector<8x32xf32>
    %1609 = vector.extract_strided_slice %1607 {offsets = [0, 32], sizes = [8, 32], strides = [1, 1]} : vector<8x128xf32> to vector<8x32xf32>
    %1610 = vector.extract_strided_slice %1607 {offsets = [0, 64], sizes = [8, 32], strides = [1, 1]} : vector<8x128xf32> to vector<8x32xf32>
    %1611 = vector.extract_strided_slice %1603 {offsets = [0, 96], sizes = [8, 32], strides = [1, 1]} : vector<8x128xf32> to vector<8x32xf32>
    %1612 = arith.mulf %1609, %1573 : vector<8x32xf32>
    %1613 = arith.mulf %1608, %1611 : vector<8x32xf32>
    %1614 = arith.addf %1612, %1613 : vector<8x32xf32>
    %1615 = math.tanh %1614 : vector<8x32xf32>
    %1616 = arith.mulf %1610, %1615 : vector<8x32xf32>
    %cst_406 = arith.constant dense<0.000000e+00> : vector<8x128xf32>
    %1617 = tpu.matmul %1616, %8, %cst_406 {dimension_numbers = #tpu.dot_dimension_numbers<[1], [0], [0], [1], [0, 0, 1, 1], [], []>} : vector<8x32xf32>, vector<32x128xf32>, vector<8x128xf32> -> vector<8x128xf32>
    %c38 = arith.constant 38 : index
    %c0_407 = arith.constant 0 : index
    %c0_408 = arith.constant 0 : index
    %1618 = vector.load %arg7[%c38, %c0_407, %c0_408] : memref<50x32x2xf32, #tpu.memory_space<vmem>>, vector<1x32x2xf32>
    %1619 = vector.shape_cast %1618 : vector<1x32x2xf32> to vector<32x2xf32>
    %cst_409 = arith.constant dense<0.000000e+00> : vector<8x2xf32>
    %1620 = tpu.matmul %1616, %1619, %cst_409 {dimension_numbers = #tpu.dot_dimension_numbers<[1], [0], [0], [1], [0, 0, 1, 1], [], []>} : vector<8x32xf32>, vector<32x2xf32>, vector<8x2xf32> -> vector<8x2xf32>
    %1621 = arith.addf %1580, %1620 : vector<8x2xf32>
    %1622 = vector.extract_strided_slice %5 {offsets = [312, 0], sizes = [8, 128], strides = [1, 1]} : vector<400x128xf32> to vector<8x128xf32>
    %1623 = arith.addf %1622, %1598 : vector<8x128xf32>
    %1624 = arith.mulf %1623, %17 : vector<8x128xf32>
    %1625 = math.tanh %1624 : vector<8x128xf32>
    %cst_410 = arith.constant 1.000000e+00 : f32
    %1626 = vector.broadcast %cst_410 : f32 to vector<8x128xf32>
    %1627 = arith.addf %1625, %1626 : vector<8x128xf32>
    %cst_411 = arith.constant 5.000000e-01 : f32
    %1628 = vector.broadcast %cst_411 : f32 to vector<8x128xf32>
    %1629 = arith.mulf %1628, %1627 : vector<8x128xf32>
    %1630 = vector.extract_strided_slice %1629 {offsets = [0, 0], sizes = [8, 32], strides = [1, 1]} : vector<8x128xf32> to vector<8x32xf32>
    %1631 = vector.extract_strided_slice %1629 {offsets = [0, 32], sizes = [8, 32], strides = [1, 1]} : vector<8x128xf32> to vector<8x32xf32>
    %1632 = vector.extract_strided_slice %1629 {offsets = [0, 64], sizes = [8, 32], strides = [1, 1]} : vector<8x128xf32> to vector<8x32xf32>
    %1633 = vector.extract_strided_slice %1625 {offsets = [0, 96], sizes = [8, 32], strides = [1, 1]} : vector<8x128xf32> to vector<8x32xf32>
    %1634 = arith.mulf %1631, %1595 : vector<8x32xf32>
    %1635 = arith.mulf %1630, %1633 : vector<8x32xf32>
    %1636 = arith.addf %1634, %1635 : vector<8x32xf32>
    %1637 = math.tanh %1636 : vector<8x32xf32>
    %1638 = arith.mulf %1632, %1637 : vector<8x32xf32>
    %cst_412 = arith.constant dense<0.000000e+00> : vector<8x128xf32>
    %1639 = tpu.matmul %1638, %6, %cst_412 {dimension_numbers = #tpu.dot_dimension_numbers<[1], [0], [0], [1], [0, 0, 1, 1], [], []>} : vector<8x32xf32>, vector<32x128xf32>, vector<8x128xf32> -> vector<8x128xf32>
    %cst_413 = arith.constant dense<0.000000e+00> : vector<8x128xf32>
    %1640 = tpu.matmul %1638, %7, %cst_413 {dimension_numbers = #tpu.dot_dimension_numbers<[1], [0], [0], [1], [0, 0, 1, 1], [], []>} : vector<8x32xf32>, vector<32x128xf32>, vector<8x128xf32> -> vector<8x128xf32>
    %1641 = arith.addf %1640, %1617 : vector<8x128xf32>
    %1642 = arith.addf %1641, %11 : vector<8x128xf32>
    %1643 = arith.mulf %1642, %17 : vector<8x128xf32>
    %1644 = math.tanh %1643 : vector<8x128xf32>
    %cst_414 = arith.constant 1.000000e+00 : f32
    %1645 = vector.broadcast %cst_414 : f32 to vector<8x128xf32>
    %1646 = arith.addf %1644, %1645 : vector<8x128xf32>
    %cst_415 = arith.constant 5.000000e-01 : f32
    %1647 = vector.broadcast %cst_415 : f32 to vector<8x128xf32>
    %1648 = arith.mulf %1647, %1646 : vector<8x128xf32>
    %1649 = vector.extract_strided_slice %1648 {offsets = [0, 0], sizes = [8, 32], strides = [1, 1]} : vector<8x128xf32> to vector<8x32xf32>
    %1650 = vector.extract_strided_slice %1648 {offsets = [0, 32], sizes = [8, 32], strides = [1, 1]} : vector<8x128xf32> to vector<8x32xf32>
    %1651 = vector.extract_strided_slice %1648 {offsets = [0, 64], sizes = [8, 32], strides = [1, 1]} : vector<8x128xf32> to vector<8x32xf32>
    %1652 = vector.extract_strided_slice %1644 {offsets = [0, 96], sizes = [8, 32], strides = [1, 1]} : vector<8x128xf32> to vector<8x32xf32>
    %1653 = arith.mulf %1650, %1614 : vector<8x32xf32>
    %1654 = arith.mulf %1649, %1652 : vector<8x32xf32>
    %1655 = arith.addf %1653, %1654 : vector<8x32xf32>
    %1656 = math.tanh %1655 : vector<8x32xf32>
    %1657 = arith.mulf %1651, %1656 : vector<8x32xf32>
    %cst_416 = arith.constant dense<0.000000e+00> : vector<8x128xf32>
    %1658 = tpu.matmul %1657, %8, %cst_416 {dimension_numbers = #tpu.dot_dimension_numbers<[1], [0], [0], [1], [0, 0, 1, 1], [], []>} : vector<8x32xf32>, vector<32x128xf32>, vector<8x128xf32> -> vector<8x128xf32>
    %c39 = arith.constant 39 : index
    %c0_417 = arith.constant 0 : index
    %c0_418 = arith.constant 0 : index
    %1659 = vector.load %arg7[%c39, %c0_417, %c0_418] : memref<50x32x2xf32, #tpu.memory_space<vmem>>, vector<1x32x2xf32>
    %1660 = vector.shape_cast %1659 : vector<1x32x2xf32> to vector<32x2xf32>
    %cst_419 = arith.constant dense<0.000000e+00> : vector<8x2xf32>
    %1661 = tpu.matmul %1657, %1660, %cst_419 {dimension_numbers = #tpu.dot_dimension_numbers<[1], [0], [0], [1], [0, 0, 1, 1], [], []>} : vector<8x32xf32>, vector<32x2xf32>, vector<8x2xf32> -> vector<8x2xf32>
    %1662 = arith.addf %1621, %1661 : vector<8x2xf32>
    %1663 = vector.extract_strided_slice %5 {offsets = [320, 0], sizes = [8, 128], strides = [1, 1]} : vector<400x128xf32> to vector<8x128xf32>
    %1664 = arith.addf %1663, %1639 : vector<8x128xf32>
    %1665 = arith.mulf %1664, %17 : vector<8x128xf32>
    %1666 = math.tanh %1665 : vector<8x128xf32>
    %cst_420 = arith.constant 1.000000e+00 : f32
    %1667 = vector.broadcast %cst_420 : f32 to vector<8x128xf32>
    %1668 = arith.addf %1666, %1667 : vector<8x128xf32>
    %cst_421 = arith.constant 5.000000e-01 : f32
    %1669 = vector.broadcast %cst_421 : f32 to vector<8x128xf32>
    %1670 = arith.mulf %1669, %1668 : vector<8x128xf32>
    %1671 = vector.extract_strided_slice %1670 {offsets = [0, 0], sizes = [8, 32], strides = [1, 1]} : vector<8x128xf32> to vector<8x32xf32>
    %1672 = vector.extract_strided_slice %1670 {offsets = [0, 32], sizes = [8, 32], strides = [1, 1]} : vector<8x128xf32> to vector<8x32xf32>
    %1673 = vector.extract_strided_slice %1670 {offsets = [0, 64], sizes = [8, 32], strides = [1, 1]} : vector<8x128xf32> to vector<8x32xf32>
    %1674 = vector.extract_strided_slice %1666 {offsets = [0, 96], sizes = [8, 32], strides = [1, 1]} : vector<8x128xf32> to vector<8x32xf32>
    %1675 = arith.mulf %1672, %1636 : vector<8x32xf32>
    %1676 = arith.mulf %1671, %1674 : vector<8x32xf32>
    %1677 = arith.addf %1675, %1676 : vector<8x32xf32>
    %1678 = math.tanh %1677 : vector<8x32xf32>
    %1679 = arith.mulf %1673, %1678 : vector<8x32xf32>
    %cst_422 = arith.constant dense<0.000000e+00> : vector<8x128xf32>
    %1680 = tpu.matmul %1679, %6, %cst_422 {dimension_numbers = #tpu.dot_dimension_numbers<[1], [0], [0], [1], [0, 0, 1, 1], [], []>} : vector<8x32xf32>, vector<32x128xf32>, vector<8x128xf32> -> vector<8x128xf32>
    %cst_423 = arith.constant dense<0.000000e+00> : vector<8x128xf32>
    %1681 = tpu.matmul %1679, %7, %cst_423 {dimension_numbers = #tpu.dot_dimension_numbers<[1], [0], [0], [1], [0, 0, 1, 1], [], []>} : vector<8x32xf32>, vector<32x128xf32>, vector<8x128xf32> -> vector<8x128xf32>
    %1682 = arith.addf %1681, %1658 : vector<8x128xf32>
    %1683 = arith.addf %1682, %11 : vector<8x128xf32>
    %1684 = arith.mulf %1683, %17 : vector<8x128xf32>
    %1685 = math.tanh %1684 : vector<8x128xf32>
    %cst_424 = arith.constant 1.000000e+00 : f32
    %1686 = vector.broadcast %cst_424 : f32 to vector<8x128xf32>
    %1687 = arith.addf %1685, %1686 : vector<8x128xf32>
    %cst_425 = arith.constant 5.000000e-01 : f32
    %1688 = vector.broadcast %cst_425 : f32 to vector<8x128xf32>
    %1689 = arith.mulf %1688, %1687 : vector<8x128xf32>
    %1690 = vector.extract_strided_slice %1689 {offsets = [0, 0], sizes = [8, 32], strides = [1, 1]} : vector<8x128xf32> to vector<8x32xf32>
    %1691 = vector.extract_strided_slice %1689 {offsets = [0, 32], sizes = [8, 32], strides = [1, 1]} : vector<8x128xf32> to vector<8x32xf32>
    %1692 = vector.extract_strided_slice %1689 {offsets = [0, 64], sizes = [8, 32], strides = [1, 1]} : vector<8x128xf32> to vector<8x32xf32>
    %1693 = vector.extract_strided_slice %1685 {offsets = [0, 96], sizes = [8, 32], strides = [1, 1]} : vector<8x128xf32> to vector<8x32xf32>
    %1694 = arith.mulf %1691, %1655 : vector<8x32xf32>
    %1695 = arith.mulf %1690, %1693 : vector<8x32xf32>
    %1696 = arith.addf %1694, %1695 : vector<8x32xf32>
    %1697 = math.tanh %1696 : vector<8x32xf32>
    %1698 = arith.mulf %1692, %1697 : vector<8x32xf32>
    %cst_426 = arith.constant dense<0.000000e+00> : vector<8x128xf32>
    %1699 = tpu.matmul %1698, %8, %cst_426 {dimension_numbers = #tpu.dot_dimension_numbers<[1], [0], [0], [1], [0, 0, 1, 1], [], []>} : vector<8x32xf32>, vector<32x128xf32>, vector<8x128xf32> -> vector<8x128xf32>
    %c40 = arith.constant 40 : index
    %c0_427 = arith.constant 0 : index
    %c0_428 = arith.constant 0 : index
    %1700 = vector.load %arg7[%c40, %c0_427, %c0_428] : memref<50x32x2xf32, #tpu.memory_space<vmem>>, vector<1x32x2xf32>
    %1701 = vector.shape_cast %1700 : vector<1x32x2xf32> to vector<32x2xf32>
    %cst_429 = arith.constant dense<0.000000e+00> : vector<8x2xf32>
    %1702 = tpu.matmul %1698, %1701, %cst_429 {dimension_numbers = #tpu.dot_dimension_numbers<[1], [0], [0], [1], [0, 0, 1, 1], [], []>} : vector<8x32xf32>, vector<32x2xf32>, vector<8x2xf32> -> vector<8x2xf32>
    %1703 = arith.addf %1662, %1702 : vector<8x2xf32>
    %1704 = vector.extract_strided_slice %5 {offsets = [328, 0], sizes = [8, 128], strides = [1, 1]} : vector<400x128xf32> to vector<8x128xf32>
    %1705 = arith.addf %1704, %1680 : vector<8x128xf32>
    %1706 = arith.mulf %1705, %17 : vector<8x128xf32>
    %1707 = math.tanh %1706 : vector<8x128xf32>
    %cst_430 = arith.constant 1.000000e+00 : f32
    %1708 = vector.broadcast %cst_430 : f32 to vector<8x128xf32>
    %1709 = arith.addf %1707, %1708 : vector<8x128xf32>
    %cst_431 = arith.constant 5.000000e-01 : f32
    %1710 = vector.broadcast %cst_431 : f32 to vector<8x128xf32>
    %1711 = arith.mulf %1710, %1709 : vector<8x128xf32>
    %1712 = vector.extract_strided_slice %1711 {offsets = [0, 0], sizes = [8, 32], strides = [1, 1]} : vector<8x128xf32> to vector<8x32xf32>
    %1713 = vector.extract_strided_slice %1711 {offsets = [0, 32], sizes = [8, 32], strides = [1, 1]} : vector<8x128xf32> to vector<8x32xf32>
    %1714 = vector.extract_strided_slice %1711 {offsets = [0, 64], sizes = [8, 32], strides = [1, 1]} : vector<8x128xf32> to vector<8x32xf32>
    %1715 = vector.extract_strided_slice %1707 {offsets = [0, 96], sizes = [8, 32], strides = [1, 1]} : vector<8x128xf32> to vector<8x32xf32>
    %1716 = arith.mulf %1713, %1677 : vector<8x32xf32>
    %1717 = arith.mulf %1712, %1715 : vector<8x32xf32>
    %1718 = arith.addf %1716, %1717 : vector<8x32xf32>
    %1719 = math.tanh %1718 : vector<8x32xf32>
    %1720 = arith.mulf %1714, %1719 : vector<8x32xf32>
    %cst_432 = arith.constant dense<0.000000e+00> : vector<8x128xf32>
    %1721 = tpu.matmul %1720, %6, %cst_432 {dimension_numbers = #tpu.dot_dimension_numbers<[1], [0], [0], [1], [0, 0, 1, 1], [], []>} : vector<8x32xf32>, vector<32x128xf32>, vector<8x128xf32> -> vector<8x128xf32>
    %cst_433 = arith.constant dense<0.000000e+00> : vector<8x128xf32>
    %1722 = tpu.matmul %1720, %7, %cst_433 {dimension_numbers = #tpu.dot_dimension_numbers<[1], [0], [0], [1], [0, 0, 1, 1], [], []>} : vector<8x32xf32>, vector<32x128xf32>, vector<8x128xf32> -> vector<8x128xf32>
    %1723 = arith.addf %1722, %1699 : vector<8x128xf32>
    %1724 = arith.addf %1723, %11 : vector<8x128xf32>
    %1725 = arith.mulf %1724, %17 : vector<8x128xf32>
    %1726 = math.tanh %1725 : vector<8x128xf32>
    %cst_434 = arith.constant 1.000000e+00 : f32
    %1727 = vector.broadcast %cst_434 : f32 to vector<8x128xf32>
    %1728 = arith.addf %1726, %1727 : vector<8x128xf32>
    %cst_435 = arith.constant 5.000000e-01 : f32
    %1729 = vector.broadcast %cst_435 : f32 to vector<8x128xf32>
    %1730 = arith.mulf %1729, %1728 : vector<8x128xf32>
    %1731 = vector.extract_strided_slice %1730 {offsets = [0, 0], sizes = [8, 32], strides = [1, 1]} : vector<8x128xf32> to vector<8x32xf32>
    %1732 = vector.extract_strided_slice %1730 {offsets = [0, 32], sizes = [8, 32], strides = [1, 1]} : vector<8x128xf32> to vector<8x32xf32>
    %1733 = vector.extract_strided_slice %1730 {offsets = [0, 64], sizes = [8, 32], strides = [1, 1]} : vector<8x128xf32> to vector<8x32xf32>
    %1734 = vector.extract_strided_slice %1726 {offsets = [0, 96], sizes = [8, 32], strides = [1, 1]} : vector<8x128xf32> to vector<8x32xf32>
    %1735 = arith.mulf %1732, %1696 : vector<8x32xf32>
    %1736 = arith.mulf %1731, %1734 : vector<8x32xf32>
    %1737 = arith.addf %1735, %1736 : vector<8x32xf32>
    %1738 = math.tanh %1737 : vector<8x32xf32>
    %1739 = arith.mulf %1733, %1738 : vector<8x32xf32>
    %cst_436 = arith.constant dense<0.000000e+00> : vector<8x128xf32>
    %1740 = tpu.matmul %1739, %8, %cst_436 {dimension_numbers = #tpu.dot_dimension_numbers<[1], [0], [0], [1], [0, 0, 1, 1], [], []>} : vector<8x32xf32>, vector<32x128xf32>, vector<8x128xf32> -> vector<8x128xf32>
    %c41 = arith.constant 41 : index
    %c0_437 = arith.constant 0 : index
    %c0_438 = arith.constant 0 : index
    %1741 = vector.load %arg7[%c41, %c0_437, %c0_438] : memref<50x32x2xf32, #tpu.memory_space<vmem>>, vector<1x32x2xf32>
    %1742 = vector.shape_cast %1741 : vector<1x32x2xf32> to vector<32x2xf32>
    %cst_439 = arith.constant dense<0.000000e+00> : vector<8x2xf32>
    %1743 = tpu.matmul %1739, %1742, %cst_439 {dimension_numbers = #tpu.dot_dimension_numbers<[1], [0], [0], [1], [0, 0, 1, 1], [], []>} : vector<8x32xf32>, vector<32x2xf32>, vector<8x2xf32> -> vector<8x2xf32>
    %1744 = arith.addf %1703, %1743 : vector<8x2xf32>
    %1745 = vector.extract_strided_slice %5 {offsets = [336, 0], sizes = [8, 128], strides = [1, 1]} : vector<400x128xf32> to vector<8x128xf32>
    %1746 = arith.addf %1745, %1721 : vector<8x128xf32>
    %1747 = arith.mulf %1746, %17 : vector<8x128xf32>
    %1748 = math.tanh %1747 : vector<8x128xf32>
    %cst_440 = arith.constant 1.000000e+00 : f32
    %1749 = vector.broadcast %cst_440 : f32 to vector<8x128xf32>
    %1750 = arith.addf %1748, %1749 : vector<8x128xf32>
    %cst_441 = arith.constant 5.000000e-01 : f32
    %1751 = vector.broadcast %cst_441 : f32 to vector<8x128xf32>
    %1752 = arith.mulf %1751, %1750 : vector<8x128xf32>
    %1753 = vector.extract_strided_slice %1752 {offsets = [0, 0], sizes = [8, 32], strides = [1, 1]} : vector<8x128xf32> to vector<8x32xf32>
    %1754 = vector.extract_strided_slice %1752 {offsets = [0, 32], sizes = [8, 32], strides = [1, 1]} : vector<8x128xf32> to vector<8x32xf32>
    %1755 = vector.extract_strided_slice %1752 {offsets = [0, 64], sizes = [8, 32], strides = [1, 1]} : vector<8x128xf32> to vector<8x32xf32>
    %1756 = vector.extract_strided_slice %1748 {offsets = [0, 96], sizes = [8, 32], strides = [1, 1]} : vector<8x128xf32> to vector<8x32xf32>
    %1757 = arith.mulf %1754, %1718 : vector<8x32xf32>
    %1758 = arith.mulf %1753, %1756 : vector<8x32xf32>
    %1759 = arith.addf %1757, %1758 : vector<8x32xf32>
    %1760 = math.tanh %1759 : vector<8x32xf32>
    %1761 = arith.mulf %1755, %1760 : vector<8x32xf32>
    %cst_442 = arith.constant dense<0.000000e+00> : vector<8x128xf32>
    %1762 = tpu.matmul %1761, %6, %cst_442 {dimension_numbers = #tpu.dot_dimension_numbers<[1], [0], [0], [1], [0, 0, 1, 1], [], []>} : vector<8x32xf32>, vector<32x128xf32>, vector<8x128xf32> -> vector<8x128xf32>
    %cst_443 = arith.constant dense<0.000000e+00> : vector<8x128xf32>
    %1763 = tpu.matmul %1761, %7, %cst_443 {dimension_numbers = #tpu.dot_dimension_numbers<[1], [0], [0], [1], [0, 0, 1, 1], [], []>} : vector<8x32xf32>, vector<32x128xf32>, vector<8x128xf32> -> vector<8x128xf32>
    %1764 = arith.addf %1763, %1740 : vector<8x128xf32>
    %1765 = arith.addf %1764, %11 : vector<8x128xf32>
    %1766 = arith.mulf %1765, %17 : vector<8x128xf32>
    %1767 = math.tanh %1766 : vector<8x128xf32>
    %cst_444 = arith.constant 1.000000e+00 : f32
    %1768 = vector.broadcast %cst_444 : f32 to vector<8x128xf32>
    %1769 = arith.addf %1767, %1768 : vector<8x128xf32>
    %cst_445 = arith.constant 5.000000e-01 : f32
    %1770 = vector.broadcast %cst_445 : f32 to vector<8x128xf32>
    %1771 = arith.mulf %1770, %1769 : vector<8x128xf32>
    %1772 = vector.extract_strided_slice %1771 {offsets = [0, 0], sizes = [8, 32], strides = [1, 1]} : vector<8x128xf32> to vector<8x32xf32>
    %1773 = vector.extract_strided_slice %1771 {offsets = [0, 32], sizes = [8, 32], strides = [1, 1]} : vector<8x128xf32> to vector<8x32xf32>
    %1774 = vector.extract_strided_slice %1771 {offsets = [0, 64], sizes = [8, 32], strides = [1, 1]} : vector<8x128xf32> to vector<8x32xf32>
    %1775 = vector.extract_strided_slice %1767 {offsets = [0, 96], sizes = [8, 32], strides = [1, 1]} : vector<8x128xf32> to vector<8x32xf32>
    %1776 = arith.mulf %1773, %1737 : vector<8x32xf32>
    %1777 = arith.mulf %1772, %1775 : vector<8x32xf32>
    %1778 = arith.addf %1776, %1777 : vector<8x32xf32>
    %1779 = math.tanh %1778 : vector<8x32xf32>
    %1780 = arith.mulf %1774, %1779 : vector<8x32xf32>
    %cst_446 = arith.constant dense<0.000000e+00> : vector<8x128xf32>
    %1781 = tpu.matmul %1780, %8, %cst_446 {dimension_numbers = #tpu.dot_dimension_numbers<[1], [0], [0], [1], [0, 0, 1, 1], [], []>} : vector<8x32xf32>, vector<32x128xf32>, vector<8x128xf32> -> vector<8x128xf32>
    %c42 = arith.constant 42 : index
    %c0_447 = arith.constant 0 : index
    %c0_448 = arith.constant 0 : index
    %1782 = vector.load %arg7[%c42, %c0_447, %c0_448] : memref<50x32x2xf32, #tpu.memory_space<vmem>>, vector<1x32x2xf32>
    %1783 = vector.shape_cast %1782 : vector<1x32x2xf32> to vector<32x2xf32>
    %cst_449 = arith.constant dense<0.000000e+00> : vector<8x2xf32>
    %1784 = tpu.matmul %1780, %1783, %cst_449 {dimension_numbers = #tpu.dot_dimension_numbers<[1], [0], [0], [1], [0, 0, 1, 1], [], []>} : vector<8x32xf32>, vector<32x2xf32>, vector<8x2xf32> -> vector<8x2xf32>
    %1785 = arith.addf %1744, %1784 : vector<8x2xf32>
    %1786 = vector.extract_strided_slice %5 {offsets = [344, 0], sizes = [8, 128], strides = [1, 1]} : vector<400x128xf32> to vector<8x128xf32>
    %1787 = arith.addf %1786, %1762 : vector<8x128xf32>
    %1788 = arith.mulf %1787, %17 : vector<8x128xf32>
    %1789 = math.tanh %1788 : vector<8x128xf32>
    %cst_450 = arith.constant 1.000000e+00 : f32
    %1790 = vector.broadcast %cst_450 : f32 to vector<8x128xf32>
    %1791 = arith.addf %1789, %1790 : vector<8x128xf32>
    %cst_451 = arith.constant 5.000000e-01 : f32
    %1792 = vector.broadcast %cst_451 : f32 to vector<8x128xf32>
    %1793 = arith.mulf %1792, %1791 : vector<8x128xf32>
    %1794 = vector.extract_strided_slice %1793 {offsets = [0, 0], sizes = [8, 32], strides = [1, 1]} : vector<8x128xf32> to vector<8x32xf32>
    %1795 = vector.extract_strided_slice %1793 {offsets = [0, 32], sizes = [8, 32], strides = [1, 1]} : vector<8x128xf32> to vector<8x32xf32>
    %1796 = vector.extract_strided_slice %1793 {offsets = [0, 64], sizes = [8, 32], strides = [1, 1]} : vector<8x128xf32> to vector<8x32xf32>
    %1797 = vector.extract_strided_slice %1789 {offsets = [0, 96], sizes = [8, 32], strides = [1, 1]} : vector<8x128xf32> to vector<8x32xf32>
    %1798 = arith.mulf %1795, %1759 : vector<8x32xf32>
    %1799 = arith.mulf %1794, %1797 : vector<8x32xf32>
    %1800 = arith.addf %1798, %1799 : vector<8x32xf32>
    %1801 = math.tanh %1800 : vector<8x32xf32>
    %1802 = arith.mulf %1796, %1801 : vector<8x32xf32>
    %cst_452 = arith.constant dense<0.000000e+00> : vector<8x128xf32>
    %1803 = tpu.matmul %1802, %6, %cst_452 {dimension_numbers = #tpu.dot_dimension_numbers<[1], [0], [0], [1], [0, 0, 1, 1], [], []>} : vector<8x32xf32>, vector<32x128xf32>, vector<8x128xf32> -> vector<8x128xf32>
    %cst_453 = arith.constant dense<0.000000e+00> : vector<8x128xf32>
    %1804 = tpu.matmul %1802, %7, %cst_453 {dimension_numbers = #tpu.dot_dimension_numbers<[1], [0], [0], [1], [0, 0, 1, 1], [], []>} : vector<8x32xf32>, vector<32x128xf32>, vector<8x128xf32> -> vector<8x128xf32>
    %1805 = arith.addf %1804, %1781 : vector<8x128xf32>
    %1806 = arith.addf %1805, %11 : vector<8x128xf32>
    %1807 = arith.mulf %1806, %17 : vector<8x128xf32>
    %1808 = math.tanh %1807 : vector<8x128xf32>
    %cst_454 = arith.constant 1.000000e+00 : f32
    %1809 = vector.broadcast %cst_454 : f32 to vector<8x128xf32>
    %1810 = arith.addf %1808, %1809 : vector<8x128xf32>
    %cst_455 = arith.constant 5.000000e-01 : f32
    %1811 = vector.broadcast %cst_455 : f32 to vector<8x128xf32>
    %1812 = arith.mulf %1811, %1810 : vector<8x128xf32>
    %1813 = vector.extract_strided_slice %1812 {offsets = [0, 0], sizes = [8, 32], strides = [1, 1]} : vector<8x128xf32> to vector<8x32xf32>
    %1814 = vector.extract_strided_slice %1812 {offsets = [0, 32], sizes = [8, 32], strides = [1, 1]} : vector<8x128xf32> to vector<8x32xf32>
    %1815 = vector.extract_strided_slice %1812 {offsets = [0, 64], sizes = [8, 32], strides = [1, 1]} : vector<8x128xf32> to vector<8x32xf32>
    %1816 = vector.extract_strided_slice %1808 {offsets = [0, 96], sizes = [8, 32], strides = [1, 1]} : vector<8x128xf32> to vector<8x32xf32>
    %1817 = arith.mulf %1814, %1778 : vector<8x32xf32>
    %1818 = arith.mulf %1813, %1816 : vector<8x32xf32>
    %1819 = arith.addf %1817, %1818 : vector<8x32xf32>
    %1820 = math.tanh %1819 : vector<8x32xf32>
    %1821 = arith.mulf %1815, %1820 : vector<8x32xf32>
    %cst_456 = arith.constant dense<0.000000e+00> : vector<8x128xf32>
    %1822 = tpu.matmul %1821, %8, %cst_456 {dimension_numbers = #tpu.dot_dimension_numbers<[1], [0], [0], [1], [0, 0, 1, 1], [], []>} : vector<8x32xf32>, vector<32x128xf32>, vector<8x128xf32> -> vector<8x128xf32>
    %c43 = arith.constant 43 : index
    %c0_457 = arith.constant 0 : index
    %c0_458 = arith.constant 0 : index
    %1823 = vector.load %arg7[%c43, %c0_457, %c0_458] : memref<50x32x2xf32, #tpu.memory_space<vmem>>, vector<1x32x2xf32>
    %1824 = vector.shape_cast %1823 : vector<1x32x2xf32> to vector<32x2xf32>
    %cst_459 = arith.constant dense<0.000000e+00> : vector<8x2xf32>
    %1825 = tpu.matmul %1821, %1824, %cst_459 {dimension_numbers = #tpu.dot_dimension_numbers<[1], [0], [0], [1], [0, 0, 1, 1], [], []>} : vector<8x32xf32>, vector<32x2xf32>, vector<8x2xf32> -> vector<8x2xf32>
    %1826 = arith.addf %1785, %1825 : vector<8x2xf32>
    %1827 = vector.extract_strided_slice %5 {offsets = [352, 0], sizes = [8, 128], strides = [1, 1]} : vector<400x128xf32> to vector<8x128xf32>
    %1828 = arith.addf %1827, %1803 : vector<8x128xf32>
    %1829 = arith.mulf %1828, %17 : vector<8x128xf32>
    %1830 = math.tanh %1829 : vector<8x128xf32>
    %cst_460 = arith.constant 1.000000e+00 : f32
    %1831 = vector.broadcast %cst_460 : f32 to vector<8x128xf32>
    %1832 = arith.addf %1830, %1831 : vector<8x128xf32>
    %cst_461 = arith.constant 5.000000e-01 : f32
    %1833 = vector.broadcast %cst_461 : f32 to vector<8x128xf32>
    %1834 = arith.mulf %1833, %1832 : vector<8x128xf32>
    %1835 = vector.extract_strided_slice %1834 {offsets = [0, 0], sizes = [8, 32], strides = [1, 1]} : vector<8x128xf32> to vector<8x32xf32>
    %1836 = vector.extract_strided_slice %1834 {offsets = [0, 32], sizes = [8, 32], strides = [1, 1]} : vector<8x128xf32> to vector<8x32xf32>
    %1837 = vector.extract_strided_slice %1834 {offsets = [0, 64], sizes = [8, 32], strides = [1, 1]} : vector<8x128xf32> to vector<8x32xf32>
    %1838 = vector.extract_strided_slice %1830 {offsets = [0, 96], sizes = [8, 32], strides = [1, 1]} : vector<8x128xf32> to vector<8x32xf32>
    %1839 = arith.mulf %1836, %1800 : vector<8x32xf32>
    %1840 = arith.mulf %1835, %1838 : vector<8x32xf32>
    %1841 = arith.addf %1839, %1840 : vector<8x32xf32>
    %1842 = math.tanh %1841 : vector<8x32xf32>
    %1843 = arith.mulf %1837, %1842 : vector<8x32xf32>
    %cst_462 = arith.constant dense<0.000000e+00> : vector<8x128xf32>
    %1844 = tpu.matmul %1843, %6, %cst_462 {dimension_numbers = #tpu.dot_dimension_numbers<[1], [0], [0], [1], [0, 0, 1, 1], [], []>} : vector<8x32xf32>, vector<32x128xf32>, vector<8x128xf32> -> vector<8x128xf32>
    %cst_463 = arith.constant dense<0.000000e+00> : vector<8x128xf32>
    %1845 = tpu.matmul %1843, %7, %cst_463 {dimension_numbers = #tpu.dot_dimension_numbers<[1], [0], [0], [1], [0, 0, 1, 1], [], []>} : vector<8x32xf32>, vector<32x128xf32>, vector<8x128xf32> -> vector<8x128xf32>
    %1846 = arith.addf %1845, %1822 : vector<8x128xf32>
    %1847 = arith.addf %1846, %11 : vector<8x128xf32>
    %1848 = arith.mulf %1847, %17 : vector<8x128xf32>
    %1849 = math.tanh %1848 : vector<8x128xf32>
    %cst_464 = arith.constant 1.000000e+00 : f32
    %1850 = vector.broadcast %cst_464 : f32 to vector<8x128xf32>
    %1851 = arith.addf %1849, %1850 : vector<8x128xf32>
    %cst_465 = arith.constant 5.000000e-01 : f32
    %1852 = vector.broadcast %cst_465 : f32 to vector<8x128xf32>
    %1853 = arith.mulf %1852, %1851 : vector<8x128xf32>
    %1854 = vector.extract_strided_slice %1853 {offsets = [0, 0], sizes = [8, 32], strides = [1, 1]} : vector<8x128xf32> to vector<8x32xf32>
    %1855 = vector.extract_strided_slice %1853 {offsets = [0, 32], sizes = [8, 32], strides = [1, 1]} : vector<8x128xf32> to vector<8x32xf32>
    %1856 = vector.extract_strided_slice %1853 {offsets = [0, 64], sizes = [8, 32], strides = [1, 1]} : vector<8x128xf32> to vector<8x32xf32>
    %1857 = vector.extract_strided_slice %1849 {offsets = [0, 96], sizes = [8, 32], strides = [1, 1]} : vector<8x128xf32> to vector<8x32xf32>
    %1858 = arith.mulf %1855, %1819 : vector<8x32xf32>
    %1859 = arith.mulf %1854, %1857 : vector<8x32xf32>
    %1860 = arith.addf %1858, %1859 : vector<8x32xf32>
    %1861 = math.tanh %1860 : vector<8x32xf32>
    %1862 = arith.mulf %1856, %1861 : vector<8x32xf32>
    %cst_466 = arith.constant dense<0.000000e+00> : vector<8x128xf32>
    %1863 = tpu.matmul %1862, %8, %cst_466 {dimension_numbers = #tpu.dot_dimension_numbers<[1], [0], [0], [1], [0, 0, 1, 1], [], []>} : vector<8x32xf32>, vector<32x128xf32>, vector<8x128xf32> -> vector<8x128xf32>
    %c44 = arith.constant 44 : index
    %c0_467 = arith.constant 0 : index
    %c0_468 = arith.constant 0 : index
    %1864 = vector.load %arg7[%c44, %c0_467, %c0_468] : memref<50x32x2xf32, #tpu.memory_space<vmem>>, vector<1x32x2xf32>
    %1865 = vector.shape_cast %1864 : vector<1x32x2xf32> to vector<32x2xf32>
    %cst_469 = arith.constant dense<0.000000e+00> : vector<8x2xf32>
    %1866 = tpu.matmul %1862, %1865, %cst_469 {dimension_numbers = #tpu.dot_dimension_numbers<[1], [0], [0], [1], [0, 0, 1, 1], [], []>} : vector<8x32xf32>, vector<32x2xf32>, vector<8x2xf32> -> vector<8x2xf32>
    %1867 = arith.addf %1826, %1866 : vector<8x2xf32>
    %1868 = vector.extract_strided_slice %5 {offsets = [360, 0], sizes = [8, 128], strides = [1, 1]} : vector<400x128xf32> to vector<8x128xf32>
    %1869 = arith.addf %1868, %1844 : vector<8x128xf32>
    %1870 = arith.mulf %1869, %17 : vector<8x128xf32>
    %1871 = math.tanh %1870 : vector<8x128xf32>
    %cst_470 = arith.constant 1.000000e+00 : f32
    %1872 = vector.broadcast %cst_470 : f32 to vector<8x128xf32>
    %1873 = arith.addf %1871, %1872 : vector<8x128xf32>
    %cst_471 = arith.constant 5.000000e-01 : f32
    %1874 = vector.broadcast %cst_471 : f32 to vector<8x128xf32>
    %1875 = arith.mulf %1874, %1873 : vector<8x128xf32>
    %1876 = vector.extract_strided_slice %1875 {offsets = [0, 0], sizes = [8, 32], strides = [1, 1]} : vector<8x128xf32> to vector<8x32xf32>
    %1877 = vector.extract_strided_slice %1875 {offsets = [0, 32], sizes = [8, 32], strides = [1, 1]} : vector<8x128xf32> to vector<8x32xf32>
    %1878 = vector.extract_strided_slice %1875 {offsets = [0, 64], sizes = [8, 32], strides = [1, 1]} : vector<8x128xf32> to vector<8x32xf32>
    %1879 = vector.extract_strided_slice %1871 {offsets = [0, 96], sizes = [8, 32], strides = [1, 1]} : vector<8x128xf32> to vector<8x32xf32>
    %1880 = arith.mulf %1877, %1841 : vector<8x32xf32>
    %1881 = arith.mulf %1876, %1879 : vector<8x32xf32>
    %1882 = arith.addf %1880, %1881 : vector<8x32xf32>
    %1883 = math.tanh %1882 : vector<8x32xf32>
    %1884 = arith.mulf %1878, %1883 : vector<8x32xf32>
    %cst_472 = arith.constant dense<0.000000e+00> : vector<8x128xf32>
    %1885 = tpu.matmul %1884, %6, %cst_472 {dimension_numbers = #tpu.dot_dimension_numbers<[1], [0], [0], [1], [0, 0, 1, 1], [], []>} : vector<8x32xf32>, vector<32x128xf32>, vector<8x128xf32> -> vector<8x128xf32>
    %cst_473 = arith.constant dense<0.000000e+00> : vector<8x128xf32>
    %1886 = tpu.matmul %1884, %7, %cst_473 {dimension_numbers = #tpu.dot_dimension_numbers<[1], [0], [0], [1], [0, 0, 1, 1], [], []>} : vector<8x32xf32>, vector<32x128xf32>, vector<8x128xf32> -> vector<8x128xf32>
    %1887 = arith.addf %1886, %1863 : vector<8x128xf32>
    %1888 = arith.addf %1887, %11 : vector<8x128xf32>
    %1889 = arith.mulf %1888, %17 : vector<8x128xf32>
    %1890 = math.tanh %1889 : vector<8x128xf32>
    %cst_474 = arith.constant 1.000000e+00 : f32
    %1891 = vector.broadcast %cst_474 : f32 to vector<8x128xf32>
    %1892 = arith.addf %1890, %1891 : vector<8x128xf32>
    %cst_475 = arith.constant 5.000000e-01 : f32
    %1893 = vector.broadcast %cst_475 : f32 to vector<8x128xf32>
    %1894 = arith.mulf %1893, %1892 : vector<8x128xf32>
    %1895 = vector.extract_strided_slice %1894 {offsets = [0, 0], sizes = [8, 32], strides = [1, 1]} : vector<8x128xf32> to vector<8x32xf32>
    %1896 = vector.extract_strided_slice %1894 {offsets = [0, 32], sizes = [8, 32], strides = [1, 1]} : vector<8x128xf32> to vector<8x32xf32>
    %1897 = vector.extract_strided_slice %1894 {offsets = [0, 64], sizes = [8, 32], strides = [1, 1]} : vector<8x128xf32> to vector<8x32xf32>
    %1898 = vector.extract_strided_slice %1890 {offsets = [0, 96], sizes = [8, 32], strides = [1, 1]} : vector<8x128xf32> to vector<8x32xf32>
    %1899 = arith.mulf %1896, %1860 : vector<8x32xf32>
    %1900 = arith.mulf %1895, %1898 : vector<8x32xf32>
    %1901 = arith.addf %1899, %1900 : vector<8x32xf32>
    %1902 = math.tanh %1901 : vector<8x32xf32>
    %1903 = arith.mulf %1897, %1902 : vector<8x32xf32>
    %cst_476 = arith.constant dense<0.000000e+00> : vector<8x128xf32>
    %1904 = tpu.matmul %1903, %8, %cst_476 {dimension_numbers = #tpu.dot_dimension_numbers<[1], [0], [0], [1], [0, 0, 1, 1], [], []>} : vector<8x32xf32>, vector<32x128xf32>, vector<8x128xf32> -> vector<8x128xf32>
    %c45 = arith.constant 45 : index
    %c0_477 = arith.constant 0 : index
    %c0_478 = arith.constant 0 : index
    %1905 = vector.load %arg7[%c45, %c0_477, %c0_478] : memref<50x32x2xf32, #tpu.memory_space<vmem>>, vector<1x32x2xf32>
    %1906 = vector.shape_cast %1905 : vector<1x32x2xf32> to vector<32x2xf32>
    %cst_479 = arith.constant dense<0.000000e+00> : vector<8x2xf32>
    %1907 = tpu.matmul %1903, %1906, %cst_479 {dimension_numbers = #tpu.dot_dimension_numbers<[1], [0], [0], [1], [0, 0, 1, 1], [], []>} : vector<8x32xf32>, vector<32x2xf32>, vector<8x2xf32> -> vector<8x2xf32>
    %1908 = arith.addf %1867, %1907 : vector<8x2xf32>
    %1909 = vector.extract_strided_slice %5 {offsets = [368, 0], sizes = [8, 128], strides = [1, 1]} : vector<400x128xf32> to vector<8x128xf32>
    %1910 = arith.addf %1909, %1885 : vector<8x128xf32>
    %1911 = arith.mulf %1910, %17 : vector<8x128xf32>
    %1912 = math.tanh %1911 : vector<8x128xf32>
    %cst_480 = arith.constant 1.000000e+00 : f32
    %1913 = vector.broadcast %cst_480 : f32 to vector<8x128xf32>
    %1914 = arith.addf %1912, %1913 : vector<8x128xf32>
    %cst_481 = arith.constant 5.000000e-01 : f32
    %1915 = vector.broadcast %cst_481 : f32 to vector<8x128xf32>
    %1916 = arith.mulf %1915, %1914 : vector<8x128xf32>
    %1917 = vector.extract_strided_slice %1916 {offsets = [0, 0], sizes = [8, 32], strides = [1, 1]} : vector<8x128xf32> to vector<8x32xf32>
    %1918 = vector.extract_strided_slice %1916 {offsets = [0, 32], sizes = [8, 32], strides = [1, 1]} : vector<8x128xf32> to vector<8x32xf32>
    %1919 = vector.extract_strided_slice %1916 {offsets = [0, 64], sizes = [8, 32], strides = [1, 1]} : vector<8x128xf32> to vector<8x32xf32>
    %1920 = vector.extract_strided_slice %1912 {offsets = [0, 96], sizes = [8, 32], strides = [1, 1]} : vector<8x128xf32> to vector<8x32xf32>
    %1921 = arith.mulf %1918, %1882 : vector<8x32xf32>
    %1922 = arith.mulf %1917, %1920 : vector<8x32xf32>
    %1923 = arith.addf %1921, %1922 : vector<8x32xf32>
    %1924 = math.tanh %1923 : vector<8x32xf32>
    %1925 = arith.mulf %1919, %1924 : vector<8x32xf32>
    %cst_482 = arith.constant dense<0.000000e+00> : vector<8x128xf32>
    %1926 = tpu.matmul %1925, %6, %cst_482 {dimension_numbers = #tpu.dot_dimension_numbers<[1], [0], [0], [1], [0, 0, 1, 1], [], []>} : vector<8x32xf32>, vector<32x128xf32>, vector<8x128xf32> -> vector<8x128xf32>
    %cst_483 = arith.constant dense<0.000000e+00> : vector<8x128xf32>
    %1927 = tpu.matmul %1925, %7, %cst_483 {dimension_numbers = #tpu.dot_dimension_numbers<[1], [0], [0], [1], [0, 0, 1, 1], [], []>} : vector<8x32xf32>, vector<32x128xf32>, vector<8x128xf32> -> vector<8x128xf32>
    %1928 = arith.addf %1927, %1904 : vector<8x128xf32>
    %1929 = arith.addf %1928, %11 : vector<8x128xf32>
    %1930 = arith.mulf %1929, %17 : vector<8x128xf32>
    %1931 = math.tanh %1930 : vector<8x128xf32>
    %cst_484 = arith.constant 1.000000e+00 : f32
    %1932 = vector.broadcast %cst_484 : f32 to vector<8x128xf32>
    %1933 = arith.addf %1931, %1932 : vector<8x128xf32>
    %cst_485 = arith.constant 5.000000e-01 : f32
    %1934 = vector.broadcast %cst_485 : f32 to vector<8x128xf32>
    %1935 = arith.mulf %1934, %1933 : vector<8x128xf32>
    %1936 = vector.extract_strided_slice %1935 {offsets = [0, 0], sizes = [8, 32], strides = [1, 1]} : vector<8x128xf32> to vector<8x32xf32>
    %1937 = vector.extract_strided_slice %1935 {offsets = [0, 32], sizes = [8, 32], strides = [1, 1]} : vector<8x128xf32> to vector<8x32xf32>
    %1938 = vector.extract_strided_slice %1935 {offsets = [0, 64], sizes = [8, 32], strides = [1, 1]} : vector<8x128xf32> to vector<8x32xf32>
    %1939 = vector.extract_strided_slice %1931 {offsets = [0, 96], sizes = [8, 32], strides = [1, 1]} : vector<8x128xf32> to vector<8x32xf32>
    %1940 = arith.mulf %1937, %1901 : vector<8x32xf32>
    %1941 = arith.mulf %1936, %1939 : vector<8x32xf32>
    %1942 = arith.addf %1940, %1941 : vector<8x32xf32>
    %1943 = math.tanh %1942 : vector<8x32xf32>
    %1944 = arith.mulf %1938, %1943 : vector<8x32xf32>
    %cst_486 = arith.constant dense<0.000000e+00> : vector<8x128xf32>
    %1945 = tpu.matmul %1944, %8, %cst_486 {dimension_numbers = #tpu.dot_dimension_numbers<[1], [0], [0], [1], [0, 0, 1, 1], [], []>} : vector<8x32xf32>, vector<32x128xf32>, vector<8x128xf32> -> vector<8x128xf32>
    %c46 = arith.constant 46 : index
    %c0_487 = arith.constant 0 : index
    %c0_488 = arith.constant 0 : index
    %1946 = vector.load %arg7[%c46, %c0_487, %c0_488] : memref<50x32x2xf32, #tpu.memory_space<vmem>>, vector<1x32x2xf32>
    %1947 = vector.shape_cast %1946 : vector<1x32x2xf32> to vector<32x2xf32>
    %cst_489 = arith.constant dense<0.000000e+00> : vector<8x2xf32>
    %1948 = tpu.matmul %1944, %1947, %cst_489 {dimension_numbers = #tpu.dot_dimension_numbers<[1], [0], [0], [1], [0, 0, 1, 1], [], []>} : vector<8x32xf32>, vector<32x2xf32>, vector<8x2xf32> -> vector<8x2xf32>
    %1949 = arith.addf %1908, %1948 : vector<8x2xf32>
    %1950 = vector.extract_strided_slice %5 {offsets = [376, 0], sizes = [8, 128], strides = [1, 1]} : vector<400x128xf32> to vector<8x128xf32>
    %1951 = arith.addf %1950, %1926 : vector<8x128xf32>
    %1952 = arith.mulf %1951, %17 : vector<8x128xf32>
    %1953 = math.tanh %1952 : vector<8x128xf32>
    %cst_490 = arith.constant 1.000000e+00 : f32
    %1954 = vector.broadcast %cst_490 : f32 to vector<8x128xf32>
    %1955 = arith.addf %1953, %1954 : vector<8x128xf32>
    %cst_491 = arith.constant 5.000000e-01 : f32
    %1956 = vector.broadcast %cst_491 : f32 to vector<8x128xf32>
    %1957 = arith.mulf %1956, %1955 : vector<8x128xf32>
    %1958 = vector.extract_strided_slice %1957 {offsets = [0, 0], sizes = [8, 32], strides = [1, 1]} : vector<8x128xf32> to vector<8x32xf32>
    %1959 = vector.extract_strided_slice %1957 {offsets = [0, 32], sizes = [8, 32], strides = [1, 1]} : vector<8x128xf32> to vector<8x32xf32>
    %1960 = vector.extract_strided_slice %1957 {offsets = [0, 64], sizes = [8, 32], strides = [1, 1]} : vector<8x128xf32> to vector<8x32xf32>
    %1961 = vector.extract_strided_slice %1953 {offsets = [0, 96], sizes = [8, 32], strides = [1, 1]} : vector<8x128xf32> to vector<8x32xf32>
    %1962 = arith.mulf %1959, %1923 : vector<8x32xf32>
    %1963 = arith.mulf %1958, %1961 : vector<8x32xf32>
    %1964 = arith.addf %1962, %1963 : vector<8x32xf32>
    %1965 = math.tanh %1964 : vector<8x32xf32>
    %1966 = arith.mulf %1960, %1965 : vector<8x32xf32>
    %cst_492 = arith.constant dense<0.000000e+00> : vector<8x128xf32>
    %1967 = tpu.matmul %1966, %6, %cst_492 {dimension_numbers = #tpu.dot_dimension_numbers<[1], [0], [0], [1], [0, 0, 1, 1], [], []>} : vector<8x32xf32>, vector<32x128xf32>, vector<8x128xf32> -> vector<8x128xf32>
    %cst_493 = arith.constant dense<0.000000e+00> : vector<8x128xf32>
    %1968 = tpu.matmul %1966, %7, %cst_493 {dimension_numbers = #tpu.dot_dimension_numbers<[1], [0], [0], [1], [0, 0, 1, 1], [], []>} : vector<8x32xf32>, vector<32x128xf32>, vector<8x128xf32> -> vector<8x128xf32>
    %1969 = arith.addf %1968, %1945 : vector<8x128xf32>
    %1970 = arith.addf %1969, %11 : vector<8x128xf32>
    %1971 = arith.mulf %1970, %17 : vector<8x128xf32>
    %1972 = math.tanh %1971 : vector<8x128xf32>
    %cst_494 = arith.constant 1.000000e+00 : f32
    %1973 = vector.broadcast %cst_494 : f32 to vector<8x128xf32>
    %1974 = arith.addf %1972, %1973 : vector<8x128xf32>
    %cst_495 = arith.constant 5.000000e-01 : f32
    %1975 = vector.broadcast %cst_495 : f32 to vector<8x128xf32>
    %1976 = arith.mulf %1975, %1974 : vector<8x128xf32>
    %1977 = vector.extract_strided_slice %1976 {offsets = [0, 0], sizes = [8, 32], strides = [1, 1]} : vector<8x128xf32> to vector<8x32xf32>
    %1978 = vector.extract_strided_slice %1976 {offsets = [0, 32], sizes = [8, 32], strides = [1, 1]} : vector<8x128xf32> to vector<8x32xf32>
    %1979 = vector.extract_strided_slice %1976 {offsets = [0, 64], sizes = [8, 32], strides = [1, 1]} : vector<8x128xf32> to vector<8x32xf32>
    %1980 = vector.extract_strided_slice %1972 {offsets = [0, 96], sizes = [8, 32], strides = [1, 1]} : vector<8x128xf32> to vector<8x32xf32>
    %1981 = arith.mulf %1978, %1942 : vector<8x32xf32>
    %1982 = arith.mulf %1977, %1980 : vector<8x32xf32>
    %1983 = arith.addf %1981, %1982 : vector<8x32xf32>
    %1984 = math.tanh %1983 : vector<8x32xf32>
    %1985 = arith.mulf %1979, %1984 : vector<8x32xf32>
    %cst_496 = arith.constant dense<0.000000e+00> : vector<8x128xf32>
    %1986 = tpu.matmul %1985, %8, %cst_496 {dimension_numbers = #tpu.dot_dimension_numbers<[1], [0], [0], [1], [0, 0, 1, 1], [], []>} : vector<8x32xf32>, vector<32x128xf32>, vector<8x128xf32> -> vector<8x128xf32>
    %c47 = arith.constant 47 : index
    %c0_497 = arith.constant 0 : index
    %c0_498 = arith.constant 0 : index
    %1987 = vector.load %arg7[%c47, %c0_497, %c0_498] : memref<50x32x2xf32, #tpu.memory_space<vmem>>, vector<1x32x2xf32>
    %1988 = vector.shape_cast %1987 : vector<1x32x2xf32> to vector<32x2xf32>
    %cst_499 = arith.constant dense<0.000000e+00> : vector<8x2xf32>
    %1989 = tpu.matmul %1985, %1988, %cst_499 {dimension_numbers = #tpu.dot_dimension_numbers<[1], [0], [0], [1], [0, 0, 1, 1], [], []>} : vector<8x32xf32>, vector<32x2xf32>, vector<8x2xf32> -> vector<8x2xf32>
    %1990 = arith.addf %1949, %1989 : vector<8x2xf32>
    %1991 = vector.extract_strided_slice %5 {offsets = [384, 0], sizes = [8, 128], strides = [1, 1]} : vector<400x128xf32> to vector<8x128xf32>
    %1992 = arith.addf %1991, %1967 : vector<8x128xf32>
    %1993 = arith.mulf %1992, %17 : vector<8x128xf32>
    %1994 = math.tanh %1993 : vector<8x128xf32>
    %cst_500 = arith.constant 1.000000e+00 : f32
    %1995 = vector.broadcast %cst_500 : f32 to vector<8x128xf32>
    %1996 = arith.addf %1994, %1995 : vector<8x128xf32>
    %cst_501 = arith.constant 5.000000e-01 : f32
    %1997 = vector.broadcast %cst_501 : f32 to vector<8x128xf32>
    %1998 = arith.mulf %1997, %1996 : vector<8x128xf32>
    %1999 = vector.extract_strided_slice %1998 {offsets = [0, 0], sizes = [8, 32], strides = [1, 1]} : vector<8x128xf32> to vector<8x32xf32>
    %2000 = vector.extract_strided_slice %1998 {offsets = [0, 32], sizes = [8, 32], strides = [1, 1]} : vector<8x128xf32> to vector<8x32xf32>
    %2001 = vector.extract_strided_slice %1998 {offsets = [0, 64], sizes = [8, 32], strides = [1, 1]} : vector<8x128xf32> to vector<8x32xf32>
    %2002 = vector.extract_strided_slice %1994 {offsets = [0, 96], sizes = [8, 32], strides = [1, 1]} : vector<8x128xf32> to vector<8x32xf32>
    %2003 = arith.mulf %2000, %1964 : vector<8x32xf32>
    %2004 = arith.mulf %1999, %2002 : vector<8x32xf32>
    %2005 = arith.addf %2003, %2004 : vector<8x32xf32>
    %2006 = math.tanh %2005 : vector<8x32xf32>
    %2007 = arith.mulf %2001, %2006 : vector<8x32xf32>
    %cst_502 = arith.constant dense<0.000000e+00> : vector<8x128xf32>
    %2008 = tpu.matmul %2007, %6, %cst_502 {dimension_numbers = #tpu.dot_dimension_numbers<[1], [0], [0], [1], [0, 0, 1, 1], [], []>} : vector<8x32xf32>, vector<32x128xf32>, vector<8x128xf32> -> vector<8x128xf32>
    %cst_503 = arith.constant dense<0.000000e+00> : vector<8x128xf32>
    %2009 = tpu.matmul %2007, %7, %cst_503 {dimension_numbers = #tpu.dot_dimension_numbers<[1], [0], [0], [1], [0, 0, 1, 1], [], []>} : vector<8x32xf32>, vector<32x128xf32>, vector<8x128xf32> -> vector<8x128xf32>
    %2010 = arith.addf %2009, %1986 : vector<8x128xf32>
    %2011 = arith.addf %2010, %11 : vector<8x128xf32>
    %2012 = arith.mulf %2011, %17 : vector<8x128xf32>
    %2013 = math.tanh %2012 : vector<8x128xf32>
    %cst_504 = arith.constant 1.000000e+00 : f32
    %2014 = vector.broadcast %cst_504 : f32 to vector<8x128xf32>
    %2015 = arith.addf %2013, %2014 : vector<8x128xf32>
    %cst_505 = arith.constant 5.000000e-01 : f32
    %2016 = vector.broadcast %cst_505 : f32 to vector<8x128xf32>
    %2017 = arith.mulf %2016, %2015 : vector<8x128xf32>
    %2018 = vector.extract_strided_slice %2017 {offsets = [0, 0], sizes = [8, 32], strides = [1, 1]} : vector<8x128xf32> to vector<8x32xf32>
    %2019 = vector.extract_strided_slice %2017 {offsets = [0, 32], sizes = [8, 32], strides = [1, 1]} : vector<8x128xf32> to vector<8x32xf32>
    %2020 = vector.extract_strided_slice %2017 {offsets = [0, 64], sizes = [8, 32], strides = [1, 1]} : vector<8x128xf32> to vector<8x32xf32>
    %2021 = vector.extract_strided_slice %2013 {offsets = [0, 96], sizes = [8, 32], strides = [1, 1]} : vector<8x128xf32> to vector<8x32xf32>
    %2022 = arith.mulf %2019, %1983 : vector<8x32xf32>
    %2023 = arith.mulf %2018, %2021 : vector<8x32xf32>
    %2024 = arith.addf %2022, %2023 : vector<8x32xf32>
    %2025 = math.tanh %2024 : vector<8x32xf32>
    %2026 = arith.mulf %2020, %2025 : vector<8x32xf32>
    %cst_506 = arith.constant dense<0.000000e+00> : vector<8x128xf32>
    %2027 = tpu.matmul %2026, %8, %cst_506 {dimension_numbers = #tpu.dot_dimension_numbers<[1], [0], [0], [1], [0, 0, 1, 1], [], []>} : vector<8x32xf32>, vector<32x128xf32>, vector<8x128xf32> -> vector<8x128xf32>
    %c48 = arith.constant 48 : index
    %c0_507 = arith.constant 0 : index
    %c0_508 = arith.constant 0 : index
    %2028 = vector.load %arg7[%c48, %c0_507, %c0_508] : memref<50x32x2xf32, #tpu.memory_space<vmem>>, vector<1x32x2xf32>
    %2029 = vector.shape_cast %2028 : vector<1x32x2xf32> to vector<32x2xf32>
    %cst_509 = arith.constant dense<0.000000e+00> : vector<8x2xf32>
    %2030 = tpu.matmul %2026, %2029, %cst_509 {dimension_numbers = #tpu.dot_dimension_numbers<[1], [0], [0], [1], [0, 0, 1, 1], [], []>} : vector<8x32xf32>, vector<32x2xf32>, vector<8x2xf32> -> vector<8x2xf32>
    %2031 = arith.addf %1990, %2030 : vector<8x2xf32>
    %2032 = vector.extract_strided_slice %5 {offsets = [392, 0], sizes = [8, 128], strides = [1, 1]} : vector<400x128xf32> to vector<8x128xf32>
    %2033 = arith.addf %2032, %2008 : vector<8x128xf32>
    %2034 = arith.mulf %2033, %17 : vector<8x128xf32>
    %2035 = math.tanh %2034 : vector<8x128xf32>
    %cst_510 = arith.constant 1.000000e+00 : f32
    %2036 = vector.broadcast %cst_510 : f32 to vector<8x128xf32>
    %2037 = arith.addf %2035, %2036 : vector<8x128xf32>
    %cst_511 = arith.constant 5.000000e-01 : f32
    %2038 = vector.broadcast %cst_511 : f32 to vector<8x128xf32>
    %2039 = arith.mulf %2038, %2037 : vector<8x128xf32>
    %2040 = vector.extract_strided_slice %2039 {offsets = [0, 0], sizes = [8, 32], strides = [1, 1]} : vector<8x128xf32> to vector<8x32xf32>
    %2041 = vector.extract_strided_slice %2039 {offsets = [0, 32], sizes = [8, 32], strides = [1, 1]} : vector<8x128xf32> to vector<8x32xf32>
    %2042 = vector.extract_strided_slice %2039 {offsets = [0, 64], sizes = [8, 32], strides = [1, 1]} : vector<8x128xf32> to vector<8x32xf32>
    %2043 = vector.extract_strided_slice %2035 {offsets = [0, 96], sizes = [8, 32], strides = [1, 1]} : vector<8x128xf32> to vector<8x32xf32>
    %2044 = arith.mulf %2041, %2005 : vector<8x32xf32>
    %2045 = arith.mulf %2040, %2043 : vector<8x32xf32>
    %2046 = arith.addf %2044, %2045 : vector<8x32xf32>
    %2047 = math.tanh %2046 : vector<8x32xf32>
    %2048 = arith.mulf %2042, %2047 : vector<8x32xf32>
    %cst_512 = arith.constant dense<0.000000e+00> : vector<8x128xf32>
    %2049 = tpu.matmul %2048, %7, %cst_512 {dimension_numbers = #tpu.dot_dimension_numbers<[1], [0], [0], [1], [0, 0, 1, 1], [], []>} : vector<8x32xf32>, vector<32x128xf32>, vector<8x128xf32> -> vector<8x128xf32>
    %2050 = arith.addf %2049, %2027 : vector<8x128xf32>
    %2051 = arith.addf %2050, %11 : vector<8x128xf32>
    %2052 = arith.mulf %2051, %17 : vector<8x128xf32>
    %2053 = math.tanh %2052 : vector<8x128xf32>
    %cst_513 = arith.constant 1.000000e+00 : f32
    %2054 = vector.broadcast %cst_513 : f32 to vector<8x128xf32>
    %2055 = arith.addf %2053, %2054 : vector<8x128xf32>
    %cst_514 = arith.constant 5.000000e-01 : f32
    %2056 = vector.broadcast %cst_514 : f32 to vector<8x128xf32>
    %2057 = arith.mulf %2056, %2055 : vector<8x128xf32>
    %2058 = vector.extract_strided_slice %2057 {offsets = [0, 0], sizes = [8, 32], strides = [1, 1]} : vector<8x128xf32> to vector<8x32xf32>
    %2059 = vector.extract_strided_slice %2057 {offsets = [0, 32], sizes = [8, 32], strides = [1, 1]} : vector<8x128xf32> to vector<8x32xf32>
    %2060 = vector.extract_strided_slice %2057 {offsets = [0, 64], sizes = [8, 32], strides = [1, 1]} : vector<8x128xf32> to vector<8x32xf32>
    %2061 = vector.extract_strided_slice %2053 {offsets = [0, 96], sizes = [8, 32], strides = [1, 1]} : vector<8x128xf32> to vector<8x32xf32>
    %2062 = arith.mulf %2059, %2024 : vector<8x32xf32>
    %2063 = arith.mulf %2058, %2061 : vector<8x32xf32>
    %2064 = arith.addf %2062, %2063 : vector<8x32xf32>
    %2065 = math.tanh %2064 : vector<8x32xf32>
    %2066 = arith.mulf %2060, %2065 : vector<8x32xf32>
    %c49 = arith.constant 49 : index
    %c0_515 = arith.constant 0 : index
    %c0_516 = arith.constant 0 : index
    %2067 = vector.load %arg7[%c49, %c0_515, %c0_516] : memref<50x32x2xf32, #tpu.memory_space<vmem>>, vector<1x32x2xf32>
    %2068 = vector.shape_cast %2067 : vector<1x32x2xf32> to vector<32x2xf32>
    %cst_517 = arith.constant dense<0.000000e+00> : vector<8x2xf32>
    %2069 = tpu.matmul %2066, %2068, %cst_517 {dimension_numbers = #tpu.dot_dimension_numbers<[1], [0], [0], [1], [0, 0, 1, 1], [], []>} : vector<8x32xf32>, vector<32x2xf32>, vector<8x2xf32> -> vector<8x2xf32>
    %2070 = arith.addf %2031, %2069 : vector<8x2xf32>
    %cst_518 = arith.constant dense<0xFF800000> : vector<8xf32>
    %2071 = vector.multi_reduction <maximumf>, %2070, %cst_518 [1] : vector<8x2xf32> to vector<8xf32>
    %2072 = vector.shape_cast %2071 : vector<8xf32> to vector<8x1xf32>
    %2073 = vector.broadcast %2072 : vector<8x1xf32> to vector<8x2xf32>
    %2074 = arith.subf %2070, %2073 : vector<8x2xf32>
    %2075 = math.exp %2074 : vector<8x2xf32>
    %cst_519 = arith.constant dense<0.000000e+00> : vector<8xf32>
    %2076 = vector.multi_reduction <add>, %2075, %cst_519 [1] : vector<8x2xf32> to vector<8xf32>
    %2077 = vector.shape_cast %2076 : vector<8xf32> to vector<8x1xf32>
    %2078 = tpu.reciprocal %2077 : vector<8x1xf32> -> vector<8x1xf32>
    %2079 = vector.broadcast %2078 : vector<8x1xf32> to vector<8x2xf32>
    %2080 = arith.mulf %2075, %2079 : vector<8x2xf32>
    %c0_520 = arith.constant 0 : index
    %c0_521 = arith.constant 0 : index
    %2081 = vector.load %arg9[%c0_520, %c0_521] : memref<8x2xf32, #tpu.memory_space<vmem>>, vector<8x2xf32>
    tpu.vector_store %arg9[%c0_520, %c0_521], %2080 {strides = array<i32>} : memref<8x2xf32, #tpu.memory_space<vmem>>, vector<8x2xf32>,
    return
  }
}

</mosaic_0001>

<llo_original>
// kernel: tpu_custom_call.1
$region0: #{tpu_custom_call.1}
  #allocation0 [shape = 'u32[]', space=smem, size = 0x4, offset = 0x4, fixed_abs, tag = 'smem constant byte address 0x4 - core index']
  #allocation1 [shape = 'u32[72,128]{1,0:T(1,128)}', space=vmem, size = 0x9000, scoped, tag = 'internal scratch']
  %s0 = inlined_call_operand.vmem [shape: f32[400,8], index: 0, kind: input, shape index: {}]
  %s1 = inlined_call_operand.vmem [shape: f32[8,128], index: 1, kind: input, shape index: {}]
  %s2 = inlined_call_operand.vmem [shape: f32[1,128], index: 2, kind: input, shape index: {}]
  %s3 = inlined_call_operand.vmem [shape: f32[32,128], index: 3, kind: input, shape index: {}]
  %s4 = inlined_call_operand.vmem [shape: f32[32,128], index: 4, kind: input, shape index: {}]
  %s5 = inlined_call_operand.vmem [shape: f32[32,128], index: 5, kind: input, shape index: {}]
  %s6 = inlined_call_operand.vmem [shape: f32[1,128], index: 6, kind: input, shape index: {}]
  %s7 = inlined_call_operand.vmem [shape: f32[50,32,2], index: 7, kind: input, shape index: {}]
  %s8 = inlined_call_operand.vmem [shape: f32[1,2], index: 8, kind: input, shape index: {}]
  %s9 = inlined_call_operand.vmem [shape: f32[8,2], index: 9, kind: output, shape index: {}]
  %s10 = sld [smem:[#allocation0]]
  $region46: #{tpu_custom_call.1} parent=0
    _
  %s12 = ssub.s32 1, %s10
  %s13 = scalar_select 0, %s12, %s10
  // Predicated region
  $region2: #{tpu_custom_call.1} parent=0 // pred_check
    _
  $region3: #{tpu_custom_call.1} parent=0 // pred_check_branch
    %15 = sbr.rel (0) target = $region5
  $region4: #{tpu_custom_call.1} parent=0 // pred_region
    _
  $region5: #{tpu_custom_call.1} parent=0 // pred_fallthru
    _
  // Predicated region
  $region6: #{tpu_custom_call.1} parent=0 // pred_check
    _
  $region7: #{tpu_custom_call.1} parent=0 // pred_check_branch
    %17 = sbr.rel (0) target = $region9
  $region8: #{tpu_custom_call.1} parent=0 // pred_region
    _
  $region9: #{tpu_custom_call.1} parent=0 // pred_fallthru
    _
  // Predicated region
  $region10: #{tpu_custom_call.1} parent=0 // pred_check
    _
  $region11: #{tpu_custom_call.1} parent=0 // pred_check_branch
    %19 = sbr.rel (0) target = $region13
  $region12: #{tpu_custom_call.1} parent=0 // pred_region
    _
  $region13: #{tpu_custom_call.1} parent=0 // pred_fallthru
    _
  // Predicated region
  $region14: #{tpu_custom_call.1} parent=0 // pred_check
    _
  $region15: #{tpu_custom_call.1} parent=0 // pred_check_branch
    %21 = sbr.rel (0) target = $region17
  $region16: #{tpu_custom_call.1} parent=0 // pred_region
    _
  $region17: #{tpu_custom_call.1} parent=0 // pred_fallthru
    _
  // Predicated region
  $region18: #{tpu_custom_call.1} parent=0 // pred_check
    _
  $region19: #{tpu_custom_call.1} parent=0 // pred_check_branch
    %23 = sbr.rel (0) target = $region21
  $region20: #{tpu_custom_call.1} parent=0 // pred_region
    _
  $region21: #{tpu_custom_call.1} parent=0 // pred_fallthru
    _
  // Predicated region
  $region22: #{tpu_custom_call.1} parent=0 // pred_check
    _
  $region23: #{tpu_custom_call.1} parent=0 // pred_check_branch
    %25 = sbr.rel (0) target = $region25
  $region24: #{tpu_custom_call.1} parent=0 // pred_region
    _
  $region25: #{tpu_custom_call.1} parent=0 // pred_fallthru
    _
  // Predicated region
  $region26: #{tpu_custom_call.1} parent=0 // pred_check
    _
  $region27: #{tpu_custom_call.1} parent=0 // pred_check_branch
    %27 = sbr.rel (0) target = $region29
  $region28: #{tpu_custom_call.1} parent=0 // pred_region
    _
  $region29: #{tpu_custom_call.1} parent=0 // pred_fallthru
    _
  // Predicated region
  $region30: #{tpu_custom_call.1} parent=0 // pred_check
    _
  $region31: #{tpu_custom_call.1} parent=0 // pred_check_branch
    %29 = sbr.rel (0) target = $region33
  $region32: #{tpu_custom_call.1} parent=0 // pred_region
    _
  $region33: #{tpu_custom_call.1} parent=0 // pred_fallthru
    _
  // Predicated region
  $region34: #{tpu_custom_call.1} parent=0 // pred_check
    _
  $region35: #{tpu_custom_call.1} parent=0 // pred_check_branch
    %31 = sbr.rel (0) target = $region37
  $region36: #{tpu_custom_call.1} parent=0 // pred_region
    _
  $region37: #{tpu_custom_call.1} parent=0 // pred_fallthru
    _
  %v32 = vld [vmem:[%s0] sm:$0xff]
  %v33 = vld [vmem:[%s0 + $0x8] sm:$0xff]
  %v34 = vld [vmem:[%s0 + $0x10] sm:$0xff]
  %v35 = vld [vmem:[%s0 + $0x18] sm:$0xff]
  %v36 = vld [vmem:[%s0 + $0x20] sm:$0xff]
  %v37 = vld [vmem:[%s0 + $0x28] sm:$0xff]
  %v38 = vld [vmem:[%s0 + $0x30] sm:$0xff]
  %v39 = vld [vmem:[%s0 + $0x38] sm:$0xff]
  %v40 = vld [vmem:[%s0 + $0x40] sm:$0xff]
  %v41 = vld [vmem:[%s0 + $0x48] sm:$0xff]
  %v42 = vld [vmem:[%s0 + $0x50] sm:$0xff]
  %v43 = vld [vmem:[%s0 + $0x58] sm:$0xff]
  %v44 = vld [vmem:[%s0 + $0x60] sm:$0xff]
  %v45 = vld [vmem:[%s0 + $0x68] sm:$0xff]
  %v46 = vld [vmem:[%s0 + $0x70] sm:$0xff]
  %v47 = vld [vmem:[%s0 + $0x78] sm:$0xff]
  %v48 = vld [vmem:[%s0 + $0x80] sm:$0xff]
  %v49 = vld [vmem:[%s0 + $0x88] sm:$0xff]
  %v50 = vld [vmem:[%s0 + $0x90] sm:$0xff]
  %v51 = vld [vmem:[%s0 + $0x98] sm:$0xff]
  %v52 = vld [vmem:[%s0 + $0xa0] sm:$0xff]
  %v53 = vld [vmem:[%s0 + $0xa8] sm:$0xff]
  %v54 = vld [vmem:[%s0 + $0xb0] sm:$0xff]
  %v55 = vld [vmem:[%s0 + $0xb8] sm:$0xff]
  %v56 = vld [vmem:[%s0 + $0xc0] sm:$0xff]
  %v57 = vld [vmem:[%s0 + $0xc8] sm:$0xff]
  %v58 = vld [vmem:[%s0 + $0xd0] sm:$0xff]
  %v59 = vld [vmem:[%s0 + $0xd8] sm:$0xff]
  %v60 = vld [vmem:[%s0 + $0xe0] sm:$0xff]
  %v61 = vld [vmem:[%s0 + $0xe8] sm:$0xff]
  %v62 = vld [vmem:[%s0 + $0xf0] sm:$0xff]
  %v63 = vld [vmem:[%s0 + $0xf8] sm:$0xff]
  %v64 = vld [vmem:[%s0 + $0x100] sm:$0xff]
  %v65 = vld [vmem:[%s0 + $0x108] sm:$0xff]
  %v66 = vld [vmem:[%s0 + $0x110] sm:$0xff]
  %v67 = vld [vmem:[%s0 + $0x118] sm:$0xff]
  %v68 = vld [vmem:[%s0 + $0x120] sm:$0xff]
  %v69 = vld [vmem:[%s0 + $0x128] sm:$0xff]
  %v70 = vld [vmem:[%s0 + $0x130] sm:$0xff]
  %v71 = vld [vmem:[%s0 + $0x138] sm:$0xff]
  %v72 = vld [vmem:[%s0 + $0x140] sm:$0xff]
  %v73 = vld [vmem:[%s0 + $0x148] sm:$0xff]
  %v74 = vld [vmem:[%s0 + $0x150] sm:$0xff]
  %v75 = vld [vmem:[%s0 + $0x158] sm:$0xff]
  %v76 = vld [vmem:[%s0 + $0x160] sm:$0xff]
  %v77 = vld [vmem:[%s0 + $0x168] sm:$0xff]
  %v78 = vld [vmem:[%s0 + $0x170] sm:$0xff]
  %v79 = vld [vmem:[%s0 + $0x178] sm:$0xff]
  %v80 = vld [vmem:[%s0 + $0x180] sm:$0xff]
  %v81 = vld [vmem:[%s0 + $0x188] sm:$0xff]
  %v82 = vld [vmem:[%s1] sm:$0xff]
  %v83 = vld [vmem:[%s2] sm:$0x1]
  %v85 = vperm.slane %v83, 0
  %vm87 = vcmask 64512
  %v89 = vsel %vm87, %v32, 0
  %v92 = vsel %vm87, %v33, 0
  %v95 = vsel %vm87, %v34, 0
  %v98 = vsel %vm87, %v35, 0
  %v101 = vsel %vm87, %v36, 0
  %v104 = vsel %vm87, %v37, 0
  %v107 = vsel %vm87, %v38, 0
  %v110 = vsel %vm87, %v39, 0
  %v113 = vsel %vm87, %v40, 0
  %v116 = vsel %vm87, %v41, 0
  %v119 = vsel %vm87, %v42, 0
  %v122 = vsel %vm87, %v43, 0
  %v125 = vsel %vm87, %v44, 0
  %v128 = vsel %vm87, %v45, 0
  %v131 = vsel %vm87, %v46, 0
  %v134 = vsel %vm87, %v47, 0
  %v137 = vsel %vm87, %v48, 0
  %v140 = vsel %vm87, %v49, 0
  %v143 = vsel %vm87, %v50, 0
  %v146 = vsel %vm87, %v51, 0
  %v149 = vsel %vm87, %v52, 0
  %v152 = vsel %vm87, %v53, 0
  %v155 = vsel %vm87, %v54, 0
  %v158 = vsel %vm87, %v55, 0
  %v161 = vsel %vm87, %v56, 0
  %v164 = vsel %vm87, %v57, 0
  %v167 = vsel %vm87, %v58, 0
  %v170 = vsel %vm87, %v59, 0
  %v173 = vsel %vm87, %v60, 0
  %v176 = vsel %vm87, %v61, 0
  %v179 = vsel %vm87, %v62, 0
  %v182 = vsel %vm87, %v63, 0
  %v185 = vsel %vm87, %v64, 0
  %v188 = vsel %vm87, %v65, 0
  %v191 = vsel %vm87, %v66, 0
  %v194 = vsel %vm87, %v67, 0
  %v197 = vsel %vm87, %v68, 0
  %v200 = vsel %vm87, %v69, 0
  %v203 = vsel %vm87, %v70, 0
  %v206 = vsel %vm87, %v71, 0
  %v209 = vsel %vm87, %v72, 0
  %v212 = vsel %vm87, %v73, 0
  %v215 = vsel %vm87, %v74, 0
  %v218 = vsel %vm87, %v75, 0
  %v221 = vsel %vm87, %v76, 0
  %v224 = vsel %vm87, %v77, 0
  %v227 = vsel %vm87, %v78, 0
  %v230 = vsel %vm87, %v79, 0
  %v233 = vsel %vm87, %v80, 0
  %v236 = vsel %vm87, %v81, 0
  %238 = vmatpush.msra.mxu0 0.0
  %239 = vmatpush.msra.mxu0 0.0
  %240 = vmatpush.msra.mxu0 0.0
  %241 = vmatpush.msra.mxu0 0.0
  %242 = vmatpush.msra.mxu0 0.0
  %243 = vmatpush.msra.mxu0 0.0
  %244 = vmatpush.msra.mxu0 0.0
  %245 = vmatpush.msra.mxu0 0.0
  %246 = vmatpush.msra.mxu0 0.0
  %247 = vmatpush.msra.mxu0 0.0
  %248 = vmatpush.msra.mxu0 0.0
  %249 = vmatpush.msra.mxu0 0.0
  %250 = vmatpush.msra.mxu0 0.0
  %251 = vmatpush.msra.mxu0 0.0
  %252 = vmatpush.msra.mxu0 0.0
  %253 = vmatpush.msra.mxu0 %v82
  %254 = vmatmul.f32.gmra.mxu0 %v89
  %v255 = vpop.f32.mrf.mxu0
  %v256 = vadd.f32 %v85, %v255
  %257 = vmatmul.f32.gmra.mxu0 %v92
  %v258 = vpop.f32.mrf.mxu0
  %v259 = vadd.f32 %v85, %v258
  %260 = vmatmul.f32.gmra.mxu0 %v95
  %v261 = vpop.f32.mrf.mxu0
  %v262 = vadd.f32 %v85, %v261
  %263 = vmatmul.f32.gmra.mxu0 %v98
  %v264 = vpop.f32.mrf.mxu0
  %v265 = vadd.f32 %v85, %v264
  %266 = vmatmul.f32.gmra.mxu0 %v101
  %v267 = vpop.f32.mrf.mxu0
  %v268 = vadd.f32 %v85, %v267
  %269 = vmatmul.f32.gmra.mxu0 %v104
  %v270 = vpop.f32.mrf.mxu0
  %v271 = vadd.f32 %v85, %v270
  %272 = vmatmul.f32.gmra.mxu0 %v107
  %v273 = vpop.f32.mrf.mxu0
  %v274 = vadd.f32 %v85, %v273
  %275 = vmatmul.f32.gmra.mxu0 %v110
  %v276 = vpop.f32.mrf.mxu0
  %v277 = vadd.f32 %v85, %v276
  %278 = vmatmul.f32.gmra.mxu0 %v113
  %v279 = vpop.f32.mrf.mxu0
  %v280 = vadd.f32 %v85, %v279
  %281 = vmatmul.f32.gmra.mxu0 %v116
  %v282 = vpop.f32.mrf.mxu0
  %v283 = vadd.f32 %v85, %v282
  %284 = vmatmul.f32.gmra.mxu0 %v119
  %v285 = vpop.f32.mrf.mxu0
  %v286 = vadd.f32 %v85, %v285
  %287 = vmatmul.f32.gmra.mxu0 %v122
  %v288 = vpop.f32.mrf.mxu0
  %v289 = vadd.f32 %v85, %v288
  %290 = vmatmul.f32.gmra.mxu0 %v125
  %v291 = vpop.f32.mrf.mxu0
  %v292 = vadd.f32 %v85, %v291
  %293 = vmatmul.f32.gmra.mxu0 %v128
  %v294 = vpop.f32.mrf.mxu0
  %v295 = vadd.f32 %v85, %v294
  %296 = vmatmul.f32.gmra.mxu0 %v131
  %v297 = vpop.f32.mrf.mxu0
  %v298 = vadd.f32 %v85, %v297
  %299 = vmatmul.f32.gmra.mxu0 %v134
  %v300 = vpop.f32.mrf.mxu0
  %v301 = vadd.f32 %v85, %v300
  %302 = vmatmul.f32.gmra.mxu0 %v137
  %v303 = vpop.f32.mrf.mxu0
  %v304 = vadd.f32 %v85, %v303
  %305 = vmatmul.f32.gmra.mxu0 %v140
  %v306 = vpop.f32.mrf.mxu0
  %v307 = vadd.f32 %v85, %v306
  %308 = vmatmul.f32.gmra.mxu0 %v143
  %v309 = vpop.f32.mrf.mxu0
  %v310 = vadd.f32 %v85, %v309
  %311 = vmatmul.f32.gmra.mxu0 %v146
  %v312 = vpop.f32.mrf.mxu0
  %v313 = vadd.f32 %v85, %v312
  %314 = vmatmul.f32.gmra.mxu0 %v149
  %v315 = vpop.f32.mrf.mxu0
  %v316 = vadd.f32 %v85, %v315
  %317 = vmatmul.f32.gmra.mxu0 %v152
  %v318 = vpop.f32.mrf.mxu0
  %v319 = vadd.f32 %v85, %v318
  %320 = vmatmul.f32.gmra.mxu0 %v155
  %v321 = vpop.f32.mrf.mxu0
  %v322 = vadd.f32 %v85, %v321
  %323 = vmatmul.f32.gmra.mxu0 %v158
  %v324 = vpop.f32.mrf.mxu0
  %v325 = vadd.f32 %v85, %v324
  %326 = vmatmul.f32.gmra.mxu0 %v161
  %v327 = vpop.f32.mrf.mxu0
  %v328 = vadd.f32 %v85, %v327
  %329 = vmatmul.f32.gmra.mxu0 %v164
  %v330 = vpop.f32.mrf.mxu0
  %v331 = vadd.f32 %v85, %v330
  %332 = vmatmul.f32.gmra.mxu0 %v167
  %v333 = vpop.f32.mrf.mxu0
  %v334 = vadd.f32 %v85, %v333
  %335 = vmatmul.f32.gmra.mxu0 %v170
  %v336 = vpop.f32.mrf.mxu0
  %v337 = vadd.f32 %v85, %v336
  %338 = vmatmul.f32.gmra.mxu0 %v173
  %v339 = vpop.f32.mrf.mxu0
  %v340 = vadd.f32 %v85, %v339
  %341 = vmatmul.f32.gmra.mxu0 %v176
  %v342 = vpop.f32.mrf.mxu0
  %v343 = vadd.f32 %v85, %v342
  %344 = vmatmul.f32.gmra.mxu0 %v179
  %v345 = vpop.f32.mrf.mxu0
  %v346 = vadd.f32 %v85, %v345
  %347 = vmatmul.f32.gmra.mxu0 %v182
  %v348 = vpop.f32.mrf.mxu0
  %v349 = vadd.f32 %v85, %v348
  %350 = vmatmul.f32.gmra.mxu0 %v185
  %v351 = vpop.f32.mrf.mxu0
  %v352 = vadd.f32 %v85, %v351
  %353 = vmatmul.f32.gmra.mxu0 %v188
  %v354 = vpop.f32.mrf.mxu0
  %v355 = vadd.f32 %v85, %v354
  %356 = vmatmul.f32.gmra.mxu0 %v191
  %v357 = vpop.f32.mrf.mxu0
  %v358 = vadd.f32 %v85, %v357
  %359 = vmatmul.f32.gmra.mxu0 %v194
  %v360 = vpop.f32.mrf.mxu0
  %v361 = vadd.f32 %v85, %v360
  %362 = vmatmul.f32.gmra.mxu0 %v197
  %v363 = vpop.f32.mrf.mxu0
  %v364 = vadd.f32 %v85, %v363
  %365 = vmatmul.f32.gmra.mxu0 %v200
  %v366 = vpop.f32.mrf.mxu0
  %v367 = vadd.f32 %v85, %v366
  %368 = vmatmul.f32.gmra.mxu0 %v203
  %v369 = vpop.f32.mrf.mxu0
  %v370 = vadd.f32 %v85, %v369
  %371 = vmatmul.f32.gmra.mxu0 %v206
  %v372 = vpop.f32.mrf.mxu0
  %v373 = vadd.f32 %v85, %v372
  %374 = vmatmul.f32.gmra.mxu0 %v209
  %v375 = vpop.f32.mrf.mxu0
  %v376 = vadd.f32 %v85, %v375
  %377 = vmatmul.f32.gmra.mxu0 %v212
  %v378 = vpop.f32.mrf.mxu0
  %v379 = vadd.f32 %v85, %v378
  %380 = vmatmul.f32.gmra.mxu0 %v215
  %v381 = vpop.f32.mrf.mxu0
  %v382 = vadd.f32 %v85, %v381
  %383 = vmatmul.f32.gmra.mxu0 %v218
  %v384 = vpop.f32.mrf.mxu0
  %v385 = vadd.f32 %v85, %v384
  %386 = vmatmul.f32.gmra.mxu0 %v221
  %v387 = vpop.f32.mrf.mxu0
  %v388 = vadd.f32 %v85, %v387
  %389 = vmatmul.f32.gmra.mxu0 %v224
  %v390 = vpop.f32.mrf.mxu0
  %v391 = vadd.f32 %v85, %v390
  %392 = vmatmul.f32.gmra.mxu0 %v227
  %v393 = vpop.f32.mrf.mxu0
  %v394 = vadd.f32 %v85, %v393
  %395 = vmatmul.f32.gmra.mxu0 %v230
  %v396 = vpop.f32.mrf.mxu0
  %v397 = vadd.f32 %v85, %v396
  %398 = vmatmul.f32.gmra.mxu0 %v233
  %v399 = vpop.f32.mrf.mxu0
  %v400 = vadd.f32 %v85, %v399
  %401 = vmatmul.f32.gmra.mxu0 %v236
  %v402 = vpop.f32.mrf.mxu0
  %v403 = vadd.f32 %v85, %v402
  %404 = vdwg.mxu0
  %v405 = vld [vmem:[%s3] sm:$0xff]
  %v406 = vld [vmem:[%s3 + $0x8] sm:$0xff]
  %v407 = vld [vmem:[%s3 + $0x10] sm:$0xff]
  %v408 = vld [vmem:[%s3 + $0x18] sm:$0xff]
  %v409 = vld [vmem:[%s4] sm:$0xff]
  %v410 = vld [vmem:[%s4 + $0x8] sm:$0xff]
  %v411 = vld [vmem:[%s4 + $0x10] sm:$0xff]
  %v412 = vld [vmem:[%s4 + $0x18] sm:$0xff]
  %v413 = vld [vmem:[%s5] sm:$0xff]
  %v414 = vld [vmem:[%s5 + $0x8] sm:$0xff]
  %v415 = vld [vmem:[%s5 + $0x10] sm:$0xff]
  %v416 = vld [vmem:[%s5 + $0x18] sm:$0xff]
  %v417 = vld [vmem:[%s6] sm:$0x1]
  %v419 = vperm.slane %v417, 0
  %v421 = vlaneseq
  %v422 = vand.u32 %v421, 127
  %vm423 = vcmp.lt.s32.totalorder %v422, 96
  %v424 = vsel %vm423, 0.5, 1.0
  %v425 = vld [vmem:[%s8] sm:$0x1]
  %v427 = vperm.slane %v425, 0
  %v429 = vadd.f32 %v256, 0.0
  %v430 = vmul.f32 %v429, %v424
  %v431 = vtanh.pop %v430
  %v432 = vadd.f32 %v431, 1.0
  %v433 = vmul.f32 %v432, 0.5
  %v434 = vmul.f32 %v433, 0.0
  %436 = vrot.lane.b32.xlu0 %v431, 32
  %v437 = vpop.permute.xlu0 %436
  %v439 = vmul.f32 %v433, %v437
  %441 = vrot.lane.b32.xlu0 %v439, 32
  %v442 = vpop.permute.xlu0 %441
  %v444 = vadd.f32 %v434, %v442
  %v445 = vtanh.pop %v444
  %447 = vrot.lane.b32.xlu0 %v445, 32
  %v448 = vpop.permute.xlu0 %447
  %v450 = vmul.f32 %v433, %v448
  %452 = vrot.lane.b32.xlu0 %v450, 64
  %v453 = vpop.permute.xlu0 %452
  %vm454 = vcmask 261120
  %v455 = vsel %vm454, %v453, 0
  %457 = vmatpush.msra.mxu0 0.0
  %458 = vmatpush.msra.mxu0 0.0
  %459 = vmatpush.msra.mxu0 0.0
  %460 = vmatpush.msra.mxu0 0.0
  %461 = vmatpush.msra.mxu0 0.0
  %462 = vmatpush.msra.mxu0 0.0
  %463 = vmatpush.msra.mxu0 0.0
  %464 = vmatpush.msra.mxu0 0.0
  %465 = vmatpush.msra.mxu0 0.0
  %466 = vmatpush.msra.mxu0 0.0
  %467 = vmatpush.msra.mxu0 0.0
  %468 = vmatpush.msra.mxu0 0.0
  %469 = vmatpush.msra.mxu0 %v408
  %470 = vmatpush.msra.mxu0 %v407
  %471 = vmatpush.msra.mxu0 %v406
  %472 = vmatpush.msra.mxu0 %v405
  %473 = vmatmul.f32.gmra.mxu0 %v455
  %v474 = vpop.f32.mrf.mxu0
  %v475 = vadd.f32 0.0, %v474
  %476 = vdwg.mxu0
  %477 = vmatpush.msra.mxu0 0.0
  %478 = vmatpush.msra.mxu0 0.0
  %479 = vmatpush.msra.mxu0 0.0
  %480 = vmatpush.msra.mxu0 0.0
  %481 = vmatpush.msra.mxu0 0.0
  %482 = vmatpush.msra.mxu0 0.0
  %483 = vmatpush.msra.mxu0 0.0
  %484 = vmatpush.msra.mxu0 0.0
  %485 = vmatpush.msra.mxu0 0.0
  %486 = vmatpush.msra.mxu0 0.0
  %487 = vmatpush.msra.mxu0 0.0
  %488 = vmatpush.msra.mxu0 0.0
  %489 = vmatpush.msra.mxu0 %v412
  %490 = vmatpush.msra.mxu0 %v411
  %491 = vmatpush.msra.mxu0 %v410
  %492 = vmatpush.msra.mxu0 %v409
  %493 = vmatmul.f32.gmra.mxu0 %v455
  %v494 = vpop.f32.mrf.mxu0
  %v495 = vadd.f32 %v419, %v494
  %496 = vdwg.mxu0
  %v497 = vmul.f32 %v495, %v424
  %v498 = vtanh.pop %v497
  %v499 = vadd.f32 %v498, 1.0
  %v500 = vmul.f32 %v499, 0.5
  %v501 = vmul.f32 %v500, 0.0
  %503 = vrot.lane.b32.xlu0 %v498, 32
  %v504 = vpop.permute.xlu0 %503
  %v506 = vmul.f32 %v500, %v504
  %508 = vrot.lane.b32.xlu0 %v506, 32
  %v509 = vpop.permute.xlu0 %508
  %v511 = vadd.f32 %v501, %v509
  %v512 = vtanh.pop %v511
  %514 = vrot.lane.b32.xlu0 %v512, 32
  %v515 = vpop.permute.xlu0 %514
  %v517 = vmul.f32 %v500, %v515
  %519 = vrot.lane.b32.xlu0 %v517, 64
  %v520 = vpop.permute.xlu0 %519
  %v521 = vsel %vm454, %v520, 0
  %523 = vmatpush.msra.mxu0 0.0
  %524 = vmatpush.msra.mxu0 0.0
  %525 = vmatpush.msra.mxu0 0.0
  %526 = vmatpush.msra.mxu0 0.0
  %527 = vmatpush.msra.mxu0 0.0
  %528 = vmatpush.msra.mxu0 0.0
  %529 = vmatpush.msra.mxu0 0.0
  %530 = vmatpush.msra.mxu0 0.0
  %531 = vmatpush.msra.mxu0 0.0
  %532 = vmatpush.msra.mxu0 0.0
  %533 = vmatpush.msra.mxu0 0.0
  %534 = vmatpush.msra.mxu0 0.0
  %535 = vmatpush.msra.mxu0 %v416
  %536 = vmatpush.msra.mxu0 %v415
  %537 = vmatpush.msra.mxu0 %v414
  %538 = vmatpush.msra.mxu0 %v413
  %539 = vmatmul.f32.gmra.mxu0 %v521
  %v540 = vpop.f32.mrf.mxu0
  %v541 = vadd.f32 0.0, %v540
  %542 = vdwg.mxu0
  %v543 = vld [vmem:[%s7] sm:$0xff]
  %v544 = vld [vmem:[%s7 + $0x8] sm:$0xff]
  %v545 = vld [vmem:[%s7 + $0x10] sm:$0xff]
  %v546 = vld [vmem:[%s7 + $0x18] sm:$0xff]
  %547 = vmatpush.msra.mxu0 0.0
  %548 = vmatpush.msra.mxu0 0.0
  %549 = vmatpush.msra.mxu0 0.0
  %550 = vmatpush.msra.mxu0 0.0
  %551 = vmatpush.msra.mxu0 0.0
  %552 = vmatpush.msra.mxu0 0.0
  %553 = vmatpush.msra.mxu0 0.0
  %554 = vmatpush.msra.mxu0 0.0
  %555 = vmatpush.msra.mxu0 0.0
  %556 = vmatpush.msra.mxu0 0.0
  %557 = vmatpush.msra.mxu0 0.0
  %558 = vmatpush.msra.mxu0 0.0
  %559 = vmatpush.msra.mxu0 %v546
  %560 = vmatpush.msra.mxu0 %v545
  %561 = vmatpush.msra.mxu0 %v544
  %562 = vmatpush.msra.mxu0 %v543
  %563 = vmatmul.f32.gmra.mxu0 %v521
  %v564 = vpop.f32.mrf.mxu0
  %v565 = vadd.f32 0.0, %v564
  %566 = vdwg.mxu0
  %v567 = vadd.f32 %v427, %v565
  %v568 = vadd.f32 %v259, %v475
  %v569 = vmul.f32 %v568, %v424
  %v570 = vtanh.pop %v569
  %v571 = vadd.f32 %v570, 1.0
  %v572 = vmul.f32 %v571, 0.5
  %v573 = vmul.f32 %v572, %v444
  %575 = vrot.lane.b32.xlu0 %v570, 32
  %v576 = vpop.permute.xlu0 %575
  %v578 = vmul.f32 %v572, %v576
  %580 = vrot.lane.b32.xlu0 %v578, 32
  %v581 = vpop.permute.xlu0 %580
  %v583 = vadd.f32 %v573, %v581
  %v584 = vtanh.pop %v583
  %586 = vrot.lane.b32.xlu0 %v584, 32
  %v587 = vpop.permute.xlu0 %586
  %v589 = vmul.f32 %v572, %v587
  %591 = vrot.lane.b32.xlu0 %v589, 64
  %v592 = vpop.permute.xlu0 %591
  %v593 = vsel %vm454, %v592, 0
  %595 = vmatpush.msra.mxu0 0.0
  %596 = vmatpush.msra.mxu0 0.0
  %597 = vmatpush.msra.mxu0 0.0
  %598 = vmatpush.msra.mxu0 0.0
  %599 = vmatpush.msra.mxu0 0.0
  %600 = vmatpush.msra.mxu0 0.0
  %601 = vmatpush.msra.mxu0 0.0
  %602 = vmatpush.msra.mxu0 0.0
  %603 = vmatpush.msra.mxu0 0.0
  %604 = vmatpush.msra.mxu0 0.0
  %605 = vmatpush.msra.mxu0 0.0
  %606 = vmatpush.msra.mxu0 0.0
  %607 = vmatpush.msra.mxu0 %v408
  %608 = vmatpush.msra.mxu0 %v407
  %609 = vmatpush.msra.mxu0 %v406
  %610 = vmatpush.msra.mxu0 %v405
  %611 = vmatmul.f32.gmra.mxu0 %v593
  %v612 = vpop.f32.mrf.mxu0
  %v613 = vadd.f32 0.0, %v612
  %614 = vdwg.mxu0
  %615 = vmatpush.msra.mxu0 0.0
  %616 = vmatpush.msra.mxu0 0.0
  %617 = vmatpush.msra.mxu0 0.0
  %618 = vmatpush.msra.mxu0 0.0
  %619 = vmatpush.msra.mxu0 0.0
  %620 = vmatpush.msra.mxu0 0.0
  %621 = vmatpush.msra.mxu0 0.0
  %622 = vmatpush.msra.mxu0 0.0
  %623 = vmatpush.msra.mxu0 0.0
  %624 = vmatpush.msra.mxu0 0.0
  %625 = vmatpush.msra.mxu0 0.0
  %626 = vmatpush.msra.mxu0 0.0
  %627 = vmatpush.msra.mxu0 %v412
  %628 = vmatpush.msra.mxu0 %v411
  %629 = vmatpush.msra.mxu0 %v410
  %630 = vmatpush.msra.mxu0 %v409
  %631 = vmatmul.f32.gmra.mxu0 %v593
  %v632 = vpop.f32.mrf.mxu0
  %v633 = vadd.f32 %v541, %v632
  %634 = vdwg.mxu0
  %v635 = vadd.f32 %v633, %v419
  %v636 = vmul.f32 %v635, %v424
  %v637 = vtanh.pop %v636
  %v638 = vadd.f32 %v637, 1.0
  %v639 = vmul.f32 %v638, 0.5
  %v640 = vmul.f32 %v639, %v511
  %642 = vrot.lane.b32.xlu0 %v637, 32
  %v643 = vpop.permute.xlu0 %642
  %v645 = vmul.f32 %v639, %v643
  %647 = vrot.lane.b32.xlu0 %v645, 32
  %v648 = vpop.permute.xlu0 %647
  %v650 = vadd.f32 %v640, %v648
  %v651 = vtanh.pop %v650
  %653 = vrot.lane.b32.xlu0 %v651, 32
  %v654 = vpop.permute.xlu0 %653
  %v656 = vmul.f32 %v639, %v654
  %658 = vrot.lane.b32.xlu0 %v656, 64
  %v659 = vpop.permute.xlu0 %658
  %v660 = vsel %vm454, %v659, 0
  %662 = vmatpush.msra.mxu0 0.0
  %663 = vmatpush.msra.mxu0 0.0
  %664 = vmatpush.msra.mxu0 0.0
  %665 = vmatpush.msra.mxu0 0.0
  %666 = vmatpush.msra.mxu0 0.0
  %667 = vmatpush.msra.mxu0 0.0
  %668 = vmatpush.msra.mxu0 0.0
  %669 = vmatpush.msra.mxu0 0.0
  %670 = vmatpush.msra.mxu0 0.0
  %671 = vmatpush.msra.mxu0 0.0
  %672 = vmatpush.msra.mxu0 0.0
  %673 = vmatpush.msra.mxu0 0.0
  %674 = vmatpush.msra.mxu0 %v416
  %675 = vmatpush.msra.mxu0 %v415
  %676 = vmatpush.msra.mxu0 %v414
  %677 = vmatpush.msra.mxu0 %v413
  %678 = vmatmul.f32.gmra.mxu0 %v660
  %v679 = vpop.f32.mrf.mxu0
  %v680 = vadd.f32 0.0, %v679
  %681 = vdwg.mxu0
  %s682 = scalar_lea.vmem %s7, 32
  %v683 = vld [vmem:[%s682] sm:$0xff]
  %v684 = vld [vmem:[%s682 + $0x8] sm:$0xff]
  %v685 = vld [vmem:[%s682 + $0x10] sm:$0xff]
  %v686 = vld [vmem:[%s682 + $0x18] sm:$0xff]
  %687 = vmatpush.msra.mxu0 0.0
  %688 = vmatpush.msra.mxu0 0.0
  %689 = vmatpush.msra.mxu0 0.0
  %690 = vmatpush.msra.mxu0 0.0
  %691 = vmatpush.msra.mxu0 0.0
  %692 = vmatpush.msra.mxu0 0.0
  %693 = vmatpush.msra.mxu0 0.0
  %694 = vmatpush.msra.mxu0 0.0
  %695 = vmatpush.msra.mxu0 0.0
  %696 = vmatpush.msra.mxu0 0.0
  %697 = vmatpush.msra.mxu0 0.0
  %698 = vmatpush.msra.mxu0 0.0
  %699 = vmatpush.msra.mxu0 %v686
  %700 = vmatpush.msra.mxu0 %v685
  %701 = vmatpush.msra.mxu0 %v684
  %702 = vmatpush.msra.mxu0 %v683
  %703 = vmatmul.f32.gmra.mxu0 %v660
  %v704 = vpop.f32.mrf.mxu0
  %v705 = vadd.f32 0.0, %v704
  %706 = vdwg.mxu0
  %v707 = vadd.f32 %v567, %v705
  %v708 = vadd.f32 %v262, %v613
  %v709 = vmul.f32 %v708, %v424
  %v710 = vtanh.pop %v709
  %v711 = vadd.f32 %v710, 1.0
  %v712 = vmul.f32 %v711, 0.5
  %v713 = vmul.f32 %v712, %v583
  %715 = vrot.lane.b32.xlu0 %v710, 32
  %v716 = vpop.permute.xlu0 %715
  %v718 = vmul.f32 %v712, %v716
  %720 = vrot.lane.b32.xlu0 %v718, 32
  %v721 = vpop.permute.xlu0 %720
  %v723 = vadd.f32 %v713, %v721
  %v724 = vtanh.pop %v723
  %726 = vrot.lane.b32.xlu0 %v724, 32
  %v727 = vpop.permute.xlu0 %726
  %v729 = vmul.f32 %v712, %v727
  %731 = vrot.lane.b32.xlu0 %v729, 64
  %v732 = vpop.permute.xlu0 %731
  %v733 = vsel %vm454, %v732, 0
  %735 = vmatpush.msra.mxu0 0.0
  %736 = vmatpush.msra.mxu0 0.0
  %737 = vmatpush.msra.mxu0 0.0
  %738 = vmatpush.msra.mxu0 0.0
  %739 = vmatpush.msra.mxu0 0.0
  %740 = vmatpush.msra.mxu0 0.0
  %741 = vmatpush.msra.mxu0 0.0
  %742 = vmatpush.msra.mxu0 0.0
  %743 = vmatpush.msra.mxu0 0.0
  %744 = vmatpush.msra.mxu0 0.0
  %745 = vmatpush.msra.mxu0 0.0
  %746 = vmatpush.msra.mxu0 0.0
  %747 = vmatpush.msra.mxu0 %v408
  %748 = vmatpush.msra.mxu0 %v407
  %749 = vmatpush.msra.mxu0 %v406
  %750 = vmatpush.msra.mxu0 %v405
  %751 = vmatmul.f32.gmra.mxu0 %v733
  %v752 = vpop.f32.mrf.mxu0
  %v753 = vadd.f32 0.0, %v752
  %754 = vdwg.mxu0
  %755 = vmatpush.msra.mxu0 0.0
  %756 = vmatpush.msra.mxu0 0.0
  %757 = vmatpush.msra.mxu0 0.0
  %758 = vmatpush.msra.mxu0 0.0
  %759 = vmatpush.msra.mxu0 0.0
  %760 = vmatpush.msra.mxu0 0.0
  %761 = vmatpush.msra.mxu0 0.0
  %762 = vmatpush.msra.mxu0 0.0
  %763 = vmatpush.msra.mxu0 0.0
  %764 = vmatpush.msra.mxu0 0.0
  %765 = vmatpush.msra.mxu0 0.0
  %766 = vmatpush.msra.mxu0 0.0
  %767 = vmatpush.msra.mxu0 %v412
  %768 = vmatpush.msra.mxu0 %v411
  %769 = vmatpush.msra.mxu0 %v410
  %770 = vmatpush.msra.mxu0 %v409
  %771 = vmatmul.f32.gmra.mxu0 %v733
  %v772 = vpop.f32.mrf.mxu0
  %v773 = vadd.f32 %v680, %v772
  %774 = vdwg.mxu0
  %v775 = vadd.f32 %v773, %v419
  %v776 = vmul.f32 %v775, %v424
  %v777 = vtanh.pop %v776
  %v778 = vadd.f32 %v777, 1.0
  %v779 = vmul.f32 %v778, 0.5
  %v780 = vmul.f32 %v779, %v650
  %782 = vrot.lane.b32.xlu0 %v777, 32
  %v783 = vpop.permute.xlu0 %782
  %v785 = vmul.f32 %v779, %v783
  %787 = vrot.lane.b32.xlu0 %v785, 32
  %v788 = vpop.permute.xlu0 %787
  %v790 = vadd.f32 %v780, %v788
  %v791 = vtanh.pop %v790
  %793 = vrot.lane.b32.xlu0 %v791, 32
  %v794 = vpop.permute.xlu0 %793
  %v796 = vmul.f32 %v779, %v794
  %798 = vrot.lane.b32.xlu0 %v796, 64
  %v799 = vpop.permute.xlu0 %798
  %v800 = vsel %vm454, %v799, 0
  %802 = vmatpush.msra.mxu0 0.0
  %803 = vmatpush.msra.mxu0 0.0
  %804 = vmatpush.msra.mxu0 0.0
  %805 = vmatpush.msra.mxu0 0.0
  %806 = vmatpush.msra.mxu0 0.0
  %807 = vmatpush.msra.mxu0 0.0
  %808 = vmatpush.msra.mxu0 0.0
  %809 = vmatpush.msra.mxu0 0.0
  %810 = vmatpush.msra.mxu0 0.0
  %811 = vmatpush.msra.mxu0 0.0
  %812 = vmatpush.msra.mxu0 0.0
  %813 = vmatpush.msra.mxu0 0.0
  %814 = vmatpush.msra.mxu0 %v416
  %815 = vmatpush.msra.mxu0 %v415
  %816 = vmatpush.msra.mxu0 %v414
  %817 = vmatpush.msra.mxu0 %v413
  %818 = vmatmul.f32.gmra.mxu0 %v800
  %v819 = vpop.f32.mrf.mxu0
  %v820 = vadd.f32 0.0, %v819
  %821 = vdwg.mxu0
  %s822 = scalar_lea.vmem %s7, 64
  %v823 = vld [vmem:[%s822] sm:$0xff]
  %v824 = vld [vmem:[%s822 + $0x8] sm:$0xff]
  %v825 = vld [vmem:[%s822 + $0x10] sm:$0xff]
  %v826 = vld [vmem:[%s822 + $0x18] sm:$0xff]
  %827 = vmatpush.msra.mxu0 0.0
  %828 = vmatpush.msra.mxu0 0.0
  %829 = vmatpush.msra.mxu0 0.0
  %830 = vmatpush.msra.mxu0 0.0
  %831 = vmatpush.msra.mxu0 0.0
  %832 = vmatpush.msra.mxu0 0.0
  %833 = vmatpush.msra.mxu0 0.0
  %834 = vmatpush.msra.mxu0 0.0
  %835 = vmatpush.msra.mxu0 0.0
  %836 = vmatpush.msra.mxu0 0.0
  %837 = vmatpush.msra.mxu0 0.0
  %838 = vmatpush.msra.mxu0 0.0
  %839 = vmatpush.msra.mxu0 %v826
  %840 = vmatpush.msra.mxu0 %v825
  %841 = vmatpush.msra.mxu0 %v824
  %842 = vmatpush.msra.mxu0 %v823
  %843 = vmatmul.f32.gmra.mxu0 %v800
  %v844 = vpop.f32.mrf.mxu0
  %v845 = vadd.f32 0.0, %v844
  %846 = vdwg.mxu0
  %v847 = vadd.f32 %v707, %v845
  %v848 = vadd.f32 %v265, %v753
  %v849 = vmul.f32 %v848, %v424
  %v850 = vtanh.pop %v849
  %v851 = vadd.f32 %v850, 1.0
  %v852 = vmul.f32 %v851, 0.5
  %v853 = vmul.f32 %v852, %v723
  %855 = vrot.lane.b32.xlu0 %v850, 32
  %v856 = vpop.permute.xlu0 %855
  %v858 = vmul.f32 %v852, %v856
  %860 = vrot.lane.b32.xlu0 %v858, 32
  %v861 = vpop.permute.xlu0 %860
  %v863 = vadd.f32 %v853, %v861
  %v864 = vtanh.pop %v863
  %866 = vrot.lane.b32.xlu0 %v864, 32
  %v867 = vpop.permute.xlu0 %866
  %v869 = vmul.f32 %v852, %v867
  %871 = vrot.lane.b32.xlu0 %v869, 64
  %v872 = vpop.permute.xlu0 %871
  %v873 = vsel %vm454, %v872, 0
  %875 = vmatpush.msra.mxu0 0.0
  %876 = vmatpush.msra.mxu0 0.0
  %877 = vmatpush.msra.mxu0 0.0
  %878 = vmatpush.msra.mxu0 0.0
  %879 = vmatpush.msra.mxu0 0.0
  %880 = vmatpush.msra.mxu0 0.0
  %881 = vmatpush.msra.mxu0 0.0
  %882 = vmatpush.msra.mxu0 0.0
  %883 = vmatpush.msra.mxu0 0.0
  %884 = vmatpush.msra.mxu0 0.0
  %885 = vmatpush.msra.mxu0 0.0
  %886 = vmatpush.msra.mxu0 0.0
  %887 = vmatpush.msra.mxu0 %v408
  %888 = vmatpush.msra.mxu0 %v407
  %889 = vmatpush.msra.mxu0 %v406
  %890 = vmatpush.msra.mxu0 %v405
  %891 = vmatmul.f32.gmra.mxu0 %v873
  %v892 = vpop.f32.mrf.mxu0
  %v893 = vadd.f32 0.0, %v892
  %894 = vdwg.mxu0
  %895 = vmatpush.msra.mxu0 0.0
  %896 = vmatpush.msra.mxu0 0.0
  %897 = vmatpush.msra.mxu0 0.0
  %898 = vmatpush.msra.mxu0 0.0
  %899 = vmatpush.msra.mxu0 0.0
  %900 = vmatpush.msra.mxu0 0.0
  %901 = vmatpush.msra.mxu0 0.0
  %902 = vmatpush.msra.mxu0 0.0
  %903 = vmatpush.msra.mxu0 0.0
  %904 = vmatpush.msra.mxu0 0.0
  %905 = vmatpush.msra.mxu0 0.0
  %906 = vmatpush.msra.mxu0 0.0
  %907 = vmatpush.msra.mxu0 %v412
  %908 = vmatpush.msra.mxu0 %v411
  %909 = vmatpush.msra.mxu0 %v410
  %910 = vmatpush.msra.mxu0 %v409
  %911 = vmatmul.f32.gmra.mxu0 %v873
  %v912 = vpop.f32.mrf.mxu0
  %v913 = vadd.f32 %v820, %v912
  %914 = vdwg.mxu0
  %v915 = vadd.f32 %v913, %v419
  %v916 = vmul.f32 %v915, %v424
  %v917 = vtanh.pop %v916
  %v918 = vadd.f32 %v917, 1.0
  %v919 = vmul.f32 %v918, 0.5
  %v920 = vmul.f32 %v919, %v790
  %922 = vrot.lane.b32.xlu0 %v917, 32
  %v923 = vpop.permute.xlu0 %922
  %v925 = vmul.f32 %v919, %v923
  %927 = vrot.lane.b32.xlu0 %v925, 32
  %v928 = vpop.permute.xlu0 %927
  %v930 = vadd.f32 %v920, %v928
  %v931 = vtanh.pop %v930
  %933 = vrot.lane.b32.xlu0 %v931, 32
  %v934 = vpop.permute.xlu0 %933
  %v936 = vmul.f32 %v919, %v934
  %938 = vrot.lane.b32.xlu0 %v936, 64
  %v939 = vpop.permute.xlu0 %938
  %v940 = vsel %vm454, %v939, 0
  %942 = vmatpush.msra.mxu0 0.0
  %943 = vmatpush.msra.mxu0 0.0
  %944 = vmatpush.msra.mxu0 0.0
  %945 = vmatpush.msra.mxu0 0.0
  %946 = vmatpush.msra.mxu0 0.0
  %947 = vmatpush.msra.mxu0 0.0
  %948 = vmatpush.msra.mxu0 0.0
  %949 = vmatpush.msra.mxu0 0.0
  %950 = vmatpush.msra.mxu0 0.0
  %951 = vmatpush.msra.mxu0 0.0
  %952 = vmatpush.msra.mxu0 0.0
  %953 = vmatpush.msra.mxu0 0.0
  %954 = vmatpush.msra.mxu0 %v416
  %955 = vmatpush.msra.mxu0 %v415
  %956 = vmatpush.msra.mxu0 %v414
  %957 = vmatpush.msra.mxu0 %v413
  %958 = vmatmul.f32.gmra.mxu0 %v940
  %v959 = vpop.f32.mrf.mxu0
  %v960 = vadd.f32 0.0, %v959
  %961 = vdwg.mxu0
  %s962 = scalar_lea.vmem %s7, 96
  %v963 = vld [vmem:[%s962] sm:$0xff]
  %v964 = vld [vmem:[%s962 + $0x8] sm:$0xff]
  %v965 = vld [vmem:[%s962 + $0x10] sm:$0xff]
  %v966 = vld [vmem:[%s962 + $0x18] sm:$0xff]
  %967 = vmatpush.msra.mxu0 0.0
  %968 = vmatpush.msra.mxu0 0.0
  %969 = vmatpush.msra.mxu0 0.0
  %970 = vmatpush.msra.mxu0 0.0
  %971 = vmatpush.msra.mxu0 0.0
  %972 = vmatpush.msra.mxu0 0.0
  %973 = vmatpush.msra.mxu0 0.0
  %974 = vmatpush.msra.mxu0 0.0
  %975 = vmatpush.msra.mxu0 0.0
  %976 = vmatpush.msra.mxu0 0.0
  %977 = vmatpush.msra.mxu0 0.0
  %978 = vmatpush.msra.mxu0 0.0
  %979 = vmatpush.msra.mxu0 %v966
  %980 = vmatpush.msra.mxu0 %v965
  %981 = vmatpush.msra.mxu0 %v964
  %982 = vmatpush.msra.mxu0 %v963
  %983 = vmatmul.f32.gmra.mxu0 %v940
  %v984 = vpop.f32.mrf.mxu0
  %v985 = vadd.f32 0.0, %v984
  %986 = vdwg.mxu0
  %v987 = vadd.f32 %v847, %v985
  %v988 = vadd.f32 %v268, %v893
  %v989 = vmul.f32 %v988, %v424
  %v990 = vtanh.pop %v989
  %v991 = vadd.f32 %v990, 1.0
  %v992 = vmul.f32 %v991, 0.5
  %v993 = vmul.f32 %v992, %v863
  %995 = vrot.lane.b32.xlu0 %v990, 32
  %v996 = vpop.permute.xlu0 %995
  %v998 = vmul.f32 %v992, %v996
  %1000 = vrot.lane.b32.xlu0 %v998, 32
  %v1001 = vpop.permute.xlu0 %1000
  %v1003 = vadd.f32 %v993, %v1001
  %v1004 = vtanh.pop %v1003
  %1006 = vrot.lane.b32.xlu0 %v1004, 32
  %v1007 = vpop.permute.xlu0 %1006
  %v1009 = vmul.f32 %v992, %v1007
  %1011 = vrot.lane.b32.xlu0 %v1009, 64
  %v1012 = vpop.permute.xlu0 %1011
  %v1013 = vsel %vm454, %v1012, 0
  %1015 = vmatpush.msra.mxu0 0.0
  %1016 = vmatpush.msra.mxu0 0.0
  %1017 = vmatpush.msra.mxu0 0.0
  %1018 = vmatpush.msra.mxu0 0.0
  %1019 = vmatpush.msra.mxu0 0.0
  %1020 = vmatpush.msra.mxu0 0.0
  %1021 = vmatpush.msra.mxu0 0.0
  %1022 = vmatpush.msra.mxu0 0.0
  %1023 = vmatpush.msra.mxu0 0.0
  %1024 = vmatpush.msra.mxu0 0.0
  %1025 = vmatpush.msra.mxu0 0.0
  %1026 = vmatpush.msra.mxu0 0.0
  %1027 = vmatpush.msra.mxu0 %v408
  %1028 = vmatpush.msra.mxu0 %v407
  %1029 = vmatpush.msra.mxu0 %v406
  %1030 = vmatpush.msra.mxu0 %v405
  %1031 = vmatmul.f32.gmra.mxu0 %v1013
  %v1032 = vpop.f32.mrf.mxu0
  %v1033 = vadd.f32 0.0, %v1032
  %1034 = vdwg.mxu0
  %1035 = vmatpush.msra.mxu0 0.0
  %1036 = vmatpush.msra.mxu0 0.0
  %1037 = vmatpush.msra.mxu0 0.0
  %1038 = vmatpush.msra.mxu0 0.0
  %1039 = vmatpush.msra.mxu0 0.0
  %1040 = vmatpush.msra.mxu0 0.0
  %1041 = vmatpush.msra.mxu0 0.0
  %1042 = vmatpush.msra.mxu0 0.0
  %1043 = vmatpush.msra.mxu0 0.0
  %1044 = vmatpush.msra.mxu0 0.0
  %1045 = vmatpush.msra.mxu0 0.0
  %1046 = vmatpush.msra.mxu0 0.0
  %1047 = vmatpush.msra.mxu0 %v412
  %1048 = vmatpush.msra.mxu0 %v411
  %1049 = vmatpush.msra.mxu0 %v410
  %1050 = vmatpush.msra.mxu0 %v409
  %1051 = vmatmul.f32.gmra.mxu0 %v1013
  %v1052 = vpop.f32.mrf.mxu0
  %v1053 = vadd.f32 %v960, %v1052
  %1054 = vdwg.mxu0
  %v1055 = vadd.f32 %v1053, %v419
  %v1056 = vmul.f32 %v1055, %v424
  %v1057 = vtanh.pop %v1056
  %v1058 = vadd.f32 %v1057, 1.0
  %v1059 = vmul.f32 %v1058, 0.5
  %v1060 = vmul.f32 %v1059, %v930
  %1062 = vrot.lane.b32.xlu0 %v1057, 32
  %v1063 = vpop.permute.xlu0 %1062
  %v1065 = vmul.f32 %v1059, %v1063
  %1067 = vrot.lane.b32.xlu0 %v1065, 32
  %v1068 = vpop.permute.xlu0 %1067
  %v1070 = vadd.f32 %v1060, %v1068
  %v1071 = vtanh.pop %v1070
  %1073 = vrot.lane.b32.xlu0 %v1071, 32
  %v1074 = vpop.permute.xlu0 %1073
  %v1076 = vmul.f32 %v1059, %v1074
  %1078 = vrot.lane.b32.xlu0 %v1076, 64
  %v1079 = vpop.permute.xlu0 %1078
  %v1080 = vsel %vm454, %v1079, 0
  %1082 = vmatpush.msra.mxu0 0.0
  %1083 = vmatpush.msra.mxu0 0.0
  %1084 = vmatpush.msra.mxu0 0.0
  %1085 = vmatpush.msra.mxu0 0.0
  %1086 = vmatpush.msra.mxu0 0.0
  %1087 = vmatpush.msra.mxu0 0.0
  %1088 = vmatpush.msra.mxu0 0.0
  %1089 = vmatpush.msra.mxu0 0.0
  %1090 = vmatpush.msra.mxu0 0.0
  %1091 = vmatpush.msra.mxu0 0.0
  %1092 = vmatpush.msra.mxu0 0.0
  %1093 = vmatpush.msra.mxu0 0.0
  %1094 = vmatpush.msra.mxu0 %v416
  %1095 = vmatpush.msra.mxu0 %v415
  %1096 = vmatpush.msra.mxu0 %v414
  %1097 = vmatpush.msra.mxu0 %v413
  %1098 = vmatmul.f32.gmra.mxu0 %v1080
  %v1099 = vpop.f32.mrf.mxu0
  %v1100 = vadd.f32 0.0, %v1099
  %1101 = vdwg.mxu0
  %s1102 = scalar_lea.vmem %s7, 128
  %v1103 = vld [vmem:[%s1102] sm:$0xff]
  %v1104 = vld [vmem:[%s1102 + $0x8] sm:$0xff]
  %v1105 = vld [vmem:[%s1102 + $0x10] sm:$0xff]
  %v1106 = vld [vmem:[%s1102 + $0x18] sm:$0xff]
  %1107 = vmatpush.msra.mxu0 0.0
  %1108 = vmatpush.msra.mxu0 0.0
  %1109 = vmatpush.msra.mxu0 0.0
  %1110 = vmatpush.msra.mxu0 0.0
  %1111 = vmatpush.msra.mxu0 0.0
  %1112 = vmatpush.msra.mxu0 0.0
  %1113 = vmatpush.msra.mxu0 0.0
  %1114 = vmatpush.msra.mxu0 0.0
  %1115 = vmatpush.msra.mxu0 0.0
  %1116 = vmatpush.msra.mxu0 0.0
  %1117 = vmatpush.msra.mxu0 0.0
  %1118 = vmatpush.msra.mxu0 0.0
  %1119 = vmatpush.msra.mxu0 %v1106
  %1120 = vmatpush.msra.mxu0 %v1105
  %1121 = vmatpush.msra.mxu0 %v1104
  %1122 = vmatpush.msra.mxu0 %v1103
  %1123 = vmatmul.f32.gmra.mxu0 %v1080
  %v1124 = vpop.f32.mrf.mxu0
  %v1125 = vadd.f32 0.0, %v1124
  %1126 = vdwg.mxu0
  %v1127 = vadd.f32 %v987, %v1125
  %v1128 = vadd.f32 %v271, %v1033
  %v1129 = vmul.f32 %v1128, %v424
  %v1130 = vtanh.pop %v1129
  %v1131 = vadd.f32 %v1130, 1.0
  %v1132 = vmul.f32 %v1131, 0.5
  %v1133 = vmul.f32 %v1132, %v1003
  %1135 = vrot.lane.b32.xlu0 %v1130, 32
  %v1136 = vpop.permute.xlu0 %1135
  %v1138 = vmul.f32 %v1132, %v1136
  %1140 = vrot.lane.b32.xlu0 %v1138, 32
  %v1141 = vpop.permute.xlu0 %1140
  %v1143 = vadd.f32 %v1133, %v1141
  %v1144 = vtanh.pop %v1143
  %1146 = vrot.lane.b32.xlu0 %v1144, 32
  %v1147 = vpop.permute.xlu0 %1146
  %v1149 = vmul.f32 %v1132, %v1147
  %1151 = vrot.lane.b32.xlu0 %v1149, 64
  %v1152 = vpop.permute.xlu0 %1151
  %v1153 = vsel %vm454, %v1152, 0
  %1155 = vmatpush.msra.mxu0 0.0
  %1156 = vmatpush.msra.mxu0 0.0
  %1157 = vmatpush.msra.mxu0 0.0
  %1158 = vmatpush.msra.mxu0 0.0
  %1159 = vmatpush.msra.mxu0 0.0
  %1160 = vmatpush.msra.mxu0 0.0
  %1161 = vmatpush.msra.mxu0 0.0
  %1162 = vmatpush.msra.mxu0 0.0
  %1163 = vmatpush.msra.mxu0 0.0
  %1164 = vmatpush.msra.mxu0 0.0
  %1165 = vmatpush.msra.mxu0 0.0
  %1166 = vmatpush.msra.mxu0 0.0
  %1167 = vmatpush.msra.mxu0 %v408
  %1168 = vmatpush.msra.mxu0 %v407
  %1169 = vmatpush.msra.mxu0 %v406
  %1170 = vmatpush.msra.mxu0 %v405
  %1171 = vmatmul.f32.gmra.mxu0 %v1153
  %v1172 = vpop.f32.mrf.mxu0
  %v1173 = vadd.f32 0.0, %v1172
  %1174 = vdwg.mxu0
  %1175 = vmatpush.msra.mxu0 0.0
  %1176 = vmatpush.msra.mxu0 0.0
  %1177 = vmatpush.msra.mxu0 0.0
  %1178 = vmatpush.msra.mxu0 0.0
  %1179 = vmatpush.msra.mxu0 0.0
  %1180 = vmatpush.msra.mxu0 0.0
  %1181 = vmatpush.msra.mxu0 0.0
  %1182 = vmatpush.msra.mxu0 0.0
  %1183 = vmatpush.msra.mxu0 0.0
  %1184 = vmatpush.msra.mxu0 0.0
  %1185 = vmatpush.msra.mxu0 0.0
  %1186 = vmatpush.msra.mxu0 0.0
  %1187 = vmatpush.msra.mxu0 %v412
  %1188 = vmatpush.msra.mxu0 %v411
  %1189 = vmatpush.msra.mxu0 %v410
  %1190 = vmatpush.msra.mxu0 %v409
  %1191 = vmatmul.f32.gmra.mxu0 %v1153
  %v1192 = vpop.f32.mrf.mxu0
  %v1193 = vadd.f32 %v1100, %v1192
  %1194 = vdwg.mxu0
  %v1195 = vadd.f32 %v1193, %v419
  %v1196 = vmul.f32 %v1195, %v424
  %v1197 = vtanh.pop %v1196
  %v1198 = vadd.f32 %v1197, 1.0
  %v1199 = vmul.f32 %v1198, 0.5
  %v1200 = vmul.f32 %v1199, %v1070
  %1202 = vrot.lane.b32.xlu0 %v1197, 32
  %v1203 = vpop.permute.xlu0 %1202
  %v1205 = vmul.f32 %v1199, %v1203
  %1207 = vrot.lane.b32.xlu0 %v1205, 32
  %v1208 = vpop.permute.xlu0 %1207
  %v1210 = vadd.f32 %v1200, %v1208
  %v1211 = vtanh.pop %v1210
  %1213 = vrot.lane.b32.xlu0 %v1211, 32
  %v1214 = vpop.permute.xlu0 %1213
  %v1216 = vmul.f32 %v1199, %v1214
  %1218 = vrot.lane.b32.xlu0 %v1216, 64
  %v1219 = vpop.permute.xlu0 %1218
  %v1220 = vsel %vm454, %v1219, 0
  %1222 = vmatpush.msra.mxu0 0.0
  %1223 = vmatpush.msra.mxu0 0.0
  %1224 = vmatpush.msra.mxu0 0.0
  %1225 = vmatpush.msra.mxu0 0.0
  %1226 = vmatpush.msra.mxu0 0.0
  %1227 = vmatpush.msra.mxu0 0.0
  %1228 = vmatpush.msra.mxu0 0.0
  %1229 = vmatpush.msra.mxu0 0.0
  %1230 = vmatpush.msra.mxu0 0.0
  %1231 = vmatpush.msra.mxu0 0.0
  %1232 = vmatpush.msra.mxu0 0.0
  %1233 = vmatpush.msra.mxu0 0.0
  %1234 = vmatpush.msra.mxu0 %v416
  %1235 = vmatpush.msra.mxu0 %v415
  %1236 = vmatpush.msra.mxu0 %v414
  %1237 = vmatpush.msra.mxu0 %v413
  %1238 = vmatmul.f32.gmra.mxu0 %v1220
  %v1239 = vpop.f32.mrf.mxu0
  %v1240 = vadd.f32 0.0, %v1239
  %1241 = vdwg.mxu0
  %s1242 = scalar_lea.vmem %s7, 160
  %v1243 = vld [vmem:[%s1242] sm:$0xff]
  %v1244 = vld [vmem:[%s1242 + $0x8] sm:$0xff]
  %v1245 = vld [vmem:[%s1242 + $0x10] sm:$0xff]
  %v1246 = vld [vmem:[%s1242 + $0x18] sm:$0xff]
  %1247 = vmatpush.msra.mxu0 0.0
  %1248 = vmatpush.msra.mxu0 0.0
  %1249 = vmatpush.msra.mxu0 0.0
  %1250 = vmatpush.msra.mxu0 0.0
  %1251 = vmatpush.msra.mxu0 0.0
  %1252 = vmatpush.msra.mxu0 0.0
  %1253 = vmatpush.msra.mxu0 0.0
  %1254 = vmatpush.msra.mxu0 0.0
  %1255 = vmatpush.msra.mxu0 0.0
  %1256 = vmatpush.msra.mxu0 0.0
  %1257 = vmatpush.msra.mxu0 0.0
  %1258 = vmatpush.msra.mxu0 0.0
  %1259 = vmatpush.msra.mxu0 %v1246
  %1260 = vmatpush.msra.mxu0 %v1245
  %1261 = vmatpush.msra.mxu0 %v1244
  %1262 = vmatpush.msra.mxu0 %v1243
  %1263 = vmatmul.f32.gmra.mxu0 %v1220
  %v1264 = vpop.f32.mrf.mxu0
  %v1265 = vadd.f32 0.0, %v1264
  %1266 = vdwg.mxu0
  %v1267 = vadd.f32 %v1127, %v1265
  %v1268 = vadd.f32 %v274, %v1173
  %v1269 = vmul.f32 %v1268, %v424
  %v1270 = vtanh.pop %v1269
  %v1271 = vadd.f32 %v1270, 1.0
  %v1272 = vmul.f32 %v1271, 0.5
  %v1273 = vmul.f32 %v1272, %v1143
  %1275 = vrot.lane.b32.xlu0 %v1270, 32
  %v1276 = vpop.permute.xlu0 %1275
  %v1278 = vmul.f32 %v1272, %v1276
  %1280 = vrot.lane.b32.xlu0 %v1278, 32
  %v1281 = vpop.permute.xlu0 %1280
  %v1283 = vadd.f32 %v1273, %v1281
  %v1284 = vtanh.pop %v1283
  %1286 = vrot.lane.b32.xlu0 %v1284, 32
  %v1287 = vpop.permute.xlu0 %1286
  %v1289 = vmul.f32 %v1272, %v1287
  %1291 = vrot.lane.b32.xlu0 %v1289, 64
  %v1292 = vpop.permute.xlu0 %1291
  %v1293 = vsel %vm454, %v1292, 0
  %1295 = vmatpush.msra.mxu0 0.0
  %1296 = vmatpush.msra.mxu0 0.0
  %1297 = vmatpush.msra.mxu0 0.0
  %1298 = vmatpush.msra.mxu0 0.0
  %1299 = vmatpush.msra.mxu0 0.0
  %1300 = vmatpush.msra.mxu0 0.0
  %1301 = vmatpush.msra.mxu0 0.0
  %1302 = vmatpush.msra.mxu0 0.0
  %1303 = vmatpush.msra.mxu0 0.0
  %1304 = vmatpush.msra.mxu0 0.0
  %1305 = vmatpush.msra.mxu0 0.0
  %1306 = vmatpush.msra.mxu0 0.0
  %1307 = vmatpush.msra.mxu0 %v408
  %1308 = vmatpush.msra.mxu0 %v407
  %1309 = vmatpush.msra.mxu0 %v406
  %1310 = vmatpush.msra.mxu0 %v405
  %1311 = vmatmul.f32.gmra.mxu0 %v1293
  %v1312 = vpop.f32.mrf.mxu0
  %v1313 = vadd.f32 0.0, %v1312
  %1314 = vdwg.mxu0
  %1315 = vmatpush.msra.mxu0 0.0
  %1316 = vmatpush.msra.mxu0 0.0
  %1317 = vmatpush.msra.mxu0 0.0
  %1318 = vmatpush.msra.mxu0 0.0
  %1319 = vmatpush.msra.mxu0 0.0
  %1320 = vmatpush.msra.mxu0 0.0
  %1321 = vmatpush.msra.mxu0 0.0
  %1322 = vmatpush.msra.mxu0 0.0
  %1323 = vmatpush.msra.mxu0 0.0
  %1324 = vmatpush.msra.mxu0 0.0
  %1325 = vmatpush.msra.mxu0 0.0
  %1326 = vmatpush.msra.mxu0 0.0
  %1327 = vmatpush.msra.mxu0 %v412
  %1328 = vmatpush.msra.mxu0 %v411
  %1329 = vmatpush.msra.mxu0 %v410
  %1330 = vmatpush.msra.mxu0 %v409
  %1331 = vmatmul.f32.gmra.mxu0 %v1293
  %v1332 = vpop.f32.mrf.mxu0
  %v1333 = vadd.f32 %v1240, %v1332
  %1334 = vdwg.mxu0
  %v1335 = vadd.f32 %v1333, %v419
  %v1336 = vmul.f32 %v1335, %v424
  %v1337 = vtanh.pop %v1336
  %v1338 = vadd.f32 %v1337, 1.0
  %v1339 = vmul.f32 %v1338, 0.5
  %v1340 = vmul.f32 %v1339, %v1210
  %1342 = vrot.lane.b32.xlu0 %v1337, 32
  %v1343 = vpop.permute.xlu0 %1342
  %v1345 = vmul.f32 %v1339, %v1343
  %1347 = vrot.lane.b32.xlu0 %v1345, 32
  %v1348 = vpop.permute.xlu0 %1347
  %v1350 = vadd.f32 %v1340, %v1348
  %v1351 = vtanh.pop %v1350
  %1353 = vrot.lane.b32.xlu0 %v1351, 32
  %v1354 = vpop.permute.xlu0 %1353
  %v1356 = vmul.f32 %v1339, %v1354
  %1358 = vrot.lane.b32.xlu0 %v1356, 64
  %v1359 = vpop.permute.xlu0 %1358
  %v1360 = vsel %vm454, %v1359, 0
  %1362 = vmatpush.msra.mxu0 0.0
  %1363 = vmatpush.msra.mxu0 0.0
  %1364 = vmatpush.msra.mxu0 0.0
  %1365 = vmatpush.msra.mxu0 0.0
  %1366 = vmatpush.msra.mxu0 0.0
  %1367 = vmatpush.msra.mxu0 0.0
  %1368 = vmatpush.msra.mxu0 0.0
  %1369 = vmatpush.msra.mxu0 0.0
  %1370 = vmatpush.msra.mxu0 0.0
  %1371 = vmatpush.msra.mxu0 0.0
  %1372 = vmatpush.msra.mxu0 0.0
  %1373 = vmatpush.msra.mxu0 0.0
  %1374 = vmatpush.msra.mxu0 %v416
  %1375 = vmatpush.msra.mxu0 %v415
  %1376 = vmatpush.msra.mxu0 %v414
  %1377 = vmatpush.msra.mxu0 %v413
  %1378 = vmatmul.f32.gmra.mxu0 %v1360
  %v1379 = vpop.f32.mrf.mxu0
  %v1380 = vadd.f32 0.0, %v1379
  %1381 = vdwg.mxu0
  %s1382 = scalar_lea.vmem %s7, 192
  %v1383 = vld [vmem:[%s1382] sm:$0xff]
  %v1384 = vld [vmem:[%s1382 + $0x8] sm:$0xff]
  %v1385 = vld [vmem:[%s1382 + $0x10] sm:$0xff]
  %v1386 = vld [vmem:[%s1382 + $0x18] sm:$0xff]
  %1387 = vmatpush.msra.mxu0 0.0
  %1388 = vmatpush.msra.mxu0 0.0
  %1389 = vmatpush.msra.mxu0 0.0
  %1390 = vmatpush.msra.mxu0 0.0
  %1391 = vmatpush.msra.mxu0 0.0
  %1392 = vmatpush.msra.mxu0 0.0
  %1393 = vmatpush.msra.mxu0 0.0
  %1394 = vmatpush.msra.mxu0 0.0
  %1395 = vmatpush.msra.mxu0 0.0
  %1396 = vmatpush.msra.mxu0 0.0
  %1397 = vmatpush.msra.mxu0 0.0
  %1398 = vmatpush.msra.mxu0 0.0
  %1399 = vmatpush.msra.mxu0 %v1386
  %1400 = vmatpush.msra.mxu0 %v1385
  %1401 = vmatpush.msra.mxu0 %v1384
  %1402 = vmatpush.msra.mxu0 %v1383
  %1403 = vmatmul.f32.gmra.mxu0 %v1360
  %v1404 = vpop.f32.mrf.mxu0
  %v1405 = vadd.f32 0.0, %v1404
  %1406 = vdwg.mxu0
  %v1407 = vadd.f32 %v1267, %v1405
  %v1408 = vadd.f32 %v277, %v1313
  %v1409 = vmul.f32 %v1408, %v424
  %v1410 = vtanh.pop %v1409
  %v1411 = vadd.f32 %v1410, 1.0
  %v1412 = vmul.f32 %v1411, 0.5
  %v1413 = vmul.f32 %v1412, %v1283
  %1415 = vrot.lane.b32.xlu0 %v1410, 32
  %v1416 = vpop.permute.xlu0 %1415
  %v1418 = vmul.f32 %v1412, %v1416
  %1420 = vrot.lane.b32.xlu0 %v1418, 32
  %v1421 = vpop.permute.xlu0 %1420
  %v1423 = vadd.f32 %v1413, %v1421
  %v1424 = vtanh.pop %v1423
  %1426 = vrot.lane.b32.xlu0 %v1424, 32
  %v1427 = vpop.permute.xlu0 %1426
  %v1429 = vmul.f32 %v1412, %v1427
  %1431 = vrot.lane.b32.xlu0 %v1429, 64
  %v1432 = vpop.permute.xlu0 %1431
  %v1433 = vsel %vm454, %v1432, 0
  %1435 = vmatpush.msra.mxu0 0.0
  %1436 = vmatpush.msra.mxu0 0.0
  %1437 = vmatpush.msra.mxu0 0.0
  %1438 = vmatpush.msra.mxu0 0.0
  %1439 = vmatpush.msra.mxu0 0.0
  %1440 = vmatpush.msra.mxu0 0.0
  %1441 = vmatpush.msra.mxu0 0.0
  %1442 = vmatpush.msra.mxu0 0.0
  %1443 = vmatpush.msra.mxu0 0.0
  %1444 = vmatpush.msra.mxu0 0.0
  %1445 = vmatpush.msra.mxu0 0.0
  %1446 = vmatpush.msra.mxu0 0.0
  %1447 = vmatpush.msra.mxu0 %v408
  %1448 = vmatpush.msra.mxu0 %v407
  %1449 = vmatpush.msra.mxu0 %v406
  %1450 = vmatpush.msra.mxu0 %v405
  %1451 = vmatmul.f32.gmra.mxu0 %v1433
  %v1452 = vpop.f32.mrf.mxu0
  %v1453 = vadd.f32 0.0, %v1452
  %1454 = vdwg.mxu0
  %1455 = vmatpush.msra.mxu0 0.0
  %1456 = vmatpush.msra.mxu0 0.0
  %1457 = vmatpush.msra.mxu0 0.0
  %1458 = vmatpush.msra.mxu0 0.0
  %1459 = vmatpush.msra.mxu0 0.0
  %1460 = vmatpush.msra.mxu0 0.0
  %1461 = vmatpush.msra.mxu0 0.0
  %1462 = vmatpush.msra.mxu0 0.0
  %1463 = vmatpush.msra.mxu0 0.0
  %1464 = vmatpush.msra.mxu0 0.0
  %1465 = vmatpush.msra.mxu0 0.0
  %1466 = vmatpush.msra.mxu0 0.0
  %1467 = vmatpush.msra.mxu0 %v412
  %1468 = vmatpush.msra.mxu0 %v411
  %1469 = vmatpush.msra.mxu0 %v410
  %1470 = vmatpush.msra.mxu0 %v409
  %1471 = vmatmul.f32.gmra.mxu0 %v1433
  %v1472 = vpop.f32.mrf.mxu0
  %v1473 = vadd.f32 %v1380, %v1472
  %1474 = vdwg.mxu0
  %v1475 = vadd.f32 %v1473, %v419
  %v1476 = vmul.f32 %v1475, %v424
  %v1477 = vtanh.pop %v1476
  %v1478 = vadd.f32 %v1477, 1.0
  %v1479 = vmul.f32 %v1478, 0.5
  %v1480 = vmul.f32 %v1479, %v1350
  %1482 = vrot.lane.b32.xlu0 %v1477, 32
  %v1483 = vpop.permute.xlu0 %1482
  %v1485 = vmul.f32 %v1479, %v1483
  %1487 = vrot.lane.b32.xlu0 %v1485, 32
  %v1488 = vpop.permute.xlu0 %1487
  %v1490 = vadd.f32 %v1480, %v1488
  %v1491 = vtanh.pop %v1490
  %1493 = vrot.lane.b32.xlu0 %v1491, 32
  %v1494 = vpop.permute.xlu0 %1493
  %v1496 = vmul.f32 %v1479, %v1494
  %1498 = vrot.lane.b32.xlu0 %v1496, 64
  %v1499 = vpop.permute.xlu0 %1498
  %v1500 = vsel %vm454, %v1499, 0
  %1502 = vmatpush.msra.mxu0 0.0
  %1503 = vmatpush.msra.mxu0 0.0
  %1504 = vmatpush.msra.mxu0 0.0
  %1505 = vmatpush.msra.mxu0 0.0
  %1506 = vmatpush.msra.mxu0 0.0
  %1507 = vmatpush.msra.mxu0 0.0
  %1508 = vmatpush.msra.mxu0 0.0
  %1509 = vmatpush.msra.mxu0 0.0
  %1510 = vmatpush.msra.mxu0 0.0
  %1511 = vmatpush.msra.mxu0 0.0
  %1512 = vmatpush.msra.mxu0 0.0
  %1513 = vmatpush.msra.mxu0 0.0
  %1514 = vmatpush.msra.mxu0 %v416
  %1515 = vmatpush.msra.mxu0 %v415
  %1516 = vmatpush.msra.mxu0 %v414
  %1517 = vmatpush.msra.mxu0 %v413
  %1518 = vmatmul.f32.gmra.mxu0 %v1500
  %v1519 = vpop.f32.mrf.mxu0
  %v1520 = vadd.f32 0.0, %v1519
  %1521 = vdwg.mxu0
  %s1522 = scalar_lea.vmem %s7, 224
  %v1523 = vld [vmem:[%s1522] sm:$0xff]
  %v1524 = vld [vmem:[%s1522 + $0x8] sm:$0xff]
  %v1525 = vld [vmem:[%s1522 + $0x10] sm:$0xff]
  %v1526 = vld [vmem:[%s1522 + $0x18] sm:$0xff]
  %1527 = vmatpush.msra.mxu0 0.0
  %1528 = vmatpush.msra.mxu0 0.0
  %1529 = vmatpush.msra.mxu0 0.0
  %1530 = vmatpush.msra.mxu0 0.0
  %1531 = vmatpush.msra.mxu0 0.0
  %1532 = vmatpush.msra.mxu0 0.0
  %1533 = vmatpush.msra.mxu0 0.0
  %1534 = vmatpush.msra.mxu0 0.0
  %1535 = vmatpush.msra.mxu0 0.0
  %1536 = vmatpush.msra.mxu0 0.0
  %1537 = vmatpush.msra.mxu0 0.0
  %1538 = vmatpush.msra.mxu0 0.0
  %1539 = vmatpush.msra.mxu0 %v1526
  %1540 = vmatpush.msra.mxu0 %v1525
  %1541 = vmatpush.msra.mxu0 %v1524
  %1542 = vmatpush.msra.mxu0 %v1523
  %1543 = vmatmul.f32.gmra.mxu0 %v1500
  %v1544 = vpop.f32.mrf.mxu0
  %v1545 = vadd.f32 0.0, %v1544
  %1546 = vdwg.mxu0
  %v1547 = vadd.f32 %v1407, %v1545
  %v1548 = vadd.f32 %v280, %v1453
  %v1549 = vmul.f32 %v1548, %v424
  %v1550 = vtanh.pop %v1549
  %v1551 = vadd.f32 %v1550, 1.0
  %v1552 = vmul.f32 %v1551, 0.5
  %v1553 = vmul.f32 %v1552, %v1423
  %1555 = vrot.lane.b32.xlu0 %v1550, 32
  %v1556 = vpop.permute.xlu0 %1555
  %v1558 = vmul.f32 %v1552, %v1556
  %1560 = vrot.lane.b32.xlu0 %v1558, 32
  %v1561 = vpop.permute.xlu0 %1560
  %v1563 = vadd.f32 %v1553, %v1561
  %v1564 = vtanh.pop %v1563
  %1566 = vrot.lane.b32.xlu0 %v1564, 32
  %v1567 = vpop.permute.xlu0 %1566
  %v1569 = vmul.f32 %v1552, %v1567
  %1571 = vrot.lane.b32.xlu0 %v1569, 64
  %v1572 = vpop.permute.xlu0 %1571
  %v1573 = vsel %vm454, %v1572, 0
  %1575 = vmatpush.msra.mxu0 0.0
  %1576 = vmatpush.msra.mxu0 0.0
  %1577 = vmatpush.msra.mxu0 0.0
  %1578 = vmatpush.msra.mxu0 0.0
  %1579 = vmatpush.msra.mxu0 0.0
  %1580 = vmatpush.msra.mxu0 0.0
  %1581 = vmatpush.msra.mxu0 0.0
  %1582 = vmatpush.msra.mxu0 0.0
  %1583 = vmatpush.msra.mxu0 0.0
  %1584 = vmatpush.msra.mxu0 0.0
  %1585 = vmatpush.msra.mxu0 0.0
  %1586 = vmatpush.msra.mxu0 0.0
  %1587 = vmatpush.msra.mxu0 %v408
  %1588 = vmatpush.msra.mxu0 %v407
  %1589 = vmatpush.msra.mxu0 %v406
  %1590 = vmatpush.msra.mxu0 %v405
  %1591 = vmatmul.f32.gmra.mxu0 %v1573
  %v1592 = vpop.f32.mrf.mxu0
  %v1593 = vadd.f32 0.0, %v1592
  %1594 = vdwg.mxu0
  %1595 = vmatpush.msra.mxu0 0.0
  %1596 = vmatpush.msra.mxu0 0.0
  %1597 = vmatpush.msra.mxu0 0.0
  %1598 = vmatpush.msra.mxu0 0.0
  %1599 = vmatpush.msra.mxu0 0.0
  %1600 = vmatpush.msra.mxu0 0.0
  %1601 = vmatpush.msra.mxu0 0.0
  %1602 = vmatpush.msra.mxu0 0.0
  %1603 = vmatpush.msra.mxu0 0.0
  %1604 = vmatpush.msra.mxu0 0.0
  %1605 = vmatpush.msra.mxu0 0.0
  %1606 = vmatpush.msra.mxu0 0.0
  %1607 = vmatpush.msra.mxu0 %v412
  %1608 = vmatpush.msra.mxu0 %v411
  %1609 = vmatpush.msra.mxu0 %v410
  %1610 = vmatpush.msra.mxu0 %v409
  %1611 = vmatmul.f32.gmra.mxu0 %v1573
  %v1612 = vpop.f32.mrf.mxu0
  %v1613 = vadd.f32 %v1520, %v1612
  %1614 = vdwg.mxu0
  %v1615 = vadd.f32 %v1613, %v419
  %v1616 = vmul.f32 %v1615, %v424
  %v1617 = vtanh.pop %v1616
  %v1618 = vadd.f32 %v1617, 1.0
  %v1619 = vmul.f32 %v1618, 0.5
  %v1620 = vmul.f32 %v1619, %v1490
  %1622 = vrot.lane.b32.xlu0 %v1617, 32
  %v1623 = vpop.permute.xlu0 %1622
  %v1625 = vmul.f32 %v1619, %v1623
  %1627 = vrot.lane.b32.xlu0 %v1625, 32
  %v1628 = vpop.permute.xlu0 %1627
  %v1630 = vadd.f32 %v1620, %v1628
  %v1631 = vtanh.pop %v1630
  %1633 = vrot.lane.b32.xlu0 %v1631, 32
  %v1634 = vpop.permute.xlu0 %1633
  %v1636 = vmul.f32 %v1619, %v1634
  %1638 = vrot.lane.b32.xlu0 %v1636, 64
  %v1639 = vpop.permute.xlu0 %1638
  %v1640 = vsel %vm454, %v1639, 0
  %1642 = vmatpush.msra.mxu0 0.0
  %1643 = vmatpush.msra.mxu0 0.0
  %1644 = vmatpush.msra.mxu0 0.0
  %1645 = vmatpush.msra.mxu0 0.0
  %1646 = vmatpush.msra.mxu0 0.0
  %1647 = vmatpush.msra.mxu0 0.0
  %1648 = vmatpush.msra.mxu0 0.0
  %1649 = vmatpush.msra.mxu0 0.0
  %1650 = vmatpush.msra.mxu0 0.0
  %1651 = vmatpush.msra.mxu0 0.0
  %1652 = vmatpush.msra.mxu0 0.0
  %1653 = vmatpush.msra.mxu0 0.0
  %1654 = vmatpush.msra.mxu0 %v416
  %1655 = vmatpush.msra.mxu0 %v415
  %1656 = vmatpush.msra.mxu0 %v414
  %1657 = vmatpush.msra.mxu0 %v413
  %1658 = vmatmul.f32.gmra.mxu0 %v1640
  %v1659 = vpop.f32.mrf.mxu0
  %v1660 = vadd.f32 0.0, %v1659
  %1661 = vdwg.mxu0
  %s1662 = scalar_lea.vmem %s7, 256
  %v1663 = vld [vmem:[%s1662] sm:$0xff]
  %v1664 = vld [vmem:[%s1662 + $0x8] sm:$0xff]
  %v1665 = vld [vmem:[%s1662 + $0x10] sm:$0xff]
  %v1666 = vld [vmem:[%s1662 + $0x18] sm:$0xff]
  %1667 = vmatpush.msra.mxu0 0.0
  %1668 = vmatpush.msra.mxu0 0.0
  %1669 = vmatpush.msra.mxu0 0.0
  %1670 = vmatpush.msra.mxu0 0.0
  %1671 = vmatpush.msra.mxu0 0.0
  %1672 = vmatpush.msra.mxu0 0.0
  %1673 = vmatpush.msra.mxu0 0.0
  %1674 = vmatpush.msra.mxu0 0.0
  %1675 = vmatpush.msra.mxu0 0.0
  %1676 = vmatpush.msra.mxu0 0.0
  %1677 = vmatpush.msra.mxu0 0.0
  %1678 = vmatpush.msra.mxu0 0.0
  %1679 = vmatpush.msra.mxu0 %v1666
  %1680 = vmatpush.msra.mxu0 %v1665
  %1681 = vmatpush.msra.mxu0 %v1664
  %1682 = vmatpush.msra.mxu0 %v1663
  %1683 = vmatmul.f32.gmra.mxu0 %v1640
  %v1684 = vpop.f32.mrf.mxu0
  %v1685 = vadd.f32 0.0, %v1684
  %1686 = vdwg.mxu0
  %v1687 = vadd.f32 %v1547, %v1685
  %v1688 = vadd.f32 %v283, %v1593
  %v1689 = vmul.f32 %v1688, %v424
  %v1690 = vtanh.pop %v1689
  %v1691 = vadd.f32 %v1690, 1.0
  %v1692 = vmul.f32 %v1691, 0.5
  %v1693 = vmul.f32 %v1692, %v1563
  %1695 = vrot.lane.b32.xlu0 %v1690, 32
  %v1696 = vpop.permute.xlu0 %1695
  %v1698 = vmul.f32 %v1692, %v1696
  %1700 = vrot.lane.b32.xlu0 %v1698, 32
  %v1701 = vpop.permute.xlu0 %1700
  %v1703 = vadd.f32 %v1693, %v1701
  %v1704 = vtanh.pop %v1703
  %1706 = vrot.lane.b32.xlu0 %v1704, 32
  %v1707 = vpop.permute.xlu0 %1706
  %v1709 = vmul.f32 %v1692, %v1707
  %1711 = vrot.lane.b32.xlu0 %v1709, 64
  %v1712 = vpop.permute.xlu0 %1711
  %v1713 = vsel %vm454, %v1712, 0
  %1715 = vmatpush.msra.mxu0 0.0
  %1716 = vmatpush.msra.mxu0 0.0
  %1717 = vmatpush.msra.mxu0 0.0
  %1718 = vmatpush.msra.mxu0 0.0
  %1719 = vmatpush.msra.mxu0 0.0
  %1720 = vmatpush.msra.mxu0 0.0
  %1721 = vmatpush.msra.mxu0 0.0
  %1722 = vmatpush.msra.mxu0 0.0
  %1723 = vmatpush.msra.mxu0 0.0
  %1724 = vmatpush.msra.mxu0 0.0
  %1725 = vmatpush.msra.mxu0 0.0
  %1726 = vmatpush.msra.mxu0 0.0
  %1727 = vmatpush.msra.mxu0 %v408
  %1728 = vmatpush.msra.mxu0 %v407
  %1729 = vmatpush.msra.mxu0 %v406
  %1730 = vmatpush.msra.mxu0 %v405
  %1731 = vmatmul.f32.gmra.mxu0 %v1713
  %v1732 = vpop.f32.mrf.mxu0
  %v1733 = vadd.f32 0.0, %v1732
  %1734 = vdwg.mxu0
  %1735 = vmatpush.msra.mxu0 0.0
  %1736 = vmatpush.msra.mxu0 0.0
  %1737 = vmatpush.msra.mxu0 0.0
  %1738 = vmatpush.msra.mxu0 0.0
  %1739 = vmatpush.msra.mxu0 0.0
  %1740 = vmatpush.msra.mxu0 0.0
  %1741 = vmatpush.msra.mxu0 0.0
  %1742 = vmatpush.msra.mxu0 0.0
  %1743 = vmatpush.msra.mxu0 0.0
  %1744 = vmatpush.msra.mxu0 0.0
  %1745 = vmatpush.msra.mxu0 0.0
  %1746 = vmatpush.msra.mxu0 0.0
  %1747 = vmatpush.msra.mxu0 %v412
  %1748 = vmatpush.msra.mxu0 %v411
  %1749 = vmatpush.msra.mxu0 %v410
  %1750 = vmatpush.msra.mxu0 %v409
  %1751 = vmatmul.f32.gmra.mxu0 %v1713
  %v1752 = vpop.f32.mrf.mxu0
  %v1753 = vadd.f32 %v1660, %v1752
  %1754 = vdwg.mxu0
  %v1755 = vadd.f32 %v1753, %v419
  %v1756 = vmul.f32 %v1755, %v424
  %v1757 = vtanh.pop %v1756
  %v1758 = vadd.f32 %v1757, 1.0
  %v1759 = vmul.f32 %v1758, 0.5
  %v1760 = vmul.f32 %v1759, %v1630
  %1762 = vrot.lane.b32.xlu0 %v1757, 32
  %v1763 = vpop.permute.xlu0 %1762
  %v1765 = vmul.f32 %v1759, %v1763
  %1767 = vrot.lane.b32.xlu0 %v1765, 32
  %v1768 = vpop.permute.xlu0 %1767
  %v1770 = vadd.f32 %v1760, %v1768
  %v1771 = vtanh.pop %v1770
  %1773 = vrot.lane.b32.xlu0 %v1771, 32
  %v1774 = vpop.permute.xlu0 %1773
  %v1776 = vmul.f32 %v1759, %v1774
  %1778 = vrot.lane.b32.xlu0 %v1776, 64
  %v1779 = vpop.permute.xlu0 %1778
  %v1780 = vsel %vm454, %v1779, 0
  %1782 = vmatpush.msra.mxu0 0.0
  %1783 = vmatpush.msra.mxu0 0.0
  %1784 = vmatpush.msra.mxu0 0.0
  %1785 = vmatpush.msra.mxu0 0.0
  %1786 = vmatpush.msra.mxu0 0.0
  %1787 = vmatpush.msra.mxu0 0.0
  %1788 = vmatpush.msra.mxu0 0.0
  %1789 = vmatpush.msra.mxu0 0.0
  %1790 = vmatpush.msra.mxu0 0.0
  %1791 = vmatpush.msra.mxu0 0.0
  %1792 = vmatpush.msra.mxu0 0.0
  %1793 = vmatpush.msra.mxu0 0.0
  %1794 = vmatpush.msra.mxu0 %v416
  %1795 = vmatpush.msra.mxu0 %v415
  %1796 = vmatpush.msra.mxu0 %v414
  %1797 = vmatpush.msra.mxu0 %v413
  %1798 = vmatmul.f32.gmra.mxu0 %v1780
  %v1799 = vpop.f32.mrf.mxu0
  %v1800 = vadd.f32 0.0, %v1799
  %1801 = vdwg.mxu0
  %s1802 = scalar_lea.vmem %s7, 288
  %v1803 = vld [vmem:[%s1802] sm:$0xff]
  %v1804 = vld [vmem:[%s1802 + $0x8] sm:$0xff]
  %v1805 = vld [vmem:[%s1802 + $0x10] sm:$0xff]
  %v1806 = vld [vmem:[%s1802 + $0x18] sm:$0xff]
  %1807 = vmatpush.msra.mxu0 0.0
  %1808 = vmatpush.msra.mxu0 0.0
  %1809 = vmatpush.msra.mxu0 0.0
  %1810 = vmatpush.msra.mxu0 0.0
  %1811 = vmatpush.msra.mxu0 0.0
  %1812 = vmatpush.msra.mxu0 0.0
  %1813 = vmatpush.msra.mxu0 0.0
  %1814 = vmatpush.msra.mxu0 0.0
  %1815 = vmatpush.msra.mxu0 0.0
  %1816 = vmatpush.msra.mxu0 0.0
  %1817 = vmatpush.msra.mxu0 0.0
  %1818 = vmatpush.msra.mxu0 0.0
  %1819 = vmatpush.msra.mxu0 %v1806
  %1820 = vmatpush.msra.mxu0 %v1805
  %1821 = vmatpush.msra.mxu0 %v1804
  %1822 = vmatpush.msra.mxu0 %v1803
  %1823 = vmatmul.f32.gmra.mxu0 %v1780
  %v1824 = vpop.f32.mrf.mxu0
  %v1825 = vadd.f32 0.0, %v1824
  %1826 = vdwg.mxu0
  %v1827 = vadd.f32 %v1687, %v1825
  %v1828 = vadd.f32 %v286, %v1733
  %v1829 = vmul.f32 %v1828, %v424
  %v1830 = vtanh.pop %v1829
  %v1831 = vadd.f32 %v1830, 1.0
  %v1832 = vmul.f32 %v1831, 0.5
  %v1833 = vmul.f32 %v1832, %v1703
  %1835 = vrot.lane.b32.xlu0 %v1830, 32
  %v1836 = vpop.permute.xlu0 %1835
  %v1838 = vmul.f32 %v1832, %v1836
  %1840 = vrot.lane.b32.xlu0 %v1838, 32
  %v1841 = vpop.permute.xlu0 %1840
  %v1843 = vadd.f32 %v1833, %v1841
  %v1844 = vtanh.pop %v1843
  %1846 = vrot.lane.b32.xlu0 %v1844, 32
  %v1847 = vpop.permute.xlu0 %1846
  %v1849 = vmul.f32 %v1832, %v1847
  %1851 = vrot.lane.b32.xlu0 %v1849, 64
  %v1852 = vpop.permute.xlu0 %1851
  %v1853 = vsel %vm454, %v1852, 0
  %1855 = vmatpush.msra.mxu0 0.0
  %1856 = vmatpush.msra.mxu0 0.0
  %1857 = vmatpush.msra.mxu0 0.0
  %1858 = vmatpush.msra.mxu0 0.0
  %1859 = vmatpush.msra.mxu0 0.0
  %1860 = vmatpush.msra.mxu0 0.0
  %1861 = vmatpush.msra.mxu0 0.0
  %1862 = vmatpush.msra.mxu0 0.0
  %1863 = vmatpush.msra.mxu0 0.0
  %1864 = vmatpush.msra.mxu0 0.0
  %1865 = vmatpush.msra.mxu0 0.0
  %1866 = vmatpush.msra.mxu0 0.0
  %1867 = vmatpush.msra.mxu0 %v408
  %1868 = vmatpush.msra.mxu0 %v407
  %1869 = vmatpush.msra.mxu0 %v406
  %1870 = vmatpush.msra.mxu0 %v405
  %1871 = vmatmul.f32.gmra.mxu0 %v1853
  %v1872 = vpop.f32.mrf.mxu0
  %v1873 = vadd.f32 0.0, %v1872
  %1874 = vdwg.mxu0
  %1875 = vmatpush.msra.mxu0 0.0
  %1876 = vmatpush.msra.mxu0 0.0
  %1877 = vmatpush.msra.mxu0 0.0
  %1878 = vmatpush.msra.mxu0 0.0
  %1879 = vmatpush.msra.mxu0 0.0
  %1880 = vmatpush.msra.mxu0 0.0
  %1881 = vmatpush.msra.mxu0 0.0
  %1882 = vmatpush.msra.mxu0 0.0
  %1883 = vmatpush.msra.mxu0 0.0
  %1884 = vmatpush.msra.mxu0 0.0
  %1885 = vmatpush.msra.mxu0 0.0
  %1886 = vmatpush.msra.mxu0 0.0
  %1887 = vmatpush.msra.mxu0 %v412
  %1888 = vmatpush.msra.mxu0 %v411
  %1889 = vmatpush.msra.mxu0 %v410
  %1890 = vmatpush.msra.mxu0 %v409
  %1891 = vmatmul.f32.gmra.mxu0 %v1853
  %v1892 = vpop.f32.mrf.mxu0
  %v1893 = vadd.f32 %v1800, %v1892
  %1894 = vdwg.mxu0
  %v1895 = vadd.f32 %v1893, %v419
  %v1896 = vmul.f32 %v1895, %v424
  %v1897 = vtanh.pop %v1896
  %v1898 = vadd.f32 %v1897, 1.0
  %v1899 = vmul.f32 %v1898, 0.5
  %v1900 = vmul.f32 %v1899, %v1770
  %1902 = vrot.lane.b32.xlu0 %v1897, 32
  %v1903 = vpop.permute.xlu0 %1902
  %v1905 = vmul.f32 %v1899, %v1903
  %1907 = vrot.lane.b32.xlu0 %v1905, 32
  %v1908 = vpop.permute.xlu0 %1907
  %v1910 = vadd.f32 %v1900, %v1908
  %v1911 = vtanh.pop %v1910
  %1913 = vrot.lane.b32.xlu0 %v1911, 32
  %v1914 = vpop.permute.xlu0 %1913
  %v1916 = vmul.f32 %v1899, %v1914
  %1918 = vrot.lane.b32.xlu0 %v1916, 64
  %v1919 = vpop.permute.xlu0 %1918
  %v1920 = vsel %vm454, %v1919, 0
  %1922 = vmatpush.msra.mxu0 0.0
  %1923 = vmatpush.msra.mxu0 0.0
  %1924 = vmatpush.msra.mxu0 0.0
  %1925 = vmatpush.msra.mxu0 0.0
  %1926 = vmatpush.msra.mxu0 0.0
  %1927 = vmatpush.msra.mxu0 0.0
  %1928 = vmatpush.msra.mxu0 0.0
  %1929 = vmatpush.msra.mxu0 0.0
  %1930 = vmatpush.msra.mxu0 0.0
  %1931 = vmatpush.msra.mxu0 0.0
  %1932 = vmatpush.msra.mxu0 0.0
  %1933 = vmatpush.msra.mxu0 0.0
  %1934 = vmatpush.msra.mxu0 %v416
  %1935 = vmatpush.msra.mxu0 %v415
  %1936 = vmatpush.msra.mxu0 %v414
  %1937 = vmatpush.msra.mxu0 %v413
  %1938 = vmatmul.f32.gmra.mxu0 %v1920
  %v1939 = vpop.f32.mrf.mxu0
  %v1940 = vadd.f32 0.0, %v1939
  %1941 = vdwg.mxu0
  %s1942 = scalar_lea.vmem %s7, 320
  %v1943 = vld [vmem:[%s1942] sm:$0xff]
  %v1944 = vld [vmem:[%s1942 + $0x8] sm:$0xff]
  %v1945 = vld [vmem:[%s1942 + $0x10] sm:$0xff]
  %v1946 = vld [vmem:[%s1942 + $0x18] sm:$0xff]
  %1947 = vmatpush.msra.mxu0 0.0
  %1948 = vmatpush.msra.mxu0 0.0
  %1949 = vmatpush.msra.mxu0 0.0
  %1950 = vmatpush.msra.mxu0 0.0
  %1951 = vmatpush.msra.mxu0 0.0
  %1952 = vmatpush.msra.mxu0 0.0
  %1953 = vmatpush.msra.mxu0 0.0
  %1954 = vmatpush.msra.mxu0 0.0
  %1955 = vmatpush.msra.mxu0 0.0
  %1956 = vmatpush.msra.mxu0 0.0
  %1957 = vmatpush.msra.mxu0 0.0
  %1958 = vmatpush.msra.mxu0 0.0
  %1959 = vmatpush.msra.mxu0 %v1946
  %1960 = vmatpush.msra.mxu0 %v1945
  %1961 = vmatpush.msra.mxu0 %v1944
  %1962 = vmatpush.msra.mxu0 %v1943
  %1963 = vmatmul.f32.gmra.mxu0 %v1920
  %v1964 = vpop.f32.mrf.mxu0
  %v1965 = vadd.f32 0.0, %v1964
  %1966 = vdwg.mxu0
  %v1967 = vadd.f32 %v1827, %v1965
  %v1968 = vadd.f32 %v289, %v1873
  %v1969 = vmul.f32 %v1968, %v424
  %v1970 = vtanh.pop %v1969
  %v1971 = vadd.f32 %v1970, 1.0
  %v1972 = vmul.f32 %v1971, 0.5
  %v1973 = vmul.f32 %v1972, %v1843
  %1975 = vrot.lane.b32.xlu0 %v1970, 32
  %v1976 = vpop.permute.xlu0 %1975
  %v1978 = vmul.f32 %v1972, %v1976
  %1980 = vrot.lane.b32.xlu0 %v1978, 32
  %v1981 = vpop.permute.xlu0 %1980
  %v1983 = vadd.f32 %v1973, %v1981
  %v1984 = vtanh.pop %v1983
  %1986 = vrot.lane.b32.xlu0 %v1984, 32
  %v1987 = vpop.permute.xlu0 %1986
  %v1989 = vmul.f32 %v1972, %v1987
  %1991 = vrot.lane.b32.xlu0 %v1989, 64
  %v1992 = vpop.permute.xlu0 %1991
  %v1993 = vsel %vm454, %v1992, 0
  %1995 = vmatpush.msra.mxu0 0.0
  %1996 = vmatpush.msra.mxu0 0.0
  %1997 = vmatpush.msra.mxu0 0.0
  %1998 = vmatpush.msra.mxu0 0.0
  %1999 = vmatpush.msra.mxu0 0.0
  %2000 = vmatpush.msra.mxu0 0.0
  %2001 = vmatpush.msra.mxu0 0.0
  %2002 = vmatpush.msra.mxu0 0.0
  %2003 = vmatpush.msra.mxu0 0.0
  %2004 = vmatpush.msra.mxu0 0.0
  %2005 = vmatpush.msra.mxu0 0.0
  %2006 = vmatpush.msra.mxu0 0.0
  %2007 = vmatpush.msra.mxu0 %v408
  %2008 = vmatpush.msra.mxu0 %v407
  %2009 = vmatpush.msra.mxu0 %v406
  %2010 = vmatpush.msra.mxu0 %v405
  %2011 = vmatmul.f32.gmra.mxu0 %v1993
  %v2012 = vpop.f32.mrf.mxu0
  %v2013 = vadd.f32 0.0, %v2012
  %2014 = vdwg.mxu0
  %2015 = vmatpush.msra.mxu0 0.0
  %2016 = vmatpush.msra.mxu0 0.0
  %2017 = vmatpush.msra.mxu0 0.0
  %2018 = vmatpush.msra.mxu0 0.0
  %2019 = vmatpush.msra.mxu0 0.0
  %2020 = vmatpush.msra.mxu0 0.0
  %2021 = vmatpush.msra.mxu0 0.0
  %2022 = vmatpush.msra.mxu0 0.0
  %2023 = vmatpush.msra.mxu0 0.0
  %2024 = vmatpush.msra.mxu0 0.0
  %2025 = vmatpush.msra.mxu0 0.0
  %2026 = vmatpush.msra.mxu0 0.0
  %2027 = vmatpush.msra.mxu0 %v412
  %2028 = vmatpush.msra.mxu0 %v411
  %2029 = vmatpush.msra.mxu0 %v410
  %2030 = vmatpush.msra.mxu0 %v409
  %2031 = vmatmul.f32.gmra.mxu0 %v1993
  %v2032 = vpop.f32.mrf.mxu0
  %v2033 = vadd.f32 %v1940, %v2032
  %2034 = vdwg.mxu0
  %v2035 = vadd.f32 %v2033, %v419
  %v2036 = vmul.f32 %v2035, %v424
  %v2037 = vtanh.pop %v2036
  %v2038 = vadd.f32 %v2037, 1.0
  %v2039 = vmul.f32 %v2038, 0.5
  %v2040 = vmul.f32 %v2039, %v1910
  %2042 = vrot.lane.b32.xlu0 %v2037, 32
  %v2043 = vpop.permute.xlu0 %2042
  %v2045 = vmul.f32 %v2039, %v2043
  %2047 = vrot.lane.b32.xlu0 %v2045, 32
  %v2048 = vpop.permute.xlu0 %2047
  %v2050 = vadd.f32 %v2040, %v2048
  %v2051 = vtanh.pop %v2050
  %2053 = vrot.lane.b32.xlu0 %v2051, 32
  %v2054 = vpop.permute.xlu0 %2053
  %v2056 = vmul.f32 %v2039, %v2054
  %2058 = vrot.lane.b32.xlu0 %v2056, 64
  %v2059 = vpop.permute.xlu0 %2058
  %v2060 = vsel %vm454, %v2059, 0
  %2062 = vmatpush.msra.mxu0 0.0
  %2063 = vmatpush.msra.mxu0 0.0
  %2064 = vmatpush.msra.mxu0 0.0
  %2065 = vmatpush.msra.mxu0 0.0
  %2066 = vmatpush.msra.mxu0 0.0
  %2067 = vmatpush.msra.mxu0 0.0
  %2068 = vmatpush.msra.mxu0 0.0
  %2069 = vmatpush.msra.mxu0 0.0
  %2070 = vmatpush.msra.mxu0 0.0
  %2071 = vmatpush.msra.mxu0 0.0
  %2072 = vmatpush.msra.mxu0 0.0
  %2073 = vmatpush.msra.mxu0 0.0
  %2074 = vmatpush.msra.mxu0 %v416
  %2075 = vmatpush.msra.mxu0 %v415
  %2076 = vmatpush.msra.mxu0 %v414
  %2077 = vmatpush.msra.mxu0 %v413
  %2078 = vmatmul.f32.gmra.mxu0 %v2060
  %v2079 = vpop.f32.mrf.mxu0
  %v2080 = vadd.f32 0.0, %v2079
  %2081 = vdwg.mxu0
  %s2082 = scalar_lea.vmem %s7, 352
  %v2083 = vld [vmem:[%s2082] sm:$0xff]
  %v2084 = vld [vmem:[%s2082 + $0x8] sm:$0xff]
  %v2085 = vld [vmem:[%s2082 + $0x10] sm:$0xff]
  %v2086 = vld [vmem:[%s2082 + $0x18] sm:$0xff]
  %2087 = vmatpush.msra.mxu0 0.0
  %2088 = vmatpush.msra.mxu0 0.0
  %2089 = vmatpush.msra.mxu0 0.0
  %2090 = vmatpush.msra.mxu0 0.0
  %2091 = vmatpush.msra.mxu0 0.0
  %2092 = vmatpush.msra.mxu0 0.0
  %2093 = vmatpush.msra.mxu0 0.0
  %2094 = vmatpush.msra.mxu0 0.0
  %2095 = vmatpush.msra.mxu0 0.0
  %2096 = vmatpush.msra.mxu0 0.0
  %2097 = vmatpush.msra.mxu0 0.0
  %2098 = vmatpush.msra.mxu0 0.0
  %2099 = vmatpush.msra.mxu0 %v2086
  %2100 = vmatpush.msra.mxu0 %v2085
  %2101 = vmatpush.msra.mxu0 %v2084
  %2102 = vmatpush.msra.mxu0 %v2083
  %2103 = vmatmul.f32.gmra.mxu0 %v2060
  %v2104 = vpop.f32.mrf.mxu0
  %v2105 = vadd.f32 0.0, %v2104
  %2106 = vdwg.mxu0
  %v2107 = vadd.f32 %v1967, %v2105
  %v2108 = vadd.f32 %v292, %v2013
  %v2109 = vmul.f32 %v2108, %v424
  %v2110 = vtanh.pop %v2109
  %v2111 = vadd.f32 %v2110, 1.0
  %v2112 = vmul.f32 %v2111, 0.5
  %v2113 = vmul.f32 %v2112, %v1983
  %2115 = vrot.lane.b32.xlu0 %v2110, 32
  %v2116 = vpop.permute.xlu0 %2115
  %v2118 = vmul.f32 %v2112, %v2116
  %2120 = vrot.lane.b32.xlu0 %v2118, 32
  %v2121 = vpop.permute.xlu0 %2120
  %v2123 = vadd.f32 %v2113, %v2121
  %v2124 = vtanh.pop %v2123
  %2126 = vrot.lane.b32.xlu0 %v2124, 32
  %v2127 = vpop.permute.xlu0 %2126
  %v2129 = vmul.f32 %v2112, %v2127
  %2131 = vrot.lane.b32.xlu0 %v2129, 64
  %v2132 = vpop.permute.xlu0 %2131
  %v2133 = vsel %vm454, %v2132, 0
  %2135 = vmatpush.msra.mxu0 0.0
  %2136 = vmatpush.msra.mxu0 0.0
  %2137 = vmatpush.msra.mxu0 0.0
  %2138 = vmatpush.msra.mxu0 0.0
  %2139 = vmatpush.msra.mxu0 0.0
  %2140 = vmatpush.msra.mxu0 0.0
  %2141 = vmatpush.msra.mxu0 0.0
  %2142 = vmatpush.msra.mxu0 0.0
  %2143 = vmatpush.msra.mxu0 0.0
  %2144 = vmatpush.msra.mxu0 0.0
  %2145 = vmatpush.msra.mxu0 0.0
  %2146 = vmatpush.msra.mxu0 0.0
  %2147 = vmatpush.msra.mxu0 %v408
  %2148 = vmatpush.msra.mxu0 %v407
  %2149 = vmatpush.msra.mxu0 %v406
  %2150 = vmatpush.msra.mxu0 %v405
  %2151 = vmatmul.f32.gmra.mxu0 %v2133
  %v2152 = vpop.f32.mrf.mxu0
  %v2153 = vadd.f32 0.0, %v2152
  %2154 = vdwg.mxu0
  %2155 = vmatpush.msra.mxu0 0.0
  %2156 = vmatpush.msra.mxu0 0.0
  %2157 = vmatpush.msra.mxu0 0.0
  %2158 = vmatpush.msra.mxu0 0.0
  %2159 = vmatpush.msra.mxu0 0.0
  %2160 = vmatpush.msra.mxu0 0.0
  %2161 = vmatpush.msra.mxu0 0.0
  %2162 = vmatpush.msra.mxu0 0.0
  %2163 = vmatpush.msra.mxu0 0.0
  %2164 = vmatpush.msra.mxu0 0.0
  %2165 = vmatpush.msra.mxu0 0.0
  %2166 = vmatpush.msra.mxu0 0.0
  %2167 = vmatpush.msra.mxu0 %v412
  %2168 = vmatpush.msra.mxu0 %v411
  %2169 = vmatpush.msra.mxu0 %v410
  %2170 = vmatpush.msra.mxu0 %v409
  %2171 = vmatmul.f32.gmra.mxu0 %v2133
  %v2172 = vpop.f32.mrf.mxu0
  %v2173 = vadd.f32 %v2080, %v2172
  %2174 = vdwg.mxu0
  %v2175 = vadd.f32 %v2173, %v419
  %v2176 = vmul.f32 %v2175, %v424
  %v2177 = vtanh.pop %v2176
  %v2178 = vadd.f32 %v2177, 1.0
  %v2179 = vmul.f32 %v2178, 0.5
  %v2180 = vmul.f32 %v2179, %v2050
  %2182 = vrot.lane.b32.xlu0 %v2177, 32
  %v2183 = vpop.permute.xlu0 %2182
  %v2185 = vmul.f32 %v2179, %v2183
  %2187 = vrot.lane.b32.xlu0 %v2185, 32
  %v2188 = vpop.permute.xlu0 %2187
  %v2190 = vadd.f32 %v2180, %v2188
  %v2191 = vtanh.pop %v2190
  %2193 = vrot.lane.b32.xlu0 %v2191, 32
  %v2194 = vpop.permute.xlu0 %2193
  %v2196 = vmul.f32 %v2179, %v2194
  %2198 = vrot.lane.b32.xlu0 %v2196, 64
  %v2199 = vpop.permute.xlu0 %2198
  %v2200 = vsel %vm454, %v2199, 0
  %2202 = vmatpush.msra.mxu0 0.0
  %2203 = vmatpush.msra.mxu0 0.0
  %2204 = vmatpush.msra.mxu0 0.0
  %2205 = vmatpush.msra.mxu0 0.0
  %2206 = vmatpush.msra.mxu0 0.0
  %2207 = vmatpush.msra.mxu0 0.0
  %2208 = vmatpush.msra.mxu0 0.0
  %2209 = vmatpush.msra.mxu0 0.0
  %2210 = vmatpush.msra.mxu0 0.0
  %2211 = vmatpush.msra.mxu0 0.0
  %2212 = vmatpush.msra.mxu0 0.0
  %2213 = vmatpush.msra.mxu0 0.0
  %2214 = vmatpush.msra.mxu0 %v416
  %2215 = vmatpush.msra.mxu0 %v415
  %2216 = vmatpush.msra.mxu0 %v414
  %2217 = vmatpush.msra.mxu0 %v413
  %2218 = vmatmul.f32.gmra.mxu0 %v2200
  %v2219 = vpop.f32.mrf.mxu0
  %v2220 = vadd.f32 0.0, %v2219
  %2221 = vdwg.mxu0
  %s2222 = scalar_lea.vmem %s7, 384
  %v2223 = vld [vmem:[%s2222] sm:$0xff]
  %v2224 = vld [vmem:[%s2222 + $0x8] sm:$0xff]
  %v2225 = vld [vmem:[%s2222 + $0x10] sm:$0xff]
  %v2226 = vld [vmem:[%s2222 + $0x18] sm:$0xff]
  %2227 = vmatpush.msra.mxu0 0.0
  %2228 = vmatpush.msra.mxu0 0.0
  %2229 = vmatpush.msra.mxu0 0.0
  %2230 = vmatpush.msra.mxu0 0.0
  %2231 = vmatpush.msra.mxu0 0.0
  %2232 = vmatpush.msra.mxu0 0.0
  %2233 = vmatpush.msra.mxu0 0.0
  %2234 = vmatpush.msra.mxu0 0.0
  %2235 = vmatpush.msra.mxu0 0.0
  %2236 = vmatpush.msra.mxu0 0.0
  %2237 = vmatpush.msra.mxu0 0.0
  %2238 = vmatpush.msra.mxu0 0.0
  %2239 = vmatpush.msra.mxu0 %v2226
  %2240 = vmatpush.msra.mxu0 %v2225
  %2241 = vmatpush.msra.mxu0 %v2224
  %2242 = vmatpush.msra.mxu0 %v2223
  %2243 = vmatmul.f32.gmra.mxu0 %v2200
  %v2244 = vpop.f32.mrf.mxu0
  %v2245 = vadd.f32 0.0, %v2244
  %2246 = vdwg.mxu0
  %v2247 = vadd.f32 %v2107, %v2245
  %v2248 = vadd.f32 %v295, %v2153
  %v2249 = vmul.f32 %v2248, %v424
  %v2250 = vtanh.pop %v2249
  %v2251 = vadd.f32 %v2250, 1.0
  %v2252 = vmul.f32 %v2251, 0.5
  %v2253 = vmul.f32 %v2252, %v2123
  %2255 = vrot.lane.b32.xlu0 %v2250, 32
  %v2256 = vpop.permute.xlu0 %2255
  %v2258 = vmul.f32 %v2252, %v2256
  %2260 = vrot.lane.b32.xlu0 %v2258, 32
  %v2261 = vpop.permute.xlu0 %2260
  %v2263 = vadd.f32 %v2253, %v2261
  %v2264 = vtanh.pop %v2263
  %2266 = vrot.lane.b32.xlu0 %v2264, 32
  %v2267 = vpop.permute.xlu0 %2266
  %v2269 = vmul.f32 %v2252, %v2267
  %2271 = vrot.lane.b32.xlu0 %v2269, 64
  %v2272 = vpop.permute.xlu0 %2271
  %v2273 = vsel %vm454, %v2272, 0
  %2275 = vmatpush.msra.mxu0 0.0
  %2276 = vmatpush.msra.mxu0 0.0
  %2277 = vmatpush.msra.mxu0 0.0
  %2278 = vmatpush.msra.mxu0 0.0
  %2279 = vmatpush.msra.mxu0 0.0
  %2280 = vmatpush.msra.mxu0 0.0
  %2281 = vmatpush.msra.mxu0 0.0
  %2282 = vmatpush.msra.mxu0 0.0
  %2283 = vmatpush.msra.mxu0 0.0
  %2284 = vmatpush.msra.mxu0 0.0
  %2285 = vmatpush.msra.mxu0 0.0
  %2286 = vmatpush.msra.mxu0 0.0
  %2287 = vmatpush.msra.mxu0 %v408
  %2288 = vmatpush.msra.mxu0 %v407
  %2289 = vmatpush.msra.mxu0 %v406
  %2290 = vmatpush.msra.mxu0 %v405
  %2291 = vmatmul.f32.gmra.mxu0 %v2273
  %v2292 = vpop.f32.mrf.mxu0
  %v2293 = vadd.f32 0.0, %v2292
  %2294 = vdwg.mxu0
  %2295 = vmatpush.msra.mxu0 0.0
  %2296 = vmatpush.msra.mxu0 0.0
  %2297 = vmatpush.msra.mxu0 0.0
  %2298 = vmatpush.msra.mxu0 0.0
  %2299 = vmatpush.msra.mxu0 0.0
  %2300 = vmatpush.msra.mxu0 0.0
  %2301 = vmatpush.msra.mxu0 0.0
  %2302 = vmatpush.msra.mxu0 0.0
  %2303 = vmatpush.msra.mxu0 0.0
  %2304 = vmatpush.msra.mxu0 0.0
  %2305 = vmatpush.msra.mxu0 0.0
  %2306 = vmatpush.msra.mxu0 0.0
  %2307 = vmatpush.msra.mxu0 %v412
  %2308 = vmatpush.msra.mxu0 %v411
  %2309 = vmatpush.msra.mxu0 %v410
  %2310 = vmatpush.msra.mxu0 %v409
  %2311 = vmatmul.f32.gmra.mxu0 %v2273
  %v2312 = vpop.f32.mrf.mxu0
  %v2313 = vadd.f32 %v2220, %v2312
  %2314 = vdwg.mxu0
  %v2315 = vadd.f32 %v2313, %v419
  %v2316 = vmul.f32 %v2315, %v424
  %v2317 = vtanh.pop %v2316
  %v2318 = vadd.f32 %v2317, 1.0
  %v2319 = vmul.f32 %v2318, 0.5
  %v2320 = vmul.f32 %v2319, %v2190
  %2322 = vrot.lane.b32.xlu0 %v2317, 32
  %v2323 = vpop.permute.xlu0 %2322
  %v2325 = vmul.f32 %v2319, %v2323
  %2327 = vrot.lane.b32.xlu0 %v2325, 32
  %v2328 = vpop.permute.xlu0 %2327
  %v2330 = vadd.f32 %v2320, %v2328
  %v2331 = vtanh.pop %v2330
  %2333 = vrot.lane.b32.xlu0 %v2331, 32
  %v2334 = vpop.permute.xlu0 %2333
  %v2336 = vmul.f32 %v2319, %v2334
  %2338 = vrot.lane.b32.xlu0 %v2336, 64
  %v2339 = vpop.permute.xlu0 %2338
  %v2340 = vsel %vm454, %v2339, 0
  %2342 = vmatpush.msra.mxu0 0.0
  %2343 = vmatpush.msra.mxu0 0.0
  %2344 = vmatpush.msra.mxu0 0.0
  %2345 = vmatpush.msra.mxu0 0.0
  %2346 = vmatpush.msra.mxu0 0.0
  %2347 = vmatpush.msra.mxu0 0.0
  %2348 = vmatpush.msra.mxu0 0.0
  %2349 = vmatpush.msra.mxu0 0.0
  %2350 = vmatpush.msra.mxu0 0.0
  %2351 = vmatpush.msra.mxu0 0.0
  %2352 = vmatpush.msra.mxu0 0.0
  %2353 = vmatpush.msra.mxu0 0.0
  %2354 = vmatpush.msra.mxu0 %v416
  %2355 = vmatpush.msra.mxu0 %v415
  %2356 = vmatpush.msra.mxu0 %v414
  %2357 = vmatpush.msra.mxu0 %v413
  %2358 = vmatmul.f32.gmra.mxu0 %v2340
  %v2359 = vpop.f32.mrf.mxu0
  %v2360 = vadd.f32 0.0, %v2359
  %2361 = vdwg.mxu0
  %s2362 = scalar_lea.vmem %s7, 416
  %v2363 = vld [vmem:[%s2362] sm:$0xff]
  %v2364 = vld [vmem:[%s2362 + $0x8] sm:$0xff]
  %v2365 = vld [vmem:[%s2362 + $0x10] sm:$0xff]
  %v2366 = vld [vmem:[%s2362 + $0x18] sm:$0xff]
  %2367 = vmatpush.msra.mxu0 0.0
  %2368 = vmatpush.msra.mxu0 0.0
  %2369 = vmatpush.msra.mxu0 0.0
  %2370 = vmatpush.msra.mxu0 0.0
  %2371 = vmatpush.msra.mxu0 0.0
  %2372 = vmatpush.msra.mxu0 0.0
  %2373 = vmatpush.msra.mxu0 0.0
  %2374 = vmatpush.msra.mxu0 0.0
  %2375 = vmatpush.msra.mxu0 0.0
  %2376 = vmatpush.msra.mxu0 0.0
  %2377 = vmatpush.msra.mxu0 0.0
  %2378 = vmatpush.msra.mxu0 0.0
  %2379 = vmatpush.msra.mxu0 %v2366
  %2380 = vmatpush.msra.mxu0 %v2365
  %2381 = vmatpush.msra.mxu0 %v2364
  %2382 = vmatpush.msra.mxu0 %v2363
  %2383 = vmatmul.f32.gmra.mxu0 %v2340
  %v2384 = vpop.f32.mrf.mxu0
  %v2385 = vadd.f32 0.0, %v2384
  %2386 = vdwg.mxu0
  %v2387 = vadd.f32 %v2247, %v2385
  %v2388 = vadd.f32 %v298, %v2293
  %v2389 = vmul.f32 %v2388, %v424
  %v2390 = vtanh.pop %v2389
  %v2391 = vadd.f32 %v2390, 1.0
  %v2392 = vmul.f32 %v2391, 0.5
  %v2393 = vmul.f32 %v2392, %v2263
  %2395 = vrot.lane.b32.xlu0 %v2390, 32
  %v2396 = vpop.permute.xlu0 %2395
  %v2398 = vmul.f32 %v2392, %v2396
  %2400 = vrot.lane.b32.xlu0 %v2398, 32
  %v2401 = vpop.permute.xlu0 %2400
  %v2403 = vadd.f32 %v2393, %v2401
  %v2404 = vtanh.pop %v2403
  %2406 = vrot.lane.b32.xlu0 %v2404, 32
  %v2407 = vpop.permute.xlu0 %2406
  %v2409 = vmul.f32 %v2392, %v2407
  %2411 = vrot.lane.b32.xlu0 %v2409, 64
  %v2412 = vpop.permute.xlu0 %2411
  %v2413 = vsel %vm454, %v2412, 0
  %2415 = vmatpush.msra.mxu0 0.0
  %2416 = vmatpush.msra.mxu0 0.0
  %2417 = vmatpush.msra.mxu0 0.0
  %2418 = vmatpush.msra.mxu0 0.0
  %2419 = vmatpush.msra.mxu0 0.0
  %2420 = vmatpush.msra.mxu0 0.0
  %2421 = vmatpush.msra.mxu0 0.0
  %2422 = vmatpush.msra.mxu0 0.0
  %2423 = vmatpush.msra.mxu0 0.0
  %2424 = vmatpush.msra.mxu0 0.0
  %2425 = vmatpush.msra.mxu0 0.0
  %2426 = vmatpush.msra.mxu0 0.0
  %2427 = vmatpush.msra.mxu0 %v408
  %2428 = vmatpush.msra.mxu0 %v407
  %2429 = vmatpush.msra.mxu0 %v406
  %2430 = vmatpush.msra.mxu0 %v405
  %2431 = vmatmul.f32.gmra.mxu0 %v2413
  %v2432 = vpop.f32.mrf.mxu0
  %v2433 = vadd.f32 0.0, %v2432
  %2434 = vdwg.mxu0
  %2435 = vmatpush.msra.mxu0 0.0
  %2436 = vmatpush.msra.mxu0 0.0
  %2437 = vmatpush.msra.mxu0 0.0
  %2438 = vmatpush.msra.mxu0 0.0
  %2439 = vmatpush.msra.mxu0 0.0
  %2440 = vmatpush.msra.mxu0 0.0
  %2441 = vmatpush.msra.mxu0 0.0
  %2442 = vmatpush.msra.mxu0 0.0
  %2443 = vmatpush.msra.mxu0 0.0
  %2444 = vmatpush.msra.mxu0 0.0
  %2445 = vmatpush.msra.mxu0 0.0
  %2446 = vmatpush.msra.mxu0 0.0
  %2447 = vmatpush.msra.mxu0 %v412
  %2448 = vmatpush.msra.mxu0 %v411
  %2449 = vmatpush.msra.mxu0 %v410
  %2450 = vmatpush.msra.mxu0 %v409
  %2451 = vmatmul.f32.gmra.mxu0 %v2413
  %v2452 = vpop.f32.mrf.mxu0
  %v2453 = vadd.f32 %v2360, %v2452
  %2454 = vdwg.mxu0
  %v2455 = vadd.f32 %v2453, %v419
  %v2456 = vmul.f32 %v2455, %v424
  %v2457 = vtanh.pop %v2456
  %v2458 = vadd.f32 %v2457, 1.0
  %v2459 = vmul.f32 %v2458, 0.5
  %v2460 = vmul.f32 %v2459, %v2330
  %2462 = vrot.lane.b32.xlu0 %v2457, 32
  %v2463 = vpop.permute.xlu0 %2462
  %v2465 = vmul.f32 %v2459, %v2463
  %2467 = vrot.lane.b32.xlu0 %v2465, 32
  %v2468 = vpop.permute.xlu0 %2467
  %v2470 = vadd.f32 %v2460, %v2468
  %v2471 = vtanh.pop %v2470
  %2473 = vrot.lane.b32.xlu0 %v2471, 32
  %v2474 = vpop.permute.xlu0 %2473
  %v2476 = vmul.f32 %v2459, %v2474
  %2478 = vrot.lane.b32.xlu0 %v2476, 64
  %v2479 = vpop.permute.xlu0 %2478
  %v2480 = vsel %vm454, %v2479, 0
  %2482 = vmatpush.msra.mxu0 0.0
  %2483 = vmatpush.msra.mxu0 0.0
  %2484 = vmatpush.msra.mxu0 0.0
  %2485 = vmatpush.msra.mxu0 0.0
  %2486 = vmatpush.msra.mxu0 0.0
  %2487 = vmatpush.msra.mxu0 0.0
  %2488 = vmatpush.msra.mxu0 0.0
  %2489 = vmatpush.msra.mxu0 0.0
  %2490 = vmatpush.msra.mxu0 0.0
  %2491 = vmatpush.msra.mxu0 0.0
  %2492 = vmatpush.msra.mxu0 0.0
  %2493 = vmatpush.msra.mxu0 0.0
  %2494 = vmatpush.msra.mxu0 %v416
  %2495 = vmatpush.msra.mxu0 %v415
  %2496 = vmatpush.msra.mxu0 %v414
  %2497 = vmatpush.msra.mxu0 %v413
  %2498 = vmatmul.f32.gmra.mxu0 %v2480
  %v2499 = vpop.f32.mrf.mxu0
  %v2500 = vadd.f32 0.0, %v2499
  %2501 = vdwg.mxu0
  %s2502 = scalar_lea.vmem %s7, 448
  %v2503 = vld [vmem:[%s2502] sm:$0xff]
  %v2504 = vld [vmem:[%s2502 + $0x8] sm:$0xff]
  %v2505 = vld [vmem:[%s2502 + $0x10] sm:$0xff]
  %v2506 = vld [vmem:[%s2502 + $0x18] sm:$0xff]
  %2507 = vmatpush.msra.mxu0 0.0
  %2508 = vmatpush.msra.mxu0 0.0
  %2509 = vmatpush.msra.mxu0 0.0
  %2510 = vmatpush.msra.mxu0 0.0
  %2511 = vmatpush.msra.mxu0 0.0
  %2512 = vmatpush.msra.mxu0 0.0
  %2513 = vmatpush.msra.mxu0 0.0
  %2514 = vmatpush.msra.mxu0 0.0
  %2515 = vmatpush.msra.mxu0 0.0
  %2516 = vmatpush.msra.mxu0 0.0
  %2517 = vmatpush.msra.mxu0 0.0
  %2518 = vmatpush.msra.mxu0 0.0
  %2519 = vmatpush.msra.mxu0 %v2506
  %2520 = vmatpush.msra.mxu0 %v2505
  %2521 = vmatpush.msra.mxu0 %v2504
  %2522 = vmatpush.msra.mxu0 %v2503
  %2523 = vmatmul.f32.gmra.mxu0 %v2480
  %v2524 = vpop.f32.mrf.mxu0
  %v2525 = vadd.f32 0.0, %v2524
  %2526 = vdwg.mxu0
  %v2527 = vadd.f32 %v2387, %v2525
  %v2528 = vadd.f32 %v301, %v2433
  %v2529 = vmul.f32 %v2528, %v424
  %v2530 = vtanh.pop %v2529
  %v2531 = vadd.f32 %v2530, 1.0
  %v2532 = vmul.f32 %v2531, 0.5
  %v2533 = vmul.f32 %v2532, %v2403
  %2535 = vrot.lane.b32.xlu0 %v2530, 32
  %v2536 = vpop.permute.xlu0 %2535
  %v2538 = vmul.f32 %v2532, %v2536
  %2540 = vrot.lane.b32.xlu0 %v2538, 32
  %v2541 = vpop.permute.xlu0 %2540
  %v2543 = vadd.f32 %v2533, %v2541
  %v2544 = vtanh.pop %v2543
  %2546 = vrot.lane.b32.xlu0 %v2544, 32
  %v2547 = vpop.permute.xlu0 %2546
  %v2549 = vmul.f32 %v2532, %v2547
  %2551 = vrot.lane.b32.xlu0 %v2549, 64
  %v2552 = vpop.permute.xlu0 %2551
  %v2553 = vsel %vm454, %v2552, 0
  %2555 = vmatpush.msra.mxu0 0.0
  %2556 = vmatpush.msra.mxu0 0.0
  %2557 = vmatpush.msra.mxu0 0.0
  %2558 = vmatpush.msra.mxu0 0.0
  %2559 = vmatpush.msra.mxu0 0.0
  %2560 = vmatpush.msra.mxu0 0.0
  %2561 = vmatpush.msra.mxu0 0.0
  %2562 = vmatpush.msra.mxu0 0.0
  %2563 = vmatpush.msra.mxu0 0.0
  %2564 = vmatpush.msra.mxu0 0.0
  %2565 = vmatpush.msra.mxu0 0.0
  %2566 = vmatpush.msra.mxu0 0.0
  %2567 = vmatpush.msra.mxu0 %v408
  %2568 = vmatpush.msra.mxu0 %v407
  %2569 = vmatpush.msra.mxu0 %v406
  %2570 = vmatpush.msra.mxu0 %v405
  %2571 = vmatmul.f32.gmra.mxu0 %v2553
  %v2572 = vpop.f32.mrf.mxu0
  %v2573 = vadd.f32 0.0, %v2572
  %2574 = vdwg.mxu0
  %2575 = vmatpush.msra.mxu0 0.0
  %2576 = vmatpush.msra.mxu0 0.0
  %2577 = vmatpush.msra.mxu0 0.0
  %2578 = vmatpush.msra.mxu0 0.0
  %2579 = vmatpush.msra.mxu0 0.0
  %2580 = vmatpush.msra.mxu0 0.0
  %2581 = vmatpush.msra.mxu0 0.0
  %2582 = vmatpush.msra.mxu0 0.0
  %2583 = vmatpush.msra.mxu0 0.0
  %2584 = vmatpush.msra.mxu0 0.0
  %2585 = vmatpush.msra.mxu0 0.0
  %2586 = vmatpush.msra.mxu0 0.0
  %2587 = vmatpush.msra.mxu0 %v412
  %2588 = vmatpush.msra.mxu0 %v411
  %2589 = vmatpush.msra.mxu0 %v410
  %2590 = vmatpush.msra.mxu0 %v409
  %2591 = vmatmul.f32.gmra.mxu0 %v2553
  %v2592 = vpop.f32.mrf.mxu0
  %v2593 = vadd.f32 %v2500, %v2592
  %2594 = vdwg.mxu0
  %v2595 = vadd.f32 %v2593, %v419
  %v2596 = vmul.f32 %v2595, %v424
  %v2597 = vtanh.pop %v2596
  %v2598 = vadd.f32 %v2597, 1.0
  %v2599 = vmul.f32 %v2598, 0.5
  %v2600 = vmul.f32 %v2599, %v2470
  %2602 = vrot.lane.b32.xlu0 %v2597, 32
  %v2603 = vpop.permute.xlu0 %2602
  %v2605 = vmul.f32 %v2599, %v2603
  %2607 = vrot.lane.b32.xlu0 %v2605, 32
  %v2608 = vpop.permute.xlu0 %2607
  %v2610 = vadd.f32 %v2600, %v2608
  %v2611 = vtanh.pop %v2610
  %2613 = vrot.lane.b32.xlu0 %v2611, 32
  %v2614 = vpop.permute.xlu0 %2613
  %v2616 = vmul.f32 %v2599, %v2614
  %2618 = vrot.lane.b32.xlu0 %v2616, 64
  %v2619 = vpop.permute.xlu0 %2618
  %v2620 = vsel %vm454, %v2619, 0
  %2622 = vmatpush.msra.mxu0 0.0
  %2623 = vmatpush.msra.mxu0 0.0
  %2624 = vmatpush.msra.mxu0 0.0
  %2625 = vmatpush.msra.mxu0 0.0
  %2626 = vmatpush.msra.mxu0 0.0
  %2627 = vmatpush.msra.mxu0 0.0
  %2628 = vmatpush.msra.mxu0 0.0
  %2629 = vmatpush.msra.mxu0 0.0
  %2630 = vmatpush.msra.mxu0 0.0
  %2631 = vmatpush.msra.mxu0 0.0
  %2632 = vmatpush.msra.mxu0 0.0
  %2633 = vmatpush.msra.mxu0 0.0
  %2634 = vmatpush.msra.mxu0 %v416
  %2635 = vmatpush.msra.mxu0 %v415
  %2636 = vmatpush.msra.mxu0 %v414
  %2637 = vmatpush.msra.mxu0 %v413
  %2638 = vmatmul.f32.gmra.mxu0 %v2620
  %v2639 = vpop.f32.mrf.mxu0
  %v2640 = vadd.f32 0.0, %v2639
  %2641 = vdwg.mxu0
  %s2642 = scalar_lea.vmem %s7, 480
  %v2643 = vld [vmem:[%s2642] sm:$0xff]
  %v2644 = vld [vmem:[%s2642 + $0x8] sm:$0xff]
  %v2645 = vld [vmem:[%s2642 + $0x10] sm:$0xff]
  %v2646 = vld [vmem:[%s2642 + $0x18] sm:$0xff]
  %2647 = vmatpush.msra.mxu0 0.0
  %2648 = vmatpush.msra.mxu0 0.0
  %2649 = vmatpush.msra.mxu0 0.0
  %2650 = vmatpush.msra.mxu0 0.0
  %2651 = vmatpush.msra.mxu0 0.0
  %2652 = vmatpush.msra.mxu0 0.0
  %2653 = vmatpush.msra.mxu0 0.0
  %2654 = vmatpush.msra.mxu0 0.0
  %2655 = vmatpush.msra.mxu0 0.0
  %2656 = vmatpush.msra.mxu0 0.0
  %2657 = vmatpush.msra.mxu0 0.0
  %2658 = vmatpush.msra.mxu0 0.0
  %2659 = vmatpush.msra.mxu0 %v2646
  %2660 = vmatpush.msra.mxu0 %v2645
  %2661 = vmatpush.msra.mxu0 %v2644
  %2662 = vmatpush.msra.mxu0 %v2643
  %2663 = vmatmul.f32.gmra.mxu0 %v2620
  %v2664 = vpop.f32.mrf.mxu0
  %v2665 = vadd.f32 0.0, %v2664
  %2666 = vdwg.mxu0
  %v2667 = vadd.f32 %v2527, %v2665
  %v2668 = vadd.f32 %v304, %v2573
  %v2669 = vmul.f32 %v2668, %v424
  %v2670 = vtanh.pop %v2669
  %v2671 = vadd.f32 %v2670, 1.0
  %v2672 = vmul.f32 %v2671, 0.5
  %v2673 = vmul.f32 %v2672, %v2543
  %2675 = vrot.lane.b32.xlu0 %v2670, 32
  %v2676 = vpop.permute.xlu0 %2675
  %v2678 = vmul.f32 %v2672, %v2676
  %2680 = vrot.lane.b32.xlu0 %v2678, 32
  %v2681 = vpop.permute.xlu0 %2680
  %v2683 = vadd.f32 %v2673, %v2681
  %v2684 = vtanh.pop %v2683
  %2686 = vrot.lane.b32.xlu0 %v2684, 32
  %v2687 = vpop.permute.xlu0 %2686
  %v2689 = vmul.f32 %v2672, %v2687
  %2691 = vrot.lane.b32.xlu0 %v2689, 64
  %v2692 = vpop.permute.xlu0 %2691
  %v2693 = vsel %vm454, %v2692, 0
  %2695 = vmatpush.msra.mxu0 0.0
  %2696 = vmatpush.msra.mxu0 0.0
  %2697 = vmatpush.msra.mxu0 0.0
  %2698 = vmatpush.msra.mxu0 0.0
  %2699 = vmatpush.msra.mxu0 0.0
  %2700 = vmatpush.msra.mxu0 0.0
  %2701 = vmatpush.msra.mxu0 0.0
  %2702 = vmatpush.msra.mxu0 0.0
  %2703 = vmatpush.msra.mxu0 0.0
  %2704 = vmatpush.msra.mxu0 0.0
  %2705 = vmatpush.msra.mxu0 0.0
  %2706 = vmatpush.msra.mxu0 0.0
  %2707 = vmatpush.msra.mxu0 %v408
  %2708 = vmatpush.msra.mxu0 %v407
  %2709 = vmatpush.msra.mxu0 %v406
  %2710 = vmatpush.msra.mxu0 %v405
  %2711 = vmatmul.f32.gmra.mxu0 %v2693
  %v2712 = vpop.f32.mrf.mxu0
  %v2713 = vadd.f32 0.0, %v2712
  %2714 = vdwg.mxu0
  %2715 = vmatpush.msra.mxu0 0.0
  %2716 = vmatpush.msra.mxu0 0.0
  %2717 = vmatpush.msra.mxu0 0.0
  %2718 = vmatpush.msra.mxu0 0.0
  %2719 = vmatpush.msra.mxu0 0.0
  %2720 = vmatpush.msra.mxu0 0.0
  %2721 = vmatpush.msra.mxu0 0.0
  %2722 = vmatpush.msra.mxu0 0.0
  %2723 = vmatpush.msra.mxu0 0.0
  %2724 = vmatpush.msra.mxu0 0.0
  %2725 = vmatpush.msra.mxu0 0.0
  %2726 = vmatpush.msra.mxu0 0.0
  %2727 = vmatpush.msra.mxu0 %v412
  %2728 = vmatpush.msra.mxu0 %v411
  %2729 = vmatpush.msra.mxu0 %v410
  %2730 = vmatpush.msra.mxu0 %v409
  %2731 = vmatmul.f32.gmra.mxu0 %v2693
  %v2732 = vpop.f32.mrf.mxu0
  %v2733 = vadd.f32 %v2640, %v2732
  %2734 = vdwg.mxu0
  %v2735 = vadd.f32 %v2733, %v419
  %v2736 = vmul.f32 %v2735, %v424
  %v2737 = vtanh.pop %v2736
  %v2738 = vadd.f32 %v2737, 1.0
  %v2739 = vmul.f32 %v2738, 0.5
  %v2740 = vmul.f32 %v2739, %v2610
  %2742 = vrot.lane.b32.xlu0 %v2737, 32
  %v2743 = vpop.permute.xlu0 %2742
  %v2745 = vmul.f32 %v2739, %v2743
  %2747 = vrot.lane.b32.xlu0 %v2745, 32
  %v2748 = vpop.permute.xlu0 %2747
  %v2750 = vadd.f32 %v2740, %v2748
  %v2751 = vtanh.pop %v2750
  %2753 = vrot.lane.b32.xlu0 %v2751, 32
  %v2754 = vpop.permute.xlu0 %2753
  %v2756 = vmul.f32 %v2739, %v2754
  %2758 = vrot.lane.b32.xlu0 %v2756, 64
  %v2759 = vpop.permute.xlu0 %2758
  %v2760 = vsel %vm454, %v2759, 0
  %2762 = vmatpush.msra.mxu0 0.0
  %2763 = vmatpush.msra.mxu0 0.0
  %2764 = vmatpush.msra.mxu0 0.0
  %2765 = vmatpush.msra.mxu0 0.0
  %2766 = vmatpush.msra.mxu0 0.0
  %2767 = vmatpush.msra.mxu0 0.0
  %2768 = vmatpush.msra.mxu0 0.0
  %2769 = vmatpush.msra.mxu0 0.0
  %2770 = vmatpush.msra.mxu0 0.0
  %2771 = vmatpush.msra.mxu0 0.0
  %2772 = vmatpush.msra.mxu0 0.0
  %2773 = vmatpush.msra.mxu0 0.0
  %2774 = vmatpush.msra.mxu0 %v416
  %2775 = vmatpush.msra.mxu0 %v415
  %2776 = vmatpush.msra.mxu0 %v414
  %2777 = vmatpush.msra.mxu0 %v413
  %2778 = vmatmul.f32.gmra.mxu0 %v2760
  %v2779 = vpop.f32.mrf.mxu0
  %v2780 = vadd.f32 0.0, %v2779
  %2781 = vdwg.mxu0
  %s2782 = scalar_lea.vmem %s7, 512
  %v2783 = vld [vmem:[%s2782] sm:$0xff]
  %v2784 = vld [vmem:[%s2782 + $0x8] sm:$0xff]
  %v2785 = vld [vmem:[%s2782 + $0x10] sm:$0xff]
  %v2786 = vld [vmem:[%s2782 + $0x18] sm:$0xff]
  %2787 = vmatpush.msra.mxu0 0.0
  %2788 = vmatpush.msra.mxu0 0.0
  %2789 = vmatpush.msra.mxu0 0.0
  %2790 = vmatpush.msra.mxu0 0.0
  %2791 = vmatpush.msra.mxu0 0.0
  %2792 = vmatpush.msra.mxu0 0.0
  %2793 = vmatpush.msra.mxu0 0.0
  %2794 = vmatpush.msra.mxu0 0.0
  %2795 = vmatpush.msra.mxu0 0.0
  %2796 = vmatpush.msra.mxu0 0.0
  %2797 = vmatpush.msra.mxu0 0.0
  %2798 = vmatpush.msra.mxu0 0.0
  %2799 = vmatpush.msra.mxu0 %v2786
  %2800 = vmatpush.msra.mxu0 %v2785
  %2801 = vmatpush.msra.mxu0 %v2784
  %2802 = vmatpush.msra.mxu0 %v2783
  %2803 = vmatmul.f32.gmra.mxu0 %v2760
  %v2804 = vpop.f32.mrf.mxu0
  %v2805 = vadd.f32 0.0, %v2804
  %2806 = vdwg.mxu0
  %v2807 = vadd.f32 %v2667, %v2805
  %v2808 = vadd.f32 %v307, %v2713
  %v2809 = vmul.f32 %v2808, %v424
  %v2810 = vtanh.pop %v2809
  %v2811 = vadd.f32 %v2810, 1.0
  %v2812 = vmul.f32 %v2811, 0.5
  %v2813 = vmul.f32 %v2812, %v2683
  %2815 = vrot.lane.b32.xlu0 %v2810, 32
  %v2816 = vpop.permute.xlu0 %2815
  %v2818 = vmul.f32 %v2812, %v2816
  %2820 = vrot.lane.b32.xlu0 %v2818, 32
  %v2821 = vpop.permute.xlu0 %2820
  %v2823 = vadd.f32 %v2813, %v2821
  %v2824 = vtanh.pop %v2823
  %2826 = vrot.lane.b32.xlu0 %v2824, 32
  %v2827 = vpop.permute.xlu0 %2826
  %v2829 = vmul.f32 %v2812, %v2827
  %2831 = vrot.lane.b32.xlu0 %v2829, 64
  %v2832 = vpop.permute.xlu0 %2831
  %v2833 = vsel %vm454, %v2832, 0
  %2835 = vmatpush.msra.mxu0 0.0
  %2836 = vmatpush.msra.mxu0 0.0
  %2837 = vmatpush.msra.mxu0 0.0
  %2838 = vmatpush.msra.mxu0 0.0
  %2839 = vmatpush.msra.mxu0 0.0
  %2840 = vmatpush.msra.mxu0 0.0
  %2841 = vmatpush.msra.mxu0 0.0
  %2842 = vmatpush.msra.mxu0 0.0
  %2843 = vmatpush.msra.mxu0 0.0
  %2844 = vmatpush.msra.mxu0 0.0
  %2845 = vmatpush.msra.mxu0 0.0
  %2846 = vmatpush.msra.mxu0 0.0
  %2847 = vmatpush.msra.mxu0 %v408
  %2848 = vmatpush.msra.mxu0 %v407
  %2849 = vmatpush.msra.mxu0 %v406
  %2850 = vmatpush.msra.mxu0 %v405
  %2851 = vmatmul.f32.gmra.mxu0 %v2833
  %v2852 = vpop.f32.mrf.mxu0
  %v2853 = vadd.f32 0.0, %v2852
  %2854 = vdwg.mxu0
  %2855 = vmatpush.msra.mxu0 0.0
  %2856 = vmatpush.msra.mxu0 0.0
  %2857 = vmatpush.msra.mxu0 0.0
  %2858 = vmatpush.msra.mxu0 0.0
  %2859 = vmatpush.msra.mxu0 0.0
  %2860 = vmatpush.msra.mxu0 0.0
  %2861 = vmatpush.msra.mxu0 0.0
  %2862 = vmatpush.msra.mxu0 0.0
  %2863 = vmatpush.msra.mxu0 0.0
  %2864 = vmatpush.msra.mxu0 0.0
  %2865 = vmatpush.msra.mxu0 0.0
  %2866 = vmatpush.msra.mxu0 0.0
  %2867 = vmatpush.msra.mxu0 %v412
  %2868 = vmatpush.msra.mxu0 %v411
  %2869 = vmatpush.msra.mxu0 %v410
  %2870 = vmatpush.msra.mxu0 %v409
  %2871 = vmatmul.f32.gmra.mxu0 %v2833
  %v2872 = vpop.f32.mrf.mxu0
  %v2873 = vadd.f32 %v2780, %v2872
  %2874 = vdwg.mxu0
  %v2875 = vadd.f32 %v2873, %v419
  %v2876 = vmul.f32 %v2875, %v424
  %v2877 = vtanh.pop %v2876
  %v2878 = vadd.f32 %v2877, 1.0
  %v2879 = vmul.f32 %v2878, 0.5
  %v2880 = vmul.f32 %v2879, %v2750
  %2882 = vrot.lane.b32.xlu0 %v2877, 32
  %v2883 = vpop.permute.xlu0 %2882
  %v2885 = vmul.f32 %v2879, %v2883
  %2887 = vrot.lane.b32.xlu0 %v2885, 32
  %v2888 = vpop.permute.xlu0 %2887
  %v2890 = vadd.f32 %v2880, %v2888
  %v2891 = vtanh.pop %v2890
  %2893 = vrot.lane.b32.xlu0 %v2891, 32
  %v2894 = vpop.permute.xlu0 %2893
  %v2896 = vmul.f32 %v2879, %v2894
  %2898 = vrot.lane.b32.xlu0 %v2896, 64
  %v2899 = vpop.permute.xlu0 %2898
  %v2900 = vsel %vm454, %v2899, 0
  %2902 = vmatpush.msra.mxu0 0.0
  %2903 = vmatpush.msra.mxu0 0.0
  %2904 = vmatpush.msra.mxu0 0.0
  %2905 = vmatpush.msra.mxu0 0.0
  %2906 = vmatpush.msra.mxu0 0.0
  %2907 = vmatpush.msra.mxu0 0.0
  %2908 = vmatpush.msra.mxu0 0.0
  %2909 = vmatpush.msra.mxu0 0.0
  %2910 = vmatpush.msra.mxu0 0.0
  %2911 = vmatpush.msra.mxu0 0.0
  %2912 = vmatpush.msra.mxu0 0.0
  %2913 = vmatpush.msra.mxu0 0.0
  %2914 = vmatpush.msra.mxu0 %v416
  %2915 = vmatpush.msra.mxu0 %v415
  %2916 = vmatpush.msra.mxu0 %v414
  %2917 = vmatpush.msra.mxu0 %v413
  %2918 = vmatmul.f32.gmra.mxu0 %v2900
  %v2919 = vpop.f32.mrf.mxu0
  %v2920 = vadd.f32 0.0, %v2919
  %2921 = vdwg.mxu0
  %s2922 = scalar_lea.vmem %s7, 544
  %v2923 = vld [vmem:[%s2922] sm:$0xff]
  %v2924 = vld [vmem:[%s2922 + $0x8] sm:$0xff]
  %v2925 = vld [vmem:[%s2922 + $0x10] sm:$0xff]
  %v2926 = vld [vmem:[%s2922 + $0x18] sm:$0xff]
  %2927 = vmatpush.msra.mxu0 0.0
  %2928 = vmatpush.msra.mxu0 0.0
  %2929 = vmatpush.msra.mxu0 0.0
  %2930 = vmatpush.msra.mxu0 0.0
  %2931 = vmatpush.msra.mxu0 0.0
  %2932 = vmatpush.msra.mxu0 0.0
  %2933 = vmatpush.msra.mxu0 0.0
  %2934 = vmatpush.msra.mxu0 0.0
  %2935 = vmatpush.msra.mxu0 0.0
  %2936 = vmatpush.msra.mxu0 0.0
  %2937 = vmatpush.msra.mxu0 0.0
  %2938 = vmatpush.msra.mxu0 0.0
  %2939 = vmatpush.msra.mxu0 %v2926
  %2940 = vmatpush.msra.mxu0 %v2925
  %2941 = vmatpush.msra.mxu0 %v2924
  %2942 = vmatpush.msra.mxu0 %v2923
  %2943 = vmatmul.f32.gmra.mxu0 %v2900
  %v2944 = vpop.f32.mrf.mxu0
  %v2945 = vadd.f32 0.0, %v2944
  %2946 = vdwg.mxu0
  %v2947 = vadd.f32 %v2807, %v2945
  %v2948 = vadd.f32 %v310, %v2853
  %v2949 = vmul.f32 %v2948, %v424
  %v2950 = vtanh.pop %v2949
  %v2951 = vadd.f32 %v2950, 1.0
  %v2952 = vmul.f32 %v2951, 0.5
  %v2953 = vmul.f32 %v2952, %v2823
  %2955 = vrot.lane.b32.xlu0 %v2950, 32
  %v2956 = vpop.permute.xlu0 %2955
  %v2958 = vmul.f32 %v2952, %v2956
  %2960 = vrot.lane.b32.xlu0 %v2958, 32
  %v2961 = vpop.permute.xlu0 %2960
  %v2963 = vadd.f32 %v2953, %v2961
  %v2964 = vtanh.pop %v2963
  %2966 = vrot.lane.b32.xlu0 %v2964, 32
  %v2967 = vpop.permute.xlu0 %2966
  %v2969 = vmul.f32 %v2952, %v2967
  %2971 = vrot.lane.b32.xlu0 %v2969, 64
  %v2972 = vpop.permute.xlu0 %2971
  %v2973 = vsel %vm454, %v2972, 0
  %2975 = vmatpush.msra.mxu0 0.0
  %2976 = vmatpush.msra.mxu0 0.0
  %2977 = vmatpush.msra.mxu0 0.0
  %2978 = vmatpush.msra.mxu0 0.0
  %2979 = vmatpush.msra.mxu0 0.0
  %2980 = vmatpush.msra.mxu0 0.0
  %2981 = vmatpush.msra.mxu0 0.0
  %2982 = vmatpush.msra.mxu0 0.0
  %2983 = vmatpush.msra.mxu0 0.0
  %2984 = vmatpush.msra.mxu0 0.0
  %2985 = vmatpush.msra.mxu0 0.0
  %2986 = vmatpush.msra.mxu0 0.0
  %2987 = vmatpush.msra.mxu0 %v408
  %2988 = vmatpush.msra.mxu0 %v407
  %2989 = vmatpush.msra.mxu0 %v406
  %2990 = vmatpush.msra.mxu0 %v405
  %2991 = vmatmul.f32.gmra.mxu0 %v2973
  %v2992 = vpop.f32.mrf.mxu0
  %v2993 = vadd.f32 0.0, %v2992
  %2994 = vdwg.mxu0
  %2995 = vmatpush.msra.mxu0 0.0
  %2996 = vmatpush.msra.mxu0 0.0
  %2997 = vmatpush.msra.mxu0 0.0
  %2998 = vmatpush.msra.mxu0 0.0
  %2999 = vmatpush.msra.mxu0 0.0
  %3000 = vmatpush.msra.mxu0 0.0
  %3001 = vmatpush.msra.mxu0 0.0
  %3002 = vmatpush.msra.mxu0 0.0
  %3003 = vmatpush.msra.mxu0 0.0
  %3004 = vmatpush.msra.mxu0 0.0
  %3005 = vmatpush.msra.mxu0 0.0
  %3006 = vmatpush.msra.mxu0 0.0
  %3007 = vmatpush.msra.mxu0 %v412
  %3008 = vmatpush.msra.mxu0 %v411
  %3009 = vmatpush.msra.mxu0 %v410
  %3010 = vmatpush.msra.mxu0 %v409
  %3011 = vmatmul.f32.gmra.mxu0 %v2973
  %v3012 = vpop.f32.mrf.mxu0
  %v3013 = vadd.f32 %v2920, %v3012
  %3014 = vdwg.mxu0
  %v3015 = vadd.f32 %v3013, %v419
  %v3016 = vmul.f32 %v3015, %v424
  %v3017 = vtanh.pop %v3016
  %v3018 = vadd.f32 %v3017, 1.0
  %v3019 = vmul.f32 %v3018, 0.5
  %v3020 = vmul.f32 %v3019, %v2890
  %3022 = vrot.lane.b32.xlu0 %v3017, 32
  %v3023 = vpop.permute.xlu0 %3022
  %v3025 = vmul.f32 %v3019, %v3023
  %3027 = vrot.lane.b32.xlu0 %v3025, 32
  %v3028 = vpop.permute.xlu0 %3027
  %v3030 = vadd.f32 %v3020, %v3028
  %v3031 = vtanh.pop %v3030
  %3033 = vrot.lane.b32.xlu0 %v3031, 32
  %v3034 = vpop.permute.xlu0 %3033
  %v3036 = vmul.f32 %v3019, %v3034
  %3038 = vrot.lane.b32.xlu0 %v3036, 64
  %v3039 = vpop.permute.xlu0 %3038
  %v3040 = vsel %vm454, %v3039, 0
  %3042 = vmatpush.msra.mxu0 0.0
  %3043 = vmatpush.msra.mxu0 0.0
  %3044 = vmatpush.msra.mxu0 0.0
  %3045 = vmatpush.msra.mxu0 0.0
  %3046 = vmatpush.msra.mxu0 0.0
  %3047 = vmatpush.msra.mxu0 0.0
  %3048 = vmatpush.msra.mxu0 0.0
  %3049 = vmatpush.msra.mxu0 0.0
  %3050 = vmatpush.msra.mxu0 0.0
  %3051 = vmatpush.msra.mxu0 0.0
  %3052 = vmatpush.msra.mxu0 0.0
  %3053 = vmatpush.msra.mxu0 0.0
  %3054 = vmatpush.msra.mxu0 %v416
  %3055 = vmatpush.msra.mxu0 %v415
  %3056 = vmatpush.msra.mxu0 %v414
  %3057 = vmatpush.msra.mxu0 %v413
  %3058 = vmatmul.f32.gmra.mxu0 %v3040
  %v3059 = vpop.f32.mrf.mxu0
  %v3060 = vadd.f32 0.0, %v3059
  %3061 = vdwg.mxu0
  %s3062 = scalar_lea.vmem %s7, 576
  %v3063 = vld [vmem:[%s3062] sm:$0xff]
  %v3064 = vld [vmem:[%s3062 + $0x8] sm:$0xff]
  %v3065 = vld [vmem:[%s3062 + $0x10] sm:$0xff]
  %v3066 = vld [vmem:[%s3062 + $0x18] sm:$0xff]
  %3067 = vmatpush.msra.mxu0 0.0
  %3068 = vmatpush.msra.mxu0 0.0
  %3069 = vmatpush.msra.mxu0 0.0
  %3070 = vmatpush.msra.mxu0 0.0
  %3071 = vmatpush.msra.mxu0 0.0
  %3072 = vmatpush.msra.mxu0 0.0
  %3073 = vmatpush.msra.mxu0 0.0
  %3074 = vmatpush.msra.mxu0 0.0
  %3075 = vmatpush.msra.mxu0 0.0
  %3076 = vmatpush.msra.mxu0 0.0
  %3077 = vmatpush.msra.mxu0 0.0
  %3078 = vmatpush.msra.mxu0 0.0
  %3079 = vmatpush.msra.mxu0 %v3066
  %3080 = vmatpush.msra.mxu0 %v3065
  %3081 = vmatpush.msra.mxu0 %v3064
  %3082 = vmatpush.msra.mxu0 %v3063
  %3083 = vmatmul.f32.gmra.mxu0 %v3040
  %v3084 = vpop.f32.mrf.mxu0
  %v3085 = vadd.f32 0.0, %v3084
  %3086 = vdwg.mxu0
  %v3087 = vadd.f32 %v2947, %v3085
  %v3088 = vadd.f32 %v313, %v2993
  %v3089 = vmul.f32 %v3088, %v424
  %v3090 = vtanh.pop %v3089
  %v3091 = vadd.f32 %v3090, 1.0
  %v3092 = vmul.f32 %v3091, 0.5
  %v3093 = vmul.f32 %v3092, %v2963
  %3095 = vrot.lane.b32.xlu0 %v3090, 32
  %v3096 = vpop.permute.xlu0 %3095
  %v3098 = vmul.f32 %v3092, %v3096
  %3100 = vrot.lane.b32.xlu0 %v3098, 32
  %v3101 = vpop.permute.xlu0 %3100
  %v3103 = vadd.f32 %v3093, %v3101
  %v3104 = vtanh.pop %v3103
  %3106 = vrot.lane.b32.xlu0 %v3104, 32
  %v3107 = vpop.permute.xlu0 %3106
  %v3109 = vmul.f32 %v3092, %v3107
  %3111 = vrot.lane.b32.xlu0 %v3109, 64
  %v3112 = vpop.permute.xlu0 %3111
  %v3113 = vsel %vm454, %v3112, 0
  %3115 = vmatpush.msra.mxu0 0.0
  %3116 = vmatpush.msra.mxu0 0.0
  %3117 = vmatpush.msra.mxu0 0.0
  %3118 = vmatpush.msra.mxu0 0.0
  %3119 = vmatpush.msra.mxu0 0.0
  %3120 = vmatpush.msra.mxu0 0.0
  %3121 = vmatpush.msra.mxu0 0.0
  %3122 = vmatpush.msra.mxu0 0.0
  %3123 = vmatpush.msra.mxu0 0.0
  %3124 = vmatpush.msra.mxu0 0.0
  %3125 = vmatpush.msra.mxu0 0.0
  %3126 = vmatpush.msra.mxu0 0.0
  %3127 = vmatpush.msra.mxu0 %v408
  %3128 = vmatpush.msra.mxu0 %v407
  %3129 = vmatpush.msra.mxu0 %v406
  %3130 = vmatpush.msra.mxu0 %v405
  %3131 = vmatmul.f32.gmra.mxu0 %v3113
  %v3132 = vpop.f32.mrf.mxu0
  %v3133 = vadd.f32 0.0, %v3132
  %3134 = vdwg.mxu0
  %3135 = vmatpush.msra.mxu0 0.0
  %3136 = vmatpush.msra.mxu0 0.0
  %3137 = vmatpush.msra.mxu0 0.0
  %3138 = vmatpush.msra.mxu0 0.0
  %3139 = vmatpush.msra.mxu0 0.0
  %3140 = vmatpush.msra.mxu0 0.0
  %3141 = vmatpush.msra.mxu0 0.0
  %3142 = vmatpush.msra.mxu0 0.0
  %3143 = vmatpush.msra.mxu0 0.0
  %3144 = vmatpush.msra.mxu0 0.0
  %3145 = vmatpush.msra.mxu0 0.0
  %3146 = vmatpush.msra.mxu0 0.0
  %3147 = vmatpush.msra.mxu0 %v412
  %3148 = vmatpush.msra.mxu0 %v411
  %3149 = vmatpush.msra.mxu0 %v410
  %3150 = vmatpush.msra.mxu0 %v409
  %3151 = vmatmul.f32.gmra.mxu0 %v3113
  %v3152 = vpop.f32.mrf.mxu0
  %v3153 = vadd.f32 %v3060, %v3152
  %3154 = vdwg.mxu0
  %v3155 = vadd.f32 %v3153, %v419
  %v3156 = vmul.f32 %v3155, %v424
  %v3157 = vtanh.pop %v3156
  %v3158 = vadd.f32 %v3157, 1.0
  %v3159 = vmul.f32 %v3158, 0.5
  %v3160 = vmul.f32 %v3159, %v3030
  %3162 = vrot.lane.b32.xlu0 %v3157, 32
  %v3163 = vpop.permute.xlu0 %3162
  %v3165 = vmul.f32 %v3159, %v3163
  %3167 = vrot.lane.b32.xlu0 %v3165, 32
  %v3168 = vpop.permute.xlu0 %3167
  %v3170 = vadd.f32 %v3160, %v3168
  %v3171 = vtanh.pop %v3170
  %3173 = vrot.lane.b32.xlu0 %v3171, 32
  %v3174 = vpop.permute.xlu0 %3173
  %v3176 = vmul.f32 %v3159, %v3174
  %3178 = vrot.lane.b32.xlu0 %v3176, 64
  %v3179 = vpop.permute.xlu0 %3178
  %v3180 = vsel %vm454, %v3179, 0
  %3182 = vmatpush.msra.mxu0 0.0
  %3183 = vmatpush.msra.mxu0 0.0
  %3184 = vmatpush.msra.mxu0 0.0
  %3185 = vmatpush.msra.mxu0 0.0
  %3186 = vmatpush.msra.mxu0 0.0
  %3187 = vmatpush.msra.mxu0 0.0
  %3188 = vmatpush.msra.mxu0 0.0
  %3189 = vmatpush.msra.mxu0 0.0
  %3190 = vmatpush.msra.mxu0 0.0
  %3191 = vmatpush.msra.mxu0 0.0
  %3192 = vmatpush.msra.mxu0 0.0
  %3193 = vmatpush.msra.mxu0 0.0
  %3194 = vmatpush.msra.mxu0 %v416
  %3195 = vmatpush.msra.mxu0 %v415
  %3196 = vmatpush.msra.mxu0 %v414
  %3197 = vmatpush.msra.mxu0 %v413
  %3198 = vmatmul.f32.gmra.mxu0 %v3180
  %v3199 = vpop.f32.mrf.mxu0
  %v3200 = vadd.f32 0.0, %v3199
  %3201 = vdwg.mxu0
  %s3202 = scalar_lea.vmem %s7, 608
  %v3203 = vld [vmem:[%s3202] sm:$0xff]
  %v3204 = vld [vmem:[%s3202 + $0x8] sm:$0xff]
  %v3205 = vld [vmem:[%s3202 + $0x10] sm:$0xff]
  %v3206 = vld [vmem:[%s3202 + $0x18] sm:$0xff]
  %3207 = vmatpush.msra.mxu0 0.0
  %3208 = vmatpush.msra.mxu0 0.0
  %3209 = vmatpush.msra.mxu0 0.0
  %3210 = vmatpush.msra.mxu0 0.0
  %3211 = vmatpush.msra.mxu0 0.0
  %3212 = vmatpush.msra.mxu0 0.0
  %3213 = vmatpush.msra.mxu0 0.0
  %3214 = vmatpush.msra.mxu0 0.0
  %3215 = vmatpush.msra.mxu0 0.0
  %3216 = vmatpush.msra.mxu0 0.0
  %3217 = vmatpush.msra.mxu0 0.0
  %3218 = vmatpush.msra.mxu0 0.0
  %3219 = vmatpush.msra.mxu0 %v3206
  %3220 = vmatpush.msra.mxu0 %v3205
  %3221 = vmatpush.msra.mxu0 %v3204
  %3222 = vmatpush.msra.mxu0 %v3203
  %3223 = vmatmul.f32.gmra.mxu0 %v3180
  %v3224 = vpop.f32.mrf.mxu0
  %v3225 = vadd.f32 0.0, %v3224
  %3226 = vdwg.mxu0
  %v3227 = vadd.f32 %v3087, %v3225
  %v3228 = vadd.f32 %v316, %v3133
  %v3229 = vmul.f32 %v3228, %v424
  %v3230 = vtanh.pop %v3229
  %v3231 = vadd.f32 %v3230, 1.0
  %v3232 = vmul.f32 %v3231, 0.5
  %v3233 = vmul.f32 %v3232, %v3103
  %3235 = vrot.lane.b32.xlu0 %v3230, 32
  %v3236 = vpop.permute.xlu0 %3235
  %v3238 = vmul.f32 %v3232, %v3236
  %3240 = vrot.lane.b32.xlu0 %v3238, 32
  %v3241 = vpop.permute.xlu0 %3240
  %v3243 = vadd.f32 %v3233, %v3241
  %v3244 = vtanh.pop %v3243
  %3246 = vrot.lane.b32.xlu0 %v3244, 32
  %v3247 = vpop.permute.xlu0 %3246
  %v3249 = vmul.f32 %v3232, %v3247
  %3251 = vrot.lane.b32.xlu0 %v3249, 64
  %v3252 = vpop.permute.xlu0 %3251
  %v3253 = vsel %vm454, %v3252, 0
  %3255 = vmatpush.msra.mxu0 0.0
  %3256 = vmatpush.msra.mxu0 0.0
  %3257 = vmatpush.msra.mxu0 0.0
  %3258 = vmatpush.msra.mxu0 0.0
  %3259 = vmatpush.msra.mxu0 0.0
  %3260 = vmatpush.msra.mxu0 0.0
  %3261 = vmatpush.msra.mxu0 0.0
  %3262 = vmatpush.msra.mxu0 0.0
  %3263 = vmatpush.msra.mxu0 0.0
  %3264 = vmatpush.msra.mxu0 0.0
  %3265 = vmatpush.msra.mxu0 0.0
  %3266 = vmatpush.msra.mxu0 0.0
  %3267 = vmatpush.msra.mxu0 %v408
  %3268 = vmatpush.msra.mxu0 %v407
  %3269 = vmatpush.msra.mxu0 %v406
  %3270 = vmatpush.msra.mxu0 %v405
  %3271 = vmatmul.f32.gmra.mxu0 %v3253
  %v3272 = vpop.f32.mrf.mxu0
  %v3273 = vadd.f32 0.0, %v3272
  %3274 = vdwg.mxu0
  %3275 = vmatpush.msra.mxu0 0.0
  %3276 = vmatpush.msra.mxu0 0.0
  %3277 = vmatpush.msra.mxu0 0.0
  %3278 = vmatpush.msra.mxu0 0.0
  %3279 = vmatpush.msra.mxu0 0.0
  %3280 = vmatpush.msra.mxu0 0.0
  %3281 = vmatpush.msra.mxu0 0.0
  %3282 = vmatpush.msra.mxu0 0.0
  %3283 = vmatpush.msra.mxu0 0.0
  %3284 = vmatpush.msra.mxu0 0.0
  %3285 = vmatpush.msra.mxu0 0.0
  %3286 = vmatpush.msra.mxu0 0.0
  %3287 = vmatpush.msra.mxu0 %v412
  %3288 = vmatpush.msra.mxu0 %v411
  %3289 = vmatpush.msra.mxu0 %v410
  %3290 = vmatpush.msra.mxu0 %v409
  %3291 = vmatmul.f32.gmra.mxu0 %v3253
  %v3292 = vpop.f32.mrf.mxu0
  %v3293 = vadd.f32 %v3200, %v3292
  %3294 = vdwg.mxu0
  %v3295 = vadd.f32 %v3293, %v419
  %v3296 = vmul.f32 %v3295, %v424
  %v3297 = vtanh.pop %v3296
  %v3298 = vadd.f32 %v3297, 1.0
  %v3299 = vmul.f32 %v3298, 0.5
  %v3300 = vmul.f32 %v3299, %v3170
  %3302 = vrot.lane.b32.xlu0 %v3297, 32
  %v3303 = vpop.permute.xlu0 %3302
  %v3305 = vmul.f32 %v3299, %v3303
  %3307 = vrot.lane.b32.xlu0 %v3305, 32
  %v3308 = vpop.permute.xlu0 %3307
  %v3310 = vadd.f32 %v3300, %v3308
  %v3311 = vtanh.pop %v3310
  %3313 = vrot.lane.b32.xlu0 %v3311, 32
  %v3314 = vpop.permute.xlu0 %3313
  %v3316 = vmul.f32 %v3299, %v3314
  %3318 = vrot.lane.b32.xlu0 %v3316, 64
  %v3319 = vpop.permute.xlu0 %3318
  %v3320 = vsel %vm454, %v3319, 0
  %3322 = vmatpush.msra.mxu0 0.0
  %3323 = vmatpush.msra.mxu0 0.0
  %3324 = vmatpush.msra.mxu0 0.0
  %3325 = vmatpush.msra.mxu0 0.0
  %3326 = vmatpush.msra.mxu0 0.0
  %3327 = vmatpush.msra.mxu0 0.0
  %3328 = vmatpush.msra.mxu0 0.0
  %3329 = vmatpush.msra.mxu0 0.0
  %3330 = vmatpush.msra.mxu0 0.0
  %3331 = vmatpush.msra.mxu0 0.0
  %3332 = vmatpush.msra.mxu0 0.0
  %3333 = vmatpush.msra.mxu0 0.0
  %3334 = vmatpush.msra.mxu0 %v416
  %3335 = vmatpush.msra.mxu0 %v415
  %3336 = vmatpush.msra.mxu0 %v414
  %3337 = vmatpush.msra.mxu0 %v413
  %3338 = vmatmul.f32.gmra.mxu0 %v3320
  %v3339 = vpop.f32.mrf.mxu0
  %v3340 = vadd.f32 0.0, %v3339
  %3341 = vdwg.mxu0
  %s3342 = scalar_lea.vmem %s7, 640
  %v3343 = vld [vmem:[%s3342] sm:$0xff]
  %v3344 = vld [vmem:[%s3342 + $0x8] sm:$0xff]
  %v3345 = vld [vmem:[%s3342 + $0x10] sm:$0xff]
  %v3346 = vld [vmem:[%s3342 + $0x18] sm:$0xff]
  %3347 = vmatpush.msra.mxu0 0.0
  %3348 = vmatpush.msra.mxu0 0.0
  %3349 = vmatpush.msra.mxu0 0.0
  %3350 = vmatpush.msra.mxu0 0.0
  %3351 = vmatpush.msra.mxu0 0.0
  %3352 = vmatpush.msra.mxu0 0.0
  %3353 = vmatpush.msra.mxu0 0.0
  %3354 = vmatpush.msra.mxu0 0.0
  %3355 = vmatpush.msra.mxu0 0.0
  %3356 = vmatpush.msra.mxu0 0.0
  %3357 = vmatpush.msra.mxu0 0.0
  %3358 = vmatpush.msra.mxu0 0.0
  %3359 = vmatpush.msra.mxu0 %v3346
  %3360 = vmatpush.msra.mxu0 %v3345
  %3361 = vmatpush.msra.mxu0 %v3344
  %3362 = vmatpush.msra.mxu0 %v3343
  %3363 = vmatmul.f32.gmra.mxu0 %v3320
  %v3364 = vpop.f32.mrf.mxu0
  %v3365 = vadd.f32 0.0, %v3364
  %3366 = vdwg.mxu0
  %v3367 = vadd.f32 %v3227, %v3365
  %v3368 = vadd.f32 %v319, %v3273
  %v3369 = vmul.f32 %v3368, %v424
  %v3370 = vtanh.pop %v3369
  %v3371 = vadd.f32 %v3370, 1.0
  %v3372 = vmul.f32 %v3371, 0.5
  %v3373 = vmul.f32 %v3372, %v3243
  %3375 = vrot.lane.b32.xlu0 %v3370, 32
  %v3376 = vpop.permute.xlu0 %3375
  %v3378 = vmul.f32 %v3372, %v3376
  %3380 = vrot.lane.b32.xlu0 %v3378, 32
  %v3381 = vpop.permute.xlu0 %3380
  %v3383 = vadd.f32 %v3373, %v3381
  %v3384 = vtanh.pop %v3383
  %3386 = vrot.lane.b32.xlu0 %v3384, 32
  %v3387 = vpop.permute.xlu0 %3386
  %v3389 = vmul.f32 %v3372, %v3387
  %3391 = vrot.lane.b32.xlu0 %v3389, 64
  %v3392 = vpop.permute.xlu0 %3391
  %v3393 = vsel %vm454, %v3392, 0
  %3395 = vmatpush.msra.mxu0 0.0
  %3396 = vmatpush.msra.mxu0 0.0
  %3397 = vmatpush.msra.mxu0 0.0
  %3398 = vmatpush.msra.mxu0 0.0
  %3399 = vmatpush.msra.mxu0 0.0
  %3400 = vmatpush.msra.mxu0 0.0
  %3401 = vmatpush.msra.mxu0 0.0
  %3402 = vmatpush.msra.mxu0 0.0
  %3403 = vmatpush.msra.mxu0 0.0
  %3404 = vmatpush.msra.mxu0 0.0
  %3405 = vmatpush.msra.mxu0 0.0
  %3406 = vmatpush.msra.mxu0 0.0
  %3407 = vmatpush.msra.mxu0 %v408
  %3408 = vmatpush.msra.mxu0 %v407
  %3409 = vmatpush.msra.mxu0 %v406
  %3410 = vmatpush.msra.mxu0 %v405
  %3411 = vmatmul.f32.gmra.mxu0 %v3393
  %v3412 = vpop.f32.mrf.mxu0
  %v3413 = vadd.f32 0.0, %v3412
  %3414 = vdwg.mxu0
  %3415 = vmatpush.msra.mxu0 0.0
  %3416 = vmatpush.msra.mxu0 0.0
  %3417 = vmatpush.msra.mxu0 0.0
  %3418 = vmatpush.msra.mxu0 0.0
  %3419 = vmatpush.msra.mxu0 0.0
  %3420 = vmatpush.msra.mxu0 0.0
  %3421 = vmatpush.msra.mxu0 0.0
  %3422 = vmatpush.msra.mxu0 0.0
  %3423 = vmatpush.msra.mxu0 0.0
  %3424 = vmatpush.msra.mxu0 0.0
  %3425 = vmatpush.msra.mxu0 0.0
  %3426 = vmatpush.msra.mxu0 0.0
  %3427 = vmatpush.msra.mxu0 %v412
  %3428 = vmatpush.msra.mxu0 %v411
  %3429 = vmatpush.msra.mxu0 %v410
  %3430 = vmatpush.msra.mxu0 %v409
  %3431 = vmatmul.f32.gmra.mxu0 %v3393
  %v3432 = vpop.f32.mrf.mxu0
  %v3433 = vadd.f32 %v3340, %v3432
  %3434 = vdwg.mxu0
  %v3435 = vadd.f32 %v3433, %v419
  %v3436 = vmul.f32 %v3435, %v424
  %v3437 = vtanh.pop %v3436
  %v3438 = vadd.f32 %v3437, 1.0
  %v3439 = vmul.f32 %v3438, 0.5
  %v3440 = vmul.f32 %v3439, %v3310
  %3442 = vrot.lane.b32.xlu0 %v3437, 32
  %v3443 = vpop.permute.xlu0 %3442
  %v3445 = vmul.f32 %v3439, %v3443
  %3447 = vrot.lane.b32.xlu0 %v3445, 32
  %v3448 = vpop.permute.xlu0 %3447
  %v3450 = vadd.f32 %v3440, %v3448
  %v3451 = vtanh.pop %v3450
  %3453 = vrot.lane.b32.xlu0 %v3451, 32
  %v3454 = vpop.permute.xlu0 %3453
  %v3456 = vmul.f32 %v3439, %v3454
  %3458 = vrot.lane.b32.xlu0 %v3456, 64
  %v3459 = vpop.permute.xlu0 %3458
  %v3460 = vsel %vm454, %v3459, 0
  %3462 = vmatpush.msra.mxu0 0.0
  %3463 = vmatpush.msra.mxu0 0.0
  %3464 = vmatpush.msra.mxu0 0.0
  %3465 = vmatpush.msra.mxu0 0.0
  %3466 = vmatpush.msra.mxu0 0.0
  %3467 = vmatpush.msra.mxu0 0.0
  %3468 = vmatpush.msra.mxu0 0.0
  %3469 = vmatpush.msra.mxu0 0.0
  %3470 = vmatpush.msra.mxu0 0.0
  %3471 = vmatpush.msra.mxu0 0.0
  %3472 = vmatpush.msra.mxu0 0.0
  %3473 = vmatpush.msra.mxu0 0.0
  %3474 = vmatpush.msra.mxu0 %v416
  %3475 = vmatpush.msra.mxu0 %v415
  %3476 = vmatpush.msra.mxu0 %v414
  %3477 = vmatpush.msra.mxu0 %v413
  %3478 = vmatmul.f32.gmra.mxu0 %v3460
  %v3479 = vpop.f32.mrf.mxu0
  %v3480 = vadd.f32 0.0, %v3479
  %3481 = vdwg.mxu0
  %s3482 = scalar_lea.vmem %s7, 672
  %v3483 = vld [vmem:[%s3482] sm:$0xff]
  %v3484 = vld [vmem:[%s3482 + $0x8] sm:$0xff]
  %v3485 = vld [vmem:[%s3482 + $0x10] sm:$0xff]
  %v3486 = vld [vmem:[%s3482 + $0x18] sm:$0xff]
  %3487 = vmatpush.msra.mxu0 0.0
  %3488 = vmatpush.msra.mxu0 0.0
  %3489 = vmatpush.msra.mxu0 0.0
  %3490 = vmatpush.msra.mxu0 0.0
  %3491 = vmatpush.msra.mxu0 0.0
  %3492 = vmatpush.msra.mxu0 0.0
  %3493 = vmatpush.msra.mxu0 0.0
  %3494 = vmatpush.msra.mxu0 0.0
  %3495 = vmatpush.msra.mxu0 0.0
  %3496 = vmatpush.msra.mxu0 0.0
  %3497 = vmatpush.msra.mxu0 0.0
  %3498 = vmatpush.msra.mxu0 0.0
  %3499 = vmatpush.msra.mxu0 %v3486
  %3500 = vmatpush.msra.mxu0 %v3485
  %3501 = vmatpush.msra.mxu0 %v3484
  %3502 = vmatpush.msra.mxu0 %v3483
  %3503 = vmatmul.f32.gmra.mxu0 %v3460
  %v3504 = vpop.f32.mrf.mxu0
  %v3505 = vadd.f32 0.0, %v3504
  %3506 = vdwg.mxu0
  %v3507 = vadd.f32 %v3367, %v3505
  %v3508 = vadd.f32 %v322, %v3413
  %v3509 = vmul.f32 %v3508, %v424
  %v3510 = vtanh.pop %v3509
  %v3511 = vadd.f32 %v3510, 1.0
  %v3512 = vmul.f32 %v3511, 0.5
  %v3513 = vmul.f32 %v3512, %v3383
  %3515 = vrot.lane.b32.xlu0 %v3510, 32
  %v3516 = vpop.permute.xlu0 %3515
  %v3518 = vmul.f32 %v3512, %v3516
  %3520 = vrot.lane.b32.xlu0 %v3518, 32
  %v3521 = vpop.permute.xlu0 %3520
  %v3523 = vadd.f32 %v3513, %v3521
  %v3524 = vtanh.pop %v3523
  %3526 = vrot.lane.b32.xlu0 %v3524, 32
  %v3527 = vpop.permute.xlu0 %3526
  %v3529 = vmul.f32 %v3512, %v3527
  %3531 = vrot.lane.b32.xlu0 %v3529, 64
  %v3532 = vpop.permute.xlu0 %3531
  %v3533 = vsel %vm454, %v3532, 0
  %3535 = vmatpush.msra.mxu0 0.0
  %3536 = vmatpush.msra.mxu0 0.0
  %3537 = vmatpush.msra.mxu0 0.0
  %3538 = vmatpush.msra.mxu0 0.0
  %3539 = vmatpush.msra.mxu0 0.0
  %3540 = vmatpush.msra.mxu0 0.0
  %3541 = vmatpush.msra.mxu0 0.0
  %3542 = vmatpush.msra.mxu0 0.0
  %3543 = vmatpush.msra.mxu0 0.0
  %3544 = vmatpush.msra.mxu0 0.0
  %3545 = vmatpush.msra.mxu0 0.0
  %3546 = vmatpush.msra.mxu0 0.0
  %3547 = vmatpush.msra.mxu0 %v408
  %3548 = vmatpush.msra.mxu0 %v407
  %3549 = vmatpush.msra.mxu0 %v406
  %3550 = vmatpush.msra.mxu0 %v405
  %3551 = vmatmul.f32.gmra.mxu0 %v3533
  %v3552 = vpop.f32.mrf.mxu0
  %v3553 = vadd.f32 0.0, %v3552
  %3554 = vdwg.mxu0
  %3555 = vmatpush.msra.mxu0 0.0
  %3556 = vmatpush.msra.mxu0 0.0
  %3557 = vmatpush.msra.mxu0 0.0
  %3558 = vmatpush.msra.mxu0 0.0
  %3559 = vmatpush.msra.mxu0 0.0
  %3560 = vmatpush.msra.mxu0 0.0
  %3561 = vmatpush.msra.mxu0 0.0
  %3562 = vmatpush.msra.mxu0 0.0
  %3563 = vmatpush.msra.mxu0 0.0
  %3564 = vmatpush.msra.mxu0 0.0
  %3565 = vmatpush.msra.mxu0 0.0
  %3566 = vmatpush.msra.mxu0 0.0
  %3567 = vmatpush.msra.mxu0 %v412
  %3568 = vmatpush.msra.mxu0 %v411
  %3569 = vmatpush.msra.mxu0 %v410
  %3570 = vmatpush.msra.mxu0 %v409
  %3571 = vmatmul.f32.gmra.mxu0 %v3533
  %v3572 = vpop.f32.mrf.mxu0
  %v3573 = vadd.f32 %v3480, %v3572
  %3574 = vdwg.mxu0
  %v3575 = vadd.f32 %v3573, %v419
  %v3576 = vmul.f32 %v3575, %v424
  %v3577 = vtanh.pop %v3576
  %v3578 = vadd.f32 %v3577, 1.0
  %v3579 = vmul.f32 %v3578, 0.5
  %v3580 = vmul.f32 %v3579, %v3450
  %3582 = vrot.lane.b32.xlu0 %v3577, 32
  %v3583 = vpop.permute.xlu0 %3582
  %v3585 = vmul.f32 %v3579, %v3583
  %3587 = vrot.lane.b32.xlu0 %v3585, 32
  %v3588 = vpop.permute.xlu0 %3587
  %v3590 = vadd.f32 %v3580, %v3588
  %v3591 = vtanh.pop %v3590
  %3593 = vrot.lane.b32.xlu0 %v3591, 32
  %v3594 = vpop.permute.xlu0 %3593
  %v3596 = vmul.f32 %v3579, %v3594
  %3598 = vrot.lane.b32.xlu0 %v3596, 64
  %v3599 = vpop.permute.xlu0 %3598
  %v3600 = vsel %vm454, %v3599, 0
  %3602 = vmatpush.msra.mxu0 0.0
  %3603 = vmatpush.msra.mxu0 0.0
  %3604 = vmatpush.msra.mxu0 0.0
  %3605 = vmatpush.msra.mxu0 0.0
  %3606 = vmatpush.msra.mxu0 0.0
  %3607 = vmatpush.msra.mxu0 0.0
  %3608 = vmatpush.msra.mxu0 0.0
  %3609 = vmatpush.msra.mxu0 0.0
  %3610 = vmatpush.msra.mxu0 0.0
  %3611 = vmatpush.msra.mxu0 0.0
  %3612 = vmatpush.msra.mxu0 0.0
  %3613 = vmatpush.msra.mxu0 0.0
  %3614 = vmatpush.msra.mxu0 %v416
  %3615 = vmatpush.msra.mxu0 %v415
  %3616 = vmatpush.msra.mxu0 %v414
  %3617 = vmatpush.msra.mxu0 %v413
  %3618 = vmatmul.f32.gmra.mxu0 %v3600
  %v3619 = vpop.f32.mrf.mxu0
  %v3620 = vadd.f32 0.0, %v3619
  %3621 = vdwg.mxu0
  %s3622 = scalar_lea.vmem %s7, 704
  %v3623 = vld [vmem:[%s3622] sm:$0xff]
  %v3624 = vld [vmem:[%s3622 + $0x8] sm:$0xff]
  %v3625 = vld [vmem:[%s3622 + $0x10] sm:$0xff]
  %v3626 = vld [vmem:[%s3622 + $0x18] sm:$0xff]
  %3627 = vmatpush.msra.mxu0 0.0
  %3628 = vmatpush.msra.mxu0 0.0
  %3629 = vmatpush.msra.mxu0 0.0
  %3630 = vmatpush.msra.mxu0 0.0
  %3631 = vmatpush.msra.mxu0 0.0
  %3632 = vmatpush.msra.mxu0 0.0
  %3633 = vmatpush.msra.mxu0 0.0
  %3634 = vmatpush.msra.mxu0 0.0
  %3635 = vmatpush.msra.mxu0 0.0
  %3636 = vmatpush.msra.mxu0 0.0
  %3637 = vmatpush.msra.mxu0 0.0
  %3638 = vmatpush.msra.mxu0 0.0
  %3639 = vmatpush.msra.mxu0 %v3626
  %3640 = vmatpush.msra.mxu0 %v3625
  %3641 = vmatpush.msra.mxu0 %v3624
  %3642 = vmatpush.msra.mxu0 %v3623
  %3643 = vmatmul.f32.gmra.mxu0 %v3600
  %v3644 = vpop.f32.mrf.mxu0
  %v3645 = vadd.f32 0.0, %v3644
  %3646 = vdwg.mxu0
  %v3647 = vadd.f32 %v3507, %v3645
  %v3648 = vadd.f32 %v325, %v3553
  %v3649 = vmul.f32 %v3648, %v424
  %v3650 = vtanh.pop %v3649
  %v3651 = vadd.f32 %v3650, 1.0
  %v3652 = vmul.f32 %v3651, 0.5
  %v3653 = vmul.f32 %v3652, %v3523
  %3655 = vrot.lane.b32.xlu0 %v3650, 32
  %v3656 = vpop.permute.xlu0 %3655
  %v3658 = vmul.f32 %v3652, %v3656
  %3660 = vrot.lane.b32.xlu0 %v3658, 32
  %v3661 = vpop.permute.xlu0 %3660
  %v3663 = vadd.f32 %v3653, %v3661
  %v3664 = vtanh.pop %v3663
  %3666 = vrot.lane.b32.xlu0 %v3664, 32
  %v3667 = vpop.permute.xlu0 %3666
  %v3669 = vmul.f32 %v3652, %v3667
  %3671 = vrot.lane.b32.xlu0 %v3669, 64
  %v3672 = vpop.permute.xlu0 %3671
  %v3673 = vsel %vm454, %v3672, 0
  %3675 = vmatpush.msra.mxu0 0.0
  %3676 = vmatpush.msra.mxu0 0.0
  %3677 = vmatpush.msra.mxu0 0.0
  %3678 = vmatpush.msra.mxu0 0.0
  %3679 = vmatpush.msra.mxu0 0.0
  %3680 = vmatpush.msra.mxu0 0.0
  %3681 = vmatpush.msra.mxu0 0.0
  %3682 = vmatpush.msra.mxu0 0.0
  %3683 = vmatpush.msra.mxu0 0.0
  %3684 = vmatpush.msra.mxu0 0.0
  %3685 = vmatpush.msra.mxu0 0.0
  %3686 = vmatpush.msra.mxu0 0.0
  %3687 = vmatpush.msra.mxu0 %v408
  %3688 = vmatpush.msra.mxu0 %v407
  %3689 = vmatpush.msra.mxu0 %v406
  %3690 = vmatpush.msra.mxu0 %v405
  %3691 = vmatmul.f32.gmra.mxu0 %v3673
  %v3692 = vpop.f32.mrf.mxu0
  %v3693 = vadd.f32 0.0, %v3692
  %3694 = vdwg.mxu0
  %3695 = vmatpush.msra.mxu0 0.0
  %3696 = vmatpush.msra.mxu0 0.0
  %3697 = vmatpush.msra.mxu0 0.0
  %3698 = vmatpush.msra.mxu0 0.0
  %3699 = vmatpush.msra.mxu0 0.0
  %3700 = vmatpush.msra.mxu0 0.0
  %3701 = vmatpush.msra.mxu0 0.0
  %3702 = vmatpush.msra.mxu0 0.0
  %3703 = vmatpush.msra.mxu0 0.0
  %3704 = vmatpush.msra.mxu0 0.0
  %3705 = vmatpush.msra.mxu0 0.0
  %3706 = vmatpush.msra.mxu0 0.0
  %3707 = vmatpush.msra.mxu0 %v412
  %3708 = vmatpush.msra.mxu0 %v411
  %3709 = vmatpush.msra.mxu0 %v410
  %3710 = vmatpush.msra.mxu0 %v409
  %3711 = vmatmul.f32.gmra.mxu0 %v3673
  %v3712 = vpop.f32.mrf.mxu0
  %v3713 = vadd.f32 %v3620, %v3712
  %3714 = vdwg.mxu0
  %v3715 = vadd.f32 %v3713, %v419
  %v3716 = vmul.f32 %v3715, %v424
  %v3717 = vtanh.pop %v3716
  %v3718 = vadd.f32 %v3717, 1.0
  %v3719 = vmul.f32 %v3718, 0.5
  %v3720 = vmul.f32 %v3719, %v3590
  %3722 = vrot.lane.b32.xlu0 %v3717, 32
  %v3723 = vpop.permute.xlu0 %3722
  %v3725 = vmul.f32 %v3719, %v3723
  %3727 = vrot.lane.b32.xlu0 %v3725, 32
  %v3728 = vpop.permute.xlu0 %3727
  %v3730 = vadd.f32 %v3720, %v3728
  %v3731 = vtanh.pop %v3730
  %3733 = vrot.lane.b32.xlu0 %v3731, 32
  %v3734 = vpop.permute.xlu0 %3733
  %v3736 = vmul.f32 %v3719, %v3734
  %3738 = vrot.lane.b32.xlu0 %v3736, 64
  %v3739 = vpop.permute.xlu0 %3738
  %v3740 = vsel %vm454, %v3739, 0
  %3742 = vmatpush.msra.mxu0 0.0
  %3743 = vmatpush.msra.mxu0 0.0
  %3744 = vmatpush.msra.mxu0 0.0
  %3745 = vmatpush.msra.mxu0 0.0
  %3746 = vmatpush.msra.mxu0 0.0
  %3747 = vmatpush.msra.mxu0 0.0
  %3748 = vmatpush.msra.mxu0 0.0
  %3749 = vmatpush.msra.mxu0 0.0
  %3750 = vmatpush.msra.mxu0 0.0
  %3751 = vmatpush.msra.mxu0 0.0
  %3752 = vmatpush.msra.mxu0 0.0
  %3753 = vmatpush.msra.mxu0 0.0
  %3754 = vmatpush.msra.mxu0 %v416
  %3755 = vmatpush.msra.mxu0 %v415
  %3756 = vmatpush.msra.mxu0 %v414
  %3757 = vmatpush.msra.mxu0 %v413
  %3758 = vmatmul.f32.gmra.mxu0 %v3740
  %v3759 = vpop.f32.mrf.mxu0
  %v3760 = vadd.f32 0.0, %v3759
  %3761 = vdwg.mxu0
  %s3762 = scalar_lea.vmem %s7, 736
  %v3763 = vld [vmem:[%s3762] sm:$0xff]
  %v3764 = vld [vmem:[%s3762 + $0x8] sm:$0xff]
  %v3765 = vld [vmem:[%s3762 + $0x10] sm:$0xff]
  %v3766 = vld [vmem:[%s3762 + $0x18] sm:$0xff]
  %3767 = vmatpush.msra.mxu0 0.0
  %3768 = vmatpush.msra.mxu0 0.0
  %3769 = vmatpush.msra.mxu0 0.0
  %3770 = vmatpush.msra.mxu0 0.0
  %3771 = vmatpush.msra.mxu0 0.0
  %3772 = vmatpush.msra.mxu0 0.0
  %3773 = vmatpush.msra.mxu0 0.0
  %3774 = vmatpush.msra.mxu0 0.0
  %3775 = vmatpush.msra.mxu0 0.0
  %3776 = vmatpush.msra.mxu0 0.0
  %3777 = vmatpush.msra.mxu0 0.0
  %3778 = vmatpush.msra.mxu0 0.0
  %3779 = vmatpush.msra.mxu0 %v3766
  %3780 = vmatpush.msra.mxu0 %v3765
  %3781 = vmatpush.msra.mxu0 %v3764
  %3782 = vmatpush.msra.mxu0 %v3763
  %3783 = vmatmul.f32.gmra.mxu0 %v3740
  %v3784 = vpop.f32.mrf.mxu0
  %v3785 = vadd.f32 0.0, %v3784
  %3786 = vdwg.mxu0
  %v3787 = vadd.f32 %v3647, %v3785
  %v3788 = vadd.f32 %v328, %v3693
  %v3789 = vmul.f32 %v3788, %v424
  %v3790 = vtanh.pop %v3789
  %v3791 = vadd.f32 %v3790, 1.0
  %v3792 = vmul.f32 %v3791, 0.5
  %v3793 = vmul.f32 %v3792, %v3663
  %3795 = vrot.lane.b32.xlu0 %v3790, 32
  %v3796 = vpop.permute.xlu0 %3795
  %v3798 = vmul.f32 %v3792, %v3796
  %3800 = vrot.lane.b32.xlu0 %v3798, 32
  %v3801 = vpop.permute.xlu0 %3800
  %v3803 = vadd.f32 %v3793, %v3801
  %v3804 = vtanh.pop %v3803
  %3806 = vrot.lane.b32.xlu0 %v3804, 32
  %v3807 = vpop.permute.xlu0 %3806
  %v3809 = vmul.f32 %v3792, %v3807
  %3811 = vrot.lane.b32.xlu0 %v3809, 64
  %v3812 = vpop.permute.xlu0 %3811
  %v3813 = vsel %vm454, %v3812, 0
  %3815 = vmatpush.msra.mxu0 0.0
  %3816 = vmatpush.msra.mxu0 0.0
  %3817 = vmatpush.msra.mxu0 0.0
  %3818 = vmatpush.msra.mxu0 0.0
  %3819 = vmatpush.msra.mxu0 0.0
  %3820 = vmatpush.msra.mxu0 0.0
  %3821 = vmatpush.msra.mxu0 0.0
  %3822 = vmatpush.msra.mxu0 0.0
  %3823 = vmatpush.msra.mxu0 0.0
  %3824 = vmatpush.msra.mxu0 0.0
  %3825 = vmatpush.msra.mxu0 0.0
  %3826 = vmatpush.msra.mxu0 0.0
  %3827 = vmatpush.msra.mxu0 %v408
  %3828 = vmatpush.msra.mxu0 %v407
  %3829 = vmatpush.msra.mxu0 %v406
  %3830 = vmatpush.msra.mxu0 %v405
  %3831 = vmatmul.f32.gmra.mxu0 %v3813
  %v3832 = vpop.f32.mrf.mxu0
  %v3833 = vadd.f32 0.0, %v3832
  %3834 = vdwg.mxu0
  %3835 = vmatpush.msra.mxu0 0.0
  %3836 = vmatpush.msra.mxu0 0.0
  %3837 = vmatpush.msra.mxu0 0.0
  %3838 = vmatpush.msra.mxu0 0.0
  %3839 = vmatpush.msra.mxu0 0.0
  %3840 = vmatpush.msra.mxu0 0.0
  %3841 = vmatpush.msra.mxu0 0.0
  %3842 = vmatpush.msra.mxu0 0.0
  %3843 = vmatpush.msra.mxu0 0.0
  %3844 = vmatpush.msra.mxu0 0.0
  %3845 = vmatpush.msra.mxu0 0.0
  %3846 = vmatpush.msra.mxu0 0.0
  %3847 = vmatpush.msra.mxu0 %v412
  %3848 = vmatpush.msra.mxu0 %v411
  %3849 = vmatpush.msra.mxu0 %v410
  %3850 = vmatpush.msra.mxu0 %v409
  %3851 = vmatmul.f32.gmra.mxu0 %v3813
  %v3852 = vpop.f32.mrf.mxu0
  %v3853 = vadd.f32 %v3760, %v3852
  %3854 = vdwg.mxu0
  %v3855 = vadd.f32 %v3853, %v419
  %v3856 = vmul.f32 %v3855, %v424
  %v3857 = vtanh.pop %v3856
  %v3858 = vadd.f32 %v3857, 1.0
  %v3859 = vmul.f32 %v3858, 0.5
  %v3860 = vmul.f32 %v3859, %v3730
  %3862 = vrot.lane.b32.xlu0 %v3857, 32
  %v3863 = vpop.permute.xlu0 %3862
  %v3865 = vmul.f32 %v3859, %v3863
  %3867 = vrot.lane.b32.xlu0 %v3865, 32
  %v3868 = vpop.permute.xlu0 %3867
  %v3870 = vadd.f32 %v3860, %v3868
  %v3871 = vtanh.pop %v3870
  %3873 = vrot.lane.b32.xlu0 %v3871, 32
  %v3874 = vpop.permute.xlu0 %3873
  %v3876 = vmul.f32 %v3859, %v3874
  %3878 = vrot.lane.b32.xlu0 %v3876, 64
  %v3879 = vpop.permute.xlu0 %3878
  %v3880 = vsel %vm454, %v3879, 0
  %3882 = vmatpush.msra.mxu0 0.0
  %3883 = vmatpush.msra.mxu0 0.0
  %3884 = vmatpush.msra.mxu0 0.0
  %3885 = vmatpush.msra.mxu0 0.0
  %3886 = vmatpush.msra.mxu0 0.0
  %3887 = vmatpush.msra.mxu0 0.0
  %3888 = vmatpush.msra.mxu0 0.0
  %3889 = vmatpush.msra.mxu0 0.0
  %3890 = vmatpush.msra.mxu0 0.0
  %3891 = vmatpush.msra.mxu0 0.0
  %3892 = vmatpush.msra.mxu0 0.0
  %3893 = vmatpush.msra.mxu0 0.0
  %3894 = vmatpush.msra.mxu0 %v416
  %3895 = vmatpush.msra.mxu0 %v415
  %3896 = vmatpush.msra.mxu0 %v414
  %3897 = vmatpush.msra.mxu0 %v413
  %3898 = vmatmul.f32.gmra.mxu0 %v3880
  %v3899 = vpop.f32.mrf.mxu0
  %v3900 = vadd.f32 0.0, %v3899
  %3901 = vdwg.mxu0
  %s3902 = scalar_lea.vmem %s7, 768
  %v3903 = vld [vmem:[%s3902] sm:$0xff]
  %v3904 = vld [vmem:[%s3902 + $0x8] sm:$0xff]
  %v3905 = vld [vmem:[%s3902 + $0x10] sm:$0xff]
  %v3906 = vld [vmem:[%s3902 + $0x18] sm:$0xff]
  %3907 = vmatpush.msra.mxu0 0.0
  %3908 = vmatpush.msra.mxu0 0.0
  %3909 = vmatpush.msra.mxu0 0.0
  %3910 = vmatpush.msra.mxu0 0.0
  %3911 = vmatpush.msra.mxu0 0.0
  %3912 = vmatpush.msra.mxu0 0.0
  %3913 = vmatpush.msra.mxu0 0.0
  %3914 = vmatpush.msra.mxu0 0.0
  %3915 = vmatpush.msra.mxu0 0.0
  %3916 = vmatpush.msra.mxu0 0.0
  %3917 = vmatpush.msra.mxu0 0.0
  %3918 = vmatpush.msra.mxu0 0.0
  %3919 = vmatpush.msra.mxu0 %v3906
  %3920 = vmatpush.msra.mxu0 %v3905
  %3921 = vmatpush.msra.mxu0 %v3904
  %3922 = vmatpush.msra.mxu0 %v3903
  %3923 = vmatmul.f32.gmra.mxu0 %v3880
  %v3924 = vpop.f32.mrf.mxu0
  %v3925 = vadd.f32 0.0, %v3924
  %3926 = vdwg.mxu0
  %v3927 = vadd.f32 %v3787, %v3925
  %v3928 = vadd.f32 %v331, %v3833
  %v3929 = vmul.f32 %v3928, %v424
  %v3930 = vtanh.pop %v3929
  %v3931 = vadd.f32 %v3930, 1.0
  %v3932 = vmul.f32 %v3931, 0.5
  %v3933 = vmul.f32 %v3932, %v3803
  %3935 = vrot.lane.b32.xlu0 %v3930, 32
  %v3936 = vpop.permute.xlu0 %3935
  %v3938 = vmul.f32 %v3932, %v3936
  %3940 = vrot.lane.b32.xlu0 %v3938, 32
  %v3941 = vpop.permute.xlu0 %3940
  %v3943 = vadd.f32 %v3933, %v3941
  %v3944 = vtanh.pop %v3943
  %3946 = vrot.lane.b32.xlu0 %v3944, 32
  %v3947 = vpop.permute.xlu0 %3946
  %v3949 = vmul.f32 %v3932, %v3947
  %3951 = vrot.lane.b32.xlu0 %v3949, 64
  %v3952 = vpop.permute.xlu0 %3951
  %v3953 = vsel %vm454, %v3952, 0
  %3955 = vmatpush.msra.mxu0 0.0
  %3956 = vmatpush.msra.mxu0 0.0
  %3957 = vmatpush.msra.mxu0 0.0
  %3958 = vmatpush.msra.mxu0 0.0
  %3959 = vmatpush.msra.mxu0 0.0
  %3960 = vmatpush.msra.mxu0 0.0
  %3961 = vmatpush.msra.mxu0 0.0
  %3962 = vmatpush.msra.mxu0 0.0
  %3963 = vmatpush.msra.mxu0 0.0
  %3964 = vmatpush.msra.mxu0 0.0
  %3965 = vmatpush.msra.mxu0 0.0
  %3966 = vmatpush.msra.mxu0 0.0
  %3967 = vmatpush.msra.mxu0 %v408
  %3968 = vmatpush.msra.mxu0 %v407
  %3969 = vmatpush.msra.mxu0 %v406
  %3970 = vmatpush.msra.mxu0 %v405
  %3971 = vmatmul.f32.gmra.mxu0 %v3953
  %v3972 = vpop.f32.mrf.mxu0
  %v3973 = vadd.f32 0.0, %v3972
  %3974 = vdwg.mxu0
  %3975 = vmatpush.msra.mxu0 0.0
  %3976 = vmatpush.msra.mxu0 0.0
  %3977 = vmatpush.msra.mxu0 0.0
  %3978 = vmatpush.msra.mxu0 0.0
  %3979 = vmatpush.msra.mxu0 0.0
  %3980 = vmatpush.msra.mxu0 0.0
  %3981 = vmatpush.msra.mxu0 0.0
  %3982 = vmatpush.msra.mxu0 0.0
  %3983 = vmatpush.msra.mxu0 0.0
  %3984 = vmatpush.msra.mxu0 0.0
  %3985 = vmatpush.msra.mxu0 0.0
  %3986 = vmatpush.msra.mxu0 0.0
  %3987 = vmatpush.msra.mxu0 %v412
  %3988 = vmatpush.msra.mxu0 %v411
  %3989 = vmatpush.msra.mxu0 %v410
  %3990 = vmatpush.msra.mxu0 %v409
  %3991 = vmatmul.f32.gmra.mxu0 %v3953
  %v3992 = vpop.f32.mrf.mxu0
  %v3993 = vadd.f32 %v3900, %v3992
  %3994 = vdwg.mxu0
  %v3995 = vadd.f32 %v3993, %v419
  %v3996 = vmul.f32 %v3995, %v424
  %v3997 = vtanh.pop %v3996
  %v3998 = vadd.f32 %v3997, 1.0
  %v3999 = vmul.f32 %v3998, 0.5
  %v4000 = vmul.f32 %v3999, %v3870
  %4002 = vrot.lane.b32.xlu0 %v3997, 32
  %v4003 = vpop.permute.xlu0 %4002
  %v4005 = vmul.f32 %v3999, %v4003
  %4007 = vrot.lane.b32.xlu0 %v4005, 32
  %v4008 = vpop.permute.xlu0 %4007
  %v4010 = vadd.f32 %v4000, %v4008
  %v4011 = vtanh.pop %v4010
  %4013 = vrot.lane.b32.xlu0 %v4011, 32
  %v4014 = vpop.permute.xlu0 %4013
  %v4016 = vmul.f32 %v3999, %v4014
  %4018 = vrot.lane.b32.xlu0 %v4016, 64
  %v4019 = vpop.permute.xlu0 %4018
  %v4020 = vsel %vm454, %v4019, 0
  %4022 = vmatpush.msra.mxu0 0.0
  %4023 = vmatpush.msra.mxu0 0.0
  %4024 = vmatpush.msra.mxu0 0.0
  %4025 = vmatpush.msra.mxu0 0.0
  %4026 = vmatpush.msra.mxu0 0.0
  %4027 = vmatpush.msra.mxu0 0.0
  %4028 = vmatpush.msra.mxu0 0.0
  %4029 = vmatpush.msra.mxu0 0.0
  %4030 = vmatpush.msra.mxu0 0.0
  %4031 = vmatpush.msra.mxu0 0.0
  %4032 = vmatpush.msra.mxu0 0.0
  %4033 = vmatpush.msra.mxu0 0.0
  %4034 = vmatpush.msra.mxu0 %v416
  %4035 = vmatpush.msra.mxu0 %v415
  %4036 = vmatpush.msra.mxu0 %v414
  %4037 = vmatpush.msra.mxu0 %v413
  %4038 = vmatmul.f32.gmra.mxu0 %v4020
  %v4039 = vpop.f32.mrf.mxu0
  %v4040 = vadd.f32 0.0, %v4039
  %4041 = vdwg.mxu0
  %s4042 = scalar_lea.vmem %s7, 800
  %v4043 = vld [vmem:[%s4042] sm:$0xff]
  %v4044 = vld [vmem:[%s4042 + $0x8] sm:$0xff]
  %v4045 = vld [vmem:[%s4042 + $0x10] sm:$0xff]
  %v4046 = vld [vmem:[%s4042 + $0x18] sm:$0xff]
  %4047 = vmatpush.msra.mxu0 0.0
  %4048 = vmatpush.msra.mxu0 0.0
  %4049 = vmatpush.msra.mxu0 0.0
  %4050 = vmatpush.msra.mxu0 0.0
  %4051 = vmatpush.msra.mxu0 0.0
  %4052 = vmatpush.msra.mxu0 0.0
  %4053 = vmatpush.msra.mxu0 0.0
  %4054 = vmatpush.msra.mxu0 0.0
  %4055 = vmatpush.msra.mxu0 0.0
  %4056 = vmatpush.msra.mxu0 0.0
  %4057 = vmatpush.msra.mxu0 0.0
  %4058 = vmatpush.msra.mxu0 0.0
  %4059 = vmatpush.msra.mxu0 %v4046
  %4060 = vmatpush.msra.mxu0 %v4045
  %4061 = vmatpush.msra.mxu0 %v4044
  %4062 = vmatpush.msra.mxu0 %v4043
  %4063 = vmatmul.f32.gmra.mxu0 %v4020
  %v4064 = vpop.f32.mrf.mxu0
  %v4065 = vadd.f32 0.0, %v4064
  %4066 = vdwg.mxu0
  %v4067 = vadd.f32 %v3927, %v4065
  %v4068 = vadd.f32 %v334, %v3973
  %v4069 = vmul.f32 %v4068, %v424
  %v4070 = vtanh.pop %v4069
  %v4071 = vadd.f32 %v4070, 1.0
  %v4072 = vmul.f32 %v4071, 0.5
  %v4073 = vmul.f32 %v4072, %v3943
  %4075 = vrot.lane.b32.xlu0 %v4070, 32
  %v4076 = vpop.permute.xlu0 %4075
  %v4078 = vmul.f32 %v4072, %v4076
  %4080 = vrot.lane.b32.xlu0 %v4078, 32
  %v4081 = vpop.permute.xlu0 %4080
  %v4083 = vadd.f32 %v4073, %v4081
  %v4084 = vtanh.pop %v4083
  %4086 = vrot.lane.b32.xlu0 %v4084, 32
  %v4087 = vpop.permute.xlu0 %4086
  %v4089 = vmul.f32 %v4072, %v4087
  %4091 = vrot.lane.b32.xlu0 %v4089, 64
  %v4092 = vpop.permute.xlu0 %4091
  %v4093 = vsel %vm454, %v4092, 0
  %4095 = vmatpush.msra.mxu0 0.0
  %4096 = vmatpush.msra.mxu0 0.0
  %4097 = vmatpush.msra.mxu0 0.0
  %4098 = vmatpush.msra.mxu0 0.0
  %4099 = vmatpush.msra.mxu0 0.0
  %4100 = vmatpush.msra.mxu0 0.0
  %4101 = vmatpush.msra.mxu0 0.0
  %4102 = vmatpush.msra.mxu0 0.0
  %4103 = vmatpush.msra.mxu0 0.0
  %4104 = vmatpush.msra.mxu0 0.0
  %4105 = vmatpush.msra.mxu0 0.0
  %4106 = vmatpush.msra.mxu0 0.0
  %4107 = vmatpush.msra.mxu0 %v408
  %4108 = vmatpush.msra.mxu0 %v407
  %4109 = vmatpush.msra.mxu0 %v406
  %4110 = vmatpush.msra.mxu0 %v405
  %4111 = vmatmul.f32.gmra.mxu0 %v4093
  %v4112 = vpop.f32.mrf.mxu0
  %v4113 = vadd.f32 0.0, %v4112
  %4114 = vdwg.mxu0
  %4115 = vmatpush.msra.mxu0 0.0
  %4116 = vmatpush.msra.mxu0 0.0
  %4117 = vmatpush.msra.mxu0 0.0
  %4118 = vmatpush.msra.mxu0 0.0
  %4119 = vmatpush.msra.mxu0 0.0
  %4120 = vmatpush.msra.mxu0 0.0
  %4121 = vmatpush.msra.mxu0 0.0
  %4122 = vmatpush.msra.mxu0 0.0
  %4123 = vmatpush.msra.mxu0 0.0
  %4124 = vmatpush.msra.mxu0 0.0
  %4125 = vmatpush.msra.mxu0 0.0
  %4126 = vmatpush.msra.mxu0 0.0
  %4127 = vmatpush.msra.mxu0 %v412
  %4128 = vmatpush.msra.mxu0 %v411
  %4129 = vmatpush.msra.mxu0 %v410
  %4130 = vmatpush.msra.mxu0 %v409
  %4131 = vmatmul.f32.gmra.mxu0 %v4093
  %v4132 = vpop.f32.mrf.mxu0
  %v4133 = vadd.f32 %v4040, %v4132
  %4134 = vdwg.mxu0
  %v4135 = vadd.f32 %v4133, %v419
  %v4136 = vmul.f32 %v4135, %v424
  %v4137 = vtanh.pop %v4136
  %v4138 = vadd.f32 %v4137, 1.0
  %v4139 = vmul.f32 %v4138, 0.5
  %v4140 = vmul.f32 %v4139, %v4010
  %4142 = vrot.lane.b32.xlu0 %v4137, 32
  %v4143 = vpop.permute.xlu0 %4142
  %v4145 = vmul.f32 %v4139, %v4143
  %4147 = vrot.lane.b32.xlu0 %v4145, 32
  %v4148 = vpop.permute.xlu0 %4147
  %v4150 = vadd.f32 %v4140, %v4148
  %v4151 = vtanh.pop %v4150
  %4153 = vrot.lane.b32.xlu0 %v4151, 32
  %v4154 = vpop.permute.xlu0 %4153
  %v4156 = vmul.f32 %v4139, %v4154
  %4158 = vrot.lane.b32.xlu0 %v4156, 64
  %v4159 = vpop.permute.xlu0 %4158
  %v4160 = vsel %vm454, %v4159, 0
  %4162 = vmatpush.msra.mxu0 0.0
  %4163 = vmatpush.msra.mxu0 0.0
  %4164 = vmatpush.msra.mxu0 0.0
  %4165 = vmatpush.msra.mxu0 0.0
  %4166 = vmatpush.msra.mxu0 0.0
  %4167 = vmatpush.msra.mxu0 0.0
  %4168 = vmatpush.msra.mxu0 0.0
  %4169 = vmatpush.msra.mxu0 0.0
  %4170 = vmatpush.msra.mxu0 0.0
  %4171 = vmatpush.msra.mxu0 0.0
  %4172 = vmatpush.msra.mxu0 0.0
  %4173 = vmatpush.msra.mxu0 0.0
  %4174 = vmatpush.msra.mxu0 %v416
  %4175 = vmatpush.msra.mxu0 %v415
  %4176 = vmatpush.msra.mxu0 %v414
  %4177 = vmatpush.msra.mxu0 %v413
  %4178 = vmatmul.f32.gmra.mxu0 %v4160
  %v4179 = vpop.f32.mrf.mxu0
  %v4180 = vadd.f32 0.0, %v4179
  %4181 = vdwg.mxu0
  %s4182 = scalar_lea.vmem %s7, 832
  %v4183 = vld [vmem:[%s4182] sm:$0xff]
  %v4184 = vld [vmem:[%s4182 + $0x8] sm:$0xff]
  %v4185 = vld [vmem:[%s4182 + $0x10] sm:$0xff]
  %v4186 = vld [vmem:[%s4182 + $0x18] sm:$0xff]
  %4187 = vmatpush.msra.mxu0 0.0
  %4188 = vmatpush.msra.mxu0 0.0
  %4189 = vmatpush.msra.mxu0 0.0
  %4190 = vmatpush.msra.mxu0 0.0
  %4191 = vmatpush.msra.mxu0 0.0
  %4192 = vmatpush.msra.mxu0 0.0
  %4193 = vmatpush.msra.mxu0 0.0
  %4194 = vmatpush.msra.mxu0 0.0
  %4195 = vmatpush.msra.mxu0 0.0
  %4196 = vmatpush.msra.mxu0 0.0
  %4197 = vmatpush.msra.mxu0 0.0
  %4198 = vmatpush.msra.mxu0 0.0
  %4199 = vmatpush.msra.mxu0 %v4186
  %4200 = vmatpush.msra.mxu0 %v4185
  %4201 = vmatpush.msra.mxu0 %v4184
  %4202 = vmatpush.msra.mxu0 %v4183
  %4203 = vmatmul.f32.gmra.mxu0 %v4160
  %v4204 = vpop.f32.mrf.mxu0
  %v4205 = vadd.f32 0.0, %v4204
  %4206 = vdwg.mxu0
  %v4207 = vadd.f32 %v4067, %v4205
  %v4208 = vadd.f32 %v337, %v4113
  %v4209 = vmul.f32 %v4208, %v424
  %v4210 = vtanh.pop %v4209
  %v4211 = vadd.f32 %v4210, 1.0
  %v4212 = vmul.f32 %v4211, 0.5
  %v4213 = vmul.f32 %v4212, %v4083
  %4215 = vrot.lane.b32.xlu0 %v4210, 32
  %v4216 = vpop.permute.xlu0 %4215
  %v4218 = vmul.f32 %v4212, %v4216
  %4220 = vrot.lane.b32.xlu0 %v4218, 32
  %v4221 = vpop.permute.xlu0 %4220
  %v4223 = vadd.f32 %v4213, %v4221
  %v4224 = vtanh.pop %v4223
  %4226 = vrot.lane.b32.xlu0 %v4224, 32
  %v4227 = vpop.permute.xlu0 %4226
  %v4229 = vmul.f32 %v4212, %v4227
  %4231 = vrot.lane.b32.xlu0 %v4229, 64
  %v4232 = vpop.permute.xlu0 %4231
  %v4233 = vsel %vm454, %v4232, 0
  %4235 = vmatpush.msra.mxu0 0.0
  %4236 = vmatpush.msra.mxu0 0.0
  %4237 = vmatpush.msra.mxu0 0.0
  %4238 = vmatpush.msra.mxu0 0.0
  %4239 = vmatpush.msra.mxu0 0.0
  %4240 = vmatpush.msra.mxu0 0.0
  %4241 = vmatpush.msra.mxu0 0.0
  %4242 = vmatpush.msra.mxu0 0.0
  %4243 = vmatpush.msra.mxu0 0.0
  %4244 = vmatpush.msra.mxu0 0.0
  %4245 = vmatpush.msra.mxu0 0.0
  %4246 = vmatpush.msra.mxu0 0.0
  %4247 = vmatpush.msra.mxu0 %v408
  %4248 = vmatpush.msra.mxu0 %v407
  %4249 = vmatpush.msra.mxu0 %v406
  %4250 = vmatpush.msra.mxu0 %v405
  %4251 = vmatmul.f32.gmra.mxu0 %v4233
  %v4252 = vpop.f32.mrf.mxu0
  %v4253 = vadd.f32 0.0, %v4252
  %4254 = vdwg.mxu0
  %4255 = vmatpush.msra.mxu0 0.0
  %4256 = vmatpush.msra.mxu0 0.0
  %4257 = vmatpush.msra.mxu0 0.0
  %4258 = vmatpush.msra.mxu0 0.0
  %4259 = vmatpush.msra.mxu0 0.0
  %4260 = vmatpush.msra.mxu0 0.0
  %4261 = vmatpush.msra.mxu0 0.0
  %4262 = vmatpush.msra.mxu0 0.0
  %4263 = vmatpush.msra.mxu0 0.0
  %4264 = vmatpush.msra.mxu0 0.0
  %4265 = vmatpush.msra.mxu0 0.0
  %4266 = vmatpush.msra.mxu0 0.0
  %4267 = vmatpush.msra.mxu0 %v412
  %4268 = vmatpush.msra.mxu0 %v411
  %4269 = vmatpush.msra.mxu0 %v410
  %4270 = vmatpush.msra.mxu0 %v409
  %4271 = vmatmul.f32.gmra.mxu0 %v4233
  %v4272 = vpop.f32.mrf.mxu0
  %v4273 = vadd.f32 %v4180, %v4272
  %4274 = vdwg.mxu0
  %v4275 = vadd.f32 %v4273, %v419
  %v4276 = vmul.f32 %v4275, %v424
  %v4277 = vtanh.pop %v4276
  %v4278 = vadd.f32 %v4277, 1.0
  %v4279 = vmul.f32 %v4278, 0.5
  %v4280 = vmul.f32 %v4279, %v4150
  %4282 = vrot.lane.b32.xlu0 %v4277, 32
  %v4283 = vpop.permute.xlu0 %4282
  %v4285 = vmul.f32 %v4279, %v4283
  %4287 = vrot.lane.b32.xlu0 %v4285, 32
  %v4288 = vpop.permute.xlu0 %4287
  %v4290 = vadd.f32 %v4280, %v4288
  %v4291 = vtanh.pop %v4290
  %4293 = vrot.lane.b32.xlu0 %v4291, 32
  %v4294 = vpop.permute.xlu0 %4293
  %v4296 = vmul.f32 %v4279, %v4294
  %4298 = vrot.lane.b32.xlu0 %v4296, 64
  %v4299 = vpop.permute.xlu0 %4298
  %v4300 = vsel %vm454, %v4299, 0
  %4302 = vmatpush.msra.mxu0 0.0
  %4303 = vmatpush.msra.mxu0 0.0
  %4304 = vmatpush.msra.mxu0 0.0
  %4305 = vmatpush.msra.mxu0 0.0
  %4306 = vmatpush.msra.mxu0 0.0
  %4307 = vmatpush.msra.mxu0 0.0
  %4308 = vmatpush.msra.mxu0 0.0
  %4309 = vmatpush.msra.mxu0 0.0
  %4310 = vmatpush.msra.mxu0 0.0
  %4311 = vmatpush.msra.mxu0 0.0
  %4312 = vmatpush.msra.mxu0 0.0
  %4313 = vmatpush.msra.mxu0 0.0
  %4314 = vmatpush.msra.mxu0 %v416
  %4315 = vmatpush.msra.mxu0 %v415
  %4316 = vmatpush.msra.mxu0 %v414
  %4317 = vmatpush.msra.mxu0 %v413
  %4318 = vmatmul.f32.gmra.mxu0 %v4300
  %v4319 = vpop.f32.mrf.mxu0
  %v4320 = vadd.f32 0.0, %v4319
  %4321 = vdwg.mxu0
  %s4322 = scalar_lea.vmem %s7, 864
  %v4323 = vld [vmem:[%s4322] sm:$0xff]
  %v4324 = vld [vmem:[%s4322 + $0x8] sm:$0xff]
  %v4325 = vld [vmem:[%s4322 + $0x10] sm:$0xff]
  %v4326 = vld [vmem:[%s4322 + $0x18] sm:$0xff]
  %4327 = vmatpush.msra.mxu0 0.0
  %4328 = vmatpush.msra.mxu0 0.0
  %4329 = vmatpush.msra.mxu0 0.0
  %4330 = vmatpush.msra.mxu0 0.0
  %4331 = vmatpush.msra.mxu0 0.0
  %4332 = vmatpush.msra.mxu0 0.0
  %4333 = vmatpush.msra.mxu0 0.0
  %4334 = vmatpush.msra.mxu0 0.0
  %4335 = vmatpush.msra.mxu0 0.0
  %4336 = vmatpush.msra.mxu0 0.0
  %4337 = vmatpush.msra.mxu0 0.0
  %4338 = vmatpush.msra.mxu0 0.0
  %4339 = vmatpush.msra.mxu0 %v4326
  %4340 = vmatpush.msra.mxu0 %v4325
  %4341 = vmatpush.msra.mxu0 %v4324
  %4342 = vmatpush.msra.mxu0 %v4323
  %4343 = vmatmul.f32.gmra.mxu0 %v4300
  %v4344 = vpop.f32.mrf.mxu0
  %v4345 = vadd.f32 0.0, %v4344
  %4346 = vdwg.mxu0
  %v4347 = vadd.f32 %v4207, %v4345
  %v4348 = vadd.f32 %v340, %v4253
  %v4349 = vmul.f32 %v4348, %v424
  %v4350 = vtanh.pop %v4349
  %v4351 = vadd.f32 %v4350, 1.0
  %v4352 = vmul.f32 %v4351, 0.5
  %v4353 = vmul.f32 %v4352, %v4223
  %4355 = vrot.lane.b32.xlu0 %v4350, 32
  %v4356 = vpop.permute.xlu0 %4355
  %v4358 = vmul.f32 %v4352, %v4356
  %4360 = vrot.lane.b32.xlu0 %v4358, 32
  %v4361 = vpop.permute.xlu0 %4360
  %v4363 = vadd.f32 %v4353, %v4361
  %v4364 = vtanh.pop %v4363
  %4366 = vrot.lane.b32.xlu0 %v4364, 32
  %v4367 = vpop.permute.xlu0 %4366
  %v4369 = vmul.f32 %v4352, %v4367
  %4371 = vrot.lane.b32.xlu0 %v4369, 64
  %v4372 = vpop.permute.xlu0 %4371
  %v4373 = vsel %vm454, %v4372, 0
  %4375 = vmatpush.msra.mxu0 0.0
  %4376 = vmatpush.msra.mxu0 0.0
  %4377 = vmatpush.msra.mxu0 0.0
  %4378 = vmatpush.msra.mxu0 0.0
  %4379 = vmatpush.msra.mxu0 0.0
  %4380 = vmatpush.msra.mxu0 0.0
  %4381 = vmatpush.msra.mxu0 0.0
  %4382 = vmatpush.msra.mxu0 0.0
  %4383 = vmatpush.msra.mxu0 0.0
  %4384 = vmatpush.msra.mxu0 0.0
  %4385 = vmatpush.msra.mxu0 0.0
  %4386 = vmatpush.msra.mxu0 0.0
  %4387 = vmatpush.msra.mxu0 %v408
  %4388 = vmatpush.msra.mxu0 %v407
  %4389 = vmatpush.msra.mxu0 %v406
  %4390 = vmatpush.msra.mxu0 %v405
  %4391 = vmatmul.f32.gmra.mxu0 %v4373
  %v4392 = vpop.f32.mrf.mxu0
  %v4393 = vadd.f32 0.0, %v4392
  %4394 = vdwg.mxu0
  %4395 = vmatpush.msra.mxu0 0.0
  %4396 = vmatpush.msra.mxu0 0.0
  %4397 = vmatpush.msra.mxu0 0.0
  %4398 = vmatpush.msra.mxu0 0.0
  %4399 = vmatpush.msra.mxu0 0.0
  %4400 = vmatpush.msra.mxu0 0.0
  %4401 = vmatpush.msra.mxu0 0.0
  %4402 = vmatpush.msra.mxu0 0.0
  %4403 = vmatpush.msra.mxu0 0.0
  %4404 = vmatpush.msra.mxu0 0.0
  %4405 = vmatpush.msra.mxu0 0.0
  %4406 = vmatpush.msra.mxu0 0.0
  %4407 = vmatpush.msra.mxu0 %v412
  %4408 = vmatpush.msra.mxu0 %v411
  %4409 = vmatpush.msra.mxu0 %v410
  %4410 = vmatpush.msra.mxu0 %v409
  %4411 = vmatmul.f32.gmra.mxu0 %v4373
  %v4412 = vpop.f32.mrf.mxu0
  %v4413 = vadd.f32 %v4320, %v4412
  %4414 = vdwg.mxu0
  %v4415 = vadd.f32 %v4413, %v419
  %v4416 = vmul.f32 %v4415, %v424
  %v4417 = vtanh.pop %v4416
  %v4418 = vadd.f32 %v4417, 1.0
  %v4419 = vmul.f32 %v4418, 0.5
  %v4420 = vmul.f32 %v4419, %v4290
  %4422 = vrot.lane.b32.xlu0 %v4417, 32
  %v4423 = vpop.permute.xlu0 %4422
  %v4425 = vmul.f32 %v4419, %v4423
  %4427 = vrot.lane.b32.xlu0 %v4425, 32
  %v4428 = vpop.permute.xlu0 %4427
  %v4430 = vadd.f32 %v4420, %v4428
  %v4431 = vtanh.pop %v4430
  %4433 = vrot.lane.b32.xlu0 %v4431, 32
  %v4434 = vpop.permute.xlu0 %4433
  %v4436 = vmul.f32 %v4419, %v4434
  %4438 = vrot.lane.b32.xlu0 %v4436, 64
  %v4439 = vpop.permute.xlu0 %4438
  %v4440 = vsel %vm454, %v4439, 0
  %4442 = vmatpush.msra.mxu0 0.0
  %4443 = vmatpush.msra.mxu0 0.0
  %4444 = vmatpush.msra.mxu0 0.0
  %4445 = vmatpush.msra.mxu0 0.0
  %4446 = vmatpush.msra.mxu0 0.0
  %4447 = vmatpush.msra.mxu0 0.0
  %4448 = vmatpush.msra.mxu0 0.0
  %4449 = vmatpush.msra.mxu0 0.0
  %4450 = vmatpush.msra.mxu0 0.0
  %4451 = vmatpush.msra.mxu0 0.0
  %4452 = vmatpush.msra.mxu0 0.0
  %4453 = vmatpush.msra.mxu0 0.0
  %4454 = vmatpush.msra.mxu0 %v416
  %4455 = vmatpush.msra.mxu0 %v415
  %4456 = vmatpush.msra.mxu0 %v414
  %4457 = vmatpush.msra.mxu0 %v413
  %4458 = vmatmul.f32.gmra.mxu0 %v4440
  %v4459 = vpop.f32.mrf.mxu0
  %v4460 = vadd.f32 0.0, %v4459
  %4461 = vdwg.mxu0
  %s4462 = scalar_lea.vmem %s7, 896
  %v4463 = vld [vmem:[%s4462] sm:$0xff]
  %v4464 = vld [vmem:[%s4462 + $0x8] sm:$0xff]
  %v4465 = vld [vmem:[%s4462 + $0x10] sm:$0xff]
  %v4466 = vld [vmem:[%s4462 + $0x18] sm:$0xff]
  %4467 = vmatpush.msra.mxu0 0.0
  %4468 = vmatpush.msra.mxu0 0.0
  %4469 = vmatpush.msra.mxu0 0.0
  %4470 = vmatpush.msra.mxu0 0.0
  %4471 = vmatpush.msra.mxu0 0.0
  %4472 = vmatpush.msra.mxu0 0.0
  %4473 = vmatpush.msra.mxu0 0.0
  %4474 = vmatpush.msra.mxu0 0.0
  %4475 = vmatpush.msra.mxu0 0.0
  %4476 = vmatpush.msra.mxu0 0.0
  %4477 = vmatpush.msra.mxu0 0.0
  %4478 = vmatpush.msra.mxu0 0.0
  %4479 = vmatpush.msra.mxu0 %v4466
  %4480 = vmatpush.msra.mxu0 %v4465
  %4481 = vmatpush.msra.mxu0 %v4464
  %4482 = vmatpush.msra.mxu0 %v4463
  %4483 = vmatmul.f32.gmra.mxu0 %v4440
  %v4484 = vpop.f32.mrf.mxu0
  %v4485 = vadd.f32 0.0, %v4484
  %4486 = vdwg.mxu0
  %v4487 = vadd.f32 %v4347, %v4485
  %v4488 = vadd.f32 %v343, %v4393
  %v4489 = vmul.f32 %v4488, %v424
  %v4490 = vtanh.pop %v4489
  %v4491 = vadd.f32 %v4490, 1.0
  %v4492 = vmul.f32 %v4491, 0.5
  %v4493 = vmul.f32 %v4492, %v4363
  %4495 = vrot.lane.b32.xlu0 %v4490, 32
  %v4496 = vpop.permute.xlu0 %4495
  %v4498 = vmul.f32 %v4492, %v4496
  %4500 = vrot.lane.b32.xlu0 %v4498, 32
  %v4501 = vpop.permute.xlu0 %4500
  %v4503 = vadd.f32 %v4493, %v4501
  %v4504 = vtanh.pop %v4503
  %4506 = vrot.lane.b32.xlu0 %v4504, 32
  %v4507 = vpop.permute.xlu0 %4506
  %v4509 = vmul.f32 %v4492, %v4507
  %4511 = vrot.lane.b32.xlu0 %v4509, 64
  %v4512 = vpop.permute.xlu0 %4511
  %v4513 = vsel %vm454, %v4512, 0
  %4515 = vmatpush.msra.mxu0 0.0
  %4516 = vmatpush.msra.mxu0 0.0
  %4517 = vmatpush.msra.mxu0 0.0
  %4518 = vmatpush.msra.mxu0 0.0
  %4519 = vmatpush.msra.mxu0 0.0
  %4520 = vmatpush.msra.mxu0 0.0
  %4521 = vmatpush.msra.mxu0 0.0
  %4522 = vmatpush.msra.mxu0 0.0
  %4523 = vmatpush.msra.mxu0 0.0
  %4524 = vmatpush.msra.mxu0 0.0
  %4525 = vmatpush.msra.mxu0 0.0
  %4526 = vmatpush.msra.mxu0 0.0
  %4527 = vmatpush.msra.mxu0 %v408
  %4528 = vmatpush.msra.mxu0 %v407
  %4529 = vmatpush.msra.mxu0 %v406
  %4530 = vmatpush.msra.mxu0 %v405
  %4531 = vmatmul.f32.gmra.mxu0 %v4513
  %v4532 = vpop.f32.mrf.mxu0
  %v4533 = vadd.f32 0.0, %v4532
  %4534 = vdwg.mxu0
  %4535 = vmatpush.msra.mxu0 0.0
  %4536 = vmatpush.msra.mxu0 0.0
  %4537 = vmatpush.msra.mxu0 0.0
  %4538 = vmatpush.msra.mxu0 0.0
  %4539 = vmatpush.msra.mxu0 0.0
  %4540 = vmatpush.msra.mxu0 0.0
  %4541 = vmatpush.msra.mxu0 0.0
  %4542 = vmatpush.msra.mxu0 0.0
  %4543 = vmatpush.msra.mxu0 0.0
  %4544 = vmatpush.msra.mxu0 0.0
  %4545 = vmatpush.msra.mxu0 0.0
  %4546 = vmatpush.msra.mxu0 0.0
  %4547 = vmatpush.msra.mxu0 %v412
  %4548 = vmatpush.msra.mxu0 %v411
  %4549 = vmatpush.msra.mxu0 %v410
  %4550 = vmatpush.msra.mxu0 %v409
  %4551 = vmatmul.f32.gmra.mxu0 %v4513
  %v4552 = vpop.f32.mrf.mxu0
  %v4553 = vadd.f32 %v4460, %v4552
  %4554 = vdwg.mxu0
  %v4555 = vadd.f32 %v4553, %v419
  %v4556 = vmul.f32 %v4555, %v424
  %v4557 = vtanh.pop %v4556
  %v4558 = vadd.f32 %v4557, 1.0
  %v4559 = vmul.f32 %v4558, 0.5
  %v4560 = vmul.f32 %v4559, %v4430
  %4562 = vrot.lane.b32.xlu0 %v4557, 32
  %v4563 = vpop.permute.xlu0 %4562
  %v4565 = vmul.f32 %v4559, %v4563
  %4567 = vrot.lane.b32.xlu0 %v4565, 32
  %v4568 = vpop.permute.xlu0 %4567
  %v4570 = vadd.f32 %v4560, %v4568
  %v4571 = vtanh.pop %v4570
  %4573 = vrot.lane.b32.xlu0 %v4571, 32
  %v4574 = vpop.permute.xlu0 %4573
  %v4576 = vmul.f32 %v4559, %v4574
  %4578 = vrot.lane.b32.xlu0 %v4576, 64
  %v4579 = vpop.permute.xlu0 %4578
  %v4580 = vsel %vm454, %v4579, 0
  %4582 = vmatpush.msra.mxu0 0.0
  %4583 = vmatpush.msra.mxu0 0.0
  %4584 = vmatpush.msra.mxu0 0.0
  %4585 = vmatpush.msra.mxu0 0.0
  %4586 = vmatpush.msra.mxu0 0.0
  %4587 = vmatpush.msra.mxu0 0.0
  %4588 = vmatpush.msra.mxu0 0.0
  %4589 = vmatpush.msra.mxu0 0.0
  %4590 = vmatpush.msra.mxu0 0.0
  %4591 = vmatpush.msra.mxu0 0.0
  %4592 = vmatpush.msra.mxu0 0.0
  %4593 = vmatpush.msra.mxu0 0.0
  %4594 = vmatpush.msra.mxu0 %v416
  %4595 = vmatpush.msra.mxu0 %v415
  %4596 = vmatpush.msra.mxu0 %v414
  %4597 = vmatpush.msra.mxu0 %v413
  %4598 = vmatmul.f32.gmra.mxu0 %v4580
  %v4599 = vpop.f32.mrf.mxu0
  %v4600 = vadd.f32 0.0, %v4599
  %4601 = vdwg.mxu0
  %s4602 = scalar_lea.vmem %s7, 928
  %v4603 = vld [vmem:[%s4602] sm:$0xff]
  %v4604 = vld [vmem:[%s4602 + $0x8] sm:$0xff]
  %v4605 = vld [vmem:[%s4602 + $0x10] sm:$0xff]
  %v4606 = vld [vmem:[%s4602 + $0x18] sm:$0xff]
  %4607 = vmatpush.msra.mxu0 0.0
  %4608 = vmatpush.msra.mxu0 0.0
  %4609 = vmatpush.msra.mxu0 0.0
  %4610 = vmatpush.msra.mxu0 0.0
  %4611 = vmatpush.msra.mxu0 0.0
  %4612 = vmatpush.msra.mxu0 0.0
  %4613 = vmatpush.msra.mxu0 0.0
  %4614 = vmatpush.msra.mxu0 0.0
  %4615 = vmatpush.msra.mxu0 0.0
  %4616 = vmatpush.msra.mxu0 0.0
  %4617 = vmatpush.msra.mxu0 0.0
  %4618 = vmatpush.msra.mxu0 0.0
  %4619 = vmatpush.msra.mxu0 %v4606
  %4620 = vmatpush.msra.mxu0 %v4605
  %4621 = vmatpush.msra.mxu0 %v4604
  %4622 = vmatpush.msra.mxu0 %v4603
  %4623 = vmatmul.f32.gmra.mxu0 %v4580
  %v4624 = vpop.f32.mrf.mxu0
  %v4625 = vadd.f32 0.0, %v4624
  %4626 = vdwg.mxu0
  %v4627 = vadd.f32 %v4487, %v4625
  %v4628 = vadd.f32 %v346, %v4533
  %v4629 = vmul.f32 %v4628, %v424
  %v4630 = vtanh.pop %v4629
  %v4631 = vadd.f32 %v4630, 1.0
  %v4632 = vmul.f32 %v4631, 0.5
  %v4633 = vmul.f32 %v4632, %v4503
  %4635 = vrot.lane.b32.xlu0 %v4630, 32
  %v4636 = vpop.permute.xlu0 %4635
  %v4638 = vmul.f32 %v4632, %v4636
  %4640 = vrot.lane.b32.xlu0 %v4638, 32
  %v4641 = vpop.permute.xlu0 %4640
  %v4643 = vadd.f32 %v4633, %v4641
  %v4644 = vtanh.pop %v4643
  %4646 = vrot.lane.b32.xlu0 %v4644, 32
  %v4647 = vpop.permute.xlu0 %4646
  %v4649 = vmul.f32 %v4632, %v4647
  %4651 = vrot.lane.b32.xlu0 %v4649, 64
  %v4652 = vpop.permute.xlu0 %4651
  %v4653 = vsel %vm454, %v4652, 0
  %4655 = vmatpush.msra.mxu0 0.0
  %4656 = vmatpush.msra.mxu0 0.0
  %4657 = vmatpush.msra.mxu0 0.0
  %4658 = vmatpush.msra.mxu0 0.0
  %4659 = vmatpush.msra.mxu0 0.0
  %4660 = vmatpush.msra.mxu0 0.0
  %4661 = vmatpush.msra.mxu0 0.0
  %4662 = vmatpush.msra.mxu0 0.0
  %4663 = vmatpush.msra.mxu0 0.0
  %4664 = vmatpush.msra.mxu0 0.0
  %4665 = vmatpush.msra.mxu0 0.0
  %4666 = vmatpush.msra.mxu0 0.0
  %4667 = vmatpush.msra.mxu0 %v408
  %4668 = vmatpush.msra.mxu0 %v407
  %4669 = vmatpush.msra.mxu0 %v406
  %4670 = vmatpush.msra.mxu0 %v405
  %4671 = vmatmul.f32.gmra.mxu0 %v4653
  %v4672 = vpop.f32.mrf.mxu0
  %v4673 = vadd.f32 0.0, %v4672
  %4674 = vdwg.mxu0
  %4675 = vmatpush.msra.mxu0 0.0
  %4676 = vmatpush.msra.mxu0 0.0
  %4677 = vmatpush.msra.mxu0 0.0
  %4678 = vmatpush.msra.mxu0 0.0
  %4679 = vmatpush.msra.mxu0 0.0
  %4680 = vmatpush.msra.mxu0 0.0
  %4681 = vmatpush.msra.mxu0 0.0
  %4682 = vmatpush.msra.mxu0 0.0
  %4683 = vmatpush.msra.mxu0 0.0
  %4684 = vmatpush.msra.mxu0 0.0
  %4685 = vmatpush.msra.mxu0 0.0
  %4686 = vmatpush.msra.mxu0 0.0
  %4687 = vmatpush.msra.mxu0 %v412
  %4688 = vmatpush.msra.mxu0 %v411
  %4689 = vmatpush.msra.mxu0 %v410
  %4690 = vmatpush.msra.mxu0 %v409
  %4691 = vmatmul.f32.gmra.mxu0 %v4653
  %v4692 = vpop.f32.mrf.mxu0
  %v4693 = vadd.f32 %v4600, %v4692
  %4694 = vdwg.mxu0
  %v4695 = vadd.f32 %v4693, %v419
  %v4696 = vmul.f32 %v4695, %v424
  %v4697 = vtanh.pop %v4696
  %v4698 = vadd.f32 %v4697, 1.0
  %v4699 = vmul.f32 %v4698, 0.5
  %v4700 = vmul.f32 %v4699, %v4570
  %4702 = vrot.lane.b32.xlu0 %v4697, 32
  %v4703 = vpop.permute.xlu0 %4702
  %v4705 = vmul.f32 %v4699, %v4703
  %4707 = vrot.lane.b32.xlu0 %v4705, 32
  %v4708 = vpop.permute.xlu0 %4707
  %v4710 = vadd.f32 %v4700, %v4708
  %v4711 = vtanh.pop %v4710
  %4713 = vrot.lane.b32.xlu0 %v4711, 32
  %v4714 = vpop.permute.xlu0 %4713
  %v4716 = vmul.f32 %v4699, %v4714
  %4718 = vrot.lane.b32.xlu0 %v4716, 64
  %v4719 = vpop.permute.xlu0 %4718
  %v4720 = vsel %vm454, %v4719, 0
  %4722 = vmatpush.msra.mxu0 0.0
  %4723 = vmatpush.msra.mxu0 0.0
  %4724 = vmatpush.msra.mxu0 0.0
  %4725 = vmatpush.msra.mxu0 0.0
  %4726 = vmatpush.msra.mxu0 0.0
  %4727 = vmatpush.msra.mxu0 0.0
  %4728 = vmatpush.msra.mxu0 0.0
  %4729 = vmatpush.msra.mxu0 0.0
  %4730 = vmatpush.msra.mxu0 0.0
  %4731 = vmatpush.msra.mxu0 0.0
  %4732 = vmatpush.msra.mxu0 0.0
  %4733 = vmatpush.msra.mxu0 0.0
  %4734 = vmatpush.msra.mxu0 %v416
  %4735 = vmatpush.msra.mxu0 %v415
  %4736 = vmatpush.msra.mxu0 %v414
  %4737 = vmatpush.msra.mxu0 %v413
  %4738 = vmatmul.f32.gmra.mxu0 %v4720
  %v4739 = vpop.f32.mrf.mxu0
  %v4740 = vadd.f32 0.0, %v4739
  %4741 = vdwg.mxu0
  %s4742 = scalar_lea.vmem %s7, 960
  %v4743 = vld [vmem:[%s4742] sm:$0xff]
  %v4744 = vld [vmem:[%s4742 + $0x8] sm:$0xff]
  %v4745 = vld [vmem:[%s4742 + $0x10] sm:$0xff]
  %v4746 = vld [vmem:[%s4742 + $0x18] sm:$0xff]
  %4747 = vmatpush.msra.mxu0 0.0
  %4748 = vmatpush.msra.mxu0 0.0
  %4749 = vmatpush.msra.mxu0 0.0
  %4750 = vmatpush.msra.mxu0 0.0
  %4751 = vmatpush.msra.mxu0 0.0
  %4752 = vmatpush.msra.mxu0 0.0
  %4753 = vmatpush.msra.mxu0 0.0
  %4754 = vmatpush.msra.mxu0 0.0
  %4755 = vmatpush.msra.mxu0 0.0
  %4756 = vmatpush.msra.mxu0 0.0
  %4757 = vmatpush.msra.mxu0 0.0
  %4758 = vmatpush.msra.mxu0 0.0
  %4759 = vmatpush.msra.mxu0 %v4746
  %4760 = vmatpush.msra.mxu0 %v4745
  %4761 = vmatpush.msra.mxu0 %v4744
  %4762 = vmatpush.msra.mxu0 %v4743
  %4763 = vmatmul.f32.gmra.mxu0 %v4720
  %v4764 = vpop.f32.mrf.mxu0
  %v4765 = vadd.f32 0.0, %v4764
  %4766 = vdwg.mxu0
  %v4767 = vadd.f32 %v4627, %v4765
  %v4768 = vadd.f32 %v349, %v4673
  %v4769 = vmul.f32 %v4768, %v424
  %v4770 = vtanh.pop %v4769
  %v4771 = vadd.f32 %v4770, 1.0
  %v4772 = vmul.f32 %v4771, 0.5
  %v4773 = vmul.f32 %v4772, %v4643
  %4775 = vrot.lane.b32.xlu0 %v4770, 32
  %v4776 = vpop.permute.xlu0 %4775
  %v4778 = vmul.f32 %v4772, %v4776
  %4780 = vrot.lane.b32.xlu0 %v4778, 32
  %v4781 = vpop.permute.xlu0 %4780
  %v4783 = vadd.f32 %v4773, %v4781
  %v4784 = vtanh.pop %v4783
  %4786 = vrot.lane.b32.xlu0 %v4784, 32
  %v4787 = vpop.permute.xlu0 %4786
  %v4789 = vmul.f32 %v4772, %v4787
  %4791 = vrot.lane.b32.xlu0 %v4789, 64
  %v4792 = vpop.permute.xlu0 %4791
  %v4793 = vsel %vm454, %v4792, 0
  %4795 = vmatpush.msra.mxu0 0.0
  %4796 = vmatpush.msra.mxu0 0.0
  %4797 = vmatpush.msra.mxu0 0.0
  %4798 = vmatpush.msra.mxu0 0.0
  %4799 = vmatpush.msra.mxu0 0.0
  %4800 = vmatpush.msra.mxu0 0.0
  %4801 = vmatpush.msra.mxu0 0.0
  %4802 = vmatpush.msra.mxu0 0.0
  %4803 = vmatpush.msra.mxu0 0.0
  %4804 = vmatpush.msra.mxu0 0.0
  %4805 = vmatpush.msra.mxu0 0.0
  %4806 = vmatpush.msra.mxu0 0.0
  %4807 = vmatpush.msra.mxu0 %v408
  %4808 = vmatpush.msra.mxu0 %v407
  %4809 = vmatpush.msra.mxu0 %v406
  %4810 = vmatpush.msra.mxu0 %v405
  %4811 = vmatmul.f32.gmra.mxu0 %v4793
  %v4812 = vpop.f32.mrf.mxu0
  %v4813 = vadd.f32 0.0, %v4812
  %4814 = vdwg.mxu0
  %4815 = vmatpush.msra.mxu0 0.0
  %4816 = vmatpush.msra.mxu0 0.0
  %4817 = vmatpush.msra.mxu0 0.0
  %4818 = vmatpush.msra.mxu0 0.0
  %4819 = vmatpush.msra.mxu0 0.0
  %4820 = vmatpush.msra.mxu0 0.0
  %4821 = vmatpush.msra.mxu0 0.0
  %4822 = vmatpush.msra.mxu0 0.0
  %4823 = vmatpush.msra.mxu0 0.0
  %4824 = vmatpush.msra.mxu0 0.0
  %4825 = vmatpush.msra.mxu0 0.0
  %4826 = vmatpush.msra.mxu0 0.0
  %4827 = vmatpush.msra.mxu0 %v412
  %4828 = vmatpush.msra.mxu0 %v411
  %4829 = vmatpush.msra.mxu0 %v410
  %4830 = vmatpush.msra.mxu0 %v409
  %4831 = vmatmul.f32.gmra.mxu0 %v4793
  %v4832 = vpop.f32.mrf.mxu0
  %v4833 = vadd.f32 %v4740, %v4832
  %4834 = vdwg.mxu0
  %v4835 = vadd.f32 %v4833, %v419
  %v4836 = vmul.f32 %v4835, %v424
  %v4837 = vtanh.pop %v4836
  %v4838 = vadd.f32 %v4837, 1.0
  %v4839 = vmul.f32 %v4838, 0.5
  %v4840 = vmul.f32 %v4839, %v4710
  %4842 = vrot.lane.b32.xlu0 %v4837, 32
  %v4843 = vpop.permute.xlu0 %4842
  %v4845 = vmul.f32 %v4839, %v4843
  %4847 = vrot.lane.b32.xlu0 %v4845, 32
  %v4848 = vpop.permute.xlu0 %4847
  %v4850 = vadd.f32 %v4840, %v4848
  %v4851 = vtanh.pop %v4850
  %4853 = vrot.lane.b32.xlu0 %v4851, 32
  %v4854 = vpop.permute.xlu0 %4853
  %v4856 = vmul.f32 %v4839, %v4854
  %4858 = vrot.lane.b32.xlu0 %v4856, 64
  %v4859 = vpop.permute.xlu0 %4858
  %v4860 = vsel %vm454, %v4859, 0
  %4862 = vmatpush.msra.mxu0 0.0
  %4863 = vmatpush.msra.mxu0 0.0
  %4864 = vmatpush.msra.mxu0 0.0
  %4865 = vmatpush.msra.mxu0 0.0
  %4866 = vmatpush.msra.mxu0 0.0
  %4867 = vmatpush.msra.mxu0 0.0
  %4868 = vmatpush.msra.mxu0 0.0
  %4869 = vmatpush.msra.mxu0 0.0
  %4870 = vmatpush.msra.mxu0 0.0
  %4871 = vmatpush.msra.mxu0 0.0
  %4872 = vmatpush.msra.mxu0 0.0
  %4873 = vmatpush.msra.mxu0 0.0
  %4874 = vmatpush.msra.mxu0 %v416
  %4875 = vmatpush.msra.mxu0 %v415
  %4876 = vmatpush.msra.mxu0 %v414
  %4877 = vmatpush.msra.mxu0 %v413
  %4878 = vmatmul.f32.gmra.mxu0 %v4860
  %v4879 = vpop.f32.mrf.mxu0
  %v4880 = vadd.f32 0.0, %v4879
  %4881 = vdwg.mxu0
  %s4882 = scalar_lea.vmem %s7, 992
  %v4883 = vld [vmem:[%s4882] sm:$0xff]
  %v4884 = vld [vmem:[%s4882 + $0x8] sm:$0xff]
  %v4885 = vld [vmem:[%s4882 + $0x10] sm:$0xff]
  %v4886 = vld [vmem:[%s4882 + $0x18] sm:$0xff]
  %4887 = vmatpush.msra.mxu0 0.0
  %4888 = vmatpush.msra.mxu0 0.0
  %4889 = vmatpush.msra.mxu0 0.0
  %4890 = vmatpush.msra.mxu0 0.0
  %4891 = vmatpush.msra.mxu0 0.0
  %4892 = vmatpush.msra.mxu0 0.0
  %4893 = vmatpush.msra.mxu0 0.0
  %4894 = vmatpush.msra.mxu0 0.0
  %4895 = vmatpush.msra.mxu0 0.0
  %4896 = vmatpush.msra.mxu0 0.0
  %4897 = vmatpush.msra.mxu0 0.0
  %4898 = vmatpush.msra.mxu0 0.0
  %4899 = vmatpush.msra.mxu0 %v4886
  %4900 = vmatpush.msra.mxu0 %v4885
  %4901 = vmatpush.msra.mxu0 %v4884
  %4902 = vmatpush.msra.mxu0 %v4883
  %4903 = vmatmul.f32.gmra.mxu0 %v4860
  %v4904 = vpop.f32.mrf.mxu0
  %v4905 = vadd.f32 0.0, %v4904
  %4906 = vdwg.mxu0
  %v4907 = vadd.f32 %v4767, %v4905
  %v4908 = vadd.f32 %v352, %v4813
  %v4909 = vmul.f32 %v4908, %v424
  %v4910 = vtanh.pop %v4909
  %v4911 = vadd.f32 %v4910, 1.0
  %v4912 = vmul.f32 %v4911, 0.5
  %v4913 = vmul.f32 %v4912, %v4783
  %4915 = vrot.lane.b32.xlu0 %v4910, 32
  %v4916 = vpop.permute.xlu0 %4915
  %v4918 = vmul.f32 %v4912, %v4916
  %4920 = vrot.lane.b32.xlu0 %v4918, 32
  %v4921 = vpop.permute.xlu0 %4920
  %v4923 = vadd.f32 %v4913, %v4921
  %v4924 = vtanh.pop %v4923
  %4926 = vrot.lane.b32.xlu0 %v4924, 32
  %v4927 = vpop.permute.xlu0 %4926
  %v4929 = vmul.f32 %v4912, %v4927
  %4931 = vrot.lane.b32.xlu0 %v4929, 64
  %v4932 = vpop.permute.xlu0 %4931
  %v4933 = vsel %vm454, %v4932, 0
  %4935 = vmatpush.msra.mxu0 0.0
  %4936 = vmatpush.msra.mxu0 0.0
  %4937 = vmatpush.msra.mxu0 0.0
  %4938 = vmatpush.msra.mxu0 0.0
  %4939 = vmatpush.msra.mxu0 0.0
  %4940 = vmatpush.msra.mxu0 0.0
  %4941 = vmatpush.msra.mxu0 0.0
  %4942 = vmatpush.msra.mxu0 0.0
  %4943 = vmatpush.msra.mxu0 0.0
  %4944 = vmatpush.msra.mxu0 0.0
  %4945 = vmatpush.msra.mxu0 0.0
  %4946 = vmatpush.msra.mxu0 0.0
  %4947 = vmatpush.msra.mxu0 %v408
  %4948 = vmatpush.msra.mxu0 %v407
  %4949 = vmatpush.msra.mxu0 %v406
  %4950 = vmatpush.msra.mxu0 %v405
  %4951 = vmatmul.f32.gmra.mxu0 %v4933
  %v4952 = vpop.f32.mrf.mxu0
  %v4953 = vadd.f32 0.0, %v4952
  %4954 = vdwg.mxu0
  %4955 = vmatpush.msra.mxu0 0.0
  %4956 = vmatpush.msra.mxu0 0.0
  %4957 = vmatpush.msra.mxu0 0.0
  %4958 = vmatpush.msra.mxu0 0.0
  %4959 = vmatpush.msra.mxu0 0.0
  %4960 = vmatpush.msra.mxu0 0.0
  %4961 = vmatpush.msra.mxu0 0.0
  %4962 = vmatpush.msra.mxu0 0.0
  %4963 = vmatpush.msra.mxu0 0.0
  %4964 = vmatpush.msra.mxu0 0.0
  %4965 = vmatpush.msra.mxu0 0.0
  %4966 = vmatpush.msra.mxu0 0.0
  %4967 = vmatpush.msra.mxu0 %v412
  %4968 = vmatpush.msra.mxu0 %v411
  %4969 = vmatpush.msra.mxu0 %v410
  %4970 = vmatpush.msra.mxu0 %v409
  %4971 = vmatmul.f32.gmra.mxu0 %v4933
  %v4972 = vpop.f32.mrf.mxu0
  %v4973 = vadd.f32 %v4880, %v4972
  %4974 = vdwg.mxu0
  %v4975 = vadd.f32 %v4973, %v419
  %v4976 = vmul.f32 %v4975, %v424
  %v4977 = vtanh.pop %v4976
  %v4978 = vadd.f32 %v4977, 1.0
  %v4979 = vmul.f32 %v4978, 0.5
  %v4980 = vmul.f32 %v4979, %v4850
  %4982 = vrot.lane.b32.xlu0 %v4977, 32
  %v4983 = vpop.permute.xlu0 %4982
  %v4985 = vmul.f32 %v4979, %v4983
  %4987 = vrot.lane.b32.xlu0 %v4985, 32
  %v4988 = vpop.permute.xlu0 %4987
  %v4990 = vadd.f32 %v4980, %v4988
  %v4991 = vtanh.pop %v4990
  %4993 = vrot.lane.b32.xlu0 %v4991, 32
  %v4994 = vpop.permute.xlu0 %4993
  %v4996 = vmul.f32 %v4979, %v4994
  %4998 = vrot.lane.b32.xlu0 %v4996, 64
  %v4999 = vpop.permute.xlu0 %4998
  %v5000 = vsel %vm454, %v4999, 0
  %5002 = vmatpush.msra.mxu0 0.0
  %5003 = vmatpush.msra.mxu0 0.0
  %5004 = vmatpush.msra.mxu0 0.0
  %5005 = vmatpush.msra.mxu0 0.0
  %5006 = vmatpush.msra.mxu0 0.0
  %5007 = vmatpush.msra.mxu0 0.0
  %5008 = vmatpush.msra.mxu0 0.0
  %5009 = vmatpush.msra.mxu0 0.0
  %5010 = vmatpush.msra.mxu0 0.0
  %5011 = vmatpush.msra.mxu0 0.0
  %5012 = vmatpush.msra.mxu0 0.0
  %5013 = vmatpush.msra.mxu0 0.0
  %5014 = vmatpush.msra.mxu0 %v416
  %5015 = vmatpush.msra.mxu0 %v415
  %5016 = vmatpush.msra.mxu0 %v414
  %5017 = vmatpush.msra.mxu0 %v413
  %5018 = vmatmul.f32.gmra.mxu0 %v5000
  %v5019 = vpop.f32.mrf.mxu0
  %v5020 = vadd.f32 0.0, %v5019
  %5021 = vdwg.mxu0
  %s5022 = scalar_lea.vmem %s7, 1024
  %v5023 = vld [vmem:[%s5022] sm:$0xff]
  %v5024 = vld [vmem:[%s5022 + $0x8] sm:$0xff]
  %v5025 = vld [vmem:[%s5022 + $0x10] sm:$0xff]
  %v5026 = vld [vmem:[%s5022 + $0x18] sm:$0xff]
  %5027 = vmatpush.msra.mxu0 0.0
  %5028 = vmatpush.msra.mxu0 0.0
  %5029 = vmatpush.msra.mxu0 0.0
  %5030 = vmatpush.msra.mxu0 0.0
  %5031 = vmatpush.msra.mxu0 0.0
  %5032 = vmatpush.msra.mxu0 0.0
  %5033 = vmatpush.msra.mxu0 0.0
  %5034 = vmatpush.msra.mxu0 0.0
  %5035 = vmatpush.msra.mxu0 0.0
  %5036 = vmatpush.msra.mxu0 0.0
  %5037 = vmatpush.msra.mxu0 0.0
  %5038 = vmatpush.msra.mxu0 0.0
  %5039 = vmatpush.msra.mxu0 %v5026
  %5040 = vmatpush.msra.mxu0 %v5025
  %5041 = vmatpush.msra.mxu0 %v5024
  %5042 = vmatpush.msra.mxu0 %v5023
  %5043 = vmatmul.f32.gmra.mxu0 %v5000
  %v5044 = vpop.f32.mrf.mxu0
  %v5045 = vadd.f32 0.0, %v5044
  %5046 = vdwg.mxu0
  %v5047 = vadd.f32 %v4907, %v5045
  %v5048 = vadd.f32 %v355, %v4953
  %v5049 = vmul.f32 %v5048, %v424
  %v5050 = vtanh.pop %v5049
  %v5051 = vadd.f32 %v5050, 1.0
  %v5052 = vmul.f32 %v5051, 0.5
  %v5053 = vmul.f32 %v5052, %v4923
  %5055 = vrot.lane.b32.xlu0 %v5050, 32
  %v5056 = vpop.permute.xlu0 %5055
  %v5058 = vmul.f32 %v5052, %v5056
  %5060 = vrot.lane.b32.xlu0 %v5058, 32
  %v5061 = vpop.permute.xlu0 %5060
  %v5063 = vadd.f32 %v5053, %v5061
  %v5064 = vtanh.pop %v5063
  %5066 = vrot.lane.b32.xlu0 %v5064, 32
  %v5067 = vpop.permute.xlu0 %5066
  %v5069 = vmul.f32 %v5052, %v5067
  %5071 = vrot.lane.b32.xlu0 %v5069, 64
  %v5072 = vpop.permute.xlu0 %5071
  %v5073 = vsel %vm454, %v5072, 0
  %5075 = vmatpush.msra.mxu0 0.0
  %5076 = vmatpush.msra.mxu0 0.0
  %5077 = vmatpush.msra.mxu0 0.0
  %5078 = vmatpush.msra.mxu0 0.0
  %5079 = vmatpush.msra.mxu0 0.0
  %5080 = vmatpush.msra.mxu0 0.0
  %5081 = vmatpush.msra.mxu0 0.0
  %5082 = vmatpush.msra.mxu0 0.0
  %5083 = vmatpush.msra.mxu0 0.0
  %5084 = vmatpush.msra.mxu0 0.0
  %5085 = vmatpush.msra.mxu0 0.0
  %5086 = vmatpush.msra.mxu0 0.0
  %5087 = vmatpush.msra.mxu0 %v408
  %5088 = vmatpush.msra.mxu0 %v407
  %5089 = vmatpush.msra.mxu0 %v406
  %5090 = vmatpush.msra.mxu0 %v405
  %5091 = vmatmul.f32.gmra.mxu0 %v5073
  %v5092 = vpop.f32.mrf.mxu0
  %v5093 = vadd.f32 0.0, %v5092
  %5094 = vdwg.mxu0
  %5095 = vmatpush.msra.mxu0 0.0
  %5096 = vmatpush.msra.mxu0 0.0
  %5097 = vmatpush.msra.mxu0 0.0
  %5098 = vmatpush.msra.mxu0 0.0
  %5099 = vmatpush.msra.mxu0 0.0
  %5100 = vmatpush.msra.mxu0 0.0
  %5101 = vmatpush.msra.mxu0 0.0
  %5102 = vmatpush.msra.mxu0 0.0
  %5103 = vmatpush.msra.mxu0 0.0
  %5104 = vmatpush.msra.mxu0 0.0
  %5105 = vmatpush.msra.mxu0 0.0
  %5106 = vmatpush.msra.mxu0 0.0
  %5107 = vmatpush.msra.mxu0 %v412
  %5108 = vmatpush.msra.mxu0 %v411
  %5109 = vmatpush.msra.mxu0 %v410
  %5110 = vmatpush.msra.mxu0 %v409
  %5111 = vmatmul.f32.gmra.mxu0 %v5073
  %v5112 = vpop.f32.mrf.mxu0
  %v5113 = vadd.f32 %v5020, %v5112
  %5114 = vdwg.mxu0
  %v5115 = vadd.f32 %v5113, %v419
  %v5116 = vmul.f32 %v5115, %v424
  %v5117 = vtanh.pop %v5116
  %v5118 = vadd.f32 %v5117, 1.0
  %v5119 = vmul.f32 %v5118, 0.5
  %v5120 = vmul.f32 %v5119, %v4990
  %5122 = vrot.lane.b32.xlu0 %v5117, 32
  %v5123 = vpop.permute.xlu0 %5122
  %v5125 = vmul.f32 %v5119, %v5123
  %5127 = vrot.lane.b32.xlu0 %v5125, 32
  %v5128 = vpop.permute.xlu0 %5127
  %v5130 = vadd.f32 %v5120, %v5128
  %v5131 = vtanh.pop %v5130
  %5133 = vrot.lane.b32.xlu0 %v5131, 32
  %v5134 = vpop.permute.xlu0 %5133
  %v5136 = vmul.f32 %v5119, %v5134
  %5138 = vrot.lane.b32.xlu0 %v5136, 64
  %v5139 = vpop.permute.xlu0 %5138
  %v5140 = vsel %vm454, %v5139, 0
  %5142 = vmatpush.msra.mxu0 0.0
  %5143 = vmatpush.msra.mxu0 0.0
  %5144 = vmatpush.msra.mxu0 0.0
  %5145 = vmatpush.msra.mxu0 0.0
  %5146 = vmatpush.msra.mxu0 0.0
  %5147 = vmatpush.msra.mxu0 0.0
  %5148 = vmatpush.msra.mxu0 0.0
  %5149 = vmatpush.msra.mxu0 0.0
  %5150 = vmatpush.msra.mxu0 0.0
  %5151 = vmatpush.msra.mxu0 0.0
  %5152 = vmatpush.msra.mxu0 0.0
  %5153 = vmatpush.msra.mxu0 0.0
  %5154 = vmatpush.msra.mxu0 %v416
  %5155 = vmatpush.msra.mxu0 %v415
  %5156 = vmatpush.msra.mxu0 %v414
  %5157 = vmatpush.msra.mxu0 %v413
  %5158 = vmatmul.f32.gmra.mxu0 %v5140
  %v5159 = vpop.f32.mrf.mxu0
  %v5160 = vadd.f32 0.0, %v5159
  %5161 = vdwg.mxu0
  %s5162 = scalar_lea.vmem %s7, 1056
  %v5163 = vld [vmem:[%s5162] sm:$0xff]
  %v5164 = vld [vmem:[%s5162 + $0x8] sm:$0xff]
  %v5165 = vld [vmem:[%s5162 + $0x10] sm:$0xff]
  %v5166 = vld [vmem:[%s5162 + $0x18] sm:$0xff]
  %5167 = vmatpush.msra.mxu0 0.0
  %5168 = vmatpush.msra.mxu0 0.0
  %5169 = vmatpush.msra.mxu0 0.0
  %5170 = vmatpush.msra.mxu0 0.0
  %5171 = vmatpush.msra.mxu0 0.0
  %5172 = vmatpush.msra.mxu0 0.0
  %5173 = vmatpush.msra.mxu0 0.0
  %5174 = vmatpush.msra.mxu0 0.0
  %5175 = vmatpush.msra.mxu0 0.0
  %5176 = vmatpush.msra.mxu0 0.0
  %5177 = vmatpush.msra.mxu0 0.0
  %5178 = vmatpush.msra.mxu0 0.0
  %5179 = vmatpush.msra.mxu0 %v5166
  %5180 = vmatpush.msra.mxu0 %v5165
  %5181 = vmatpush.msra.mxu0 %v5164
  %5182 = vmatpush.msra.mxu0 %v5163
  %5183 = vmatmul.f32.gmra.mxu0 %v5140
  %v5184 = vpop.f32.mrf.mxu0
  %v5185 = vadd.f32 0.0, %v5184
  %5186 = vdwg.mxu0
  %v5187 = vadd.f32 %v5047, %v5185
  %v5188 = vadd.f32 %v358, %v5093
  %v5189 = vmul.f32 %v5188, %v424
  %v5190 = vtanh.pop %v5189
  %v5191 = vadd.f32 %v5190, 1.0
  %v5192 = vmul.f32 %v5191, 0.5
  %v5193 = vmul.f32 %v5192, %v5063
  %5195 = vrot.lane.b32.xlu0 %v5190, 32
  %v5196 = vpop.permute.xlu0 %5195
  %v5198 = vmul.f32 %v5192, %v5196
  %5200 = vrot.lane.b32.xlu0 %v5198, 32
  %v5201 = vpop.permute.xlu0 %5200
  %v5203 = vadd.f32 %v5193, %v5201
  %v5204 = vtanh.pop %v5203
  %5206 = vrot.lane.b32.xlu0 %v5204, 32
  %v5207 = vpop.permute.xlu0 %5206
  %v5209 = vmul.f32 %v5192, %v5207
  %5211 = vrot.lane.b32.xlu0 %v5209, 64
  %v5212 = vpop.permute.xlu0 %5211
  %v5213 = vsel %vm454, %v5212, 0
  %5215 = vmatpush.msra.mxu0 0.0
  %5216 = vmatpush.msra.mxu0 0.0
  %5217 = vmatpush.msra.mxu0 0.0
  %5218 = vmatpush.msra.mxu0 0.0
  %5219 = vmatpush.msra.mxu0 0.0
  %5220 = vmatpush.msra.mxu0 0.0
  %5221 = vmatpush.msra.mxu0 0.0
  %5222 = vmatpush.msra.mxu0 0.0
  %5223 = vmatpush.msra.mxu0 0.0
  %5224 = vmatpush.msra.mxu0 0.0
  %5225 = vmatpush.msra.mxu0 0.0
  %5226 = vmatpush.msra.mxu0 0.0
  %5227 = vmatpush.msra.mxu0 %v408
  %5228 = vmatpush.msra.mxu0 %v407
  %5229 = vmatpush.msra.mxu0 %v406
  %5230 = vmatpush.msra.mxu0 %v405
  %5231 = vmatmul.f32.gmra.mxu0 %v5213
  %v5232 = vpop.f32.mrf.mxu0
  %v5233 = vadd.f32 0.0, %v5232
  %5234 = vdwg.mxu0
  %5235 = vmatpush.msra.mxu0 0.0
  %5236 = vmatpush.msra.mxu0 0.0
  %5237 = vmatpush.msra.mxu0 0.0
  %5238 = vmatpush.msra.mxu0 0.0
  %5239 = vmatpush.msra.mxu0 0.0
  %5240 = vmatpush.msra.mxu0 0.0
  %5241 = vmatpush.msra.mxu0 0.0
  %5242 = vmatpush.msra.mxu0 0.0
  %5243 = vmatpush.msra.mxu0 0.0
  %5244 = vmatpush.msra.mxu0 0.0
  %5245 = vmatpush.msra.mxu0 0.0
  %5246 = vmatpush.msra.mxu0 0.0
  %5247 = vmatpush.msra.mxu0 %v412
  %5248 = vmatpush.msra.mxu0 %v411
  %5249 = vmatpush.msra.mxu0 %v410
  %5250 = vmatpush.msra.mxu0 %v409
  %5251 = vmatmul.f32.gmra.mxu0 %v5213
  %v5252 = vpop.f32.mrf.mxu0
  %v5253 = vadd.f32 %v5160, %v5252
  %5254 = vdwg.mxu0
  %v5255 = vadd.f32 %v5253, %v419
  %v5256 = vmul.f32 %v5255, %v424
  %v5257 = vtanh.pop %v5256
  %v5258 = vadd.f32 %v5257, 1.0
  %v5259 = vmul.f32 %v5258, 0.5
  %v5260 = vmul.f32 %v5259, %v5130
  %5262 = vrot.lane.b32.xlu0 %v5257, 32
  %v5263 = vpop.permute.xlu0 %5262
  %v5265 = vmul.f32 %v5259, %v5263
  %5267 = vrot.lane.b32.xlu0 %v5265, 32
  %v5268 = vpop.permute.xlu0 %5267
  %v5270 = vadd.f32 %v5260, %v5268
  %v5271 = vtanh.pop %v5270
  %5273 = vrot.lane.b32.xlu0 %v5271, 32
  %v5274 = vpop.permute.xlu0 %5273
  %v5276 = vmul.f32 %v5259, %v5274
  %5278 = vrot.lane.b32.xlu0 %v5276, 64
  %v5279 = vpop.permute.xlu0 %5278
  %v5280 = vsel %vm454, %v5279, 0
  %5282 = vmatpush.msra.mxu0 0.0
  %5283 = vmatpush.msra.mxu0 0.0
  %5284 = vmatpush.msra.mxu0 0.0
  %5285 = vmatpush.msra.mxu0 0.0
  %5286 = vmatpush.msra.mxu0 0.0
  %5287 = vmatpush.msra.mxu0 0.0
  %5288 = vmatpush.msra.mxu0 0.0
  %5289 = vmatpush.msra.mxu0 0.0
  %5290 = vmatpush.msra.mxu0 0.0
  %5291 = vmatpush.msra.mxu0 0.0
  %5292 = vmatpush.msra.mxu0 0.0
  %5293 = vmatpush.msra.mxu0 0.0
  %5294 = vmatpush.msra.mxu0 %v416
  %5295 = vmatpush.msra.mxu0 %v415
  %5296 = vmatpush.msra.mxu0 %v414
  %5297 = vmatpush.msra.mxu0 %v413
  %5298 = vmatmul.f32.gmra.mxu0 %v5280
  %v5299 = vpop.f32.mrf.mxu0
  %v5300 = vadd.f32 0.0, %v5299
  %5301 = vdwg.mxu0
  %s5302 = scalar_lea.vmem %s7, 1088
  %v5303 = vld [vmem:[%s5302] sm:$0xff]
  %v5304 = vld [vmem:[%s5302 + $0x8] sm:$0xff]
  %v5305 = vld [vmem:[%s5302 + $0x10] sm:$0xff]
  %v5306 = vld [vmem:[%s5302 + $0x18] sm:$0xff]
  %5307 = vmatpush.msra.mxu0 0.0
  %5308 = vmatpush.msra.mxu0 0.0
  %5309 = vmatpush.msra.mxu0 0.0
  %5310 = vmatpush.msra.mxu0 0.0
  %5311 = vmatpush.msra.mxu0 0.0
  %5312 = vmatpush.msra.mxu0 0.0
  %5313 = vmatpush.msra.mxu0 0.0
  %5314 = vmatpush.msra.mxu0 0.0
  %5315 = vmatpush.msra.mxu0 0.0
  %5316 = vmatpush.msra.mxu0 0.0
  %5317 = vmatpush.msra.mxu0 0.0
  %5318 = vmatpush.msra.mxu0 0.0
  %5319 = vmatpush.msra.mxu0 %v5306
  %5320 = vmatpush.msra.mxu0 %v5305
  %5321 = vmatpush.msra.mxu0 %v5304
  %5322 = vmatpush.msra.mxu0 %v5303
  %5323 = vmatmul.f32.gmra.mxu0 %v5280
  %v5324 = vpop.f32.mrf.mxu0
  %v5325 = vadd.f32 0.0, %v5324
  %5326 = vdwg.mxu0
  %v5327 = vadd.f32 %v5187, %v5325
  %v5328 = vadd.f32 %v361, %v5233
  %v5329 = vmul.f32 %v5328, %v424
  %v5330 = vtanh.pop %v5329
  %v5331 = vadd.f32 %v5330, 1.0
  %v5332 = vmul.f32 %v5331, 0.5
  %v5333 = vmul.f32 %v5332, %v5203
  %5335 = vrot.lane.b32.xlu0 %v5330, 32
  %v5336 = vpop.permute.xlu0 %5335
  %v5338 = vmul.f32 %v5332, %v5336
  %5340 = vrot.lane.b32.xlu0 %v5338, 32
  %v5341 = vpop.permute.xlu0 %5340
  %v5343 = vadd.f32 %v5333, %v5341
  %v5344 = vtanh.pop %v5343
  %5346 = vrot.lane.b32.xlu0 %v5344, 32
  %v5347 = vpop.permute.xlu0 %5346
  %v5349 = vmul.f32 %v5332, %v5347
  %5351 = vrot.lane.b32.xlu0 %v5349, 64
  %v5352 = vpop.permute.xlu0 %5351
  %v5353 = vsel %vm454, %v5352, 0
  %5355 = vmatpush.msra.mxu0 0.0
  %5356 = vmatpush.msra.mxu0 0.0
  %5357 = vmatpush.msra.mxu0 0.0
  %5358 = vmatpush.msra.mxu0 0.0
  %5359 = vmatpush.msra.mxu0 0.0
  %5360 = vmatpush.msra.mxu0 0.0
  %5361 = vmatpush.msra.mxu0 0.0
  %5362 = vmatpush.msra.mxu0 0.0
  %5363 = vmatpush.msra.mxu0 0.0
  %5364 = vmatpush.msra.mxu0 0.0
  %5365 = vmatpush.msra.mxu0 0.0
  %5366 = vmatpush.msra.mxu0 0.0
  %5367 = vmatpush.msra.mxu0 %v408
  %5368 = vmatpush.msra.mxu0 %v407
  %5369 = vmatpush.msra.mxu0 %v406
  %5370 = vmatpush.msra.mxu0 %v405
  %5371 = vmatmul.f32.gmra.mxu0 %v5353
  %v5372 = vpop.f32.mrf.mxu0
  %v5373 = vadd.f32 0.0, %v5372
  %5374 = vdwg.mxu0
  %5375 = vmatpush.msra.mxu0 0.0
  %5376 = vmatpush.msra.mxu0 0.0
  %5377 = vmatpush.msra.mxu0 0.0
  %5378 = vmatpush.msra.mxu0 0.0
  %5379 = vmatpush.msra.mxu0 0.0
  %5380 = vmatpush.msra.mxu0 0.0
  %5381 = vmatpush.msra.mxu0 0.0
  %5382 = vmatpush.msra.mxu0 0.0
  %5383 = vmatpush.msra.mxu0 0.0
  %5384 = vmatpush.msra.mxu0 0.0
  %5385 = vmatpush.msra.mxu0 0.0
  %5386 = vmatpush.msra.mxu0 0.0
  %5387 = vmatpush.msra.mxu0 %v412
  %5388 = vmatpush.msra.mxu0 %v411
  %5389 = vmatpush.msra.mxu0 %v410
  %5390 = vmatpush.msra.mxu0 %v409
  %5391 = vmatmul.f32.gmra.mxu0 %v5353
  %v5392 = vpop.f32.mrf.mxu0
  %v5393 = vadd.f32 %v5300, %v5392
  %5394 = vdwg.mxu0
  %v5395 = vadd.f32 %v5393, %v419
  %v5396 = vmul.f32 %v5395, %v424
  %v5397 = vtanh.pop %v5396
  %v5398 = vadd.f32 %v5397, 1.0
  %v5399 = vmul.f32 %v5398, 0.5
  %v5400 = vmul.f32 %v5399, %v5270
  %5402 = vrot.lane.b32.xlu0 %v5397, 32
  %v5403 = vpop.permute.xlu0 %5402
  %v5405 = vmul.f32 %v5399, %v5403
  %5407 = vrot.lane.b32.xlu0 %v5405, 32
  %v5408 = vpop.permute.xlu0 %5407
  %v5410 = vadd.f32 %v5400, %v5408
  %v5411 = vtanh.pop %v5410
  %5413 = vrot.lane.b32.xlu0 %v5411, 32
  %v5414 = vpop.permute.xlu0 %5413
  %v5416 = vmul.f32 %v5399, %v5414
  %5418 = vrot.lane.b32.xlu0 %v5416, 64
  %v5419 = vpop.permute.xlu0 %5418
  %v5420 = vsel %vm454, %v5419, 0
  %5422 = vmatpush.msra.mxu0 0.0
  %5423 = vmatpush.msra.mxu0 0.0
  %5424 = vmatpush.msra.mxu0 0.0
  %5425 = vmatpush.msra.mxu0 0.0
  %5426 = vmatpush.msra.mxu0 0.0
  %5427 = vmatpush.msra.mxu0 0.0
  %5428 = vmatpush.msra.mxu0 0.0
  %5429 = vmatpush.msra.mxu0 0.0
  %5430 = vmatpush.msra.mxu0 0.0
  %5431 = vmatpush.msra.mxu0 0.0
  %5432 = vmatpush.msra.mxu0 0.0
  %5433 = vmatpush.msra.mxu0 0.0
  %5434 = vmatpush.msra.mxu0 %v416
  %5435 = vmatpush.msra.mxu0 %v415
  %5436 = vmatpush.msra.mxu0 %v414
  %5437 = vmatpush.msra.mxu0 %v413
  %5438 = vmatmul.f32.gmra.mxu0 %v5420
  %v5439 = vpop.f32.mrf.mxu0
  %v5440 = vadd.f32 0.0, %v5439
  %5441 = vdwg.mxu0
  %s5442 = scalar_lea.vmem %s7, 1120
  %v5443 = vld [vmem:[%s5442] sm:$0xff]
  %v5444 = vld [vmem:[%s5442 + $0x8] sm:$0xff]
  %v5445 = vld [vmem:[%s5442 + $0x10] sm:$0xff]
  %v5446 = vld [vmem:[%s5442 + $0x18] sm:$0xff]
  %5447 = vmatpush.msra.mxu0 0.0
  %5448 = vmatpush.msra.mxu0 0.0
  %5449 = vmatpush.msra.mxu0 0.0
  %5450 = vmatpush.msra.mxu0 0.0
  %5451 = vmatpush.msra.mxu0 0.0
  %5452 = vmatpush.msra.mxu0 0.0
  %5453 = vmatpush.msra.mxu0 0.0
  %5454 = vmatpush.msra.mxu0 0.0
  %5455 = vmatpush.msra.mxu0 0.0
  %5456 = vmatpush.msra.mxu0 0.0
  %5457 = vmatpush.msra.mxu0 0.0
  %5458 = vmatpush.msra.mxu0 0.0
  %5459 = vmatpush.msra.mxu0 %v5446
  %5460 = vmatpush.msra.mxu0 %v5445
  %5461 = vmatpush.msra.mxu0 %v5444
  %5462 = vmatpush.msra.mxu0 %v5443
  %5463 = vmatmul.f32.gmra.mxu0 %v5420
  %v5464 = vpop.f32.mrf.mxu0
  %v5465 = vadd.f32 0.0, %v5464
  %5466 = vdwg.mxu0
  %v5467 = vadd.f32 %v5327, %v5465
  %v5468 = vadd.f32 %v364, %v5373
  %v5469 = vmul.f32 %v5468, %v424
  %v5470 = vtanh.pop %v5469
  %v5471 = vadd.f32 %v5470, 1.0
  %v5472 = vmul.f32 %v5471, 0.5
  %v5473 = vmul.f32 %v5472, %v5343
  %5475 = vrot.lane.b32.xlu0 %v5470, 32
  %v5476 = vpop.permute.xlu0 %5475
  %v5478 = vmul.f32 %v5472, %v5476
  %5480 = vrot.lane.b32.xlu0 %v5478, 32
  %v5481 = vpop.permute.xlu0 %5480
  %v5483 = vadd.f32 %v5473, %v5481
  %v5484 = vtanh.pop %v5483
  %5486 = vrot.lane.b32.xlu0 %v5484, 32
  %v5487 = vpop.permute.xlu0 %5486
  %v5489 = vmul.f32 %v5472, %v5487
  %5491 = vrot.lane.b32.xlu0 %v5489, 64
  %v5492 = vpop.permute.xlu0 %5491
  %v5493 = vsel %vm454, %v5492, 0
  %5495 = vmatpush.msra.mxu0 0.0
  %5496 = vmatpush.msra.mxu0 0.0
  %5497 = vmatpush.msra.mxu0 0.0
  %5498 = vmatpush.msra.mxu0 0.0
  %5499 = vmatpush.msra.mxu0 0.0
  %5500 = vmatpush.msra.mxu0 0.0
  %5501 = vmatpush.msra.mxu0 0.0
  %5502 = vmatpush.msra.mxu0 0.0
  %5503 = vmatpush.msra.mxu0 0.0
  %5504 = vmatpush.msra.mxu0 0.0
  %5505 = vmatpush.msra.mxu0 0.0
  %5506 = vmatpush.msra.mxu0 0.0
  %5507 = vmatpush.msra.mxu0 %v408
  %5508 = vmatpush.msra.mxu0 %v407
  %5509 = vmatpush.msra.mxu0 %v406
  %5510 = vmatpush.msra.mxu0 %v405
  %5511 = vmatmul.f32.gmra.mxu0 %v5493
  %v5512 = vpop.f32.mrf.mxu0
  %v5513 = vadd.f32 0.0, %v5512
  %5514 = vdwg.mxu0
  %5515 = vmatpush.msra.mxu0 0.0
  %5516 = vmatpush.msra.mxu0 0.0
  %5517 = vmatpush.msra.mxu0 0.0
  %5518 = vmatpush.msra.mxu0 0.0
  %5519 = vmatpush.msra.mxu0 0.0
  %5520 = vmatpush.msra.mxu0 0.0
  %5521 = vmatpush.msra.mxu0 0.0
  %5522 = vmatpush.msra.mxu0 0.0
  %5523 = vmatpush.msra.mxu0 0.0
  %5524 = vmatpush.msra.mxu0 0.0
  %5525 = vmatpush.msra.mxu0 0.0
  %5526 = vmatpush.msra.mxu0 0.0
  %5527 = vmatpush.msra.mxu0 %v412
  %5528 = vmatpush.msra.mxu0 %v411
  %5529 = vmatpush.msra.mxu0 %v410
  %5530 = vmatpush.msra.mxu0 %v409
  %5531 = vmatmul.f32.gmra.mxu0 %v5493
  %v5532 = vpop.f32.mrf.mxu0
  %v5533 = vadd.f32 %v5440, %v5532
  %5534 = vdwg.mxu0
  %v5535 = vadd.f32 %v5533, %v419
  %v5536 = vmul.f32 %v5535, %v424
  %v5537 = vtanh.pop %v5536
  %v5538 = vadd.f32 %v5537, 1.0
  %v5539 = vmul.f32 %v5538, 0.5
  %v5540 = vmul.f32 %v5539, %v5410
  %5542 = vrot.lane.b32.xlu0 %v5537, 32
  %v5543 = vpop.permute.xlu0 %5542
  %v5545 = vmul.f32 %v5539, %v5543
  %5547 = vrot.lane.b32.xlu0 %v5545, 32
  %v5548 = vpop.permute.xlu0 %5547
  %v5550 = vadd.f32 %v5540, %v5548
  %v5551 = vtanh.pop %v5550
  %5553 = vrot.lane.b32.xlu0 %v5551, 32
  %v5554 = vpop.permute.xlu0 %5553
  %v5556 = vmul.f32 %v5539, %v5554
  %5558 = vrot.lane.b32.xlu0 %v5556, 64
  %v5559 = vpop.permute.xlu0 %5558
  %v5560 = vsel %vm454, %v5559, 0
  %5562 = vmatpush.msra.mxu0 0.0
  %5563 = vmatpush.msra.mxu0 0.0
  %5564 = vmatpush.msra.mxu0 0.0
  %5565 = vmatpush.msra.mxu0 0.0
  %5566 = vmatpush.msra.mxu0 0.0
  %5567 = vmatpush.msra.mxu0 0.0
  %5568 = vmatpush.msra.mxu0 0.0
  %5569 = vmatpush.msra.mxu0 0.0
  %5570 = vmatpush.msra.mxu0 0.0
  %5571 = vmatpush.msra.mxu0 0.0
  %5572 = vmatpush.msra.mxu0 0.0
  %5573 = vmatpush.msra.mxu0 0.0
  %5574 = vmatpush.msra.mxu0 %v416
  %5575 = vmatpush.msra.mxu0 %v415
  %5576 = vmatpush.msra.mxu0 %v414
  %5577 = vmatpush.msra.mxu0 %v413
  %5578 = vmatmul.f32.gmra.mxu0 %v5560
  %v5579 = vpop.f32.mrf.mxu0
  %v5580 = vadd.f32 0.0, %v5579
  %5581 = vdwg.mxu0
  %s5582 = scalar_lea.vmem %s7, 1152
  %v5583 = vld [vmem:[%s5582] sm:$0xff]
  %v5584 = vld [vmem:[%s5582 + $0x8] sm:$0xff]
  %v5585 = vld [vmem:[%s5582 + $0x10] sm:$0xff]
  %v5586 = vld [vmem:[%s5582 + $0x18] sm:$0xff]
  %5587 = vmatpush.msra.mxu0 0.0
  %5588 = vmatpush.msra.mxu0 0.0
  %5589 = vmatpush.msra.mxu0 0.0
  %5590 = vmatpush.msra.mxu0 0.0
  %5591 = vmatpush.msra.mxu0 0.0
  %5592 = vmatpush.msra.mxu0 0.0
  %5593 = vmatpush.msra.mxu0 0.0
  %5594 = vmatpush.msra.mxu0 0.0
  %5595 = vmatpush.msra.mxu0 0.0
  %5596 = vmatpush.msra.mxu0 0.0
  %5597 = vmatpush.msra.mxu0 0.0
  %5598 = vmatpush.msra.mxu0 0.0
  %5599 = vmatpush.msra.mxu0 %v5586
  %5600 = vmatpush.msra.mxu0 %v5585
  %5601 = vmatpush.msra.mxu0 %v5584
  %5602 = vmatpush.msra.mxu0 %v5583
  %5603 = vmatmul.f32.gmra.mxu0 %v5560
  %v5604 = vpop.f32.mrf.mxu0
  %v5605 = vadd.f32 0.0, %v5604
  %5606 = vdwg.mxu0
  %v5607 = vadd.f32 %v5467, %v5605
  %v5608 = vadd.f32 %v367, %v5513
  %v5609 = vmul.f32 %v5608, %v424
  %v5610 = vtanh.pop %v5609
  %v5611 = vadd.f32 %v5610, 1.0
  %v5612 = vmul.f32 %v5611, 0.5
  %v5613 = vmul.f32 %v5612, %v5483
  %5615 = vrot.lane.b32.xlu0 %v5610, 32
  %v5616 = vpop.permute.xlu0 %5615
  %v5618 = vmul.f32 %v5612, %v5616
  %5620 = vrot.lane.b32.xlu0 %v5618, 32
  %v5621 = vpop.permute.xlu0 %5620
  %v5623 = vadd.f32 %v5613, %v5621
  %v5624 = vtanh.pop %v5623
  %5626 = vrot.lane.b32.xlu0 %v5624, 32
  %v5627 = vpop.permute.xlu0 %5626
  %v5629 = vmul.f32 %v5612, %v5627
  %5631 = vrot.lane.b32.xlu0 %v5629, 64
  %v5632 = vpop.permute.xlu0 %5631
  %v5633 = vsel %vm454, %v5632, 0
  %5635 = vmatpush.msra.mxu0 0.0
  %5636 = vmatpush.msra.mxu0 0.0
  %5637 = vmatpush.msra.mxu0 0.0
  %5638 = vmatpush.msra.mxu0 0.0
  %5639 = vmatpush.msra.mxu0 0.0
  %5640 = vmatpush.msra.mxu0 0.0
  %5641 = vmatpush.msra.mxu0 0.0
  %5642 = vmatpush.msra.mxu0 0.0
  %5643 = vmatpush.msra.mxu0 0.0
  %5644 = vmatpush.msra.mxu0 0.0
  %5645 = vmatpush.msra.mxu0 0.0
  %5646 = vmatpush.msra.mxu0 0.0
  %5647 = vmatpush.msra.mxu0 %v408
  %5648 = vmatpush.msra.mxu0 %v407
  %5649 = vmatpush.msra.mxu0 %v406
  %5650 = vmatpush.msra.mxu0 %v405
  %5651 = vmatmul.f32.gmra.mxu0 %v5633
  %v5652 = vpop.f32.mrf.mxu0
  %v5653 = vadd.f32 0.0, %v5652
  %5654 = vdwg.mxu0
  %5655 = vmatpush.msra.mxu0 0.0
  %5656 = vmatpush.msra.mxu0 0.0
  %5657 = vmatpush.msra.mxu0 0.0
  %5658 = vmatpush.msra.mxu0 0.0
  %5659 = vmatpush.msra.mxu0 0.0
  %5660 = vmatpush.msra.mxu0 0.0
  %5661 = vmatpush.msra.mxu0 0.0
  %5662 = vmatpush.msra.mxu0 0.0
  %5663 = vmatpush.msra.mxu0 0.0
  %5664 = vmatpush.msra.mxu0 0.0
  %5665 = vmatpush.msra.mxu0 0.0
  %5666 = vmatpush.msra.mxu0 0.0
  %5667 = vmatpush.msra.mxu0 %v412
  %5668 = vmatpush.msra.mxu0 %v411
  %5669 = vmatpush.msra.mxu0 %v410
  %5670 = vmatpush.msra.mxu0 %v409
  %5671 = vmatmul.f32.gmra.mxu0 %v5633
  %v5672 = vpop.f32.mrf.mxu0
  %v5673 = vadd.f32 %v5580, %v5672
  %5674 = vdwg.mxu0
  %v5675 = vadd.f32 %v5673, %v419
  %v5676 = vmul.f32 %v5675, %v424
  %v5677 = vtanh.pop %v5676
  %v5678 = vadd.f32 %v5677, 1.0
  %v5679 = vmul.f32 %v5678, 0.5
  %v5680 = vmul.f32 %v5679, %v5550
  %5682 = vrot.lane.b32.xlu0 %v5677, 32
  %v5683 = vpop.permute.xlu0 %5682
  %v5685 = vmul.f32 %v5679, %v5683
  %5687 = vrot.lane.b32.xlu0 %v5685, 32
  %v5688 = vpop.permute.xlu0 %5687
  %v5690 = vadd.f32 %v5680, %v5688
  %v5691 = vtanh.pop %v5690
  %5693 = vrot.lane.b32.xlu0 %v5691, 32
  %v5694 = vpop.permute.xlu0 %5693
  %v5696 = vmul.f32 %v5679, %v5694
  %5698 = vrot.lane.b32.xlu0 %v5696, 64
  %v5699 = vpop.permute.xlu0 %5698
  %v5700 = vsel %vm454, %v5699, 0
  %5702 = vmatpush.msra.mxu0 0.0
  %5703 = vmatpush.msra.mxu0 0.0
  %5704 = vmatpush.msra.mxu0 0.0
  %5705 = vmatpush.msra.mxu0 0.0
  %5706 = vmatpush.msra.mxu0 0.0
  %5707 = vmatpush.msra.mxu0 0.0
  %5708 = vmatpush.msra.mxu0 0.0
  %5709 = vmatpush.msra.mxu0 0.0
  %5710 = vmatpush.msra.mxu0 0.0
  %5711 = vmatpush.msra.mxu0 0.0
  %5712 = vmatpush.msra.mxu0 0.0
  %5713 = vmatpush.msra.mxu0 0.0
  %5714 = vmatpush.msra.mxu0 %v416
  %5715 = vmatpush.msra.mxu0 %v415
  %5716 = vmatpush.msra.mxu0 %v414
  %5717 = vmatpush.msra.mxu0 %v413
  %5718 = vmatmul.f32.gmra.mxu0 %v5700
  %v5719 = vpop.f32.mrf.mxu0
  %v5720 = vadd.f32 0.0, %v5719
  %5721 = vdwg.mxu0
  %s5722 = scalar_lea.vmem %s7, 1184
  %v5723 = vld [vmem:[%s5722] sm:$0xff]
  %v5724 = vld [vmem:[%s5722 + $0x8] sm:$0xff]
  %v5725 = vld [vmem:[%s5722 + $0x10] sm:$0xff]
  %v5726 = vld [vmem:[%s5722 + $0x18] sm:$0xff]
  %5727 = vmatpush.msra.mxu0 0.0
  %5728 = vmatpush.msra.mxu0 0.0
  %5729 = vmatpush.msra.mxu0 0.0
  %5730 = vmatpush.msra.mxu0 0.0
  %5731 = vmatpush.msra.mxu0 0.0
  %5732 = vmatpush.msra.mxu0 0.0
  %5733 = vmatpush.msra.mxu0 0.0
  %5734 = vmatpush.msra.mxu0 0.0
  %5735 = vmatpush.msra.mxu0 0.0
  %5736 = vmatpush.msra.mxu0 0.0
  %5737 = vmatpush.msra.mxu0 0.0
  %5738 = vmatpush.msra.mxu0 0.0
  %5739 = vmatpush.msra.mxu0 %v5726
  %5740 = vmatpush.msra.mxu0 %v5725
  %5741 = vmatpush.msra.mxu0 %v5724
  %5742 = vmatpush.msra.mxu0 %v5723
  %5743 = vmatmul.f32.gmra.mxu0 %v5700
  %v5744 = vpop.f32.mrf.mxu0
  %v5745 = vadd.f32 0.0, %v5744
  %5746 = vdwg.mxu0
  %v5747 = vadd.f32 %v5607, %v5745
  %v5748 = vadd.f32 %v370, %v5653
  %v5749 = vmul.f32 %v5748, %v424
  %v5750 = vtanh.pop %v5749
  %v5751 = vadd.f32 %v5750, 1.0
  %v5752 = vmul.f32 %v5751, 0.5
  %v5753 = vmul.f32 %v5752, %v5623
  %5755 = vrot.lane.b32.xlu0 %v5750, 32
  %v5756 = vpop.permute.xlu0 %5755
  %v5758 = vmul.f32 %v5752, %v5756
  %5760 = vrot.lane.b32.xlu0 %v5758, 32
  %v5761 = vpop.permute.xlu0 %5760
  %v5763 = vadd.f32 %v5753, %v5761
  %v5764 = vtanh.pop %v5763
  %5766 = vrot.lane.b32.xlu0 %v5764, 32
  %v5767 = vpop.permute.xlu0 %5766
  %v5769 = vmul.f32 %v5752, %v5767
  %5771 = vrot.lane.b32.xlu0 %v5769, 64
  %v5772 = vpop.permute.xlu0 %5771
  %v5773 = vsel %vm454, %v5772, 0
  %5775 = vmatpush.msra.mxu0 0.0
  %5776 = vmatpush.msra.mxu0 0.0
  %5777 = vmatpush.msra.mxu0 0.0
  %5778 = vmatpush.msra.mxu0 0.0
  %5779 = vmatpush.msra.mxu0 0.0
  %5780 = vmatpush.msra.mxu0 0.0
  %5781 = vmatpush.msra.mxu0 0.0
  %5782 = vmatpush.msra.mxu0 0.0
  %5783 = vmatpush.msra.mxu0 0.0
  %5784 = vmatpush.msra.mxu0 0.0
  %5785 = vmatpush.msra.mxu0 0.0
  %5786 = vmatpush.msra.mxu0 0.0
  %5787 = vmatpush.msra.mxu0 %v408
  %5788 = vmatpush.msra.mxu0 %v407
  %5789 = vmatpush.msra.mxu0 %v406
  %5790 = vmatpush.msra.mxu0 %v405
  %5791 = vmatmul.f32.gmra.mxu0 %v5773
  %v5792 = vpop.f32.mrf.mxu0
  %v5793 = vadd.f32 0.0, %v5792
  %5794 = vdwg.mxu0
  %5795 = vmatpush.msra.mxu0 0.0
  %5796 = vmatpush.msra.mxu0 0.0
  %5797 = vmatpush.msra.mxu0 0.0
  %5798 = vmatpush.msra.mxu0 0.0
  %5799 = vmatpush.msra.mxu0 0.0
  %5800 = vmatpush.msra.mxu0 0.0
  %5801 = vmatpush.msra.mxu0 0.0
  %5802 = vmatpush.msra.mxu0 0.0
  %5803 = vmatpush.msra.mxu0 0.0
  %5804 = vmatpush.msra.mxu0 0.0
  %5805 = vmatpush.msra.mxu0 0.0
  %5806 = vmatpush.msra.mxu0 0.0
  %5807 = vmatpush.msra.mxu0 %v412
  %5808 = vmatpush.msra.mxu0 %v411
  %5809 = vmatpush.msra.mxu0 %v410
  %5810 = vmatpush.msra.mxu0 %v409
  %5811 = vmatmul.f32.gmra.mxu0 %v5773
  %v5812 = vpop.f32.mrf.mxu0
  %v5813 = vadd.f32 %v5720, %v5812
  %5814 = vdwg.mxu0
  %v5815 = vadd.f32 %v5813, %v419
  %v5816 = vmul.f32 %v5815, %v424
  %v5817 = vtanh.pop %v5816
  %v5818 = vadd.f32 %v5817, 1.0
  %v5819 = vmul.f32 %v5818, 0.5
  %v5820 = vmul.f32 %v5819, %v5690
  %5822 = vrot.lane.b32.xlu0 %v5817, 32
  %v5823 = vpop.permute.xlu0 %5822
  %v5825 = vmul.f32 %v5819, %v5823
  %5827 = vrot.lane.b32.xlu0 %v5825, 32
  %v5828 = vpop.permute.xlu0 %5827
  %v5830 = vadd.f32 %v5820, %v5828
  %v5831 = vtanh.pop %v5830
  %5833 = vrot.lane.b32.xlu0 %v5831, 32
  %v5834 = vpop.permute.xlu0 %5833
  %v5836 = vmul.f32 %v5819, %v5834
  %5838 = vrot.lane.b32.xlu0 %v5836, 64
  %v5839 = vpop.permute.xlu0 %5838
  %v5840 = vsel %vm454, %v5839, 0
  %5842 = vmatpush.msra.mxu0 0.0
  %5843 = vmatpush.msra.mxu0 0.0
  %5844 = vmatpush.msra.mxu0 0.0
  %5845 = vmatpush.msra.mxu0 0.0
  %5846 = vmatpush.msra.mxu0 0.0
  %5847 = vmatpush.msra.mxu0 0.0
  %5848 = vmatpush.msra.mxu0 0.0
  %5849 = vmatpush.msra.mxu0 0.0
  %5850 = vmatpush.msra.mxu0 0.0
  %5851 = vmatpush.msra.mxu0 0.0
  %5852 = vmatpush.msra.mxu0 0.0
  %5853 = vmatpush.msra.mxu0 0.0
  %5854 = vmatpush.msra.mxu0 %v416
  %5855 = vmatpush.msra.mxu0 %v415
  %5856 = vmatpush.msra.mxu0 %v414
  %5857 = vmatpush.msra.mxu0 %v413
  %5858 = vmatmul.f32.gmra.mxu0 %v5840
  %v5859 = vpop.f32.mrf.mxu0
  %v5860 = vadd.f32 0.0, %v5859
  %5861 = vdwg.mxu0
  %s5862 = scalar_lea.vmem %s7, 1216
  %v5863 = vld [vmem:[%s5862] sm:$0xff]
  %v5864 = vld [vmem:[%s5862 + $0x8] sm:$0xff]
  %v5865 = vld [vmem:[%s5862 + $0x10] sm:$0xff]
  %v5866 = vld [vmem:[%s5862 + $0x18] sm:$0xff]
  %5867 = vmatpush.msra.mxu0 0.0
  %5868 = vmatpush.msra.mxu0 0.0
  %5869 = vmatpush.msra.mxu0 0.0
  %5870 = vmatpush.msra.mxu0 0.0
  %5871 = vmatpush.msra.mxu0 0.0
  %5872 = vmatpush.msra.mxu0 0.0
  %5873 = vmatpush.msra.mxu0 0.0
  %5874 = vmatpush.msra.mxu0 0.0
  %5875 = vmatpush.msra.mxu0 0.0
  %5876 = vmatpush.msra.mxu0 0.0
  %5877 = vmatpush.msra.mxu0 0.0
  %5878 = vmatpush.msra.mxu0 0.0
  %5879 = vmatpush.msra.mxu0 %v5866
  %5880 = vmatpush.msra.mxu0 %v5865
  %5881 = vmatpush.msra.mxu0 %v5864
  %5882 = vmatpush.msra.mxu0 %v5863
  %5883 = vmatmul.f32.gmra.mxu0 %v5840
  %v5884 = vpop.f32.mrf.mxu0
  %v5885 = vadd.f32 0.0, %v5884
  %5886 = vdwg.mxu0
  %v5887 = vadd.f32 %v5747, %v5885
  %v5888 = vadd.f32 %v373, %v5793
  %v5889 = vmul.f32 %v5888, %v424
  %v5890 = vtanh.pop %v5889
  %v5891 = vadd.f32 %v5890, 1.0
  %v5892 = vmul.f32 %v5891, 0.5
  %v5893 = vmul.f32 %v5892, %v5763
  %5895 = vrot.lane.b32.xlu0 %v5890, 32
  %v5896 = vpop.permute.xlu0 %5895
  %v5898 = vmul.f32 %v5892, %v5896
  %5900 = vrot.lane.b32.xlu0 %v5898, 32
  %v5901 = vpop.permute.xlu0 %5900
  %v5903 = vadd.f32 %v5893, %v5901
  %v5904 = vtanh.pop %v5903
  %5906 = vrot.lane.b32.xlu0 %v5904, 32
  %v5907 = vpop.permute.xlu0 %5906
  %v5909 = vmul.f32 %v5892, %v5907
  %5911 = vrot.lane.b32.xlu0 %v5909, 64
  %v5912 = vpop.permute.xlu0 %5911
  %v5913 = vsel %vm454, %v5912, 0
  %5915 = vmatpush.msra.mxu0 0.0
  %5916 = vmatpush.msra.mxu0 0.0
  %5917 = vmatpush.msra.mxu0 0.0
  %5918 = vmatpush.msra.mxu0 0.0
  %5919 = vmatpush.msra.mxu0 0.0
  %5920 = vmatpush.msra.mxu0 0.0
  %5921 = vmatpush.msra.mxu0 0.0
  %5922 = vmatpush.msra.mxu0 0.0
  %5923 = vmatpush.msra.mxu0 0.0
  %5924 = vmatpush.msra.mxu0 0.0
  %5925 = vmatpush.msra.mxu0 0.0
  %5926 = vmatpush.msra.mxu0 0.0
  %5927 = vmatpush.msra.mxu0 %v408
  %5928 = vmatpush.msra.mxu0 %v407
  %5929 = vmatpush.msra.mxu0 %v406
  %5930 = vmatpush.msra.mxu0 %v405
  %5931 = vmatmul.f32.gmra.mxu0 %v5913
  %v5932 = vpop.f32.mrf.mxu0
  %v5933 = vadd.f32 0.0, %v5932
  %5934 = vdwg.mxu0
  %5935 = vmatpush.msra.mxu0 0.0
  %5936 = vmatpush.msra.mxu0 0.0
  %5937 = vmatpush.msra.mxu0 0.0
  %5938 = vmatpush.msra.mxu0 0.0
  %5939 = vmatpush.msra.mxu0 0.0
  %5940 = vmatpush.msra.mxu0 0.0
  %5941 = vmatpush.msra.mxu0 0.0
  %5942 = vmatpush.msra.mxu0 0.0
  %5943 = vmatpush.msra.mxu0 0.0
  %5944 = vmatpush.msra.mxu0 0.0
  %5945 = vmatpush.msra.mxu0 0.0
  %5946 = vmatpush.msra.mxu0 0.0
  %5947 = vmatpush.msra.mxu0 %v412
  %5948 = vmatpush.msra.mxu0 %v411
  %5949 = vmatpush.msra.mxu0 %v410
  %5950 = vmatpush.msra.mxu0 %v409
  %5951 = vmatmul.f32.gmra.mxu0 %v5913
  %v5952 = vpop.f32.mrf.mxu0
  %v5953 = vadd.f32 %v5860, %v5952
  %5954 = vdwg.mxu0
  %v5955 = vadd.f32 %v5953, %v419
  %v5956 = vmul.f32 %v5955, %v424
  %v5957 = vtanh.pop %v5956
  %v5958 = vadd.f32 %v5957, 1.0
  %v5959 = vmul.f32 %v5958, 0.5
  %v5960 = vmul.f32 %v5959, %v5830
  %5962 = vrot.lane.b32.xlu0 %v5957, 32
  %v5963 = vpop.permute.xlu0 %5962
  %v5965 = vmul.f32 %v5959, %v5963
  %5967 = vrot.lane.b32.xlu0 %v5965, 32
  %v5968 = vpop.permute.xlu0 %5967
  %v5970 = vadd.f32 %v5960, %v5968
  %v5971 = vtanh.pop %v5970
  %5973 = vrot.lane.b32.xlu0 %v5971, 32
  %v5974 = vpop.permute.xlu0 %5973
  %v5976 = vmul.f32 %v5959, %v5974
  %5978 = vrot.lane.b32.xlu0 %v5976, 64
  %v5979 = vpop.permute.xlu0 %5978
  %v5980 = vsel %vm454, %v5979, 0
  %5982 = vmatpush.msra.mxu0 0.0
  %5983 = vmatpush.msra.mxu0 0.0
  %5984 = vmatpush.msra.mxu0 0.0
  %5985 = vmatpush.msra.mxu0 0.0
  %5986 = vmatpush.msra.mxu0 0.0
  %5987 = vmatpush.msra.mxu0 0.0
  %5988 = vmatpush.msra.mxu0 0.0
  %5989 = vmatpush.msra.mxu0 0.0
  %5990 = vmatpush.msra.mxu0 0.0
  %5991 = vmatpush.msra.mxu0 0.0
  %5992 = vmatpush.msra.mxu0 0.0
  %5993 = vmatpush.msra.mxu0 0.0
  %5994 = vmatpush.msra.mxu0 %v416
  %5995 = vmatpush.msra.mxu0 %v415
  %5996 = vmatpush.msra.mxu0 %v414
  %5997 = vmatpush.msra.mxu0 %v413
  %5998 = vmatmul.f32.gmra.mxu0 %v5980
  %v5999 = vpop.f32.mrf.mxu0
  %v6000 = vadd.f32 0.0, %v5999
  %6001 = vdwg.mxu0
  %s6002 = scalar_lea.vmem %s7, 1248
  %v6003 = vld [vmem:[%s6002] sm:$0xff]
  %v6004 = vld [vmem:[%s6002 + $0x8] sm:$0xff]
  %v6005 = vld [vmem:[%s6002 + $0x10] sm:$0xff]
  %v6006 = vld [vmem:[%s6002 + $0x18] sm:$0xff]
  %6007 = vmatpush.msra.mxu0 0.0
  %6008 = vmatpush.msra.mxu0 0.0
  %6009 = vmatpush.msra.mxu0 0.0
  %6010 = vmatpush.msra.mxu0 0.0
  %6011 = vmatpush.msra.mxu0 0.0
  %6012 = vmatpush.msra.mxu0 0.0
  %6013 = vmatpush.msra.mxu0 0.0
  %6014 = vmatpush.msra.mxu0 0.0
  %6015 = vmatpush.msra.mxu0 0.0
  %6016 = vmatpush.msra.mxu0 0.0
  %6017 = vmatpush.msra.mxu0 0.0
  %6018 = vmatpush.msra.mxu0 0.0
  %6019 = vmatpush.msra.mxu0 %v6006
  %6020 = vmatpush.msra.mxu0 %v6005
  %6021 = vmatpush.msra.mxu0 %v6004
  %6022 = vmatpush.msra.mxu0 %v6003
  %6023 = vmatmul.f32.gmra.mxu0 %v5980
  %v6024 = vpop.f32.mrf.mxu0
  %v6025 = vadd.f32 0.0, %v6024
  %6026 = vdwg.mxu0
  %v6027 = vadd.f32 %v5887, %v6025
  %v6028 = vadd.f32 %v376, %v5933
  %v6029 = vmul.f32 %v6028, %v424
  %v6030 = vtanh.pop %v6029
  %v6031 = vadd.f32 %v6030, 1.0
  %v6032 = vmul.f32 %v6031, 0.5
  %v6033 = vmul.f32 %v6032, %v5903
  %6035 = vrot.lane.b32.xlu0 %v6030, 32
  %v6036 = vpop.permute.xlu0 %6035
  %v6038 = vmul.f32 %v6032, %v6036
  %6040 = vrot.lane.b32.xlu0 %v6038, 32
  %v6041 = vpop.permute.xlu0 %6040
  %v6043 = vadd.f32 %v6033, %v6041
  %v6044 = vtanh.pop %v6043
  %6046 = vrot.lane.b32.xlu0 %v6044, 32
  %v6047 = vpop.permute.xlu0 %6046
  %v6049 = vmul.f32 %v6032, %v6047
  %6051 = vrot.lane.b32.xlu0 %v6049, 64
  %v6052 = vpop.permute.xlu0 %6051
  %v6053 = vsel %vm454, %v6052, 0
  %6055 = vmatpush.msra.mxu0 0.0
  %6056 = vmatpush.msra.mxu0 0.0
  %6057 = vmatpush.msra.mxu0 0.0
  %6058 = vmatpush.msra.mxu0 0.0
  %6059 = vmatpush.msra.mxu0 0.0
  %6060 = vmatpush.msra.mxu0 0.0
  %6061 = vmatpush.msra.mxu0 0.0
  %6062 = vmatpush.msra.mxu0 0.0
  %6063 = vmatpush.msra.mxu0 0.0
  %6064 = vmatpush.msra.mxu0 0.0
  %6065 = vmatpush.msra.mxu0 0.0
  %6066 = vmatpush.msra.mxu0 0.0
  %6067 = vmatpush.msra.mxu0 %v408
  %6068 = vmatpush.msra.mxu0 %v407
  %6069 = vmatpush.msra.mxu0 %v406
  %6070 = vmatpush.msra.mxu0 %v405
  %6071 = vmatmul.f32.gmra.mxu0 %v6053
  %v6072 = vpop.f32.mrf.mxu0
  %v6073 = vadd.f32 0.0, %v6072
  %6074 = vdwg.mxu0
  %6075 = vmatpush.msra.mxu0 0.0
  %6076 = vmatpush.msra.mxu0 0.0
  %6077 = vmatpush.msra.mxu0 0.0
  %6078 = vmatpush.msra.mxu0 0.0
  %6079 = vmatpush.msra.mxu0 0.0
  %6080 = vmatpush.msra.mxu0 0.0
  %6081 = vmatpush.msra.mxu0 0.0
  %6082 = vmatpush.msra.mxu0 0.0
  %6083 = vmatpush.msra.mxu0 0.0
  %6084 = vmatpush.msra.mxu0 0.0
  %6085 = vmatpush.msra.mxu0 0.0
  %6086 = vmatpush.msra.mxu0 0.0
  %6087 = vmatpush.msra.mxu0 %v412
  %6088 = vmatpush.msra.mxu0 %v411
  %6089 = vmatpush.msra.mxu0 %v410
  %6090 = vmatpush.msra.mxu0 %v409
  %6091 = vmatmul.f32.gmra.mxu0 %v6053
  %v6092 = vpop.f32.mrf.mxu0
  %v6093 = vadd.f32 %v6000, %v6092
  %6094 = vdwg.mxu0
  %v6095 = vadd.f32 %v6093, %v419
  %v6096 = vmul.f32 %v6095, %v424
  %v6097 = vtanh.pop %v6096
  %v6098 = vadd.f32 %v6097, 1.0
  %v6099 = vmul.f32 %v6098, 0.5
  %v6100 = vmul.f32 %v6099, %v5970
  %6102 = vrot.lane.b32.xlu0 %v6097, 32
  %v6103 = vpop.permute.xlu0 %6102
  %v6105 = vmul.f32 %v6099, %v6103
  %6107 = vrot.lane.b32.xlu0 %v6105, 32
  %v6108 = vpop.permute.xlu0 %6107
  %v6110 = vadd.f32 %v6100, %v6108
  %v6111 = vtanh.pop %v6110
  %6113 = vrot.lane.b32.xlu0 %v6111, 32
  %v6114 = vpop.permute.xlu0 %6113
  %v6116 = vmul.f32 %v6099, %v6114
  %6118 = vrot.lane.b32.xlu0 %v6116, 64
  %v6119 = vpop.permute.xlu0 %6118
  %v6120 = vsel %vm454, %v6119, 0
  %6122 = vmatpush.msra.mxu0 0.0
  %6123 = vmatpush.msra.mxu0 0.0
  %6124 = vmatpush.msra.mxu0 0.0
  %6125 = vmatpush.msra.mxu0 0.0
  %6126 = vmatpush.msra.mxu0 0.0
  %6127 = vmatpush.msra.mxu0 0.0
  %6128 = vmatpush.msra.mxu0 0.0
  %6129 = vmatpush.msra.mxu0 0.0
  %6130 = vmatpush.msra.mxu0 0.0
  %6131 = vmatpush.msra.mxu0 0.0
  %6132 = vmatpush.msra.mxu0 0.0
  %6133 = vmatpush.msra.mxu0 0.0
  %6134 = vmatpush.msra.mxu0 %v416
  %6135 = vmatpush.msra.mxu0 %v415
  %6136 = vmatpush.msra.mxu0 %v414
  %6137 = vmatpush.msra.mxu0 %v413
  %6138 = vmatmul.f32.gmra.mxu0 %v6120
  %v6139 = vpop.f32.mrf.mxu0
  %v6140 = vadd.f32 0.0, %v6139
  %6141 = vdwg.mxu0
  %s6142 = scalar_lea.vmem %s7, 1280
  %v6143 = vld [vmem:[%s6142] sm:$0xff]
  %v6144 = vld [vmem:[%s6142 + $0x8] sm:$0xff]
  %v6145 = vld [vmem:[%s6142 + $0x10] sm:$0xff]
  %v6146 = vld [vmem:[%s6142 + $0x18] sm:$0xff]
  %6147 = vmatpush.msra.mxu0 0.0
  %6148 = vmatpush.msra.mxu0 0.0
  %6149 = vmatpush.msra.mxu0 0.0
  %6150 = vmatpush.msra.mxu0 0.0
  %6151 = vmatpush.msra.mxu0 0.0
  %6152 = vmatpush.msra.mxu0 0.0
  %6153 = vmatpush.msra.mxu0 0.0
  %6154 = vmatpush.msra.mxu0 0.0
  %6155 = vmatpush.msra.mxu0 0.0
  %6156 = vmatpush.msra.mxu0 0.0
  %6157 = vmatpush.msra.mxu0 0.0
  %6158 = vmatpush.msra.mxu0 0.0
  %6159 = vmatpush.msra.mxu0 %v6146
  %6160 = vmatpush.msra.mxu0 %v6145
  %6161 = vmatpush.msra.mxu0 %v6144
  %6162 = vmatpush.msra.mxu0 %v6143
  %6163 = vmatmul.f32.gmra.mxu0 %v6120
  %v6164 = vpop.f32.mrf.mxu0
  %v6165 = vadd.f32 0.0, %v6164
  %6166 = vdwg.mxu0
  %v6167 = vadd.f32 %v6027, %v6165
  %v6168 = vadd.f32 %v379, %v6073
  %v6169 = vmul.f32 %v6168, %v424
  %v6170 = vtanh.pop %v6169
  %v6171 = vadd.f32 %v6170, 1.0
  %v6172 = vmul.f32 %v6171, 0.5
  %v6173 = vmul.f32 %v6172, %v6043
  %6175 = vrot.lane.b32.xlu0 %v6170, 32
  %v6176 = vpop.permute.xlu0 %6175
  %v6178 = vmul.f32 %v6172, %v6176
  %6180 = vrot.lane.b32.xlu0 %v6178, 32
  %v6181 = vpop.permute.xlu0 %6180
  %v6183 = vadd.f32 %v6173, %v6181
  %v6184 = vtanh.pop %v6183
  %6186 = vrot.lane.b32.xlu0 %v6184, 32
  %v6187 = vpop.permute.xlu0 %6186
  %v6189 = vmul.f32 %v6172, %v6187
  %6191 = vrot.lane.b32.xlu0 %v6189, 64
  %v6192 = vpop.permute.xlu0 %6191
  %v6193 = vsel %vm454, %v6192, 0
  %6195 = vmatpush.msra.mxu0 0.0
  %6196 = vmatpush.msra.mxu0 0.0
  %6197 = vmatpush.msra.mxu0 0.0
  %6198 = vmatpush.msra.mxu0 0.0
  %6199 = vmatpush.msra.mxu0 0.0
  %6200 = vmatpush.msra.mxu0 0.0
  %6201 = vmatpush.msra.mxu0 0.0
  %6202 = vmatpush.msra.mxu0 0.0
  %6203 = vmatpush.msra.mxu0 0.0
  %6204 = vmatpush.msra.mxu0 0.0
  %6205 = vmatpush.msra.mxu0 0.0
  %6206 = vmatpush.msra.mxu0 0.0
  %6207 = vmatpush.msra.mxu0 %v408
  %6208 = vmatpush.msra.mxu0 %v407
  %6209 = vmatpush.msra.mxu0 %v406
  %6210 = vmatpush.msra.mxu0 %v405
  %6211 = vmatmul.f32.gmra.mxu0 %v6193
  %v6212 = vpop.f32.mrf.mxu0
  %v6213 = vadd.f32 0.0, %v6212
  %6214 = vdwg.mxu0
  %6215 = vmatpush.msra.mxu0 0.0
  %6216 = vmatpush.msra.mxu0 0.0
  %6217 = vmatpush.msra.mxu0 0.0
  %6218 = vmatpush.msra.mxu0 0.0
  %6219 = vmatpush.msra.mxu0 0.0
  %6220 = vmatpush.msra.mxu0 0.0
  %6221 = vmatpush.msra.mxu0 0.0
  %6222 = vmatpush.msra.mxu0 0.0
  %6223 = vmatpush.msra.mxu0 0.0
  %6224 = vmatpush.msra.mxu0 0.0
  %6225 = vmatpush.msra.mxu0 0.0
  %6226 = vmatpush.msra.mxu0 0.0
  %6227 = vmatpush.msra.mxu0 %v412
  %6228 = vmatpush.msra.mxu0 %v411
  %6229 = vmatpush.msra.mxu0 %v410
  %6230 = vmatpush.msra.mxu0 %v409
  %6231 = vmatmul.f32.gmra.mxu0 %v6193
  %v6232 = vpop.f32.mrf.mxu0
  %v6233 = vadd.f32 %v6140, %v6232
  %6234 = vdwg.mxu0
  %v6235 = vadd.f32 %v6233, %v419
  %v6236 = vmul.f32 %v6235, %v424
  %v6237 = vtanh.pop %v6236
  %v6238 = vadd.f32 %v6237, 1.0
  %v6239 = vmul.f32 %v6238, 0.5
  %v6240 = vmul.f32 %v6239, %v6110
  %6242 = vrot.lane.b32.xlu0 %v6237, 32
  %v6243 = vpop.permute.xlu0 %6242
  %v6245 = vmul.f32 %v6239, %v6243
  %6247 = vrot.lane.b32.xlu0 %v6245, 32
  %v6248 = vpop.permute.xlu0 %6247
  %v6250 = vadd.f32 %v6240, %v6248
  %v6251 = vtanh.pop %v6250
  %6253 = vrot.lane.b32.xlu0 %v6251, 32
  %v6254 = vpop.permute.xlu0 %6253
  %v6256 = vmul.f32 %v6239, %v6254
  %6258 = vrot.lane.b32.xlu0 %v6256, 64
  %v6259 = vpop.permute.xlu0 %6258
  %v6260 = vsel %vm454, %v6259, 0
  %6262 = vmatpush.msra.mxu0 0.0
  %6263 = vmatpush.msra.mxu0 0.0
  %6264 = vmatpush.msra.mxu0 0.0
  %6265 = vmatpush.msra.mxu0 0.0
  %6266 = vmatpush.msra.mxu0 0.0
  %6267 = vmatpush.msra.mxu0 0.0
  %6268 = vmatpush.msra.mxu0 0.0
  %6269 = vmatpush.msra.mxu0 0.0
  %6270 = vmatpush.msra.mxu0 0.0
  %6271 = vmatpush.msra.mxu0 0.0
  %6272 = vmatpush.msra.mxu0 0.0
  %6273 = vmatpush.msra.mxu0 0.0
  %6274 = vmatpush.msra.mxu0 %v416
  %6275 = vmatpush.msra.mxu0 %v415
  %6276 = vmatpush.msra.mxu0 %v414
  %6277 = vmatpush.msra.mxu0 %v413
  %6278 = vmatmul.f32.gmra.mxu0 %v6260
  %v6279 = vpop.f32.mrf.mxu0
  %v6280 = vadd.f32 0.0, %v6279
  %6281 = vdwg.mxu0
  %s6282 = scalar_lea.vmem %s7, 1312
  %v6283 = vld [vmem:[%s6282] sm:$0xff]
  %v6284 = vld [vmem:[%s6282 + $0x8] sm:$0xff]
  %v6285 = vld [vmem:[%s6282 + $0x10] sm:$0xff]
  %v6286 = vld [vmem:[%s6282 + $0x18] sm:$0xff]
  %6287 = vmatpush.msra.mxu0 0.0
  %6288 = vmatpush.msra.mxu0 0.0
  %6289 = vmatpush.msra.mxu0 0.0
  %6290 = vmatpush.msra.mxu0 0.0
  %6291 = vmatpush.msra.mxu0 0.0
  %6292 = vmatpush.msra.mxu0 0.0
  %6293 = vmatpush.msra.mxu0 0.0
  %6294 = vmatpush.msra.mxu0 0.0
  %6295 = vmatpush.msra.mxu0 0.0
  %6296 = vmatpush.msra.mxu0 0.0
  %6297 = vmatpush.msra.mxu0 0.0
  %6298 = vmatpush.msra.mxu0 0.0
  %6299 = vmatpush.msra.mxu0 %v6286
  %6300 = vmatpush.msra.mxu0 %v6285
  %6301 = vmatpush.msra.mxu0 %v6284
  %6302 = vmatpush.msra.mxu0 %v6283
  %6303 = vmatmul.f32.gmra.mxu0 %v6260
  %v6304 = vpop.f32.mrf.mxu0
  %v6305 = vadd.f32 0.0, %v6304
  %6306 = vdwg.mxu0
  %v6307 = vadd.f32 %v6167, %v6305
  %v6308 = vadd.f32 %v382, %v6213
  %v6309 = vmul.f32 %v6308, %v424
  %v6310 = vtanh.pop %v6309
  %v6311 = vadd.f32 %v6310, 1.0
  %v6312 = vmul.f32 %v6311, 0.5
  %v6313 = vmul.f32 %v6312, %v6183
  %6315 = vrot.lane.b32.xlu0 %v6310, 32
  %v6316 = vpop.permute.xlu0 %6315
  %v6318 = vmul.f32 %v6312, %v6316
  %6320 = vrot.lane.b32.xlu0 %v6318, 32
  %v6321 = vpop.permute.xlu0 %6320
  %v6323 = vadd.f32 %v6313, %v6321
  %v6324 = vtanh.pop %v6323
  %6326 = vrot.lane.b32.xlu0 %v6324, 32
  %v6327 = vpop.permute.xlu0 %6326
  %v6329 = vmul.f32 %v6312, %v6327
  %6331 = vrot.lane.b32.xlu0 %v6329, 64
  %v6332 = vpop.permute.xlu0 %6331
  %v6333 = vsel %vm454, %v6332, 0
  %6335 = vmatpush.msra.mxu0 0.0
  %6336 = vmatpush.msra.mxu0 0.0
  %6337 = vmatpush.msra.mxu0 0.0
  %6338 = vmatpush.msra.mxu0 0.0
  %6339 = vmatpush.msra.mxu0 0.0
  %6340 = vmatpush.msra.mxu0 0.0
  %6341 = vmatpush.msra.mxu0 0.0
  %6342 = vmatpush.msra.mxu0 0.0
  %6343 = vmatpush.msra.mxu0 0.0
  %6344 = vmatpush.msra.mxu0 0.0
  %6345 = vmatpush.msra.mxu0 0.0
  %6346 = vmatpush.msra.mxu0 0.0
  %6347 = vmatpush.msra.mxu0 %v408
  %6348 = vmatpush.msra.mxu0 %v407
  %6349 = vmatpush.msra.mxu0 %v406
  %6350 = vmatpush.msra.mxu0 %v405
  %6351 = vmatmul.f32.gmra.mxu0 %v6333
  %v6352 = vpop.f32.mrf.mxu0
  %v6353 = vadd.f32 0.0, %v6352
  %6354 = vdwg.mxu0
  %6355 = vmatpush.msra.mxu0 0.0
  %6356 = vmatpush.msra.mxu0 0.0
  %6357 = vmatpush.msra.mxu0 0.0
  %6358 = vmatpush.msra.mxu0 0.0
  %6359 = vmatpush.msra.mxu0 0.0
  %6360 = vmatpush.msra.mxu0 0.0
  %6361 = vmatpush.msra.mxu0 0.0
  %6362 = vmatpush.msra.mxu0 0.0
  %6363 = vmatpush.msra.mxu0 0.0
  %6364 = vmatpush.msra.mxu0 0.0
  %6365 = vmatpush.msra.mxu0 0.0
  %6366 = vmatpush.msra.mxu0 0.0
  %6367 = vmatpush.msra.mxu0 %v412
  %6368 = vmatpush.msra.mxu0 %v411
  %6369 = vmatpush.msra.mxu0 %v410
  %6370 = vmatpush.msra.mxu0 %v409
  %6371 = vmatmul.f32.gmra.mxu0 %v6333
  %v6372 = vpop.f32.mrf.mxu0
  %v6373 = vadd.f32 %v6280, %v6372
  %6374 = vdwg.mxu0
  %v6375 = vadd.f32 %v6373, %v419
  %v6376 = vmul.f32 %v6375, %v424
  %v6377 = vtanh.pop %v6376
  %v6378 = vadd.f32 %v6377, 1.0
  %v6379 = vmul.f32 %v6378, 0.5
  %v6380 = vmul.f32 %v6379, %v6250
  %6382 = vrot.lane.b32.xlu0 %v6377, 32
  %v6383 = vpop.permute.xlu0 %6382
  %v6385 = vmul.f32 %v6379, %v6383
  %6387 = vrot.lane.b32.xlu0 %v6385, 32
  %v6388 = vpop.permute.xlu0 %6387
  %v6390 = vadd.f32 %v6380, %v6388
  %v6391 = vtanh.pop %v6390
  %6393 = vrot.lane.b32.xlu0 %v6391, 32
  %v6394 = vpop.permute.xlu0 %6393
  %v6396 = vmul.f32 %v6379, %v6394
  %6398 = vrot.lane.b32.xlu0 %v6396, 64
  %v6399 = vpop.permute.xlu0 %6398
  %v6400 = vsel %vm454, %v6399, 0
  %6402 = vmatpush.msra.mxu0 0.0
  %6403 = vmatpush.msra.mxu0 0.0
  %6404 = vmatpush.msra.mxu0 0.0
  %6405 = vmatpush.msra.mxu0 0.0
  %6406 = vmatpush.msra.mxu0 0.0
  %6407 = vmatpush.msra.mxu0 0.0
  %6408 = vmatpush.msra.mxu0 0.0
  %6409 = vmatpush.msra.mxu0 0.0
  %6410 = vmatpush.msra.mxu0 0.0
  %6411 = vmatpush.msra.mxu0 0.0
  %6412 = vmatpush.msra.mxu0 0.0
  %6413 = vmatpush.msra.mxu0 0.0
  %6414 = vmatpush.msra.mxu0 %v416
  %6415 = vmatpush.msra.mxu0 %v415
  %6416 = vmatpush.msra.mxu0 %v414
  %6417 = vmatpush.msra.mxu0 %v413
  %6418 = vmatmul.f32.gmra.mxu0 %v6400
  %v6419 = vpop.f32.mrf.mxu0
  %v6420 = vadd.f32 0.0, %v6419
  %6421 = vdwg.mxu0
  %s6422 = scalar_lea.vmem %s7, 1344
  %v6423 = vld [vmem:[%s6422] sm:$0xff]
  %v6424 = vld [vmem:[%s6422 + $0x8] sm:$0xff]
  %v6425 = vld [vmem:[%s6422 + $0x10] sm:$0xff]
  %v6426 = vld [vmem:[%s6422 + $0x18] sm:$0xff]
  %6427 = vmatpush.msra.mxu0 0.0
  %6428 = vmatpush.msra.mxu0 0.0
  %6429 = vmatpush.msra.mxu0 0.0
  %6430 = vmatpush.msra.mxu0 0.0
  %6431 = vmatpush.msra.mxu0 0.0
  %6432 = vmatpush.msra.mxu0 0.0
  %6433 = vmatpush.msra.mxu0 0.0
  %6434 = vmatpush.msra.mxu0 0.0
  %6435 = vmatpush.msra.mxu0 0.0
  %6436 = vmatpush.msra.mxu0 0.0
  %6437 = vmatpush.msra.mxu0 0.0
  %6438 = vmatpush.msra.mxu0 0.0
  %6439 = vmatpush.msra.mxu0 %v6426
  %6440 = vmatpush.msra.mxu0 %v6425
  %6441 = vmatpush.msra.mxu0 %v6424
  %6442 = vmatpush.msra.mxu0 %v6423
  %6443 = vmatmul.f32.gmra.mxu0 %v6400
  %v6444 = vpop.f32.mrf.mxu0
  %v6445 = vadd.f32 0.0, %v6444
  %6446 = vdwg.mxu0
  %v6447 = vadd.f32 %v6307, %v6445
  %v6448 = vadd.f32 %v385, %v6353
  %v6449 = vmul.f32 %v6448, %v424
  %v6450 = vtanh.pop %v6449
  %v6451 = vadd.f32 %v6450, 1.0
  %v6452 = vmul.f32 %v6451, 0.5
  %v6453 = vmul.f32 %v6452, %v6323
  %6455 = vrot.lane.b32.xlu0 %v6450, 32
  %v6456 = vpop.permute.xlu0 %6455
  %v6458 = vmul.f32 %v6452, %v6456
  %6460 = vrot.lane.b32.xlu0 %v6458, 32
  %v6461 = vpop.permute.xlu0 %6460
  %v6463 = vadd.f32 %v6453, %v6461
  %v6464 = vtanh.pop %v6463
  %6466 = vrot.lane.b32.xlu0 %v6464, 32
  %v6467 = vpop.permute.xlu0 %6466
  %v6469 = vmul.f32 %v6452, %v6467
  %6471 = vrot.lane.b32.xlu0 %v6469, 64
  %v6472 = vpop.permute.xlu0 %6471
  %v6473 = vsel %vm454, %v6472, 0
  %6475 = vmatpush.msra.mxu0 0.0
  %6476 = vmatpush.msra.mxu0 0.0
  %6477 = vmatpush.msra.mxu0 0.0
  %6478 = vmatpush.msra.mxu0 0.0
  %6479 = vmatpush.msra.mxu0 0.0
  %6480 = vmatpush.msra.mxu0 0.0
  %6481 = vmatpush.msra.mxu0 0.0
  %6482 = vmatpush.msra.mxu0 0.0
  %6483 = vmatpush.msra.mxu0 0.0
  %6484 = vmatpush.msra.mxu0 0.0
  %6485 = vmatpush.msra.mxu0 0.0
  %6486 = vmatpush.msra.mxu0 0.0
  %6487 = vmatpush.msra.mxu0 %v408
  %6488 = vmatpush.msra.mxu0 %v407
  %6489 = vmatpush.msra.mxu0 %v406
  %6490 = vmatpush.msra.mxu0 %v405
  %6491 = vmatmul.f32.gmra.mxu0 %v6473
  %v6492 = vpop.f32.mrf.mxu0
  %v6493 = vadd.f32 0.0, %v6492
  %6494 = vdwg.mxu0
  %6495 = vmatpush.msra.mxu0 0.0
  %6496 = vmatpush.msra.mxu0 0.0
  %6497 = vmatpush.msra.mxu0 0.0
  %6498 = vmatpush.msra.mxu0 0.0
  %6499 = vmatpush.msra.mxu0 0.0
  %6500 = vmatpush.msra.mxu0 0.0
  %6501 = vmatpush.msra.mxu0 0.0
  %6502 = vmatpush.msra.mxu0 0.0
  %6503 = vmatpush.msra.mxu0 0.0
  %6504 = vmatpush.msra.mxu0 0.0
  %6505 = vmatpush.msra.mxu0 0.0
  %6506 = vmatpush.msra.mxu0 0.0
  %6507 = vmatpush.msra.mxu0 %v412
  %6508 = vmatpush.msra.mxu0 %v411
  %6509 = vmatpush.msra.mxu0 %v410
  %6510 = vmatpush.msra.mxu0 %v409
  %6511 = vmatmul.f32.gmra.mxu0 %v6473
  %v6512 = vpop.f32.mrf.mxu0
  %v6513 = vadd.f32 %v6420, %v6512
  %6514 = vdwg.mxu0
  %v6515 = vadd.f32 %v6513, %v419
  %v6516 = vmul.f32 %v6515, %v424
  %v6517 = vtanh.pop %v6516
  %v6518 = vadd.f32 %v6517, 1.0
  %v6519 = vmul.f32 %v6518, 0.5
  %v6520 = vmul.f32 %v6519, %v6390
  %6522 = vrot.lane.b32.xlu0 %v6517, 32
  %v6523 = vpop.permute.xlu0 %6522
  %v6525 = vmul.f32 %v6519, %v6523
  %6527 = vrot.lane.b32.xlu0 %v6525, 32
  %v6528 = vpop.permute.xlu0 %6527
  %v6530 = vadd.f32 %v6520, %v6528
  %v6531 = vtanh.pop %v6530
  %6533 = vrot.lane.b32.xlu0 %v6531, 32
  %v6534 = vpop.permute.xlu0 %6533
  %v6536 = vmul.f32 %v6519, %v6534
  %6538 = vrot.lane.b32.xlu0 %v6536, 64
  %v6539 = vpop.permute.xlu0 %6538
  %v6540 = vsel %vm454, %v6539, 0
  %6542 = vmatpush.msra.mxu0 0.0
  %6543 = vmatpush.msra.mxu0 0.0
  %6544 = vmatpush.msra.mxu0 0.0
  %6545 = vmatpush.msra.mxu0 0.0
  %6546 = vmatpush.msra.mxu0 0.0
  %6547 = vmatpush.msra.mxu0 0.0
  %6548 = vmatpush.msra.mxu0 0.0
  %6549 = vmatpush.msra.mxu0 0.0
  %6550 = vmatpush.msra.mxu0 0.0
  %6551 = vmatpush.msra.mxu0 0.0
  %6552 = vmatpush.msra.mxu0 0.0
  %6553 = vmatpush.msra.mxu0 0.0
  %6554 = vmatpush.msra.mxu0 %v416
  %6555 = vmatpush.msra.mxu0 %v415
  %6556 = vmatpush.msra.mxu0 %v414
  %6557 = vmatpush.msra.mxu0 %v413
  %6558 = vmatmul.f32.gmra.mxu0 %v6540
  %v6559 = vpop.f32.mrf.mxu0
  %v6560 = vadd.f32 0.0, %v6559
  %6561 = vdwg.mxu0
  %s6562 = scalar_lea.vmem %s7, 1376
  %v6563 = vld [vmem:[%s6562] sm:$0xff]
  %v6564 = vld [vmem:[%s6562 + $0x8] sm:$0xff]
  %v6565 = vld [vmem:[%s6562 + $0x10] sm:$0xff]
  %v6566 = vld [vmem:[%s6562 + $0x18] sm:$0xff]
  %6567 = vmatpush.msra.mxu0 0.0
  %6568 = vmatpush.msra.mxu0 0.0
  %6569 = vmatpush.msra.mxu0 0.0
  %6570 = vmatpush.msra.mxu0 0.0
  %6571 = vmatpush.msra.mxu0 0.0
  %6572 = vmatpush.msra.mxu0 0.0
  %6573 = vmatpush.msra.mxu0 0.0
  %6574 = vmatpush.msra.mxu0 0.0
  %6575 = vmatpush.msra.mxu0 0.0
  %6576 = vmatpush.msra.mxu0 0.0
  %6577 = vmatpush.msra.mxu0 0.0
  %6578 = vmatpush.msra.mxu0 0.0
  %6579 = vmatpush.msra.mxu0 %v6566
  %6580 = vmatpush.msra.mxu0 %v6565
  %6581 = vmatpush.msra.mxu0 %v6564
  %6582 = vmatpush.msra.mxu0 %v6563
  %6583 = vmatmul.f32.gmra.mxu0 %v6540
  %v6584 = vpop.f32.mrf.mxu0
  %v6585 = vadd.f32 0.0, %v6584
  %6586 = vdwg.mxu0
  %v6587 = vadd.f32 %v6447, %v6585
  %v6588 = vadd.f32 %v388, %v6493
  %v6589 = vmul.f32 %v6588, %v424
  %v6590 = vtanh.pop %v6589
  %v6591 = vadd.f32 %v6590, 1.0
  %v6592 = vmul.f32 %v6591, 0.5
  %v6593 = vmul.f32 %v6592, %v6463
  %6595 = vrot.lane.b32.xlu0 %v6590, 32
  %v6596 = vpop.permute.xlu0 %6595
  %v6598 = vmul.f32 %v6592, %v6596
  %6600 = vrot.lane.b32.xlu0 %v6598, 32
  %v6601 = vpop.permute.xlu0 %6600
  %v6603 = vadd.f32 %v6593, %v6601
  %v6604 = vtanh.pop %v6603
  %6606 = vrot.lane.b32.xlu0 %v6604, 32
  %v6607 = vpop.permute.xlu0 %6606
  %v6609 = vmul.f32 %v6592, %v6607
  %6611 = vrot.lane.b32.xlu0 %v6609, 64
  %v6612 = vpop.permute.xlu0 %6611
  %v6613 = vsel %vm454, %v6612, 0
  %6615 = vmatpush.msra.mxu0 0.0
  %6616 = vmatpush.msra.mxu0 0.0
  %6617 = vmatpush.msra.mxu0 0.0
  %6618 = vmatpush.msra.mxu0 0.0
  %6619 = vmatpush.msra.mxu0 0.0
  %6620 = vmatpush.msra.mxu0 0.0
  %6621 = vmatpush.msra.mxu0 0.0
  %6622 = vmatpush.msra.mxu0 0.0
  %6623 = vmatpush.msra.mxu0 0.0
  %6624 = vmatpush.msra.mxu0 0.0
  %6625 = vmatpush.msra.mxu0 0.0
  %6626 = vmatpush.msra.mxu0 0.0
  %6627 = vmatpush.msra.mxu0 %v408
  %6628 = vmatpush.msra.mxu0 %v407
  %6629 = vmatpush.msra.mxu0 %v406
  %6630 = vmatpush.msra.mxu0 %v405
  %6631 = vmatmul.f32.gmra.mxu0 %v6613
  %v6632 = vpop.f32.mrf.mxu0
  %v6633 = vadd.f32 0.0, %v6632
  %6634 = vdwg.mxu0
  %6635 = vmatpush.msra.mxu0 0.0
  %6636 = vmatpush.msra.mxu0 0.0
  %6637 = vmatpush.msra.mxu0 0.0
  %6638 = vmatpush.msra.mxu0 0.0
  %6639 = vmatpush.msra.mxu0 0.0
  %6640 = vmatpush.msra.mxu0 0.0
  %6641 = vmatpush.msra.mxu0 0.0
  %6642 = vmatpush.msra.mxu0 0.0
  %6643 = vmatpush.msra.mxu0 0.0
  %6644 = vmatpush.msra.mxu0 0.0
  %6645 = vmatpush.msra.mxu0 0.0
  %6646 = vmatpush.msra.mxu0 0.0
  %6647 = vmatpush.msra.mxu0 %v412
  %6648 = vmatpush.msra.mxu0 %v411
  %6649 = vmatpush.msra.mxu0 %v410
  %6650 = vmatpush.msra.mxu0 %v409
  %6651 = vmatmul.f32.gmra.mxu0 %v6613
  %v6652 = vpop.f32.mrf.mxu0
  %v6653 = vadd.f32 %v6560, %v6652
  %6654 = vdwg.mxu0
  %v6655 = vadd.f32 %v6653, %v419
  %v6656 = vmul.f32 %v6655, %v424
  %v6657 = vtanh.pop %v6656
  %v6658 = vadd.f32 %v6657, 1.0
  %v6659 = vmul.f32 %v6658, 0.5
  %v6660 = vmul.f32 %v6659, %v6530
  %6662 = vrot.lane.b32.xlu0 %v6657, 32
  %v6663 = vpop.permute.xlu0 %6662
  %v6665 = vmul.f32 %v6659, %v6663
  %6667 = vrot.lane.b32.xlu0 %v6665, 32
  %v6668 = vpop.permute.xlu0 %6667
  %v6670 = vadd.f32 %v6660, %v6668
  %v6671 = vtanh.pop %v6670
  %6673 = vrot.lane.b32.xlu0 %v6671, 32
  %v6674 = vpop.permute.xlu0 %6673
  %v6676 = vmul.f32 %v6659, %v6674
  %6678 = vrot.lane.b32.xlu0 %v6676, 64
  %v6679 = vpop.permute.xlu0 %6678
  %v6680 = vsel %vm454, %v6679, 0
  %6682 = vmatpush.msra.mxu0 0.0
  %6683 = vmatpush.msra.mxu0 0.0
  %6684 = vmatpush.msra.mxu0 0.0
  %6685 = vmatpush.msra.mxu0 0.0
  %6686 = vmatpush.msra.mxu0 0.0
  %6687 = vmatpush.msra.mxu0 0.0
  %6688 = vmatpush.msra.mxu0 0.0
  %6689 = vmatpush.msra.mxu0 0.0
  %6690 = vmatpush.msra.mxu0 0.0
  %6691 = vmatpush.msra.mxu0 0.0
  %6692 = vmatpush.msra.mxu0 0.0
  %6693 = vmatpush.msra.mxu0 0.0
  %6694 = vmatpush.msra.mxu0 %v416
  %6695 = vmatpush.msra.mxu0 %v415
  %6696 = vmatpush.msra.mxu0 %v414
  %6697 = vmatpush.msra.mxu0 %v413
  %6698 = vmatmul.f32.gmra.mxu0 %v6680
  %v6699 = vpop.f32.mrf.mxu0
  %v6700 = vadd.f32 0.0, %v6699
  %6701 = vdwg.mxu0
  %s6702 = scalar_lea.vmem %s7, 1408
  %v6703 = vld [vmem:[%s6702] sm:$0xff]
  %v6704 = vld [vmem:[%s6702 + $0x8] sm:$0xff]
  %v6705 = vld [vmem:[%s6702 + $0x10] sm:$0xff]
  %v6706 = vld [vmem:[%s6702 + $0x18] sm:$0xff]
  %6707 = vmatpush.msra.mxu0 0.0
  %6708 = vmatpush.msra.mxu0 0.0
  %6709 = vmatpush.msra.mxu0 0.0
  %6710 = vmatpush.msra.mxu0 0.0
  %6711 = vmatpush.msra.mxu0 0.0
  %6712 = vmatpush.msra.mxu0 0.0
  %6713 = vmatpush.msra.mxu0 0.0
  %6714 = vmatpush.msra.mxu0 0.0
  %6715 = vmatpush.msra.mxu0 0.0
  %6716 = vmatpush.msra.mxu0 0.0
  %6717 = vmatpush.msra.mxu0 0.0
  %6718 = vmatpush.msra.mxu0 0.0
  %6719 = vmatpush.msra.mxu0 %v6706
  %6720 = vmatpush.msra.mxu0 %v6705
  %6721 = vmatpush.msra.mxu0 %v6704
  %6722 = vmatpush.msra.mxu0 %v6703
  %6723 = vmatmul.f32.gmra.mxu0 %v6680
  %v6724 = vpop.f32.mrf.mxu0
  %v6725 = vadd.f32 0.0, %v6724
  %6726 = vdwg.mxu0
  %v6727 = vadd.f32 %v6587, %v6725
  %v6728 = vadd.f32 %v391, %v6633
  %v6729 = vmul.f32 %v6728, %v424
  %v6730 = vtanh.pop %v6729
  %v6731 = vadd.f32 %v6730, 1.0
  %v6732 = vmul.f32 %v6731, 0.5
  %v6733 = vmul.f32 %v6732, %v6603
  %6735 = vrot.lane.b32.xlu0 %v6730, 32
  %v6736 = vpop.permute.xlu0 %6735
  %v6738 = vmul.f32 %v6732, %v6736
  %6740 = vrot.lane.b32.xlu0 %v6738, 32
  %v6741 = vpop.permute.xlu0 %6740
  %v6743 = vadd.f32 %v6733, %v6741
  %v6744 = vtanh.pop %v6743
  %6746 = vrot.lane.b32.xlu0 %v6744, 32
  %v6747 = vpop.permute.xlu0 %6746
  %v6749 = vmul.f32 %v6732, %v6747
  %6751 = vrot.lane.b32.xlu0 %v6749, 64
  %v6752 = vpop.permute.xlu0 %6751
  %v6753 = vsel %vm454, %v6752, 0
  %6755 = vmatpush.msra.mxu0 0.0
  %6756 = vmatpush.msra.mxu0 0.0
  %6757 = vmatpush.msra.mxu0 0.0
  %6758 = vmatpush.msra.mxu0 0.0
  %6759 = vmatpush.msra.mxu0 0.0
  %6760 = vmatpush.msra.mxu0 0.0
  %6761 = vmatpush.msra.mxu0 0.0
  %6762 = vmatpush.msra.mxu0 0.0
  %6763 = vmatpush.msra.mxu0 0.0
  %6764 = vmatpush.msra.mxu0 0.0
  %6765 = vmatpush.msra.mxu0 0.0
  %6766 = vmatpush.msra.mxu0 0.0
  %6767 = vmatpush.msra.mxu0 %v408
  %6768 = vmatpush.msra.mxu0 %v407
  %6769 = vmatpush.msra.mxu0 %v406
  %6770 = vmatpush.msra.mxu0 %v405
  %6771 = vmatmul.f32.gmra.mxu0 %v6753
  %v6772 = vpop.f32.mrf.mxu0
  %v6773 = vadd.f32 0.0, %v6772
  %6774 = vdwg.mxu0
  %6775 = vmatpush.msra.mxu0 0.0
  %6776 = vmatpush.msra.mxu0 0.0
  %6777 = vmatpush.msra.mxu0 0.0
  %6778 = vmatpush.msra.mxu0 0.0
  %6779 = vmatpush.msra.mxu0 0.0
  %6780 = vmatpush.msra.mxu0 0.0
  %6781 = vmatpush.msra.mxu0 0.0
  %6782 = vmatpush.msra.mxu0 0.0
  %6783 = vmatpush.msra.mxu0 0.0
  %6784 = vmatpush.msra.mxu0 0.0
  %6785 = vmatpush.msra.mxu0 0.0
  %6786 = vmatpush.msra.mxu0 0.0
  %6787 = vmatpush.msra.mxu0 %v412
  %6788 = vmatpush.msra.mxu0 %v411
  %6789 = vmatpush.msra.mxu0 %v410
  %6790 = vmatpush.msra.mxu0 %v409
  %6791 = vmatmul.f32.gmra.mxu0 %v6753
  %v6792 = vpop.f32.mrf.mxu0
  %v6793 = vadd.f32 %v6700, %v6792
  %6794 = vdwg.mxu0
  %v6795 = vadd.f32 %v6793, %v419
  %v6796 = vmul.f32 %v6795, %v424
  %v6797 = vtanh.pop %v6796
  %v6798 = vadd.f32 %v6797, 1.0
  %v6799 = vmul.f32 %v6798, 0.5
  %v6800 = vmul.f32 %v6799, %v6670
  %6802 = vrot.lane.b32.xlu0 %v6797, 32
  %v6803 = vpop.permute.xlu0 %6802
  %v6805 = vmul.f32 %v6799, %v6803
  %6807 = vrot.lane.b32.xlu0 %v6805, 32
  %v6808 = vpop.permute.xlu0 %6807
  %v6810 = vadd.f32 %v6800, %v6808
  %v6811 = vtanh.pop %v6810
  %6813 = vrot.lane.b32.xlu0 %v6811, 32
  %v6814 = vpop.permute.xlu0 %6813
  %v6816 = vmul.f32 %v6799, %v6814
  %6818 = vrot.lane.b32.xlu0 %v6816, 64
  %v6819 = vpop.permute.xlu0 %6818
  %v6820 = vsel %vm454, %v6819, 0
  %6822 = vmatpush.msra.mxu0 0.0
  %6823 = vmatpush.msra.mxu0 0.0
  %6824 = vmatpush.msra.mxu0 0.0
  %6825 = vmatpush.msra.mxu0 0.0
  %6826 = vmatpush.msra.mxu0 0.0
  %6827 = vmatpush.msra.mxu0 0.0
  %6828 = vmatpush.msra.mxu0 0.0
  %6829 = vmatpush.msra.mxu0 0.0
  %6830 = vmatpush.msra.mxu0 0.0
  %6831 = vmatpush.msra.mxu0 0.0
  %6832 = vmatpush.msra.mxu0 0.0
  %6833 = vmatpush.msra.mxu0 0.0
  %6834 = vmatpush.msra.mxu0 %v416
  %6835 = vmatpush.msra.mxu0 %v415
  %6836 = vmatpush.msra.mxu0 %v414
  %6837 = vmatpush.msra.mxu0 %v413
  %6838 = vmatmul.f32.gmra.mxu0 %v6820
  %v6839 = vpop.f32.mrf.mxu0
  %v6840 = vadd.f32 0.0, %v6839
  %6841 = vdwg.mxu0
  %s6842 = scalar_lea.vmem %s7, 1440
  %v6843 = vld [vmem:[%s6842] sm:$0xff]
  %v6844 = vld [vmem:[%s6842 + $0x8] sm:$0xff]
  %v6845 = vld [vmem:[%s6842 + $0x10] sm:$0xff]
  %v6846 = vld [vmem:[%s6842 + $0x18] sm:$0xff]
  %6847 = vmatpush.msra.mxu0 0.0
  %6848 = vmatpush.msra.mxu0 0.0
  %6849 = vmatpush.msra.mxu0 0.0
  %6850 = vmatpush.msra.mxu0 0.0
  %6851 = vmatpush.msra.mxu0 0.0
  %6852 = vmatpush.msra.mxu0 0.0
  %6853 = vmatpush.msra.mxu0 0.0
  %6854 = vmatpush.msra.mxu0 0.0
  %6855 = vmatpush.msra.mxu0 0.0
  %6856 = vmatpush.msra.mxu0 0.0
  %6857 = vmatpush.msra.mxu0 0.0
  %6858 = vmatpush.msra.mxu0 0.0
  %6859 = vmatpush.msra.mxu0 %v6846
  %6860 = vmatpush.msra.mxu0 %v6845
  %6861 = vmatpush.msra.mxu0 %v6844
  %6862 = vmatpush.msra.mxu0 %v6843
  %6863 = vmatmul.f32.gmra.mxu0 %v6820
  %v6864 = vpop.f32.mrf.mxu0
  %v6865 = vadd.f32 0.0, %v6864
  %6866 = vdwg.mxu0
  %v6867 = vadd.f32 %v6727, %v6865
  %v6868 = vadd.f32 %v394, %v6773
  %v6869 = vmul.f32 %v6868, %v424
  %v6870 = vtanh.pop %v6869
  %v6871 = vadd.f32 %v6870, 1.0
  %v6872 = vmul.f32 %v6871, 0.5
  %v6873 = vmul.f32 %v6872, %v6743
  %6875 = vrot.lane.b32.xlu0 %v6870, 32
  %v6876 = vpop.permute.xlu0 %6875
  %v6878 = vmul.f32 %v6872, %v6876
  %6880 = vrot.lane.b32.xlu0 %v6878, 32
  %v6881 = vpop.permute.xlu0 %6880
  %v6883 = vadd.f32 %v6873, %v6881
  %v6884 = vtanh.pop %v6883
  %6886 = vrot.lane.b32.xlu0 %v6884, 32
  %v6887 = vpop.permute.xlu0 %6886
  %v6889 = vmul.f32 %v6872, %v6887
  %6891 = vrot.lane.b32.xlu0 %v6889, 64
  %v6892 = vpop.permute.xlu0 %6891
  %v6893 = vsel %vm454, %v6892, 0
  %6895 = vmatpush.msra.mxu0 0.0
  %6896 = vmatpush.msra.mxu0 0.0
  %6897 = vmatpush.msra.mxu0 0.0
  %6898 = vmatpush.msra.mxu0 0.0
  %6899 = vmatpush.msra.mxu0 0.0
  %6900 = vmatpush.msra.mxu0 0.0
  %6901 = vmatpush.msra.mxu0 0.0
  %6902 = vmatpush.msra.mxu0 0.0
  %6903 = vmatpush.msra.mxu0 0.0
  %6904 = vmatpush.msra.mxu0 0.0
  %6905 = vmatpush.msra.mxu0 0.0
  %6906 = vmatpush.msra.mxu0 0.0
  %6907 = vmatpush.msra.mxu0 %v408
  %6908 = vmatpush.msra.mxu0 %v407
  %6909 = vmatpush.msra.mxu0 %v406
  %6910 = vmatpush.msra.mxu0 %v405
  %6911 = vmatmul.f32.gmra.mxu0 %v6893
  %v6912 = vpop.f32.mrf.mxu0
  %v6913 = vadd.f32 0.0, %v6912
  %6914 = vdwg.mxu0
  %6915 = vmatpush.msra.mxu0 0.0
  %6916 = vmatpush.msra.mxu0 0.0
  %6917 = vmatpush.msra.mxu0 0.0
  %6918 = vmatpush.msra.mxu0 0.0
  %6919 = vmatpush.msra.mxu0 0.0
  %6920 = vmatpush.msra.mxu0 0.0
  %6921 = vmatpush.msra.mxu0 0.0
  %6922 = vmatpush.msra.mxu0 0.0
  %6923 = vmatpush.msra.mxu0 0.0
  %6924 = vmatpush.msra.mxu0 0.0
  %6925 = vmatpush.msra.mxu0 0.0
  %6926 = vmatpush.msra.mxu0 0.0
  %6927 = vmatpush.msra.mxu0 %v412
  %6928 = vmatpush.msra.mxu0 %v411
  %6929 = vmatpush.msra.mxu0 %v410
  %6930 = vmatpush.msra.mxu0 %v409
  %6931 = vmatmul.f32.gmra.mxu0 %v6893
  %v6932 = vpop.f32.mrf.mxu0
  %v6933 = vadd.f32 %v6840, %v6932
  %6934 = vdwg.mxu0
  %v6935 = vadd.f32 %v6933, %v419
  %v6936 = vmul.f32 %v6935, %v424
  %v6937 = vtanh.pop %v6936
  %v6938 = vadd.f32 %v6937, 1.0
  %v6939 = vmul.f32 %v6938, 0.5
  %v6940 = vmul.f32 %v6939, %v6810
  %6942 = vrot.lane.b32.xlu0 %v6937, 32
  %v6943 = vpop.permute.xlu0 %6942
  %v6945 = vmul.f32 %v6939, %v6943
  %6947 = vrot.lane.b32.xlu0 %v6945, 32
  %v6948 = vpop.permute.xlu0 %6947
  %v6950 = vadd.f32 %v6940, %v6948
  %v6951 = vtanh.pop %v6950
  %6953 = vrot.lane.b32.xlu0 %v6951, 32
  %v6954 = vpop.permute.xlu0 %6953
  %v6956 = vmul.f32 %v6939, %v6954
  %6958 = vrot.lane.b32.xlu0 %v6956, 64
  %v6959 = vpop.permute.xlu0 %6958
  %v6960 = vsel %vm454, %v6959, 0
  %6962 = vmatpush.msra.mxu0 0.0
  %6963 = vmatpush.msra.mxu0 0.0
  %6964 = vmatpush.msra.mxu0 0.0
  %6965 = vmatpush.msra.mxu0 0.0
  %6966 = vmatpush.msra.mxu0 0.0
  %6967 = vmatpush.msra.mxu0 0.0
  %6968 = vmatpush.msra.mxu0 0.0
  %6969 = vmatpush.msra.mxu0 0.0
  %6970 = vmatpush.msra.mxu0 0.0
  %6971 = vmatpush.msra.mxu0 0.0
  %6972 = vmatpush.msra.mxu0 0.0
  %6973 = vmatpush.msra.mxu0 0.0
  %6974 = vmatpush.msra.mxu0 %v416
  %6975 = vmatpush.msra.mxu0 %v415
  %6976 = vmatpush.msra.mxu0 %v414
  %6977 = vmatpush.msra.mxu0 %v413
  %6978 = vmatmul.f32.gmra.mxu0 %v6960
  %v6979 = vpop.f32.mrf.mxu0
  %v6980 = vadd.f32 0.0, %v6979
  %6981 = vdwg.mxu0
  %s6982 = scalar_lea.vmem %s7, 1472
  %v6983 = vld [vmem:[%s6982] sm:$0xff]
  %v6984 = vld [vmem:[%s6982 + $0x8] sm:$0xff]
  %v6985 = vld [vmem:[%s6982 + $0x10] sm:$0xff]
  %v6986 = vld [vmem:[%s6982 + $0x18] sm:$0xff]
  %6987 = vmatpush.msra.mxu0 0.0
  %6988 = vmatpush.msra.mxu0 0.0
  %6989 = vmatpush.msra.mxu0 0.0
  %6990 = vmatpush.msra.mxu0 0.0
  %6991 = vmatpush.msra.mxu0 0.0
  %6992 = vmatpush.msra.mxu0 0.0
  %6993 = vmatpush.msra.mxu0 0.0
  %6994 = vmatpush.msra.mxu0 0.0
  %6995 = vmatpush.msra.mxu0 0.0
  %6996 = vmatpush.msra.mxu0 0.0
  %6997 = vmatpush.msra.mxu0 0.0
  %6998 = vmatpush.msra.mxu0 0.0
  %6999 = vmatpush.msra.mxu0 %v6986
  %7000 = vmatpush.msra.mxu0 %v6985
  %7001 = vmatpush.msra.mxu0 %v6984
  %7002 = vmatpush.msra.mxu0 %v6983
  %7003 = vmatmul.f32.gmra.mxu0 %v6960
  %v7004 = vpop.f32.mrf.mxu0
  %v7005 = vadd.f32 0.0, %v7004
  %7006 = vdwg.mxu0
  %v7007 = vadd.f32 %v6867, %v7005
  %v7008 = vadd.f32 %v397, %v6913
  %v7009 = vmul.f32 %v7008, %v424
  %v7010 = vtanh.pop %v7009
  %v7011 = vadd.f32 %v7010, 1.0
  %v7012 = vmul.f32 %v7011, 0.5
  %v7013 = vmul.f32 %v7012, %v6883
  %7015 = vrot.lane.b32.xlu0 %v7010, 32
  %v7016 = vpop.permute.xlu0 %7015
  %v7018 = vmul.f32 %v7012, %v7016
  %7020 = vrot.lane.b32.xlu0 %v7018, 32
  %v7021 = vpop.permute.xlu0 %7020
  %v7023 = vadd.f32 %v7013, %v7021
  %v7024 = vtanh.pop %v7023
  %7026 = vrot.lane.b32.xlu0 %v7024, 32
  %v7027 = vpop.permute.xlu0 %7026
  %v7029 = vmul.f32 %v7012, %v7027
  %7031 = vrot.lane.b32.xlu0 %v7029, 64
  %v7032 = vpop.permute.xlu0 %7031
  %v7033 = vsel %vm454, %v7032, 0
  %7035 = vmatpush.msra.mxu0 0.0
  %7036 = vmatpush.msra.mxu0 0.0
  %7037 = vmatpush.msra.mxu0 0.0
  %7038 = vmatpush.msra.mxu0 0.0
  %7039 = vmatpush.msra.mxu0 0.0
  %7040 = vmatpush.msra.mxu0 0.0
  %7041 = vmatpush.msra.mxu0 0.0
  %7042 = vmatpush.msra.mxu0 0.0
  %7043 = vmatpush.msra.mxu0 0.0
  %7044 = vmatpush.msra.mxu0 0.0
  %7045 = vmatpush.msra.mxu0 0.0
  %7046 = vmatpush.msra.mxu0 0.0
  %7047 = vmatpush.msra.mxu0 %v408
  %7048 = vmatpush.msra.mxu0 %v407
  %7049 = vmatpush.msra.mxu0 %v406
  %7050 = vmatpush.msra.mxu0 %v405
  %7051 = vmatmul.f32.gmra.mxu0 %v7033
  %v7052 = vpop.f32.mrf.mxu0
  %v7053 = vadd.f32 0.0, %v7052
  %7054 = vdwg.mxu0
  %7055 = vmatpush.msra.mxu0 0.0
  %7056 = vmatpush.msra.mxu0 0.0
  %7057 = vmatpush.msra.mxu0 0.0
  %7058 = vmatpush.msra.mxu0 0.0
  %7059 = vmatpush.msra.mxu0 0.0
  %7060 = vmatpush.msra.mxu0 0.0
  %7061 = vmatpush.msra.mxu0 0.0
  %7062 = vmatpush.msra.mxu0 0.0
  %7063 = vmatpush.msra.mxu0 0.0
  %7064 = vmatpush.msra.mxu0 0.0
  %7065 = vmatpush.msra.mxu0 0.0
  %7066 = vmatpush.msra.mxu0 0.0
  %7067 = vmatpush.msra.mxu0 %v412
  %7068 = vmatpush.msra.mxu0 %v411
  %7069 = vmatpush.msra.mxu0 %v410
  %7070 = vmatpush.msra.mxu0 %v409
  %7071 = vmatmul.f32.gmra.mxu0 %v7033
  %v7072 = vpop.f32.mrf.mxu0
  %v7073 = vadd.f32 %v6980, %v7072
  %7074 = vdwg.mxu0
  %v7075 = vadd.f32 %v7073, %v419
  %v7076 = vmul.f32 %v7075, %v424
  %v7077 = vtanh.pop %v7076
  %v7078 = vadd.f32 %v7077, 1.0
  %v7079 = vmul.f32 %v7078, 0.5
  %v7080 = vmul.f32 %v7079, %v6950
  %7082 = vrot.lane.b32.xlu0 %v7077, 32
  %v7083 = vpop.permute.xlu0 %7082
  %v7085 = vmul.f32 %v7079, %v7083
  %7087 = vrot.lane.b32.xlu0 %v7085, 32
  %v7088 = vpop.permute.xlu0 %7087
  %v7090 = vadd.f32 %v7080, %v7088
  %v7091 = vtanh.pop %v7090
  %7093 = vrot.lane.b32.xlu0 %v7091, 32
  %v7094 = vpop.permute.xlu0 %7093
  %v7096 = vmul.f32 %v7079, %v7094
  %7098 = vrot.lane.b32.xlu0 %v7096, 64
  %v7099 = vpop.permute.xlu0 %7098
  %v7100 = vsel %vm454, %v7099, 0
  %7102 = vmatpush.msra.mxu0 0.0
  %7103 = vmatpush.msra.mxu0 0.0
  %7104 = vmatpush.msra.mxu0 0.0
  %7105 = vmatpush.msra.mxu0 0.0
  %7106 = vmatpush.msra.mxu0 0.0
  %7107 = vmatpush.msra.mxu0 0.0
  %7108 = vmatpush.msra.mxu0 0.0
  %7109 = vmatpush.msra.mxu0 0.0
  %7110 = vmatpush.msra.mxu0 0.0
  %7111 = vmatpush.msra.mxu0 0.0
  %7112 = vmatpush.msra.mxu0 0.0
  %7113 = vmatpush.msra.mxu0 0.0
  %7114 = vmatpush.msra.mxu0 %v416
  %7115 = vmatpush.msra.mxu0 %v415
  %7116 = vmatpush.msra.mxu0 %v414
  %7117 = vmatpush.msra.mxu0 %v413
  %7118 = vmatmul.f32.gmra.mxu0 %v7100
  %v7119 = vpop.f32.mrf.mxu0
  %v7120 = vadd.f32 0.0, %v7119
  %7121 = vdwg.mxu0
  %s7122 = scalar_lea.vmem %s7, 1504
  %v7123 = vld [vmem:[%s7122] sm:$0xff]
  %v7124 = vld [vmem:[%s7122 + $0x8] sm:$0xff]
  %v7125 = vld [vmem:[%s7122 + $0x10] sm:$0xff]
  %v7126 = vld [vmem:[%s7122 + $0x18] sm:$0xff]
  %7127 = vmatpush.msra.mxu0 0.0
  %7128 = vmatpush.msra.mxu0 0.0
  %7129 = vmatpush.msra.mxu0 0.0
  %7130 = vmatpush.msra.mxu0 0.0
  %7131 = vmatpush.msra.mxu0 0.0
  %7132 = vmatpush.msra.mxu0 0.0
  %7133 = vmatpush.msra.mxu0 0.0
  %7134 = vmatpush.msra.mxu0 0.0
  %7135 = vmatpush.msra.mxu0 0.0
  %7136 = vmatpush.msra.mxu0 0.0
  %7137 = vmatpush.msra.mxu0 0.0
  %7138 = vmatpush.msra.mxu0 0.0
  %7139 = vmatpush.msra.mxu0 %v7126
  %7140 = vmatpush.msra.mxu0 %v7125
  %7141 = vmatpush.msra.mxu0 %v7124
  %7142 = vmatpush.msra.mxu0 %v7123
  %7143 = vmatmul.f32.gmra.mxu0 %v7100
  %v7144 = vpop.f32.mrf.mxu0
  %v7145 = vadd.f32 0.0, %v7144
  %7146 = vdwg.mxu0
  %v7147 = vadd.f32 %v7007, %v7145
  %v7148 = vadd.f32 %v400, %v7053
  %v7149 = vmul.f32 %v7148, %v424
  %v7150 = vtanh.pop %v7149
  %v7151 = vadd.f32 %v7150, 1.0
  %v7152 = vmul.f32 %v7151, 0.5
  %v7153 = vmul.f32 %v7152, %v7023
  %7155 = vrot.lane.b32.xlu0 %v7150, 32
  %v7156 = vpop.permute.xlu0 %7155
  %v7158 = vmul.f32 %v7152, %v7156
  %7160 = vrot.lane.b32.xlu0 %v7158, 32
  %v7161 = vpop.permute.xlu0 %7160
  %v7163 = vadd.f32 %v7153, %v7161
  %v7164 = vtanh.pop %v7163
  %7166 = vrot.lane.b32.xlu0 %v7164, 32
  %v7167 = vpop.permute.xlu0 %7166
  %v7169 = vmul.f32 %v7152, %v7167
  %7171 = vrot.lane.b32.xlu0 %v7169, 64
  %v7172 = vpop.permute.xlu0 %7171
  %v7173 = vsel %vm454, %v7172, 0
  %7175 = vmatpush.msra.mxu0 0.0
  %7176 = vmatpush.msra.mxu0 0.0
  %7177 = vmatpush.msra.mxu0 0.0
  %7178 = vmatpush.msra.mxu0 0.0
  %7179 = vmatpush.msra.mxu0 0.0
  %7180 = vmatpush.msra.mxu0 0.0
  %7181 = vmatpush.msra.mxu0 0.0
  %7182 = vmatpush.msra.mxu0 0.0
  %7183 = vmatpush.msra.mxu0 0.0
  %7184 = vmatpush.msra.mxu0 0.0
  %7185 = vmatpush.msra.mxu0 0.0
  %7186 = vmatpush.msra.mxu0 0.0
  %7187 = vmatpush.msra.mxu0 %v408
  %7188 = vmatpush.msra.mxu0 %v407
  %7189 = vmatpush.msra.mxu0 %v406
  %7190 = vmatpush.msra.mxu0 %v405
  %7191 = vmatmul.f32.gmra.mxu0 %v7173
  %v7192 = vpop.f32.mrf.mxu0
  %v7193 = vadd.f32 0.0, %v7192
  %7194 = vdwg.mxu0
  %7195 = vmatpush.msra.mxu0 0.0
  %7196 = vmatpush.msra.mxu0 0.0
  %7197 = vmatpush.msra.mxu0 0.0
  %7198 = vmatpush.msra.mxu0 0.0
  %7199 = vmatpush.msra.mxu0 0.0
  %7200 = vmatpush.msra.mxu0 0.0
  %7201 = vmatpush.msra.mxu0 0.0
  %7202 = vmatpush.msra.mxu0 0.0
  %7203 = vmatpush.msra.mxu0 0.0
  %7204 = vmatpush.msra.mxu0 0.0
  %7205 = vmatpush.msra.mxu0 0.0
  %7206 = vmatpush.msra.mxu0 0.0
  %7207 = vmatpush.msra.mxu0 %v412
  %7208 = vmatpush.msra.mxu0 %v411
  %7209 = vmatpush.msra.mxu0 %v410
  %7210 = vmatpush.msra.mxu0 %v409
  %7211 = vmatmul.f32.gmra.mxu0 %v7173
  %v7212 = vpop.f32.mrf.mxu0
  %v7213 = vadd.f32 %v7120, %v7212
  %7214 = vdwg.mxu0
  %v7215 = vadd.f32 %v7213, %v419
  %v7216 = vmul.f32 %v7215, %v424
  %v7217 = vtanh.pop %v7216
  %v7218 = vadd.f32 %v7217, 1.0
  %v7219 = vmul.f32 %v7218, 0.5
  %v7220 = vmul.f32 %v7219, %v7090
  %7222 = vrot.lane.b32.xlu0 %v7217, 32
  %v7223 = vpop.permute.xlu0 %7222
  %v7225 = vmul.f32 %v7219, %v7223
  %7227 = vrot.lane.b32.xlu0 %v7225, 32
  %v7228 = vpop.permute.xlu0 %7227
  %v7230 = vadd.f32 %v7220, %v7228
  %v7231 = vtanh.pop %v7230
  %7233 = vrot.lane.b32.xlu0 %v7231, 32
  %v7234 = vpop.permute.xlu0 %7233
  %v7236 = vmul.f32 %v7219, %v7234
  %7238 = vrot.lane.b32.xlu0 %v7236, 64
  %v7239 = vpop.permute.xlu0 %7238
  %v7240 = vsel %vm454, %v7239, 0
  %7242 = vmatpush.msra.mxu0 0.0
  %7243 = vmatpush.msra.mxu0 0.0
  %7244 = vmatpush.msra.mxu0 0.0
  %7245 = vmatpush.msra.mxu0 0.0
  %7246 = vmatpush.msra.mxu0 0.0
  %7247 = vmatpush.msra.mxu0 0.0
  %7248 = vmatpush.msra.mxu0 0.0
  %7249 = vmatpush.msra.mxu0 0.0
  %7250 = vmatpush.msra.mxu0 0.0
  %7251 = vmatpush.msra.mxu0 0.0
  %7252 = vmatpush.msra.mxu0 0.0
  %7253 = vmatpush.msra.mxu0 0.0
  %7254 = vmatpush.msra.mxu0 %v416
  %7255 = vmatpush.msra.mxu0 %v415
  %7256 = vmatpush.msra.mxu0 %v414
  %7257 = vmatpush.msra.mxu0 %v413
  %7258 = vmatmul.f32.gmra.mxu0 %v7240
  %v7259 = vpop.f32.mrf.mxu0
  %v7260 = vadd.f32 0.0, %v7259
  %7261 = vdwg.mxu0
  %s7262 = scalar_lea.vmem %s7, 1536
  %v7263 = vld [vmem:[%s7262] sm:$0xff]
  %v7264 = vld [vmem:[%s7262 + $0x8] sm:$0xff]
  %v7265 = vld [vmem:[%s7262 + $0x10] sm:$0xff]
  %v7266 = vld [vmem:[%s7262 + $0x18] sm:$0xff]
  %7267 = vmatpush.msra.mxu0 0.0
  %7268 = vmatpush.msra.mxu0 0.0
  %7269 = vmatpush.msra.mxu0 0.0
  %7270 = vmatpush.msra.mxu0 0.0
  %7271 = vmatpush.msra.mxu0 0.0
  %7272 = vmatpush.msra.mxu0 0.0
  %7273 = vmatpush.msra.mxu0 0.0
  %7274 = vmatpush.msra.mxu0 0.0
  %7275 = vmatpush.msra.mxu0 0.0
  %7276 = vmatpush.msra.mxu0 0.0
  %7277 = vmatpush.msra.mxu0 0.0
  %7278 = vmatpush.msra.mxu0 0.0
  %7279 = vmatpush.msra.mxu0 %v7266
  %7280 = vmatpush.msra.mxu0 %v7265
  %7281 = vmatpush.msra.mxu0 %v7264
  %7282 = vmatpush.msra.mxu0 %v7263
  %7283 = vmatmul.f32.gmra.mxu0 %v7240
  %v7284 = vpop.f32.mrf.mxu0
  %v7285 = vadd.f32 0.0, %v7284
  %7286 = vdwg.mxu0
  %v7287 = vadd.f32 %v7147, %v7285
  %v7288 = vadd.f32 %v403, %v7193
  %v7289 = vmul.f32 %v7288, %v424
  %v7290 = vtanh.pop %v7289
  %v7291 = vadd.f32 %v7290, 1.0
  %v7292 = vmul.f32 %v7291, 0.5
  %v7293 = vmul.f32 %v7292, %v7163
  %7295 = vrot.lane.b32.xlu0 %v7290, 32
  %v7296 = vpop.permute.xlu0 %7295
  %v7298 = vmul.f32 %v7292, %v7296
  %7300 = vrot.lane.b32.xlu0 %v7298, 32
  %v7301 = vpop.permute.xlu0 %7300
  %v7303 = vadd.f32 %v7293, %v7301
  %v7304 = vtanh.pop %v7303
  %7306 = vrot.lane.b32.xlu0 %v7304, 32
  %v7307 = vpop.permute.xlu0 %7306
  %v7309 = vmul.f32 %v7292, %v7307
  %7311 = vrot.lane.b32.xlu0 %v7309, 64
  %v7312 = vpop.permute.xlu0 %7311
  %v7313 = vsel %vm454, %v7312, 0
  %7315 = vmatpush.msra.mxu0 0.0
  %7316 = vmatpush.msra.mxu0 0.0
  %7317 = vmatpush.msra.mxu0 0.0
  %7318 = vmatpush.msra.mxu0 0.0
  %7319 = vmatpush.msra.mxu0 0.0
  %7320 = vmatpush.msra.mxu0 0.0
  %7321 = vmatpush.msra.mxu0 0.0
  %7322 = vmatpush.msra.mxu0 0.0
  %7323 = vmatpush.msra.mxu0 0.0
  %7324 = vmatpush.msra.mxu0 0.0
  %7325 = vmatpush.msra.mxu0 0.0
  %7326 = vmatpush.msra.mxu0 0.0
  %7327 = vmatpush.msra.mxu0 %v412
  %7328 = vmatpush.msra.mxu0 %v411
  %7329 = vmatpush.msra.mxu0 %v410
  %7330 = vmatpush.msra.mxu0 %v409
  %7331 = vmatmul.f32.gmra.mxu0 %v7313
  %v7332 = vpop.f32.mrf.mxu0
  %v7333 = vadd.f32 %v7260, %v7332
  %7334 = vdwg.mxu0
  %v7335 = vadd.f32 %v7333, %v419
  %v7336 = vmul.f32 %v7335, %v424
  %v7337 = vtanh.pop %v7336
  %v7338 = vadd.f32 %v7337, 1.0
  %v7339 = vmul.f32 %v7338, 0.5
  %v7340 = vmul.f32 %v7339, %v7230
  %7342 = vrot.lane.b32.xlu0 %v7337, 32
  %v7343 = vpop.permute.xlu0 %7342
  %v7345 = vmul.f32 %v7339, %v7343
  %7347 = vrot.lane.b32.xlu0 %v7345, 32
  %v7348 = vpop.permute.xlu0 %7347
  %v7350 = vadd.f32 %v7340, %v7348
  %v7351 = vtanh.pop %v7350
  %7353 = vrot.lane.b32.xlu0 %v7351, 32
  %v7354 = vpop.permute.xlu0 %7353
  %v7356 = vmul.f32 %v7339, %v7354
  %s7357 = scalar_lea.vmem %s7, 1568
  %v7358 = vld [vmem:[%s7357] sm:$0xff]
  %v7359 = vld [vmem:[%s7357 + $0x8] sm:$0xff]
  %v7360 = vld [vmem:[%s7357 + $0x10] sm:$0xff]
  %v7361 = vld [vmem:[%s7357 + $0x18] sm:$0xff]
  %7363 = vrot.lane.b32.xlu0 %v7356, 64
  %v7364 = vpop.permute.xlu0 %7363
  %v7365 = vsel %vm454, %v7364, 0
  %7367 = vmatpush.msra.mxu0 0.0
  %7368 = vmatpush.msra.mxu0 0.0
  %7369 = vmatpush.msra.mxu0 0.0
  %7370 = vmatpush.msra.mxu0 0.0
  %7371 = vmatpush.msra.mxu0 0.0
  %7372 = vmatpush.msra.mxu0 0.0
  %7373 = vmatpush.msra.mxu0 0.0
  %7374 = vmatpush.msra.mxu0 0.0
  %7375 = vmatpush.msra.mxu0 0.0
  %7376 = vmatpush.msra.mxu0 0.0
  %7377 = vmatpush.msra.mxu0 0.0
  %7378 = vmatpush.msra.mxu0 0.0
  %7379 = vmatpush.msra.mxu0 %v7361
  %7380 = vmatpush.msra.mxu0 %v7360
  %7381 = vmatpush.msra.mxu0 %v7359
  %7382 = vmatpush.msra.mxu0 %v7358
  %7383 = vmatmul.f32.gmra.mxu0 %v7365
  %v7384 = vpop.f32.mrf.mxu0
  %v7385 = vadd.f32 0.0, %v7384
  %7386 = vdwg.mxu0
  %v7387 = vadd.f32 %v7287, %v7385
  %vm7388 = vcmask 15360
  %v7389 = vsel %vm7388, %v7387, -inf
  %7390 = vmax.xlane.f32.xlu0 %v7389
  %v7391 = vpop.xlane.xlu0 %7390
  %v7392 = vsub.f32 %v7387, %v7391
  %v7393 = vmul.f32 %v7392, 1.442695
  %v7394 = vpow.pop %v7393
  %v7395 = vsel %vm7388, %v7394, 0.0
  %7396 = vadd.xlane.f32.xlu0 %v7395
  %v7397 = vpop.xlane.xlu0 %7396
  %v7398 = vrcp.pop %v7397
  %v7399 = vmul.f32 %v7397, %v7398
  %v7400 = vsub.f32 1.0, %v7399
  %v7401 = vmul.f32 %v7398, %v7400
  %v7402 = vadd.f32 %v7398, %v7401
  %vm7403 = vweird.f32 %v7397
  %vm7404 = vweird.f32 %v7398
  %vm7405 = vmor %vm7403, %vm7404
  %v7406 = vsel %vm7405, %v7398, %v7402
  %v7407 = vand.u32 2147483647, %v7397
  %vm7408 = vcmp.eq.f32.partialorder %v7407, 8.507059e+37
  %v7409 = vand.u32 %v7397, 2147483648
  %v7410 = vor.u32 1.1754944e-38, %v7409
  %v7411 = vsel %vm7408, %v7410, %v7406
  %v7412 = vmul.f32 %v7394, %v7411
  %7413 = vst.msk [vmem:[%s9] sm:$0xff] %vm7388, %v7412
  // Predicated region
  $region38: #{tpu_custom_call.1} parent=0 // pred_check
    _
  $region39: #{tpu_custom_call.1} parent=0 // pred_check_branch
    %7415 = sbr.rel (0) target = $region41
  $region40: #{tpu_custom_call.1} parent=0 // pred_region
    _
  $region41: #{tpu_custom_call.1} parent=0 // pred_fallthru
    _
  // Predicated region
  $region42: #{tpu_custom_call.1} parent=0 // pred_check
    _
  $region43: #{tpu_custom_call.1} parent=0 // pred_check_branch
    %7417 = sbr.rel (0) target = $region45
  $region44: #{tpu_custom_call.1} parent=0 // pred_region
    _
  $region45: #{tpu_custom_call.1} parent=0 // pred_fallthru
    _

</llo_original>
